<compile_context>
chip_gen: v6e
topology: v6e:2x2x1
jax: 0.10.0
libtpu: 0.0.40
codegen_flags: <defaults>
</compile_context>

<pallas_src>
import functools

import jax
import jax.numpy as jnp
import numpy as np
from jax import lax
from jax.experimental import pallas as pl
from jax.experimental.pallas import tpu as pltpu


# ----------------------------------------------------------------------------
# In-kernel building blocks
# ----------------------------------------------------------------------------
def _layer_norm(x, gamma, beta, eps=1e-5):
    mu = jnp.mean(x, axis=-1, keepdims=True)
    xc = x - mu
    var = jnp.mean(xc * xc, axis=-1, keepdims=True)
    return xc * lax.rsqrt(var + eps) * gamma + beta


def _mha(q_in, k_in, wq3_ref, wkv_ref, wsq_ref, vec_ref, *, num_heads, use_ln, gated):
    """Fused MultiHeadAttention forward for one batch element (all in vregs).

    q_in: (Lq, Dq) activations; k_in: (Lk, Dk) activations.
    wq3_ref: (Dq, 2E|3E) bf16  [fc_q^T | scale*(W_in_q@fc_q)^T | gate^T]
    wkv_ref: (Dk, 2E)    bf16  [(W_in_k@fc_k)^T | (W_in_v@fc_v)^T]
    wsq_ref: (2, E, E)   bf16  [attn out_proj^T, fc_o^T]
    vec_ref: (11, E)     f32   [bq, bq_eff*scale, bk_eff, bv_eff, b_out, b_fc_o,
                                ln0_g, ln0_b, ln1_g, ln1_b, bg]
    Returns (Lq, E) float32.
    """
    f32, bf16 = jnp.float32, jnp.bfloat16
    E = wsq_ref.shape[-1]
    dh = E // num_heads
    Lq = q_in.shape[0]

    vec = vec_ref[...]

    def row(i):                       # (1, E) broadcast row
        return vec[i:i + 1, :]

    # One wide projection dot per input side (fills the 256-wide MXU).
    qg = jnp.dot(q_in.astype(bf16), wq3_ref[...], preferred_element_type=f32)
    q_p = qg[:, :E] + row(0)                    # fc_q output (residual branch)
    q = qg[:, E:2 * E] + row(1)                 # attn q in-proj, 1/sqrt(dh) pre-folded
    kv = jnp.dot(k_in.astype(bf16), wkv_ref[...], preferred_element_type=f32)
    k = kv[:, :E] + row(2)
    v = kv[:, E:] + row(3)

    qb, kb, vb = q.astype(bf16), k.astype(bf16), v.astype(bf16)

    # Per-head scores, stacked so the softmax reductions run once over full vregs.
    scores = []
    for h in range(num_heads):
        sl = slice(h * dh, (h + 1) * dh)
        scores.append(lax.dot_general(qb[:, sl], kb[:, sl],
                                      (((1,), (1,)), ((), ())),
                                      preferred_element_type=f32))      # (Lq, Lk)
    s = jnp.concatenate(scores, axis=0)                                  # (H*Lq, Lk)
    s = s - jnp.max(s, axis=-1, keepdims=True)
    e = jnp.exp(s)
    p = e * pl.reciprocal(jnp.sum(e, axis=-1, keepdims=True), approx=True)
    pb = p.astype(bf16)

    outs = []
    for h in range(num_heads):
        sl = slice(h * dh, (h + 1) * dh)
        outs.append(jnp.dot(pb[h * Lq:(h + 1) * Lq, :], vb[:, sl],
                            preferred_element_type=f32))                # (Lq, dh)
    attn = jnp.concatenate(outs, axis=-1)                                # (Lq, E)

    a = jnp.dot(attn.astype(bf16), wsq_ref[0], preferred_element_type=f32) + row(4)
    o = q_p + a                                                          # residual on fc_q(Q)
    if use_ln:
        o = _layer_norm(o, row(6), row(7))
    o = o + jnp.maximum(
        jnp.dot(o.astype(bf16), wsq_ref[1], preferred_element_type=f32) + row(5), 0.0)
    if use_ln:
        o = _layer_norm(o, row(8), row(9))
    if gated:
        g = qg[:, 2 * E:] + row(10)
        o = o * (g * pl.reciprocal(1.0 + jnp.exp(-g), approx=True))      # SiLU gate
    return o


def _ilra_kernel(*refs, num_layers, num_heads, use_ln):
    # refs layout (in order):
    #   x_ref (1, N, D_in)
    #   per layer: latent_ref, fwd(wq3, wkv, wsq, vec), bwd(wq3, wkv, wsq, vec)
    #   s_ref, pool(wq3, wkv, wsq, vec), clsw_ref (E, L), clsb_ref (1, L)
    #   o_ref (1, 1, L)   <- output appended by pallas_call
    x_ref = refs[0]
    idx = 1
    x = x_ref[0]                                           # (N, D_in)
    for _ in range(num_layers):
        latent_ref = refs[idx]; idx += 1
        fwd = refs[idx:idx + 4]; idx += 4
        bwd = refs[idx:idx + 4]; idx += 4
        h = _mha(latent_ref[0], x, *fwd, num_heads=num_heads, use_ln=use_ln, gated=True)
        x = _mha(x, h, *bwd, num_heads=num_heads, use_ln=use_ln, gated=True)
    s_ref = refs[idx]; idx += 1
    pool = refs[idx:idx + 4]; idx += 4
    clsw_ref = refs[idx]; idx += 1
    clsb_ref = refs[idx]; idx += 1
    o_ref = refs[idx]

    feat = _mha(s_ref[0], x, *pool, num_heads=num_heads, use_ln=use_ln, gated=False)
    logits = jnp.dot(feat, clsw_ref[...], preferred_element_type=jnp.float32)
    o_ref[0] = (logits + clsb_ref[...]).astype(o_ref.dtype)


# ----------------------------------------------------------------------------
# Wrapper-side parameter packing (algebraic folding + layout plumbing)
# ----------------------------------------------------------------------------
def _pack_mha(raw, *, num_heads):
    f32, bf16 = jnp.float32, jnp.bfloat16
    E, dim_q = raw["wq"].shape
    dh = E // num_heads
    scale = 1.0 / float(np.sqrt(dh))
    w_in, b_in = raw["in_w"], raw["in_b"]
    w_iq, w_ik, w_iv = w_in[:E], w_in[E:2 * E], w_in[2 * E:]
    b_iq, b_ik, b_iv = b_in[:E], b_in[E:2 * E], b_in[2 * E:]
    hp = functools.partial(jnp.dot, precision="highest")
    # fc_q chained with the attention q in-projection, 1/sqrt(dh) folded in.
    wq_eff = scale * hp(w_iq, raw["wq"])
    bq_eff = scale * (hp(w_iq, raw["bq"]) + b_iq)
    # fc_k / fc_v folded into the attention k/v in-projections.
    wk_eff = hp(w_ik, raw["wk"]); bk_eff = hp(w_ik, raw["bk"]) + b_ik
    wv_eff = hp(w_iv, raw["wv"]); bv_eff = hp(w_iv, raw["bv"]) + b_iv
    gated = "wg" in raw
    q_cols = [raw["wq"].T, wq_eff.T] + ([raw["wg"].T] if gated else [])
    bg = raw.get("bg", jnp.zeros((E,), f32))
    ones, zeros = jnp.ones((E,), f32), jnp.zeros((E,), f32)
    g0, be0 = raw.get("ln0_g", ones), raw.get("ln0_b", zeros)
    g1, be1 = raw.get("ln1_g", ones), raw.get("ln1_b", zeros)
    return dict(
        wq3=jnp.concatenate(q_cols, axis=-1).astype(bf16),               # (Dq, 2E|3E)
        wkv=jnp.concatenate([wk_eff.T, wv_eff.T], axis=-1).astype(bf16),  # (Dk, 2E)
        wsq=jnp.stack([raw["out_w"].T, raw["wfo"].T]).astype(bf16),       # (2, E, E)
        vec=jnp.stack([raw["bq"], bq_eff, bk_eff, bv_eff, raw["out_b"], raw["bfo"],
                       g0, be0, g1, be1, bg]).astype(f32),                # (11, E)
    )


def ilra_forward(x, model, *, num_heads, use_ln):
    """Whole ILRA forward pass as a single fused pallas_call."""
    B, N, D_in = x.shape
    E = model["pool_S"].shape[-1]
    assert E % num_heads == 0
    num_layers = len(model["blocks"])
    num_logits = model["cls_w"].shape[0]
    bf16 = jnp.bfloat16

    inputs = [x.astype(bf16)]
    in_specs = [pl.BlockSpec((1, N, D_in), lambda b: (b, 0, 0))]

    def add_const(arr):
        # Constant index_map: single copy stays VMEM-resident across the batch grid.
        inputs.append(arr)
        if arr.ndim == 2:
            in_specs.append(pl.BlockSpec(arr.shape, lambda b: (0, 0)))
        else:
            in_specs.append(pl.BlockSpec(arr.shape, lambda b: (0, 0, 0)))

    def add_mha(packed):
        for name in ("wq3", "wkv", "wsq", "vec"):
            add_const(packed[name])

    for blk in model["blocks"]:
        add_const(blk["latent"].astype(bf16))           # (1, num_inds, E), un-broadcast
        add_mha(_pack_mha(blk["fwd"], num_heads=num_heads))
        add_mha(_pack_mha(blk["bwd"], num_heads=num_heads))

    add_const(model["pool_S"].astype(bf16))             # (1, 1, E), un-broadcast
    add_mha(_pack_mha(model["pool"], num_heads=num_heads))
    add_const(model["cls_w"].T)                         # (E, num_logits) f32
    add_const(model["cls_b"].reshape(1, num_logits))    # (1, num_logits) f32

    kernel = functools.partial(_ilra_kernel, num_layers=num_layers,
                               num_heads=num_heads, use_ln=use_ln)
    out = pl.pallas_call(
        kernel,
        out_shape=jax.ShapeDtypeStruct((B, 1, num_logits), jnp.float32),
        grid=(B,),
        in_specs=in_specs,
        out_specs=pl.BlockSpec((1, 1, num_logits), lambda b: (b, 0, 0)),
        compiler_params=pltpu.CompilerParams(dimension_semantics=("parallel",)),
    )(*inputs)
    return out[:, 0, :]


# ----------------------------------------------------------------------------
# Pure-JAX reference (faithful to the PyTorch module, unmerged weights, f32)
# ----------------------------------------------------------------------------
def _ln_ref(x, g, b, eps=1e-5):
    mu = jnp.mean(x, axis=-1, keepdims=True)
    var = jnp.mean((x - mu) ** 2, axis=-1, keepdims=True)
    return (x - mu) / jnp.sqrt(var + eps) * g + b


def _mha_ref(q_in, k_in, raw, *, num_heads, use_ln, gated):
    E = raw["wq"].shape[0]
    dh = E // num_heads
    B, Lq, _ = q_in.shape
    Lk = k_in.shape[1]
    q_p = q_in @ raw["wq"].T + raw["bq"]
    k_p = k_in @ raw["wk"].T + raw["bk"]
    v_p = k_in @ raw["wv"].T + raw["bv"]
    w_in, b_in = raw["in_w"], raw["in_b"]
    q = q_p @ w_in[:E].T + b_in[:E]
    k = k_p @ w_in[E:2 * E].T + b_in[E:2 * E]
    v = v_p @ w_in[2 * E:].T + b_in[2 * E:]
    q = q.reshape(B, Lq, num_heads, dh).transpose(0, 2, 1, 3)
    k = k.reshape(B, Lk, num_heads, dh).transpose(0, 2, 1, 3)
    v = v.reshape(B, Lk, num_heads, dh).transpose(0, 2, 1, 3)
    s = jnp.einsum("bhqd,bhkd->bhqk", q, k) / np.sqrt(dh)
    a = jnp.einsum("bhqk,bhkd->bhqd", jax.nn.softmax(s, axis=-1), v)
    a = a.transpose(0, 2, 1, 3).reshape(B, Lq, E)
    a = a @ raw["out_w"].T + raw["out_b"]
    o = q_p + a
    if use_ln:
        o = _ln_ref(o, raw["ln0_g"], raw["ln0_b"])
    o = o + jax.nn.relu(o @ raw["wfo"].T + raw["bfo"])
    if use_ln:
        o = _ln_ref(o, raw["ln1_g"], raw["ln1_b"])
    if gated:
        o = o * jax.nn.silu(q_in @ raw["wg"].T + raw["bg"])
    return o


def ilra_reference(x, model, *, num_heads, use_ln):
    B = x.shape[0]
    for blk in model["blocks"]:
        latent = jnp.broadcast_to(blk["latent"], (B,) + blk["latent"].shape[1:])
        h = _mha_ref(latent, x, blk["fwd"], num_heads=num_heads, use_ln=use_ln, gated=True)
        x = _mha_ref(x, h, blk["bwd"], num_heads=num_heads, use_ln=use_ln, gated=True)
    s = jnp.broadcast_to(model["pool_S"], (B, 1, model["pool_S"].shape[-1]))
    feat = _mha_ref(s, x, model["pool"], num_heads=num_heads, use_ln=use_ln, gated=False)
    return feat[:, 0, :] @ model["cls_w"].T + model["cls_b"]


# ----------------------------------------------------------------------------
# Deterministic synthetic parameters
# ----------------------------------------------------------------------------
def _init_mha(key, dim_q, dim_k, dim_v, *, use_ln, gated):
    f32 = jnp.float32
    ks = jax.random.split(key, 18)
    E = dim_v
    w = lambda k, o, i: jax.random.normal(k, (o, i), f32) / np.sqrt(i)
    b = lambda k, d: 0.05 * jax.random.normal(k, (d,), f32)
    raw = dict(
        wq=w(ks[0], E, dim_q), bq=b(ks[1], E),
        wk=w(ks[2], E, dim_k), bk=b(ks[3], E),
        wv=w(ks[4], E, dim_k), bv=b(ks[5], E),
        in_w=w(ks[6], 3 * E, E), in_b=b(ks[7], 3 * E),
        out_w=w(ks[8], E, E), out_b=b(ks[9], E),
        wfo=w(ks[10], E, E), bfo=b(ks[11], E),
    )
    if use_ln:
        raw["ln0_g"] = 1.0 + 0.05 * jax.random.normal(ks[12], (E,), f32)
        raw["ln0_b"] = b(ks[13], E)
        raw["ln1_g"] = 1.0 + 0.05 * jax.random.normal(ks[14], (E,), f32)
        raw["ln1_b"] = b(ks[15], E)
    if gated:
        raw["wg"] = w(ks[16], E, dim_q)
        raw["bg"] = b(ks[17], E)
    return raw


def init_ilra(key, *, num_layers, dim_in, hidden, num_inds, num_logits, use_ln):
    f32 = jnp.float32
    ks = jax.random.split(key, 3 * num_layers + 4)
    blocks = []
    for i in range(num_layers):
        d_in = dim_in if i == 0 else hidden
        latent = jax.random.normal(ks[3 * i], (1, num_inds, hidden), f32) / np.sqrt(hidden)
        fwd = _init_mha(ks[3 * i + 1], hidden, d_in, hidden, use_ln=use_ln, gated=True)
        bwd = _init_mha(ks[3 * i + 2], d_in, hidden, hidden, use_ln=use_ln, gated=True)
        blocks.append(dict(latent=latent, fwd=fwd, bwd=bwd))
    base = 3 * num_layers
    pool_S = jax.random.normal(ks[base], (1, 1, hidden), f32) / np.sqrt(hidden)
    pool = _init_mha(ks[base + 1], hidden, hidden, hidden, use_ln=use_ln, gated=False)
    cls_w = jax.random.normal(ks[base + 2], (num_logits, hidden), f32) / np.sqrt(hidden)
    cls_b = 0.05 * jax.random.normal(ks[base + 3], (num_logits,), f32)
    return dict(blocks=blocks, pool_S=pool_S, pool=pool, cls_w=cls_w, cls_b=cls_b)


if __name__ == "__main__":
    key = jax.random.PRNGKey(0)
    B, N = 2, 64                  # batch of bags, patches per bag
    patch_dim, hidden = 64, 128   # hidden_feat lane-dense (=128)
    num_heads, topk = 4, 16       # num_heads, num_inds
    num_layers, num_logits = 2, 4
    use_ln = True

    k_x, k_p = jax.random.split(key)
    x = jax.random.normal(k_x, (B, N, patch_dim), jnp.float32)
    model = init_ilra(k_p, num_layers=num_layers, dim_in=patch_dim, hidden=hidden,
                      num_inds=topk, num_logits=num_logits, use_ln=use_ln)

    run = jax.jit(lambda xx, mm: ilra_forward(xx, mm, num_heads=num_heads, use_ln=use_ln))
    logits = jax.block_until_ready(run(x, model))

    with jax.default_matmul_precision("highest"):
        ref = ilra_reference(x, model, num_heads=num_heads, use_ln=use_ln)
    # bf16 matmul inputs / f32 accumulation + approx reciprocals -> relaxed tolerance.
    np.testing.assert_allclose(np.asarray(logits), np.asarray(ref), rtol=2e-2, atol=3e-2)
    print("KERNEL_OK")
</pallas_src>

<mosaic_0001>
module attributes {stable_mosaic.version = 11 : i64} {
  func.func @_ilra_kernel(%arg0: i32, %arg1: memref<1x64x64xbf16, #tpu.memory_space<vmem>>, %arg2: memref<1x16x128xbf16, #tpu.memory_space<vmem>>, %arg3: memref<128x384xbf16, #tpu.memory_space<vmem>>, %arg4: memref<64x256xbf16, #tpu.memory_space<vmem>>, %arg5: memref<2x128x128xbf16, #tpu.memory_space<vmem>>, %arg6: memref<11x128xf32, #tpu.memory_space<vmem>>, %arg7: memref<64x384xbf16, #tpu.memory_space<vmem>>, %arg8: memref<128x256xbf16, #tpu.memory_space<vmem>>, %arg9: memref<2x128x128xbf16, #tpu.memory_space<vmem>>, %arg10: memref<11x128xf32, #tpu.memory_space<vmem>>, %arg11: memref<1x16x128xbf16, #tpu.memory_space<vmem>>, %arg12: memref<128x384xbf16, #tpu.memory_space<vmem>>, %arg13: memref<128x256xbf16, #tpu.memory_space<vmem>>, %arg14: memref<2x128x128xbf16, #tpu.memory_space<vmem>>, %arg15: memref<11x128xf32, #tpu.memory_space<vmem>>, %arg16: memref<128x384xbf16, #tpu.memory_space<vmem>>, %arg17: memref<128x256xbf16, #tpu.memory_space<vmem>>, %arg18: memref<2x128x128xbf16, #tpu.memory_space<vmem>>, %arg19: memref<11x128xf32, #tpu.memory_space<vmem>>, %arg20: memref<1x1x128xbf16, #tpu.memory_space<vmem>>, %arg21: memref<128x256xbf16, #tpu.memory_space<vmem>>, %arg22: memref<128x256xbf16, #tpu.memory_space<vmem>>, %arg23: memref<2x128x128xbf16, #tpu.memory_space<vmem>>, %arg24: memref<11x128xf32, #tpu.memory_space<vmem>>, %arg25: memref<128x4xf32, #tpu.memory_space<vmem>>, %arg26: memref<1x4xf32, #tpu.memory_space<vmem>>, %arg27: memref<1x1x4xf32, #tpu.memory_space<vmem>>) attributes {dimension_semantics = [#tpu.dimension_semantics<parallel>], iteration_bounds = array<i64: 2>, scalar_prefetch = 0 : i64, scratch_operands = 0 : i64, tpu.core_type = #tpu.core_type<tc>, window_params = [{transform_indices = @transform_0, window_bounds = array<i64: 1, 64, 64>}, {pipeline_mode = #tpu.pipeline_mode<synchronous>, transform_indices = @transform_1, window_bounds = array<i64: 1, 16, 128>}, {pipeline_mode = #tpu.pipeline_mode<synchronous>, transform_indices = @transform_2, window_bounds = array<i64: 128, 384>}, {pipeline_mode = #tpu.pipeline_mode<synchronous>, transform_indices = @transform_3, window_bounds = array<i64: 64, 256>}, {pipeline_mode = #tpu.pipeline_mode<synchronous>, transform_indices = @transform_4, window_bounds = array<i64: 2, 128, 128>}, {pipeline_mode = #tpu.pipeline_mode<synchronous>, transform_indices = @transform_5, window_bounds = array<i64: 11, 128>}, {pipeline_mode = #tpu.pipeline_mode<synchronous>, transform_indices = @transform_6, window_bounds = array<i64: 64, 384>}, {pipeline_mode = #tpu.pipeline_mode<synchronous>, transform_indices = @transform_7, window_bounds = array<i64: 128, 256>}, {pipeline_mode = #tpu.pipeline_mode<synchronous>, transform_indices = @transform_8, window_bounds = array<i64: 2, 128, 128>}, {pipeline_mode = #tpu.pipeline_mode<synchronous>, transform_indices = @transform_9, window_bounds = array<i64: 11, 128>}, {pipeline_mode = #tpu.pipeline_mode<synchronous>, transform_indices = @transform_10, window_bounds = array<i64: 1, 16, 128>}, {pipeline_mode = #tpu.pipeline_mode<synchronous>, transform_indices = @transform_11, window_bounds = array<i64: 128, 384>}, {pipeline_mode = #tpu.pipeline_mode<synchronous>, transform_indices = @transform_12, window_bounds = array<i64: 128, 256>}, {pipeline_mode = #tpu.pipeline_mode<synchronous>, transform_indices = @transform_13, window_bounds = array<i64: 2, 128, 128>}, {pipeline_mode = #tpu.pipeline_mode<synchronous>, transform_indices = @transform_14, window_bounds = array<i64: 11, 128>}, {pipeline_mode = #tpu.pipeline_mode<synchronous>, transform_indices = @transform_15, window_bounds = array<i64: 128, 384>}, {pipeline_mode = #tpu.pipeline_mode<synchronous>, transform_indices = @transform_16, window_bounds = array<i64: 128, 256>}, {pipeline_mode = #tpu.pipeline_mode<synchronous>, transform_indices = @transform_17, window_bounds = array<i64: 2, 128, 128>}, {pipeline_mode = #tpu.pipeline_mode<synchronous>, transform_indices = @transform_18, window_bounds = array<i64: 11, 128>}, {pipeline_mode = #tpu.pipeline_mode<synchronous>, transform_indices = @transform_19, window_bounds = array<i64: 1, 1, 128>}, {pipeline_mode = #tpu.pipeline_mode<synchronous>, transform_indices = @transform_20, window_bounds = array<i64: 128, 256>}, {pipeline_mode = #tpu.pipeline_mode<synchronous>, transform_indices = @transform_21, window_bounds = array<i64: 128, 256>}, {pipeline_mode = #tpu.pipeline_mode<synchronous>, transform_indices = @transform_22, window_bounds = array<i64: 2, 128, 128>}, {pipeline_mode = #tpu.pipeline_mode<synchronous>, transform_indices = @transform_23, window_bounds = array<i64: 11, 128>}, {pipeline_mode = #tpu.pipeline_mode<synchronous>, transform_indices = @transform_24, window_bounds = array<i64: 128, 4>}, {pipeline_mode = #tpu.pipeline_mode<synchronous>, transform_indices = @transform_25, window_bounds = array<i64: 1, 4>}, {transform_indices = @transform_26, window_bounds = array<i64: 1, 1, 4>}]} {
    %c0 = arith.constant 0 : index
    %c0_0 = arith.constant 0 : index
    %c0_1 = arith.constant 0 : index
    %0 = vector.load %arg1[%c0, %c0_0, %c0_1] : memref<1x64x64xbf16, #tpu.memory_space<vmem>>, vector<1x64x64xbf16>
    %1 = vector.shape_cast %0 : vector<1x64x64xbf16> to vector<64x64xbf16>
    %c0_2 = arith.constant 0 : index
    %c0_3 = arith.constant 0 : index
    %c0_4 = arith.constant 0 : index
    %2 = vector.load %arg2[%c0_2, %c0_3, %c0_4] : memref<1x16x128xbf16, #tpu.memory_space<vmem>>, vector<1x16x128xbf16>
    %3 = vector.shape_cast %2 : vector<1x16x128xbf16> to vector<16x128xbf16>
    %c0_5 = arith.constant 0 : index
    %c0_6 = arith.constant 0 : index
    %4 = vector.load %arg6[%c0_5, %c0_6] : memref<11x128xf32, #tpu.memory_space<vmem>>, vector<11x128xf32>
    %c0_7 = arith.constant 0 : index
    %c0_8 = arith.constant 0 : index
    %5 = vector.load %arg3[%c0_7, %c0_8] : memref<128x384xbf16, #tpu.memory_space<vmem>>, vector<128x384xbf16>
    %cst = arith.constant dense<0.000000e+00> : vector<16x384xf32>
    %6 = tpu.matmul %3, %5, %cst {dimension_numbers = #tpu.dot_dimension_numbers<[1], [0], [0], [1], [0, 0, 1, 1], [], []>} : vector<16x128xbf16>, vector<128x384xbf16>, vector<16x384xf32> -> vector<16x384xf32>
    %7 = vector.extract_strided_slice %6 {offsets = [0, 0], sizes = [16, 128], strides = [1, 1]} : vector<16x384xf32> to vector<16x128xf32>
    %8 = vector.extract_strided_slice %4 {offsets = [0, 0], sizes = [1, 128], strides = [1, 1]} : vector<11x128xf32> to vector<1x128xf32>
    %9 = vector.broadcast %8 : vector<1x128xf32> to vector<16x128xf32>
    %10 = arith.addf %7, %9 : vector<16x128xf32>
    %11 = vector.extract_strided_slice %6 {offsets = [0, 128], sizes = [16, 128], strides = [1, 1]} : vector<16x384xf32> to vector<16x128xf32>
    %12 = vector.extract_strided_slice %4 {offsets = [1, 0], sizes = [1, 128], strides = [1, 1]} : vector<11x128xf32> to vector<1x128xf32>
    %13 = vector.broadcast %12 : vector<1x128xf32> to vector<16x128xf32>
    %14 = arith.addf %11, %13 : vector<16x128xf32>
    %c0_9 = arith.constant 0 : index
    %c0_10 = arith.constant 0 : index
    %15 = vector.load %arg4[%c0_9, %c0_10] : memref<64x256xbf16, #tpu.memory_space<vmem>>, vector<64x256xbf16>
    %cst_11 = arith.constant dense<0.000000e+00> : vector<64x256xf32>
    %16 = tpu.matmul %1, %15, %cst_11 {dimension_numbers = #tpu.dot_dimension_numbers<[1], [0], [0], [1], [0, 0, 1, 1], [], []>} : vector<64x64xbf16>, vector<64x256xbf16>, vector<64x256xf32> -> vector<64x256xf32>
    %17 = vector.extract_strided_slice %16 {offsets = [0, 0], sizes = [64, 128], strides = [1, 1]} : vector<64x256xf32> to vector<64x128xf32>
    %18 = vector.extract_strided_slice %4 {offsets = [2, 0], sizes = [1, 128], strides = [1, 1]} : vector<11x128xf32> to vector<1x128xf32>
    %19 = vector.broadcast %18 : vector<1x128xf32> to vector<64x128xf32>
    %20 = arith.addf %17, %19 : vector<64x128xf32>
    %21 = vector.extract_strided_slice %16 {offsets = [0, 128], sizes = [64, 128], strides = [1, 1]} : vector<64x256xf32> to vector<64x128xf32>
    %22 = vector.extract_strided_slice %4 {offsets = [3, 0], sizes = [1, 128], strides = [1, 1]} : vector<11x128xf32> to vector<1x128xf32>
    %23 = vector.broadcast %22 : vector<1x128xf32> to vector<64x128xf32>
    %24 = arith.addf %21, %23 : vector<64x128xf32>
    %25 = arith.truncf %14 : vector<16x128xf32> to vector<16x128xbf16>
    %26 = arith.truncf %20 : vector<64x128xf32> to vector<64x128xbf16>
    %27 = arith.truncf %24 : vector<64x128xf32> to vector<64x128xbf16>
    %28 = vector.extract_strided_slice %25 {offsets = [0, 0], sizes = [16, 32], strides = [1, 1]} : vector<16x128xbf16> to vector<16x32xbf16>
    %29 = vector.extract_strided_slice %26 {offsets = [0, 0], sizes = [64, 32], strides = [1, 1]} : vector<64x128xbf16> to vector<64x32xbf16>
    %cst_12 = arith.constant dense<0.000000e+00> : vector<16x64xf32>
    %30 = tpu.matmul %28, %29, %cst_12 {dimension_numbers = #tpu.dot_dimension_numbers<[1], [1], [0], [0], [0, 0, 1, 0], [], []>} : vector<16x32xbf16>, vector<64x32xbf16>, vector<16x64xf32> -> vector<16x64xf32>
    %31 = vector.extract_strided_slice %25 {offsets = [0, 32], sizes = [16, 32], strides = [1, 1]} : vector<16x128xbf16> to vector<16x32xbf16>
    %32 = vector.extract_strided_slice %26 {offsets = [0, 32], sizes = [64, 32], strides = [1, 1]} : vector<64x128xbf16> to vector<64x32xbf16>
    %cst_13 = arith.constant dense<0.000000e+00> : vector<16x64xf32>
    %33 = tpu.matmul %31, %32, %cst_13 {dimension_numbers = #tpu.dot_dimension_numbers<[1], [1], [0], [0], [0, 0, 1, 0], [], []>} : vector<16x32xbf16>, vector<64x32xbf16>, vector<16x64xf32> -> vector<16x64xf32>
    %34 = vector.extract_strided_slice %25 {offsets = [0, 64], sizes = [16, 32], strides = [1, 1]} : vector<16x128xbf16> to vector<16x32xbf16>
    %35 = vector.extract_strided_slice %26 {offsets = [0, 64], sizes = [64, 32], strides = [1, 1]} : vector<64x128xbf16> to vector<64x32xbf16>
    %cst_14 = arith.constant dense<0.000000e+00> : vector<16x64xf32>
    %36 = tpu.matmul %34, %35, %cst_14 {dimension_numbers = #tpu.dot_dimension_numbers<[1], [1], [0], [0], [0, 0, 1, 0], [], []>} : vector<16x32xbf16>, vector<64x32xbf16>, vector<16x64xf32> -> vector<16x64xf32>
    %37 = vector.extract_strided_slice %25 {offsets = [0, 96], sizes = [16, 32], strides = [1, 1]} : vector<16x128xbf16> to vector<16x32xbf16>
    %38 = vector.extract_strided_slice %26 {offsets = [0, 96], sizes = [64, 32], strides = [1, 1]} : vector<64x128xbf16> to vector<64x32xbf16>
    %cst_15 = arith.constant dense<0.000000e+00> : vector<16x64xf32>
    %39 = tpu.matmul %37, %38, %cst_15 {dimension_numbers = #tpu.dot_dimension_numbers<[1], [1], [0], [0], [0, 0, 1, 0], [], []>} : vector<16x32xbf16>, vector<64x32xbf16>, vector<16x64xf32> -> vector<16x64xf32>
    %40 = tpu.concatenate %30, %33, %36, %39 in 0 : vector<16x64xf32>, vector<16x64xf32>, vector<16x64xf32>, vector<16x64xf32> -> vector<64x64xf32>
    %cst_16 = arith.constant dense<0xFF800000> : vector<64xf32>
    %41 = vector.multi_reduction <maximumf>, %40, %cst_16 [1] : vector<64x64xf32> to vector<64xf32>
    %42 = vector.shape_cast %41 : vector<64xf32> to vector<64x1xf32>
    %43 = vector.broadcast %42 : vector<64x1xf32> to vector<64x64xf32>
    %44 = arith.subf %40, %43 : vector<64x64xf32>
    %45 = math.exp %44 : vector<64x64xf32>
    %cst_17 = arith.constant dense<0.000000e+00> : vector<64xf32>
    %46 = vector.multi_reduction <add>, %45, %cst_17 [1] : vector<64x64xf32> to vector<64xf32>
    %47 = vector.shape_cast %46 : vector<64xf32> to vector<64x1xf32>
    %48 = tpu.reciprocal %47 {approx = true} : vector<64x1xf32> -> vector<64x1xf32>
    %49 = vector.broadcast %48 : vector<64x1xf32> to vector<64x64xf32>
    %50 = arith.mulf %45, %49 : vector<64x64xf32>
    %51 = arith.truncf %50 : vector<64x64xf32> to vector<64x64xbf16>
    %52 = vector.extract_strided_slice %51 {offsets = [0, 0], sizes = [16, 64], strides = [1, 1]} : vector<64x64xbf16> to vector<16x64xbf16>
    %53 = vector.extract_strided_slice %27 {offsets = [0, 0], sizes = [64, 32], strides = [1, 1]} : vector<64x128xbf16> to vector<64x32xbf16>
    %cst_18 = arith.constant dense<0.000000e+00> : vector<16x32xf32>
    %54 = tpu.matmul %52, %53, %cst_18 {dimension_numbers = #tpu.dot_dimension_numbers<[1], [0], [0], [1], [0, 0, 1, 1], [], []>} : vector<16x64xbf16>, vector<64x32xbf16>, vector<16x32xf32> -> vector<16x32xf32>
    %55 = vector.extract_strided_slice %51 {offsets = [16, 0], sizes = [16, 64], strides = [1, 1]} : vector<64x64xbf16> to vector<16x64xbf16>
    %56 = vector.extract_strided_slice %27 {offsets = [0, 32], sizes = [64, 32], strides = [1, 1]} : vector<64x128xbf16> to vector<64x32xbf16>
    %cst_19 = arith.constant dense<0.000000e+00> : vector<16x32xf32>
    %57 = tpu.matmul %55, %56, %cst_19 {dimension_numbers = #tpu.dot_dimension_numbers<[1], [0], [0], [1], [0, 0, 1, 1], [], []>} : vector<16x64xbf16>, vector<64x32xbf16>, vector<16x32xf32> -> vector<16x32xf32>
    %58 = vector.extract_strided_slice %51 {offsets = [32, 0], sizes = [16, 64], strides = [1, 1]} : vector<64x64xbf16> to vector<16x64xbf16>
    %59 = vector.extract_strided_slice %27 {offsets = [0, 64], sizes = [64, 32], strides = [1, 1]} : vector<64x128xbf16> to vector<64x32xbf16>
    %cst_20 = arith.constant dense<0.000000e+00> : vector<16x32xf32>
    %60 = tpu.matmul %58, %59, %cst_20 {dimension_numbers = #tpu.dot_dimension_numbers<[1], [0], [0], [1], [0, 0, 1, 1], [], []>} : vector<16x64xbf16>, vector<64x32xbf16>, vector<16x32xf32> -> vector<16x32xf32>
    %61 = vector.extract_strided_slice %51 {offsets = [48, 0], sizes = [16, 64], strides = [1, 1]} : vector<64x64xbf16> to vector<16x64xbf16>
    %62 = vector.extract_strided_slice %27 {offsets = [0, 96], sizes = [64, 32], strides = [1, 1]} : vector<64x128xbf16> to vector<64x32xbf16>
    %cst_21 = arith.constant dense<0.000000e+00> : vector<16x32xf32>
    %63 = tpu.matmul %61, %62, %cst_21 {dimension_numbers = #tpu.dot_dimension_numbers<[1], [0], [0], [1], [0, 0, 1, 1], [], []>} : vector<16x64xbf16>, vector<64x32xbf16>, vector<16x32xf32> -> vector<16x32xf32>
    %64 = tpu.concatenate %54, %57, %60, %63 in 1 : vector<16x32xf32>, vector<16x32xf32>, vector<16x32xf32>, vector<16x32xf32> -> vector<16x128xf32>
    %65 = arith.truncf %64 : vector<16x128xf32> to vector<16x128xbf16>
    %c0_22 = arith.constant 0 : index
    %c0_23 = arith.constant 0 : index
    %c0_24 = arith.constant 0 : index
    %66 = vector.load %arg5[%c0_22, %c0_23, %c0_24] : memref<2x128x128xbf16, #tpu.memory_space<vmem>>, vector<1x128x128xbf16>
    %67 = vector.shape_cast %66 : vector<1x128x128xbf16> to vector<128x128xbf16>
    %cst_25 = arith.constant dense<0.000000e+00> : vector<16x128xf32>
    %68 = tpu.matmul %65, %67, %cst_25 {dimension_numbers = #tpu.dot_dimension_numbers<[1], [0], [0], [1], [0, 0, 1, 1], [], []>} : vector<16x128xbf16>, vector<128x128xbf16>, vector<16x128xf32> -> vector<16x128xf32>
    %69 = vector.extract_strided_slice %4 {offsets = [4, 0], sizes = [1, 128], strides = [1, 1]} : vector<11x128xf32> to vector<1x128xf32>
    %70 = vector.broadcast %69 : vector<1x128xf32> to vector<16x128xf32>
    %71 = arith.addf %68, %70 : vector<16x128xf32>
    %72 = arith.addf %10, %71 : vector<16x128xf32>
    %73 = vector.extract_strided_slice %4 {offsets = [6, 0], sizes = [1, 128], strides = [1, 1]} : vector<11x128xf32> to vector<1x128xf32>
    %74 = vector.extract_strided_slice %4 {offsets = [7, 0], sizes = [1, 128], strides = [1, 1]} : vector<11x128xf32> to vector<1x128xf32>
    %cst_26 = arith.constant dense<0.000000e+00> : vector<16xf32>
    %75 = vector.multi_reduction <add>, %72, %cst_26 [1] : vector<16x128xf32> to vector<16xf32>
    %76 = vector.shape_cast %75 : vector<16xf32> to vector<16x1xf32>
    %cst_27 = arith.constant 1.280000e+02 : f32
    %77 = vector.broadcast %cst_27 : f32 to vector<16x1xf32>
    %78 = arith.divf %76, %77 : vector<16x1xf32>
    %79 = vector.broadcast %78 : vector<16x1xf32> to vector<16x128xf32>
    %80 = arith.subf %72, %79 : vector<16x128xf32>
    %81 = arith.mulf %80, %80 : vector<16x128xf32>
    %cst_28 = arith.constant dense<0.000000e+00> : vector<16xf32>
    %82 = vector.multi_reduction <add>, %81, %cst_28 [1] : vector<16x128xf32> to vector<16xf32>
    %83 = vector.shape_cast %82 : vector<16xf32> to vector<16x1xf32>
    %cst_29 = arith.constant 1.280000e+02 : f32
    %84 = vector.broadcast %cst_29 : f32 to vector<16x1xf32>
    %85 = arith.divf %83, %84 : vector<16x1xf32>
    %cst_30 = arith.constant 9.99999974E-6 : f32
    %86 = vector.broadcast %cst_30 : f32 to vector<16x1xf32>
    %87 = arith.addf %85, %86 : vector<16x1xf32>
    %88 = math.rsqrt %87 : vector<16x1xf32>
    %89 = vector.broadcast %88 : vector<16x1xf32> to vector<16x128xf32>
    %90 = arith.mulf %80, %89 : vector<16x128xf32>
    %91 = vector.broadcast %73 : vector<1x128xf32> to vector<16x128xf32>
    %92 = arith.mulf %90, %91 : vector<16x128xf32>
    %93 = vector.broadcast %74 : vector<1x128xf32> to vector<16x128xf32>
    %94 = arith.addf %92, %93 : vector<16x128xf32>
    %95 = arith.truncf %94 : vector<16x128xf32> to vector<16x128xbf16>
    %c1 = arith.constant 1 : index
    %c0_31 = arith.constant 0 : index
    %c0_32 = arith.constant 0 : index
    %96 = vector.load %arg5[%c1, %c0_31, %c0_32] : memref<2x128x128xbf16, #tpu.memory_space<vmem>>, vector<1x128x128xbf16>
    %97 = vector.shape_cast %96 : vector<1x128x128xbf16> to vector<128x128xbf16>
    %cst_33 = arith.constant dense<0.000000e+00> : vector<16x128xf32>
    %98 = tpu.matmul %95, %97, %cst_33 {dimension_numbers = #tpu.dot_dimension_numbers<[1], [0], [0], [1], [0, 0, 1, 1], [], []>} : vector<16x128xbf16>, vector<128x128xbf16>, vector<16x128xf32> -> vector<16x128xf32>
    %99 = vector.extract_strided_slice %4 {offsets = [5, 0], sizes = [1, 128], strides = [1, 1]} : vector<11x128xf32> to vector<1x128xf32>
    %100 = vector.broadcast %99 : vector<1x128xf32> to vector<16x128xf32>
    %101 = arith.addf %98, %100 : vector<16x128xf32>
    %cst_34 = arith.constant 0.000000e+00 : f32
    %102 = vector.broadcast %cst_34 : f32 to vector<16x128xf32>
    %103 = arith.maximumf %101, %102 : vector<16x128xf32>
    %104 = arith.addf %94, %103 : vector<16x128xf32>
    %105 = vector.extract_strided_slice %4 {offsets = [8, 0], sizes = [1, 128], strides = [1, 1]} : vector<11x128xf32> to vector<1x128xf32>
    %106 = vector.extract_strided_slice %4 {offsets = [9, 0], sizes = [1, 128], strides = [1, 1]} : vector<11x128xf32> to vector<1x128xf32>
    %cst_35 = arith.constant dense<0.000000e+00> : vector<16xf32>
    %107 = vector.multi_reduction <add>, %104, %cst_35 [1] : vector<16x128xf32> to vector<16xf32>
    %108 = vector.shape_cast %107 : vector<16xf32> to vector<16x1xf32>
    %cst_36 = arith.constant 1.280000e+02 : f32
    %109 = vector.broadcast %cst_36 : f32 to vector<16x1xf32>
    %110 = arith.divf %108, %109 : vector<16x1xf32>
    %111 = vector.broadcast %110 : vector<16x1xf32> to vector<16x128xf32>
    %112 = arith.subf %104, %111 : vector<16x128xf32>
    %113 = arith.mulf %112, %112 : vector<16x128xf32>
    %cst_37 = arith.constant dense<0.000000e+00> : vector<16xf32>
    %114 = vector.multi_reduction <add>, %113, %cst_37 [1] : vector<16x128xf32> to vector<16xf32>
    %115 = vector.shape_cast %114 : vector<16xf32> to vector<16x1xf32>
    %cst_38 = arith.constant 1.280000e+02 : f32
    %116 = vector.broadcast %cst_38 : f32 to vector<16x1xf32>
    %117 = arith.divf %115, %116 : vector<16x1xf32>
    %cst_39 = arith.constant 9.99999974E-6 : f32
    %118 = vector.broadcast %cst_39 : f32 to vector<16x1xf32>
    %119 = arith.addf %117, %118 : vector<16x1xf32>
    %120 = math.rsqrt %119 : vector<16x1xf32>
    %121 = vector.broadcast %120 : vector<16x1xf32> to vector<16x128xf32>
    %122 = arith.mulf %112, %121 : vector<16x128xf32>
    %123 = vector.broadcast %105 : vector<1x128xf32> to vector<16x128xf32>
    %124 = arith.mulf %122, %123 : vector<16x128xf32>
    %125 = vector.broadcast %106 : vector<1x128xf32> to vector<16x128xf32>
    %126 = arith.addf %124, %125 : vector<16x128xf32>
    %127 = vector.extract_strided_slice %6 {offsets = [0, 256], sizes = [16, 128], strides = [1, 1]} : vector<16x384xf32> to vector<16x128xf32>
    %128 = vector.extract_strided_slice %4 {offsets = [10, 0], sizes = [1, 128], strides = [1, 1]} : vector<11x128xf32> to vector<1x128xf32>
    %129 = vector.broadcast %128 : vector<1x128xf32> to vector<16x128xf32>
    %130 = arith.addf %127, %129 : vector<16x128xf32>
    %cst_40 = arith.constant 0.000000e+00 : f32
    %131 = vector.broadcast %cst_40 : f32 to vector<16x128xf32>
    %132 = arith.subf %131, %130 : vector<16x128xf32>
    %133 = math.exp %132 : vector<16x128xf32>
    %cst_41 = arith.constant 1.000000e+00 : f32
    %134 = vector.broadcast %cst_41 : f32 to vector<16x128xf32>
    %135 = arith.addf %134, %133 : vector<16x128xf32>
    %136 = tpu.reciprocal %135 {approx = true} : vector<16x128xf32> -> vector<16x128xf32>
    %137 = arith.mulf %130, %136 : vector<16x128xf32>
    %138 = arith.mulf %126, %137 : vector<16x128xf32>
    %c0_42 = arith.constant 0 : index
    %c0_43 = arith.constant 0 : index
    %139 = vector.load %arg10[%c0_42, %c0_43] : memref<11x128xf32, #tpu.memory_space<vmem>>, vector<11x128xf32>
    %c0_44 = arith.constant 0 : index
    %c0_45 = arith.constant 0 : index
    %140 = vector.load %arg7[%c0_44, %c0_45] : memref<64x384xbf16, #tpu.memory_space<vmem>>, vector<64x384xbf16>
    %cst_46 = arith.constant dense<0.000000e+00> : vector<64x384xf32>
    %141 = tpu.matmul %1, %140, %cst_46 {dimension_numbers = #tpu.dot_dimension_numbers<[1], [0], [0], [1], [0, 0, 1, 1], [], []>} : vector<64x64xbf16>, vector<64x384xbf16>, vector<64x384xf32> -> vector<64x384xf32>
    %142 = vector.extract_strided_slice %141 {offsets = [0, 0], sizes = [64, 128], strides = [1, 1]} : vector<64x384xf32> to vector<64x128xf32>
    %143 = vector.extract_strided_slice %139 {offsets = [0, 0], sizes = [1, 128], strides = [1, 1]} : vector<11x128xf32> to vector<1x128xf32>
    %144 = vector.broadcast %143 : vector<1x128xf32> to vector<64x128xf32>
    %145 = arith.addf %142, %144 : vector<64x128xf32>
    %146 = vector.extract_strided_slice %141 {offsets = [0, 128], sizes = [64, 128], strides = [1, 1]} : vector<64x384xf32> to vector<64x128xf32>
    %147 = vector.extract_strided_slice %139 {offsets = [1, 0], sizes = [1, 128], strides = [1, 1]} : vector<11x128xf32> to vector<1x128xf32>
    %148 = vector.broadcast %147 : vector<1x128xf32> to vector<64x128xf32>
    %149 = arith.addf %146, %148 : vector<64x128xf32>
    %150 = arith.truncf %138 : vector<16x128xf32> to vector<16x128xbf16>
    %c0_47 = arith.constant 0 : index
    %c0_48 = arith.constant 0 : index
    %151 = vector.load %arg8[%c0_47, %c0_48] : memref<128x256xbf16, #tpu.memory_space<vmem>>, vector<128x256xbf16>
    %cst_49 = arith.constant dense<0.000000e+00> : vector<16x256xf32>
    %152 = tpu.matmul %150, %151, %cst_49 {dimension_numbers = #tpu.dot_dimension_numbers<[1], [0], [0], [1], [0, 0, 1, 1], [], []>} : vector<16x128xbf16>, vector<128x256xbf16>, vector<16x256xf32> -> vector<16x256xf32>
    %153 = vector.extract_strided_slice %152 {offsets = [0, 0], sizes = [16, 128], strides = [1, 1]} : vector<16x256xf32> to vector<16x128xf32>
    %154 = vector.extract_strided_slice %139 {offsets = [2, 0], sizes = [1, 128], strides = [1, 1]} : vector<11x128xf32> to vector<1x128xf32>
    %155 = vector.broadcast %154 : vector<1x128xf32> to vector<16x128xf32>
    %156 = arith.addf %153, %155 : vector<16x128xf32>
    %157 = vector.extract_strided_slice %152 {offsets = [0, 128], sizes = [16, 128], strides = [1, 1]} : vector<16x256xf32> to vector<16x128xf32>
    %158 = vector.extract_strided_slice %139 {offsets = [3, 0], sizes = [1, 128], strides = [1, 1]} : vector<11x128xf32> to vector<1x128xf32>
    %159 = vector.broadcast %158 : vector<1x128xf32> to vector<16x128xf32>
    %160 = arith.addf %157, %159 : vector<16x128xf32>
    %161 = arith.truncf %149 : vector<64x128xf32> to vector<64x128xbf16>
    %162 = arith.truncf %156 : vector<16x128xf32> to vector<16x128xbf16>
    %163 = arith.truncf %160 : vector<16x128xf32> to vector<16x128xbf16>
    %164 = vector.extract_strided_slice %161 {offsets = [0, 0], sizes = [64, 32], strides = [1, 1]} : vector<64x128xbf16> to vector<64x32xbf16>
    %165 = vector.extract_strided_slice %162 {offsets = [0, 0], sizes = [16, 32], strides = [1, 1]} : vector<16x128xbf16> to vector<16x32xbf16>
    %cst_50 = arith.constant dense<0.000000e+00> : vector<64x16xf32>
    %166 = tpu.matmul %164, %165, %cst_50 {dimension_numbers = #tpu.dot_dimension_numbers<[1], [1], [0], [0], [0, 0, 1, 0], [], []>} : vector<64x32xbf16>, vector<16x32xbf16>, vector<64x16xf32> -> vector<64x16xf32>
    %167 = vector.extract_strided_slice %161 {offsets = [0, 32], sizes = [64, 32], strides = [1, 1]} : vector<64x128xbf16> to vector<64x32xbf16>
    %168 = vector.extract_strided_slice %162 {offsets = [0, 32], sizes = [16, 32], strides = [1, 1]} : vector<16x128xbf16> to vector<16x32xbf16>
    %cst_51 = arith.constant dense<0.000000e+00> : vector<64x16xf32>
    %169 = tpu.matmul %167, %168, %cst_51 {dimension_numbers = #tpu.dot_dimension_numbers<[1], [1], [0], [0], [0, 0, 1, 0], [], []>} : vector<64x32xbf16>, vector<16x32xbf16>, vector<64x16xf32> -> vector<64x16xf32>
    %170 = vector.extract_strided_slice %161 {offsets = [0, 64], sizes = [64, 32], strides = [1, 1]} : vector<64x128xbf16> to vector<64x32xbf16>
    %171 = vector.extract_strided_slice %162 {offsets = [0, 64], sizes = [16, 32], strides = [1, 1]} : vector<16x128xbf16> to vector<16x32xbf16>
    %cst_52 = arith.constant dense<0.000000e+00> : vector<64x16xf32>
    %172 = tpu.matmul %170, %171, %cst_52 {dimension_numbers = #tpu.dot_dimension_numbers<[1], [1], [0], [0], [0, 0, 1, 0], [], []>} : vector<64x32xbf16>, vector<16x32xbf16>, vector<64x16xf32> -> vector<64x16xf32>
    %173 = vector.extract_strided_slice %161 {offsets = [0, 96], sizes = [64, 32], strides = [1, 1]} : vector<64x128xbf16> to vector<64x32xbf16>
    %174 = vector.extract_strided_slice %162 {offsets = [0, 96], sizes = [16, 32], strides = [1, 1]} : vector<16x128xbf16> to vector<16x32xbf16>
    %cst_53 = arith.constant dense<0.000000e+00> : vector<64x16xf32>
    %175 = tpu.matmul %173, %174, %cst_53 {dimension_numbers = #tpu.dot_dimension_numbers<[1], [1], [0], [0], [0, 0, 1, 0], [], []>} : vector<64x32xbf16>, vector<16x32xbf16>, vector<64x16xf32> -> vector<64x16xf32>
    %176 = tpu.concatenate %166, %169, %172, %175 in 0 : vector<64x16xf32>, vector<64x16xf32>, vector<64x16xf32>, vector<64x16xf32> -> vector<256x16xf32>
    %cst_54 = arith.constant dense<0xFF800000> : vector<256xf32>
    %177 = vector.multi_reduction <maximumf>, %176, %cst_54 [1] : vector<256x16xf32> to vector<256xf32>
    %178 = vector.shape_cast %177 : vector<256xf32> to vector<256x1xf32>
    %179 = vector.broadcast %178 : vector<256x1xf32> to vector<256x16xf32>
    %180 = arith.subf %176, %179 : vector<256x16xf32>
    %181 = math.exp %180 : vector<256x16xf32>
    %cst_55 = arith.constant dense<0.000000e+00> : vector<256xf32>
    %182 = vector.multi_reduction <add>, %181, %cst_55 [1] : vector<256x16xf32> to vector<256xf32>
    %183 = vector.shape_cast %182 : vector<256xf32> to vector<256x1xf32>
    %184 = tpu.reciprocal %183 {approx = true} : vector<256x1xf32> -> vector<256x1xf32>
    %185 = vector.broadcast %184 : vector<256x1xf32> to vector<256x16xf32>
    %186 = arith.mulf %181, %185 : vector<256x16xf32>
    %187 = arith.truncf %186 : vector<256x16xf32> to vector<256x16xbf16>
    %188 = vector.extract_strided_slice %187 {offsets = [0, 0], sizes = [64, 16], strides = [1, 1]} : vector<256x16xbf16> to vector<64x16xbf16>
    %189 = vector.extract_strided_slice %163 {offsets = [0, 0], sizes = [16, 32], strides = [1, 1]} : vector<16x128xbf16> to vector<16x32xbf16>
    %cst_56 = arith.constant dense<0.000000e+00> : vector<64x32xf32>
    %190 = tpu.matmul %188, %189, %cst_56 {dimension_numbers = #tpu.dot_dimension_numbers<[1], [0], [0], [1], [0, 0, 1, 1], [], []>} : vector<64x16xbf16>, vector<16x32xbf16>, vector<64x32xf32> -> vector<64x32xf32>
    %191 = vector.extract_strided_slice %187 {offsets = [64, 0], sizes = [64, 16], strides = [1, 1]} : vector<256x16xbf16> to vector<64x16xbf16>
    %192 = vector.extract_strided_slice %163 {offsets = [0, 32], sizes = [16, 32], strides = [1, 1]} : vector<16x128xbf16> to vector<16x32xbf16>
    %cst_57 = arith.constant dense<0.000000e+00> : vector<64x32xf32>
    %193 = tpu.matmul %191, %192, %cst_57 {dimension_numbers = #tpu.dot_dimension_numbers<[1], [0], [0], [1], [0, 0, 1, 1], [], []>} : vector<64x16xbf16>, vector<16x32xbf16>, vector<64x32xf32> -> vector<64x32xf32>
    %194 = vector.extract_strided_slice %187 {offsets = [128, 0], sizes = [64, 16], strides = [1, 1]} : vector<256x16xbf16> to vector<64x16xbf16>
    %195 = vector.extract_strided_slice %163 {offsets = [0, 64], sizes = [16, 32], strides = [1, 1]} : vector<16x128xbf16> to vector<16x32xbf16>
    %cst_58 = arith.constant dense<0.000000e+00> : vector<64x32xf32>
    %196 = tpu.matmul %194, %195, %cst_58 {dimension_numbers = #tpu.dot_dimension_numbers<[1], [0], [0], [1], [0, 0, 1, 1], [], []>} : vector<64x16xbf16>, vector<16x32xbf16>, vector<64x32xf32> -> vector<64x32xf32>
    %197 = vector.extract_strided_slice %187 {offsets = [192, 0], sizes = [64, 16], strides = [1, 1]} : vector<256x16xbf16> to vector<64x16xbf16>
    %198 = vector.extract_strided_slice %163 {offsets = [0, 96], sizes = [16, 32], strides = [1, 1]} : vector<16x128xbf16> to vector<16x32xbf16>
    %cst_59 = arith.constant dense<0.000000e+00> : vector<64x32xf32>
    %199 = tpu.matmul %197, %198, %cst_59 {dimension_numbers = #tpu.dot_dimension_numbers<[1], [0], [0], [1], [0, 0, 1, 1], [], []>} : vector<64x16xbf16>, vector<16x32xbf16>, vector<64x32xf32> -> vector<64x32xf32>
    %200 = tpu.concatenate %190, %193, %196, %199 in 1 : vector<64x32xf32>, vector<64x32xf32>, vector<64x32xf32>, vector<64x32xf32> -> vector<64x128xf32>
    %201 = arith.truncf %200 : vector<64x128xf32> to vector<64x128xbf16>
    %c0_60 = arith.constant 0 : index
    %c0_61 = arith.constant 0 : index
    %c0_62 = arith.constant 0 : index
    %202 = vector.load %arg9[%c0_60, %c0_61, %c0_62] : memref<2x128x128xbf16, #tpu.memory_space<vmem>>, vector<1x128x128xbf16>
    %203 = vector.shape_cast %202 : vector<1x128x128xbf16> to vector<128x128xbf16>
    %cst_63 = arith.constant dense<0.000000e+00> : vector<64x128xf32>
    %204 = tpu.matmul %201, %203, %cst_63 {dimension_numbers = #tpu.dot_dimension_numbers<[1], [0], [0], [1], [0, 0, 1, 1], [], []>} : vector<64x128xbf16>, vector<128x128xbf16>, vector<64x128xf32> -> vector<64x128xf32>
    %205 = vector.extract_strided_slice %139 {offsets = [4, 0], sizes = [1, 128], strides = [1, 1]} : vector<11x128xf32> to vector<1x128xf32>
    %206 = vector.broadcast %205 : vector<1x128xf32> to vector<64x128xf32>
    %207 = arith.addf %204, %206 : vector<64x128xf32>
    %208 = arith.addf %145, %207 : vector<64x128xf32>
    %209 = vector.extract_strided_slice %139 {offsets = [6, 0], sizes = [1, 128], strides = [1, 1]} : vector<11x128xf32> to vector<1x128xf32>
    %210 = vector.extract_strided_slice %139 {offsets = [7, 0], sizes = [1, 128], strides = [1, 1]} : vector<11x128xf32> to vector<1x128xf32>
    %cst_64 = arith.constant dense<0.000000e+00> : vector<64xf32>
    %211 = vector.multi_reduction <add>, %208, %cst_64 [1] : vector<64x128xf32> to vector<64xf32>
    %212 = vector.shape_cast %211 : vector<64xf32> to vector<64x1xf32>
    %cst_65 = arith.constant 1.280000e+02 : f32
    %213 = vector.broadcast %cst_65 : f32 to vector<64x1xf32>
    %214 = arith.divf %212, %213 : vector<64x1xf32>
    %215 = vector.broadcast %214 : vector<64x1xf32> to vector<64x128xf32>
    %216 = arith.subf %208, %215 : vector<64x128xf32>
    %217 = arith.mulf %216, %216 : vector<64x128xf32>
    %cst_66 = arith.constant dense<0.000000e+00> : vector<64xf32>
    %218 = vector.multi_reduction <add>, %217, %cst_66 [1] : vector<64x128xf32> to vector<64xf32>
    %219 = vector.shape_cast %218 : vector<64xf32> to vector<64x1xf32>
    %cst_67 = arith.constant 1.280000e+02 : f32
    %220 = vector.broadcast %cst_67 : f32 to vector<64x1xf32>
    %221 = arith.divf %219, %220 : vector<64x1xf32>
    %cst_68 = arith.constant 9.99999974E-6 : f32
    %222 = vector.broadcast %cst_68 : f32 to vector<64x1xf32>
    %223 = arith.addf %221, %222 : vector<64x1xf32>
    %224 = math.rsqrt %223 : vector<64x1xf32>
    %225 = vector.broadcast %224 : vector<64x1xf32> to vector<64x128xf32>
    %226 = arith.mulf %216, %225 : vector<64x128xf32>
    %227 = vector.broadcast %209 : vector<1x128xf32> to vector<64x128xf32>
    %228 = arith.mulf %226, %227 : vector<64x128xf32>
    %229 = vector.broadcast %210 : vector<1x128xf32> to vector<64x128xf32>
    %230 = arith.addf %228, %229 : vector<64x128xf32>
    %231 = arith.truncf %230 : vector<64x128xf32> to vector<64x128xbf16>
    %c1_69 = arith.constant 1 : index
    %c0_70 = arith.constant 0 : index
    %c0_71 = arith.constant 0 : index
    %232 = vector.load %arg9[%c1_69, %c0_70, %c0_71] : memref<2x128x128xbf16, #tpu.memory_space<vmem>>, vector<1x128x128xbf16>
    %233 = vector.shape_cast %232 : vector<1x128x128xbf16> to vector<128x128xbf16>
    %cst_72 = arith.constant dense<0.000000e+00> : vector<64x128xf32>
    %234 = tpu.matmul %231, %233, %cst_72 {dimension_numbers = #tpu.dot_dimension_numbers<[1], [0], [0], [1], [0, 0, 1, 1], [], []>} : vector<64x128xbf16>, vector<128x128xbf16>, vector<64x128xf32> -> vector<64x128xf32>
    %235 = vector.extract_strided_slice %139 {offsets = [5, 0], sizes = [1, 128], strides = [1, 1]} : vector<11x128xf32> to vector<1x128xf32>
    %236 = vector.broadcast %235 : vector<1x128xf32> to vector<64x128xf32>
    %237 = arith.addf %234, %236 : vector<64x128xf32>
    %cst_73 = arith.constant 0.000000e+00 : f32
    %238 = vector.broadcast %cst_73 : f32 to vector<64x128xf32>
    %239 = arith.maximumf %237, %238 : vector<64x128xf32>
    %240 = arith.addf %230, %239 : vector<64x128xf32>
    %241 = vector.extract_strided_slice %139 {offsets = [8, 0], sizes = [1, 128], strides = [1, 1]} : vector<11x128xf32> to vector<1x128xf32>
    %242 = vector.extract_strided_slice %139 {offsets = [9, 0], sizes = [1, 128], strides = [1, 1]} : vector<11x128xf32> to vector<1x128xf32>
    %cst_74 = arith.constant dense<0.000000e+00> : vector<64xf32>
    %243 = vector.multi_reduction <add>, %240, %cst_74 [1] : vector<64x128xf32> to vector<64xf32>
    %244 = vector.shape_cast %243 : vector<64xf32> to vector<64x1xf32>
    %cst_75 = arith.constant 1.280000e+02 : f32
    %245 = vector.broadcast %cst_75 : f32 to vector<64x1xf32>
    %246 = arith.divf %244, %245 : vector<64x1xf32>
    %247 = vector.broadcast %246 : vector<64x1xf32> to vector<64x128xf32>
    %248 = arith.subf %240, %247 : vector<64x128xf32>
    %249 = arith.mulf %248, %248 : vector<64x128xf32>
    %cst_76 = arith.constant dense<0.000000e+00> : vector<64xf32>
    %250 = vector.multi_reduction <add>, %249, %cst_76 [1] : vector<64x128xf32> to vector<64xf32>
    %251 = vector.shape_cast %250 : vector<64xf32> to vector<64x1xf32>
    %cst_77 = arith.constant 1.280000e+02 : f32
    %252 = vector.broadcast %cst_77 : f32 to vector<64x1xf32>
    %253 = arith.divf %251, %252 : vector<64x1xf32>
    %cst_78 = arith.constant 9.99999974E-6 : f32
    %254 = vector.broadcast %cst_78 : f32 to vector<64x1xf32>
    %255 = arith.addf %253, %254 : vector<64x1xf32>
    %256 = math.rsqrt %255 : vector<64x1xf32>
    %257 = vector.broadcast %256 : vector<64x1xf32> to vector<64x128xf32>
    %258 = arith.mulf %248, %257 : vector<64x128xf32>
    %259 = vector.broadcast %241 : vector<1x128xf32> to vector<64x128xf32>
    %260 = arith.mulf %258, %259 : vector<64x128xf32>
    %261 = vector.broadcast %242 : vector<1x128xf32> to vector<64x128xf32>
    %262 = arith.addf %260, %261 : vector<64x128xf32>
    %263 = vector.extract_strided_slice %141 {offsets = [0, 256], sizes = [64, 128], strides = [1, 1]} : vector<64x384xf32> to vector<64x128xf32>
    %264 = vector.extract_strided_slice %139 {offsets = [10, 0], sizes = [1, 128], strides = [1, 1]} : vector<11x128xf32> to vector<1x128xf32>
    %265 = vector.broadcast %264 : vector<1x128xf32> to vector<64x128xf32>
    %266 = arith.addf %263, %265 : vector<64x128xf32>
    %cst_79 = arith.constant 0.000000e+00 : f32
    %267 = vector.broadcast %cst_79 : f32 to vector<64x128xf32>
    %268 = arith.subf %267, %266 : vector<64x128xf32>
    %269 = math.exp %268 : vector<64x128xf32>
    %cst_80 = arith.constant 1.000000e+00 : f32
    %270 = vector.broadcast %cst_80 : f32 to vector<64x128xf32>
    %271 = arith.addf %270, %269 : vector<64x128xf32>
    %272 = tpu.reciprocal %271 {approx = true} : vector<64x128xf32> -> vector<64x128xf32>
    %273 = arith.mulf %266, %272 : vector<64x128xf32>
    %274 = arith.mulf %262, %273 : vector<64x128xf32>
    %c0_81 = arith.constant 0 : index
    %c0_82 = arith.constant 0 : index
    %c0_83 = arith.constant 0 : index
    %275 = vector.load %arg11[%c0_81, %c0_82, %c0_83] : memref<1x16x128xbf16, #tpu.memory_space<vmem>>, vector<1x16x128xbf16>
    %276 = vector.shape_cast %275 : vector<1x16x128xbf16> to vector<16x128xbf16>
    %c0_84 = arith.constant 0 : index
    %c0_85 = arith.constant 0 : index
    %277 = vector.load %arg15[%c0_84, %c0_85] : memref<11x128xf32, #tpu.memory_space<vmem>>, vector<11x128xf32>
    %c0_86 = arith.constant 0 : index
    %c0_87 = arith.constant 0 : index
    %278 = vector.load %arg12[%c0_86, %c0_87] : memref<128x384xbf16, #tpu.memory_space<vmem>>, vector<128x384xbf16>
    %cst_88 = arith.constant dense<0.000000e+00> : vector<16x384xf32>
    %279 = tpu.matmul %276, %278, %cst_88 {dimension_numbers = #tpu.dot_dimension_numbers<[1], [0], [0], [1], [0, 0, 1, 1], [], []>} : vector<16x128xbf16>, vector<128x384xbf16>, vector<16x384xf32> -> vector<16x384xf32>
    %280 = vector.extract_strided_slice %279 {offsets = [0, 0], sizes = [16, 128], strides = [1, 1]} : vector<16x384xf32> to vector<16x128xf32>
    %281 = vector.extract_strided_slice %277 {offsets = [0, 0], sizes = [1, 128], strides = [1, 1]} : vector<11x128xf32> to vector<1x128xf32>
    %282 = vector.broadcast %281 : vector<1x128xf32> to vector<16x128xf32>
    %283 = arith.addf %280, %282 : vector<16x128xf32>
    %284 = vector.extract_strided_slice %279 {offsets = [0, 128], sizes = [16, 128], strides = [1, 1]} : vector<16x384xf32> to vector<16x128xf32>
    %285 = vector.extract_strided_slice %277 {offsets = [1, 0], sizes = [1, 128], strides = [1, 1]} : vector<11x128xf32> to vector<1x128xf32>
    %286 = vector.broadcast %285 : vector<1x128xf32> to vector<16x128xf32>
    %287 = arith.addf %284, %286 : vector<16x128xf32>
    %288 = arith.truncf %274 : vector<64x128xf32> to vector<64x128xbf16>
    %c0_89 = arith.constant 0 : index
    %c0_90 = arith.constant 0 : index
    %289 = vector.load %arg13[%c0_89, %c0_90] : memref<128x256xbf16, #tpu.memory_space<vmem>>, vector<128x256xbf16>
    %cst_91 = arith.constant dense<0.000000e+00> : vector<64x256xf32>
    %290 = tpu.matmul %288, %289, %cst_91 {dimension_numbers = #tpu.dot_dimension_numbers<[1], [0], [0], [1], [0, 0, 1, 1], [], []>} : vector<64x128xbf16>, vector<128x256xbf16>, vector<64x256xf32> -> vector<64x256xf32>
    %291 = vector.extract_strided_slice %290 {offsets = [0, 0], sizes = [64, 128], strides = [1, 1]} : vector<64x256xf32> to vector<64x128xf32>
    %292 = vector.extract_strided_slice %277 {offsets = [2, 0], sizes = [1, 128], strides = [1, 1]} : vector<11x128xf32> to vector<1x128xf32>
    %293 = vector.broadcast %292 : vector<1x128xf32> to vector<64x128xf32>
    %294 = arith.addf %291, %293 : vector<64x128xf32>
    %295 = vector.extract_strided_slice %290 {offsets = [0, 128], sizes = [64, 128], strides = [1, 1]} : vector<64x256xf32> to vector<64x128xf32>
    %296 = vector.extract_strided_slice %277 {offsets = [3, 0], sizes = [1, 128], strides = [1, 1]} : vector<11x128xf32> to vector<1x128xf32>
    %297 = vector.broadcast %296 : vector<1x128xf32> to vector<64x128xf32>
    %298 = arith.addf %295, %297 : vector<64x128xf32>
    %299 = arith.truncf %287 : vector<16x128xf32> to vector<16x128xbf16>
    %300 = arith.truncf %294 : vector<64x128xf32> to vector<64x128xbf16>
    %301 = arith.truncf %298 : vector<64x128xf32> to vector<64x128xbf16>
    %302 = vector.extract_strided_slice %299 {offsets = [0, 0], sizes = [16, 32], strides = [1, 1]} : vector<16x128xbf16> to vector<16x32xbf16>
    %303 = vector.extract_strided_slice %300 {offsets = [0, 0], sizes = [64, 32], strides = [1, 1]} : vector<64x128xbf16> to vector<64x32xbf16>
    %cst_92 = arith.constant dense<0.000000e+00> : vector<16x64xf32>
    %304 = tpu.matmul %302, %303, %cst_92 {dimension_numbers = #tpu.dot_dimension_numbers<[1], [1], [0], [0], [0, 0, 1, 0], [], []>} : vector<16x32xbf16>, vector<64x32xbf16>, vector<16x64xf32> -> vector<16x64xf32>
    %305 = vector.extract_strided_slice %299 {offsets = [0, 32], sizes = [16, 32], strides = [1, 1]} : vector<16x128xbf16> to vector<16x32xbf16>
    %306 = vector.extract_strided_slice %300 {offsets = [0, 32], sizes = [64, 32], strides = [1, 1]} : vector<64x128xbf16> to vector<64x32xbf16>
    %cst_93 = arith.constant dense<0.000000e+00> : vector<16x64xf32>
    %307 = tpu.matmul %305, %306, %cst_93 {dimension_numbers = #tpu.dot_dimension_numbers<[1], [1], [0], [0], [0, 0, 1, 0], [], []>} : vector<16x32xbf16>, vector<64x32xbf16>, vector<16x64xf32> -> vector<16x64xf32>
    %308 = vector.extract_strided_slice %299 {offsets = [0, 64], sizes = [16, 32], strides = [1, 1]} : vector<16x128xbf16> to vector<16x32xbf16>
    %309 = vector.extract_strided_slice %300 {offsets = [0, 64], sizes = [64, 32], strides = [1, 1]} : vector<64x128xbf16> to vector<64x32xbf16>
    %cst_94 = arith.constant dense<0.000000e+00> : vector<16x64xf32>
    %310 = tpu.matmul %308, %309, %cst_94 {dimension_numbers = #tpu.dot_dimension_numbers<[1], [1], [0], [0], [0, 0, 1, 0], [], []>} : vector<16x32xbf16>, vector<64x32xbf16>, vector<16x64xf32> -> vector<16x64xf32>
    %311 = vector.extract_strided_slice %299 {offsets = [0, 96], sizes = [16, 32], strides = [1, 1]} : vector<16x128xbf16> to vector<16x32xbf16>
    %312 = vector.extract_strided_slice %300 {offsets = [0, 96], sizes = [64, 32], strides = [1, 1]} : vector<64x128xbf16> to vector<64x32xbf16>
    %cst_95 = arith.constant dense<0.000000e+00> : vector<16x64xf32>
    %313 = tpu.matmul %311, %312, %cst_95 {dimension_numbers = #tpu.dot_dimension_numbers<[1], [1], [0], [0], [0, 0, 1, 0], [], []>} : vector<16x32xbf16>, vector<64x32xbf16>, vector<16x64xf32> -> vector<16x64xf32>
    %314 = tpu.concatenate %304, %307, %310, %313 in 0 : vector<16x64xf32>, vector<16x64xf32>, vector<16x64xf32>, vector<16x64xf32> -> vector<64x64xf32>
    %cst_96 = arith.constant dense<0xFF800000> : vector<64xf32>
    %315 = vector.multi_reduction <maximumf>, %314, %cst_96 [1] : vector<64x64xf32> to vector<64xf32>
    %316 = vector.shape_cast %315 : vector<64xf32> to vector<64x1xf32>
    %317 = vector.broadcast %316 : vector<64x1xf32> to vector<64x64xf32>
    %318 = arith.subf %314, %317 : vector<64x64xf32>
    %319 = math.exp %318 : vector<64x64xf32>
    %cst_97 = arith.constant dense<0.000000e+00> : vector<64xf32>
    %320 = vector.multi_reduction <add>, %319, %cst_97 [1] : vector<64x64xf32> to vector<64xf32>
    %321 = vector.shape_cast %320 : vector<64xf32> to vector<64x1xf32>
    %322 = tpu.reciprocal %321 {approx = true} : vector<64x1xf32> -> vector<64x1xf32>
    %323 = vector.broadcast %322 : vector<64x1xf32> to vector<64x64xf32>
    %324 = arith.mulf %319, %323 : vector<64x64xf32>
    %325 = arith.truncf %324 : vector<64x64xf32> to vector<64x64xbf16>
    %326 = vector.extract_strided_slice %325 {offsets = [0, 0], sizes = [16, 64], strides = [1, 1]} : vector<64x64xbf16> to vector<16x64xbf16>
    %327 = vector.extract_strided_slice %301 {offsets = [0, 0], sizes = [64, 32], strides = [1, 1]} : vector<64x128xbf16> to vector<64x32xbf16>
    %cst_98 = arith.constant dense<0.000000e+00> : vector<16x32xf32>
    %328 = tpu.matmul %326, %327, %cst_98 {dimension_numbers = #tpu.dot_dimension_numbers<[1], [0], [0], [1], [0, 0, 1, 1], [], []>} : vector<16x64xbf16>, vector<64x32xbf16>, vector<16x32xf32> -> vector<16x32xf32>
    %329 = vector.extract_strided_slice %325 {offsets = [16, 0], sizes = [16, 64], strides = [1, 1]} : vector<64x64xbf16> to vector<16x64xbf16>
    %330 = vector.extract_strided_slice %301 {offsets = [0, 32], sizes = [64, 32], strides = [1, 1]} : vector<64x128xbf16> to vector<64x32xbf16>
    %cst_99 = arith.constant dense<0.000000e+00> : vector<16x32xf32>
    %331 = tpu.matmul %329, %330, %cst_99 {dimension_numbers = #tpu.dot_dimension_numbers<[1], [0], [0], [1], [0, 0, 1, 1], [], []>} : vector<16x64xbf16>, vector<64x32xbf16>, vector<16x32xf32> -> vector<16x32xf32>
    %332 = vector.extract_strided_slice %325 {offsets = [32, 0], sizes = [16, 64], strides = [1, 1]} : vector<64x64xbf16> to vector<16x64xbf16>
    %333 = vector.extract_strided_slice %301 {offsets = [0, 64], sizes = [64, 32], strides = [1, 1]} : vector<64x128xbf16> to vector<64x32xbf16>
    %cst_100 = arith.constant dense<0.000000e+00> : vector<16x32xf32>
    %334 = tpu.matmul %332, %333, %cst_100 {dimension_numbers = #tpu.dot_dimension_numbers<[1], [0], [0], [1], [0, 0, 1, 1], [], []>} : vector<16x64xbf16>, vector<64x32xbf16>, vector<16x32xf32> -> vector<16x32xf32>
    %335 = vector.extract_strided_slice %325 {offsets = [48, 0], sizes = [16, 64], strides = [1, 1]} : vector<64x64xbf16> to vector<16x64xbf16>
    %336 = vector.extract_strided_slice %301 {offsets = [0, 96], sizes = [64, 32], strides = [1, 1]} : vector<64x128xbf16> to vector<64x32xbf16>
    %cst_101 = arith.constant dense<0.000000e+00> : vector<16x32xf32>
    %337 = tpu.matmul %335, %336, %cst_101 {dimension_numbers = #tpu.dot_dimension_numbers<[1], [0], [0], [1], [0, 0, 1, 1], [], []>} : vector<16x64xbf16>, vector<64x32xbf16>, vector<16x32xf32> -> vector<16x32xf32>
    %338 = tpu.concatenate %328, %331, %334, %337 in 1 : vector<16x32xf32>, vector<16x32xf32>, vector<16x32xf32>, vector<16x32xf32> -> vector<16x128xf32>
    %339 = arith.truncf %338 : vector<16x128xf32> to vector<16x128xbf16>
    %c0_102 = arith.constant 0 : index
    %c0_103 = arith.constant 0 : index
    %c0_104 = arith.constant 0 : index
    %340 = vector.load %arg14[%c0_102, %c0_103, %c0_104] : memref<2x128x128xbf16, #tpu.memory_space<vmem>>, vector<1x128x128xbf16>
    %341 = vector.shape_cast %340 : vector<1x128x128xbf16> to vector<128x128xbf16>
    %cst_105 = arith.constant dense<0.000000e+00> : vector<16x128xf32>
    %342 = tpu.matmul %339, %341, %cst_105 {dimension_numbers = #tpu.dot_dimension_numbers<[1], [0], [0], [1], [0, 0, 1, 1], [], []>} : vector<16x128xbf16>, vector<128x128xbf16>, vector<16x128xf32> -> vector<16x128xf32>
    %343 = vector.extract_strided_slice %277 {offsets = [4, 0], sizes = [1, 128], strides = [1, 1]} : vector<11x128xf32> to vector<1x128xf32>
    %344 = vector.broadcast %343 : vector<1x128xf32> to vector<16x128xf32>
    %345 = arith.addf %342, %344 : vector<16x128xf32>
    %346 = arith.addf %283, %345 : vector<16x128xf32>
    %347 = vector.extract_strided_slice %277 {offsets = [6, 0], sizes = [1, 128], strides = [1, 1]} : vector<11x128xf32> to vector<1x128xf32>
    %348 = vector.extract_strided_slice %277 {offsets = [7, 0], sizes = [1, 128], strides = [1, 1]} : vector<11x128xf32> to vector<1x128xf32>
    %cst_106 = arith.constant dense<0.000000e+00> : vector<16xf32>
    %349 = vector.multi_reduction <add>, %346, %cst_106 [1] : vector<16x128xf32> to vector<16xf32>
    %350 = vector.shape_cast %349 : vector<16xf32> to vector<16x1xf32>
    %cst_107 = arith.constant 1.280000e+02 : f32
    %351 = vector.broadcast %cst_107 : f32 to vector<16x1xf32>
    %352 = arith.divf %350, %351 : vector<16x1xf32>
    %353 = vector.broadcast %352 : vector<16x1xf32> to vector<16x128xf32>
    %354 = arith.subf %346, %353 : vector<16x128xf32>
    %355 = arith.mulf %354, %354 : vector<16x128xf32>
    %cst_108 = arith.constant dense<0.000000e+00> : vector<16xf32>
    %356 = vector.multi_reduction <add>, %355, %cst_108 [1] : vector<16x128xf32> to vector<16xf32>
    %357 = vector.shape_cast %356 : vector<16xf32> to vector<16x1xf32>
    %cst_109 = arith.constant 1.280000e+02 : f32
    %358 = vector.broadcast %cst_109 : f32 to vector<16x1xf32>
    %359 = arith.divf %357, %358 : vector<16x1xf32>
    %cst_110 = arith.constant 9.99999974E-6 : f32
    %360 = vector.broadcast %cst_110 : f32 to vector<16x1xf32>
    %361 = arith.addf %359, %360 : vector<16x1xf32>
    %362 = math.rsqrt %361 : vector<16x1xf32>
    %363 = vector.broadcast %362 : vector<16x1xf32> to vector<16x128xf32>
    %364 = arith.mulf %354, %363 : vector<16x128xf32>
    %365 = vector.broadcast %347 : vector<1x128xf32> to vector<16x128xf32>
    %366 = arith.mulf %364, %365 : vector<16x128xf32>
    %367 = vector.broadcast %348 : vector<1x128xf32> to vector<16x128xf32>
    %368 = arith.addf %366, %367 : vector<16x128xf32>
    %369 = arith.truncf %368 : vector<16x128xf32> to vector<16x128xbf16>
    %c1_111 = arith.constant 1 : index
    %c0_112 = arith.constant 0 : index
    %c0_113 = arith.constant 0 : index
    %370 = vector.load %arg14[%c1_111, %c0_112, %c0_113] : memref<2x128x128xbf16, #tpu.memory_space<vmem>>, vector<1x128x128xbf16>
    %371 = vector.shape_cast %370 : vector<1x128x128xbf16> to vector<128x128xbf16>
    %cst_114 = arith.constant dense<0.000000e+00> : vector<16x128xf32>
    %372 = tpu.matmul %369, %371, %cst_114 {dimension_numbers = #tpu.dot_dimension_numbers<[1], [0], [0], [1], [0, 0, 1, 1], [], []>} : vector<16x128xbf16>, vector<128x128xbf16>, vector<16x128xf32> -> vector<16x128xf32>
    %373 = vector.extract_strided_slice %277 {offsets = [5, 0], sizes = [1, 128], strides = [1, 1]} : vector<11x128xf32> to vector<1x128xf32>
    %374 = vector.broadcast %373 : vector<1x128xf32> to vector<16x128xf32>
    %375 = arith.addf %372, %374 : vector<16x128xf32>
    %cst_115 = arith.constant 0.000000e+00 : f32
    %376 = vector.broadcast %cst_115 : f32 to vector<16x128xf32>
    %377 = arith.maximumf %375, %376 : vector<16x128xf32>
    %378 = arith.addf %368, %377 : vector<16x128xf32>
    %379 = vector.extract_strided_slice %277 {offsets = [8, 0], sizes = [1, 128], strides = [1, 1]} : vector<11x128xf32> to vector<1x128xf32>
    %380 = vector.extract_strided_slice %277 {offsets = [9, 0], sizes = [1, 128], strides = [1, 1]} : vector<11x128xf32> to vector<1x128xf32>
    %cst_116 = arith.constant dense<0.000000e+00> : vector<16xf32>
    %381 = vector.multi_reduction <add>, %378, %cst_116 [1] : vector<16x128xf32> to vector<16xf32>
    %382 = vector.shape_cast %381 : vector<16xf32> to vector<16x1xf32>
    %cst_117 = arith.constant 1.280000e+02 : f32
    %383 = vector.broadcast %cst_117 : f32 to vector<16x1xf32>
    %384 = arith.divf %382, %383 : vector<16x1xf32>
    %385 = vector.broadcast %384 : vector<16x1xf32> to vector<16x128xf32>
    %386 = arith.subf %378, %385 : vector<16x128xf32>
    %387 = arith.mulf %386, %386 : vector<16x128xf32>
    %cst_118 = arith.constant dense<0.000000e+00> : vector<16xf32>
    %388 = vector.multi_reduction <add>, %387, %cst_118 [1] : vector<16x128xf32> to vector<16xf32>
    %389 = vector.shape_cast %388 : vector<16xf32> to vector<16x1xf32>
    %cst_119 = arith.constant 1.280000e+02 : f32
    %390 = vector.broadcast %cst_119 : f32 to vector<16x1xf32>
    %391 = arith.divf %389, %390 : vector<16x1xf32>
    %cst_120 = arith.constant 9.99999974E-6 : f32
    %392 = vector.broadcast %cst_120 : f32 to vector<16x1xf32>
    %393 = arith.addf %391, %392 : vector<16x1xf32>
    %394 = math.rsqrt %393 : vector<16x1xf32>
    %395 = vector.broadcast %394 : vector<16x1xf32> to vector<16x128xf32>
    %396 = arith.mulf %386, %395 : vector<16x128xf32>
    %397 = vector.broadcast %379 : vector<1x128xf32> to vector<16x128xf32>
    %398 = arith.mulf %396, %397 : vector<16x128xf32>
    %399 = vector.broadcast %380 : vector<1x128xf32> to vector<16x128xf32>
    %400 = arith.addf %398, %399 : vector<16x128xf32>
    %401 = vector.extract_strided_slice %279 {offsets = [0, 256], sizes = [16, 128], strides = [1, 1]} : vector<16x384xf32> to vector<16x128xf32>
    %402 = vector.extract_strided_slice %277 {offsets = [10, 0], sizes = [1, 128], strides = [1, 1]} : vector<11x128xf32> to vector<1x128xf32>
    %403 = vector.broadcast %402 : vector<1x128xf32> to vector<16x128xf32>
    %404 = arith.addf %401, %403 : vector<16x128xf32>
    %cst_121 = arith.constant 0.000000e+00 : f32
    %405 = vector.broadcast %cst_121 : f32 to vector<16x128xf32>
    %406 = arith.subf %405, %404 : vector<16x128xf32>
    %407 = math.exp %406 : vector<16x128xf32>
    %cst_122 = arith.constant 1.000000e+00 : f32
    %408 = vector.broadcast %cst_122 : f32 to vector<16x128xf32>
    %409 = arith.addf %408, %407 : vector<16x128xf32>
    %410 = tpu.reciprocal %409 {approx = true} : vector<16x128xf32> -> vector<16x128xf32>
    %411 = arith.mulf %404, %410 : vector<16x128xf32>
    %412 = arith.mulf %400, %411 : vector<16x128xf32>
    %c0_123 = arith.constant 0 : index
    %c0_124 = arith.constant 0 : index
    %413 = vector.load %arg19[%c0_123, %c0_124] : memref<11x128xf32, #tpu.memory_space<vmem>>, vector<11x128xf32>
    %414 = arith.truncf %274 : vector<64x128xf32> to vector<64x128xbf16>
    %c0_125 = arith.constant 0 : index
    %c0_126 = arith.constant 0 : index
    %415 = vector.load %arg16[%c0_125, %c0_126] : memref<128x384xbf16, #tpu.memory_space<vmem>>, vector<128x384xbf16>
    %cst_127 = arith.constant dense<0.000000e+00> : vector<64x384xf32>
    %416 = tpu.matmul %414, %415, %cst_127 {dimension_numbers = #tpu.dot_dimension_numbers<[1], [0], [0], [1], [0, 0, 1, 1], [], []>} : vector<64x128xbf16>, vector<128x384xbf16>, vector<64x384xf32> -> vector<64x384xf32>
    %417 = vector.extract_strided_slice %416 {offsets = [0, 0], sizes = [64, 128], strides = [1, 1]} : vector<64x384xf32> to vector<64x128xf32>
    %418 = vector.extract_strided_slice %413 {offsets = [0, 0], sizes = [1, 128], strides = [1, 1]} : vector<11x128xf32> to vector<1x128xf32>
    %419 = vector.broadcast %418 : vector<1x128xf32> to vector<64x128xf32>
    %420 = arith.addf %417, %419 : vector<64x128xf32>
    %421 = vector.extract_strided_slice %416 {offsets = [0, 128], sizes = [64, 128], strides = [1, 1]} : vector<64x384xf32> to vector<64x128xf32>
    %422 = vector.extract_strided_slice %413 {offsets = [1, 0], sizes = [1, 128], strides = [1, 1]} : vector<11x128xf32> to vector<1x128xf32>
    %423 = vector.broadcast %422 : vector<1x128xf32> to vector<64x128xf32>
    %424 = arith.addf %421, %423 : vector<64x128xf32>
    %425 = arith.truncf %412 : vector<16x128xf32> to vector<16x128xbf16>
    %c0_128 = arith.constant 0 : index
    %c0_129 = arith.constant 0 : index
    %426 = vector.load %arg17[%c0_128, %c0_129] : memref<128x256xbf16, #tpu.memory_space<vmem>>, vector<128x256xbf16>
    %cst_130 = arith.constant dense<0.000000e+00> : vector<16x256xf32>
    %427 = tpu.matmul %425, %426, %cst_130 {dimension_numbers = #tpu.dot_dimension_numbers<[1], [0], [0], [1], [0, 0, 1, 1], [], []>} : vector<16x128xbf16>, vector<128x256xbf16>, vector<16x256xf32> -> vector<16x256xf32>
    %428 = vector.extract_strided_slice %427 {offsets = [0, 0], sizes = [16, 128], strides = [1, 1]} : vector<16x256xf32> to vector<16x128xf32>
    %429 = vector.extract_strided_slice %413 {offsets = [2, 0], sizes = [1, 128], strides = [1, 1]} : vector<11x128xf32> to vector<1x128xf32>
    %430 = vector.broadcast %429 : vector<1x128xf32> to vector<16x128xf32>
    %431 = arith.addf %428, %430 : vector<16x128xf32>
    %432 = vector.extract_strided_slice %427 {offsets = [0, 128], sizes = [16, 128], strides = [1, 1]} : vector<16x256xf32> to vector<16x128xf32>
    %433 = vector.extract_strided_slice %413 {offsets = [3, 0], sizes = [1, 128], strides = [1, 1]} : vector<11x128xf32> to vector<1x128xf32>
    %434 = vector.broadcast %433 : vector<1x128xf32> to vector<16x128xf32>
    %435 = arith.addf %432, %434 : vector<16x128xf32>
    %436 = arith.truncf %424 : vector<64x128xf32> to vector<64x128xbf16>
    %437 = arith.truncf %431 : vector<16x128xf32> to vector<16x128xbf16>
    %438 = arith.truncf %435 : vector<16x128xf32> to vector<16x128xbf16>
    %439 = vector.extract_strided_slice %436 {offsets = [0, 0], sizes = [64, 32], strides = [1, 1]} : vector<64x128xbf16> to vector<64x32xbf16>
    %440 = vector.extract_strided_slice %437 {offsets = [0, 0], sizes = [16, 32], strides = [1, 1]} : vector<16x128xbf16> to vector<16x32xbf16>
    %cst_131 = arith.constant dense<0.000000e+00> : vector<64x16xf32>
    %441 = tpu.matmul %439, %440, %cst_131 {dimension_numbers = #tpu.dot_dimension_numbers<[1], [1], [0], [0], [0, 0, 1, 0], [], []>} : vector<64x32xbf16>, vector<16x32xbf16>, vector<64x16xf32> -> vector<64x16xf32>
    %442 = vector.extract_strided_slice %436 {offsets = [0, 32], sizes = [64, 32], strides = [1, 1]} : vector<64x128xbf16> to vector<64x32xbf16>
    %443 = vector.extract_strided_slice %437 {offsets = [0, 32], sizes = [16, 32], strides = [1, 1]} : vector<16x128xbf16> to vector<16x32xbf16>
    %cst_132 = arith.constant dense<0.000000e+00> : vector<64x16xf32>
    %444 = tpu.matmul %442, %443, %cst_132 {dimension_numbers = #tpu.dot_dimension_numbers<[1], [1], [0], [0], [0, 0, 1, 0], [], []>} : vector<64x32xbf16>, vector<16x32xbf16>, vector<64x16xf32> -> vector<64x16xf32>
    %445 = vector.extract_strided_slice %436 {offsets = [0, 64], sizes = [64, 32], strides = [1, 1]} : vector<64x128xbf16> to vector<64x32xbf16>
    %446 = vector.extract_strided_slice %437 {offsets = [0, 64], sizes = [16, 32], strides = [1, 1]} : vector<16x128xbf16> to vector<16x32xbf16>
    %cst_133 = arith.constant dense<0.000000e+00> : vector<64x16xf32>
    %447 = tpu.matmul %445, %446, %cst_133 {dimension_numbers = #tpu.dot_dimension_numbers<[1], [1], [0], [0], [0, 0, 1, 0], [], []>} : vector<64x32xbf16>, vector<16x32xbf16>, vector<64x16xf32> -> vector<64x16xf32>
    %448 = vector.extract_strided_slice %436 {offsets = [0, 96], sizes = [64, 32], strides = [1, 1]} : vector<64x128xbf16> to vector<64x32xbf16>
    %449 = vector.extract_strided_slice %437 {offsets = [0, 96], sizes = [16, 32], strides = [1, 1]} : vector<16x128xbf16> to vector<16x32xbf16>
    %cst_134 = arith.constant dense<0.000000e+00> : vector<64x16xf32>
    %450 = tpu.matmul %448, %449, %cst_134 {dimension_numbers = #tpu.dot_dimension_numbers<[1], [1], [0], [0], [0, 0, 1, 0], [], []>} : vector<64x32xbf16>, vector<16x32xbf16>, vector<64x16xf32> -> vector<64x16xf32>
    %451 = tpu.concatenate %441, %444, %447, %450 in 0 : vector<64x16xf32>, vector<64x16xf32>, vector<64x16xf32>, vector<64x16xf32> -> vector<256x16xf32>
    %cst_135 = arith.constant dense<0xFF800000> : vector<256xf32>
    %452 = vector.multi_reduction <maximumf>, %451, %cst_135 [1] : vector<256x16xf32> to vector<256xf32>
    %453 = vector.shape_cast %452 : vector<256xf32> to vector<256x1xf32>
    %454 = vector.broadcast %453 : vector<256x1xf32> to vector<256x16xf32>
    %455 = arith.subf %451, %454 : vector<256x16xf32>
    %456 = math.exp %455 : vector<256x16xf32>
    %cst_136 = arith.constant dense<0.000000e+00> : vector<256xf32>
    %457 = vector.multi_reduction <add>, %456, %cst_136 [1] : vector<256x16xf32> to vector<256xf32>
    %458 = vector.shape_cast %457 : vector<256xf32> to vector<256x1xf32>
    %459 = tpu.reciprocal %458 {approx = true} : vector<256x1xf32> -> vector<256x1xf32>
    %460 = vector.broadcast %459 : vector<256x1xf32> to vector<256x16xf32>
    %461 = arith.mulf %456, %460 : vector<256x16xf32>
    %462 = arith.truncf %461 : vector<256x16xf32> to vector<256x16xbf16>
    %463 = vector.extract_strided_slice %462 {offsets = [0, 0], sizes = [64, 16], strides = [1, 1]} : vector<256x16xbf16> to vector<64x16xbf16>
    %464 = vector.extract_strided_slice %438 {offsets = [0, 0], sizes = [16, 32], strides = [1, 1]} : vector<16x128xbf16> to vector<16x32xbf16>
    %cst_137 = arith.constant dense<0.000000e+00> : vector<64x32xf32>
    %465 = tpu.matmul %463, %464, %cst_137 {dimension_numbers = #tpu.dot_dimension_numbers<[1], [0], [0], [1], [0, 0, 1, 1], [], []>} : vector<64x16xbf16>, vector<16x32xbf16>, vector<64x32xf32> -> vector<64x32xf32>
    %466 = vector.extract_strided_slice %462 {offsets = [64, 0], sizes = [64, 16], strides = [1, 1]} : vector<256x16xbf16> to vector<64x16xbf16>
    %467 = vector.extract_strided_slice %438 {offsets = [0, 32], sizes = [16, 32], strides = [1, 1]} : vector<16x128xbf16> to vector<16x32xbf16>
    %cst_138 = arith.constant dense<0.000000e+00> : vector<64x32xf32>
    %468 = tpu.matmul %466, %467, %cst_138 {dimension_numbers = #tpu.dot_dimension_numbers<[1], [0], [0], [1], [0, 0, 1, 1], [], []>} : vector<64x16xbf16>, vector<16x32xbf16>, vector<64x32xf32> -> vector<64x32xf32>
    %469 = vector.extract_strided_slice %462 {offsets = [128, 0], sizes = [64, 16], strides = [1, 1]} : vector<256x16xbf16> to vector<64x16xbf16>
    %470 = vector.extract_strided_slice %438 {offsets = [0, 64], sizes = [16, 32], strides = [1, 1]} : vector<16x128xbf16> to vector<16x32xbf16>
    %cst_139 = arith.constant dense<0.000000e+00> : vector<64x32xf32>
    %471 = tpu.matmul %469, %470, %cst_139 {dimension_numbers = #tpu.dot_dimension_numbers<[1], [0], [0], [1], [0, 0, 1, 1], [], []>} : vector<64x16xbf16>, vector<16x32xbf16>, vector<64x32xf32> -> vector<64x32xf32>
    %472 = vector.extract_strided_slice %462 {offsets = [192, 0], sizes = [64, 16], strides = [1, 1]} : vector<256x16xbf16> to vector<64x16xbf16>
    %473 = vector.extract_strided_slice %438 {offsets = [0, 96], sizes = [16, 32], strides = [1, 1]} : vector<16x128xbf16> to vector<16x32xbf16>
    %cst_140 = arith.constant dense<0.000000e+00> : vector<64x32xf32>
    %474 = tpu.matmul %472, %473, %cst_140 {dimension_numbers = #tpu.dot_dimension_numbers<[1], [0], [0], [1], [0, 0, 1, 1], [], []>} : vector<64x16xbf16>, vector<16x32xbf16>, vector<64x32xf32> -> vector<64x32xf32>
    %475 = tpu.concatenate %465, %468, %471, %474 in 1 : vector<64x32xf32>, vector<64x32xf32>, vector<64x32xf32>, vector<64x32xf32> -> vector<64x128xf32>
    %476 = arith.truncf %475 : vector<64x128xf32> to vector<64x128xbf16>
    %c0_141 = arith.constant 0 : index
    %c0_142 = arith.constant 0 : index
    %c0_143 = arith.constant 0 : index
    %477 = vector.load %arg18[%c0_141, %c0_142, %c0_143] : memref<2x128x128xbf16, #tpu.memory_space<vmem>>, vector<1x128x128xbf16>
    %478 = vector.shape_cast %477 : vector<1x128x128xbf16> to vector<128x128xbf16>
    %cst_144 = arith.constant dense<0.000000e+00> : vector<64x128xf32>
    %479 = tpu.matmul %476, %478, %cst_144 {dimension_numbers = #tpu.dot_dimension_numbers<[1], [0], [0], [1], [0, 0, 1, 1], [], []>} : vector<64x128xbf16>, vector<128x128xbf16>, vector<64x128xf32> -> vector<64x128xf32>
    %480 = vector.extract_strided_slice %413 {offsets = [4, 0], sizes = [1, 128], strides = [1, 1]} : vector<11x128xf32> to vector<1x128xf32>
    %481 = vector.broadcast %480 : vector<1x128xf32> to vector<64x128xf32>
    %482 = arith.addf %479, %481 : vector<64x128xf32>
    %483 = arith.addf %420, %482 : vector<64x128xf32>
    %484 = vector.extract_strided_slice %413 {offsets = [6, 0], sizes = [1, 128], strides = [1, 1]} : vector<11x128xf32> to vector<1x128xf32>
    %485 = vector.extract_strided_slice %413 {offsets = [7, 0], sizes = [1, 128], strides = [1, 1]} : vector<11x128xf32> to vector<1x128xf32>
    %cst_145 = arith.constant dense<0.000000e+00> : vector<64xf32>
    %486 = vector.multi_reduction <add>, %483, %cst_145 [1] : vector<64x128xf32> to vector<64xf32>
    %487 = vector.shape_cast %486 : vector<64xf32> to vector<64x1xf32>
    %cst_146 = arith.constant 1.280000e+02 : f32
    %488 = vector.broadcast %cst_146 : f32 to vector<64x1xf32>
    %489 = arith.divf %487, %488 : vector<64x1xf32>
    %490 = vector.broadcast %489 : vector<64x1xf32> to vector<64x128xf32>
    %491 = arith.subf %483, %490 : vector<64x128xf32>
    %492 = arith.mulf %491, %491 : vector<64x128xf32>
    %cst_147 = arith.constant dense<0.000000e+00> : vector<64xf32>
    %493 = vector.multi_reduction <add>, %492, %cst_147 [1] : vector<64x128xf32> to vector<64xf32>
    %494 = vector.shape_cast %493 : vector<64xf32> to vector<64x1xf32>
    %cst_148 = arith.constant 1.280000e+02 : f32
    %495 = vector.broadcast %cst_148 : f32 to vector<64x1xf32>
    %496 = arith.divf %494, %495 : vector<64x1xf32>
    %cst_149 = arith.constant 9.99999974E-6 : f32
    %497 = vector.broadcast %cst_149 : f32 to vector<64x1xf32>
    %498 = arith.addf %496, %497 : vector<64x1xf32>
    %499 = math.rsqrt %498 : vector<64x1xf32>
    %500 = vector.broadcast %499 : vector<64x1xf32> to vector<64x128xf32>
    %501 = arith.mulf %491, %500 : vector<64x128xf32>
    %502 = vector.broadcast %484 : vector<1x128xf32> to vector<64x128xf32>
    %503 = arith.mulf %501, %502 : vector<64x128xf32>
    %504 = vector.broadcast %485 : vector<1x128xf32> to vector<64x128xf32>
    %505 = arith.addf %503, %504 : vector<64x128xf32>
    %506 = arith.truncf %505 : vector<64x128xf32> to vector<64x128xbf16>
    %c1_150 = arith.constant 1 : index
    %c0_151 = arith.constant 0 : index
    %c0_152 = arith.constant 0 : index
    %507 = vector.load %arg18[%c1_150, %c0_151, %c0_152] : memref<2x128x128xbf16, #tpu.memory_space<vmem>>, vector<1x128x128xbf16>
    %508 = vector.shape_cast %507 : vector<1x128x128xbf16> to vector<128x128xbf16>
    %cst_153 = arith.constant dense<0.000000e+00> : vector<64x128xf32>
    %509 = tpu.matmul %506, %508, %cst_153 {dimension_numbers = #tpu.dot_dimension_numbers<[1], [0], [0], [1], [0, 0, 1, 1], [], []>} : vector<64x128xbf16>, vector<128x128xbf16>, vector<64x128xf32> -> vector<64x128xf32>
    %510 = vector.extract_strided_slice %413 {offsets = [5, 0], sizes = [1, 128], strides = [1, 1]} : vector<11x128xf32> to vector<1x128xf32>
    %511 = vector.broadcast %510 : vector<1x128xf32> to vector<64x128xf32>
    %512 = arith.addf %509, %511 : vector<64x128xf32>
    %cst_154 = arith.constant 0.000000e+00 : f32
    %513 = vector.broadcast %cst_154 : f32 to vector<64x128xf32>
    %514 = arith.maximumf %512, %513 : vector<64x128xf32>
    %515 = arith.addf %505, %514 : vector<64x128xf32>
    %516 = vector.extract_strided_slice %413 {offsets = [8, 0], sizes = [1, 128], strides = [1, 1]} : vector<11x128xf32> to vector<1x128xf32>
    %517 = vector.extract_strided_slice %413 {offsets = [9, 0], sizes = [1, 128], strides = [1, 1]} : vector<11x128xf32> to vector<1x128xf32>
    %cst_155 = arith.constant dense<0.000000e+00> : vector<64xf32>
    %518 = vector.multi_reduction <add>, %515, %cst_155 [1] : vector<64x128xf32> to vector<64xf32>
    %519 = vector.shape_cast %518 : vector<64xf32> to vector<64x1xf32>
    %cst_156 = arith.constant 1.280000e+02 : f32
    %520 = vector.broadcast %cst_156 : f32 to vector<64x1xf32>
    %521 = arith.divf %519, %520 : vector<64x1xf32>
    %522 = vector.broadcast %521 : vector<64x1xf32> to vector<64x128xf32>
    %523 = arith.subf %515, %522 : vector<64x128xf32>
    %524 = arith.mulf %523, %523 : vector<64x128xf32>
    %cst_157 = arith.constant dense<0.000000e+00> : vector<64xf32>
    %525 = vector.multi_reduction <add>, %524, %cst_157 [1] : vector<64x128xf32> to vector<64xf32>
    %526 = vector.shape_cast %525 : vector<64xf32> to vector<64x1xf32>
    %cst_158 = arith.constant 1.280000e+02 : f32
    %527 = vector.broadcast %cst_158 : f32 to vector<64x1xf32>
    %528 = arith.divf %526, %527 : vector<64x1xf32>
    %cst_159 = arith.constant 9.99999974E-6 : f32
    %529 = vector.broadcast %cst_159 : f32 to vector<64x1xf32>
    %530 = arith.addf %528, %529 : vector<64x1xf32>
    %531 = math.rsqrt %530 : vector<64x1xf32>
    %532 = vector.broadcast %531 : vector<64x1xf32> to vector<64x128xf32>
    %533 = arith.mulf %523, %532 : vector<64x128xf32>
    %534 = vector.broadcast %516 : vector<1x128xf32> to vector<64x128xf32>
    %535 = arith.mulf %533, %534 : vector<64x128xf32>
    %536 = vector.broadcast %517 : vector<1x128xf32> to vector<64x128xf32>
    %537 = arith.addf %535, %536 : vector<64x128xf32>
    %538 = vector.extract_strided_slice %416 {offsets = [0, 256], sizes = [64, 128], strides = [1, 1]} : vector<64x384xf32> to vector<64x128xf32>
    %539 = vector.extract_strided_slice %413 {offsets = [10, 0], sizes = [1, 128], strides = [1, 1]} : vector<11x128xf32> to vector<1x128xf32>
    %540 = vector.broadcast %539 : vector<1x128xf32> to vector<64x128xf32>
    %541 = arith.addf %538, %540 : vector<64x128xf32>
    %cst_160 = arith.constant 0.000000e+00 : f32
    %542 = vector.broadcast %cst_160 : f32 to vector<64x128xf32>
    %543 = arith.subf %542, %541 : vector<64x128xf32>
    %544 = math.exp %543 : vector<64x128xf32>
    %cst_161 = arith.constant 1.000000e+00 : f32
    %545 = vector.broadcast %cst_161 : f32 to vector<64x128xf32>
    %546 = arith.addf %545, %544 : vector<64x128xf32>
    %547 = tpu.reciprocal %546 {approx = true} : vector<64x128xf32> -> vector<64x128xf32>
    %548 = arith.mulf %541, %547 : vector<64x128xf32>
    %549 = arith.mulf %537, %548 : vector<64x128xf32>
    %c0_162 = arith.constant 0 : index
    %c0_163 = arith.constant 0 : index
    %c0_164 = arith.constant 0 : index
    %550 = vector.load %arg20[%c0_162, %c0_163, %c0_164] : memref<1x1x128xbf16, #tpu.memory_space<vmem>>, vector<1x1x128xbf16>
    %551 = vector.shape_cast %550 : vector<1x1x128xbf16> to vector<1x128xbf16>
    %c0_165 = arith.constant 0 : index
    %c0_166 = arith.constant 0 : index
    %552 = vector.load %arg24[%c0_165, %c0_166] : memref<11x128xf32, #tpu.memory_space<vmem>>, vector<11x128xf32>
    %c0_167 = arith.constant 0 : index
    %c0_168 = arith.constant 0 : index
    %553 = vector.load %arg21[%c0_167, %c0_168] : memref<128x256xbf16, #tpu.memory_space<vmem>>, vector<128x256xbf16>
    %cst_169 = arith.constant dense<0.000000e+00> : vector<1x256xf32>
    %554 = tpu.matmul %551, %553, %cst_169 {dimension_numbers = #tpu.dot_dimension_numbers<[1], [0], [0], [1], [0, 0, 1, 1], [], []>} : vector<1x128xbf16>, vector<128x256xbf16>, vector<1x256xf32> -> vector<1x256xf32>
    %555 = vector.extract_strided_slice %554 {offsets = [0, 0], sizes = [1, 128], strides = [1, 1]} : vector<1x256xf32> to vector<1x128xf32>
    %556 = vector.extract_strided_slice %552 {offsets = [0, 0], sizes = [1, 128], strides = [1, 1]} : vector<11x128xf32> to vector<1x128xf32>
    %557 = arith.addf %555, %556 : vector<1x128xf32>
    %558 = vector.extract_strided_slice %554 {offsets = [0, 128], sizes = [1, 128], strides = [1, 1]} : vector<1x256xf32> to vector<1x128xf32>
    %559 = vector.extract_strided_slice %552 {offsets = [1, 0], sizes = [1, 128], strides = [1, 1]} : vector<11x128xf32> to vector<1x128xf32>
    %560 = arith.addf %558, %559 : vector<1x128xf32>
    %561 = arith.truncf %549 : vector<64x128xf32> to vector<64x128xbf16>
    %c0_170 = arith.constant 0 : index
    %c0_171 = arith.constant 0 : index
    %562 = vector.load %arg22[%c0_170, %c0_171] : memref<128x256xbf16, #tpu.memory_space<vmem>>, vector<128x256xbf16>
    %cst_172 = arith.constant dense<0.000000e+00> : vector<64x256xf32>
    %563 = tpu.matmul %561, %562, %cst_172 {dimension_numbers = #tpu.dot_dimension_numbers<[1], [0], [0], [1], [0, 0, 1, 1], [], []>} : vector<64x128xbf16>, vector<128x256xbf16>, vector<64x256xf32> -> vector<64x256xf32>
    %564 = vector.extract_strided_slice %563 {offsets = [0, 0], sizes = [64, 128], strides = [1, 1]} : vector<64x256xf32> to vector<64x128xf32>
    %565 = vector.extract_strided_slice %552 {offsets = [2, 0], sizes = [1, 128], strides = [1, 1]} : vector<11x128xf32> to vector<1x128xf32>
    %566 = vector.broadcast %565 : vector<1x128xf32> to vector<64x128xf32>
    %567 = arith.addf %564, %566 : vector<64x128xf32>
    %568 = vector.extract_strided_slice %563 {offsets = [0, 128], sizes = [64, 128], strides = [1, 1]} : vector<64x256xf32> to vector<64x128xf32>
    %569 = vector.extract_strided_slice %552 {offsets = [3, 0], sizes = [1, 128], strides = [1, 1]} : vector<11x128xf32> to vector<1x128xf32>
    %570 = vector.broadcast %569 : vector<1x128xf32> to vector<64x128xf32>
    %571 = arith.addf %568, %570 : vector<64x128xf32>
    %572 = arith.truncf %560 : vector<1x128xf32> to vector<1x128xbf16>
    %573 = arith.truncf %567 : vector<64x128xf32> to vector<64x128xbf16>
    %574 = arith.truncf %571 : vector<64x128xf32> to vector<64x128xbf16>
    %575 = vector.extract_strided_slice %572 {offsets = [0, 0], sizes = [1, 32], strides = [1, 1]} : vector<1x128xbf16> to vector<1x32xbf16>
    %576 = vector.extract_strided_slice %573 {offsets = [0, 0], sizes = [64, 32], strides = [1, 1]} : vector<64x128xbf16> to vector<64x32xbf16>
    %cst_173 = arith.constant dense<0.000000e+00> : vector<1x64xf32>
    %577 = tpu.matmul %575, %576, %cst_173 {dimension_numbers = #tpu.dot_dimension_numbers<[1], [1], [0], [0], [0, 0, 1, 0], [], []>} : vector<1x32xbf16>, vector<64x32xbf16>, vector<1x64xf32> -> vector<1x64xf32>
    %578 = vector.extract_strided_slice %572 {offsets = [0, 32], sizes = [1, 32], strides = [1, 1]} : vector<1x128xbf16> to vector<1x32xbf16>
    %579 = vector.extract_strided_slice %573 {offsets = [0, 32], sizes = [64, 32], strides = [1, 1]} : vector<64x128xbf16> to vector<64x32xbf16>
    %cst_174 = arith.constant dense<0.000000e+00> : vector<1x64xf32>
    %580 = tpu.matmul %578, %579, %cst_174 {dimension_numbers = #tpu.dot_dimension_numbers<[1], [1], [0], [0], [0, 0, 1, 0], [], []>} : vector<1x32xbf16>, vector<64x32xbf16>, vector<1x64xf32> -> vector<1x64xf32>
    %581 = vector.extract_strided_slice %572 {offsets = [0, 64], sizes = [1, 32], strides = [1, 1]} : vector<1x128xbf16> to vector<1x32xbf16>
    %582 = vector.extract_strided_slice %573 {offsets = [0, 64], sizes = [64, 32], strides = [1, 1]} : vector<64x128xbf16> to vector<64x32xbf16>
    %cst_175 = arith.constant dense<0.000000e+00> : vector<1x64xf32>
    %583 = tpu.matmul %581, %582, %cst_175 {dimension_numbers = #tpu.dot_dimension_numbers<[1], [1], [0], [0], [0, 0, 1, 0], [], []>} : vector<1x32xbf16>, vector<64x32xbf16>, vector<1x64xf32> -> vector<1x64xf32>
    %584 = vector.extract_strided_slice %572 {offsets = [0, 96], sizes = [1, 32], strides = [1, 1]} : vector<1x128xbf16> to vector<1x32xbf16>
    %585 = vector.extract_strided_slice %573 {offsets = [0, 96], sizes = [64, 32], strides = [1, 1]} : vector<64x128xbf16> to vector<64x32xbf16>
    %cst_176 = arith.constant dense<0.000000e+00> : vector<1x64xf32>
    %586 = tpu.matmul %584, %585, %cst_176 {dimension_numbers = #tpu.dot_dimension_numbers<[1], [1], [0], [0], [0, 0, 1, 0], [], []>} : vector<1x32xbf16>, vector<64x32xbf16>, vector<1x64xf32> -> vector<1x64xf32>
    %587 = tpu.concatenate %577, %580, %583, %586 in 0 : vector<1x64xf32>, vector<1x64xf32>, vector<1x64xf32>, vector<1x64xf32> -> vector<4x64xf32>
    %cst_177 = arith.constant dense<0xFF800000> : vector<4xf32>
    %588 = vector.multi_reduction <maximumf>, %587, %cst_177 [1] : vector<4x64xf32> to vector<4xf32>
    %589 = vector.shape_cast %588 : vector<4xf32> to vector<4x1xf32>
    %590 = vector.broadcast %589 : vector<4x1xf32> to vector<4x64xf32>
    %591 = arith.subf %587, %590 : vector<4x64xf32>
    %592 = math.exp %591 : vector<4x64xf32>
    %cst_178 = arith.constant dense<0.000000e+00> : vector<4xf32>
    %593 = vector.multi_reduction <add>, %592, %cst_178 [1] : vector<4x64xf32> to vector<4xf32>
    %594 = vector.shape_cast %593 : vector<4xf32> to vector<4x1xf32>
    %595 = tpu.reciprocal %594 {approx = true} : vector<4x1xf32> -> vector<4x1xf32>
    %596 = vector.broadcast %595 : vector<4x1xf32> to vector<4x64xf32>
    %597 = arith.mulf %592, %596 : vector<4x64xf32>
    %598 = arith.truncf %597 : vector<4x64xf32> to vector<4x64xbf16>
    %599 = vector.extract_strided_slice %598 {offsets = [0, 0], sizes = [1, 64], strides = [1, 1]} : vector<4x64xbf16> to vector<1x64xbf16>
    %600 = vector.extract_strided_slice %574 {offsets = [0, 0], sizes = [64, 32], strides = [1, 1]} : vector<64x128xbf16> to vector<64x32xbf16>
    %cst_179 = arith.constant dense<0.000000e+00> : vector<1x32xf32>
    %601 = tpu.matmul %599, %600, %cst_179 {dimension_numbers = #tpu.dot_dimension_numbers<[1], [0], [0], [1], [0, 0, 1, 1], [], []>} : vector<1x64xbf16>, vector<64x32xbf16>, vector<1x32xf32> -> vector<1x32xf32>
    %602 = vector.extract_strided_slice %598 {offsets = [1, 0], sizes = [1, 64], strides = [1, 1]} : vector<4x64xbf16> to vector<1x64xbf16>
    %603 = vector.extract_strided_slice %574 {offsets = [0, 32], sizes = [64, 32], strides = [1, 1]} : vector<64x128xbf16> to vector<64x32xbf16>
    %cst_180 = arith.constant dense<0.000000e+00> : vector<1x32xf32>
    %604 = tpu.matmul %602, %603, %cst_180 {dimension_numbers = #tpu.dot_dimension_numbers<[1], [0], [0], [1], [0, 0, 1, 1], [], []>} : vector<1x64xbf16>, vector<64x32xbf16>, vector<1x32xf32> -> vector<1x32xf32>
    %605 = vector.extract_strided_slice %598 {offsets = [2, 0], sizes = [1, 64], strides = [1, 1]} : vector<4x64xbf16> to vector<1x64xbf16>
    %606 = vector.extract_strided_slice %574 {offsets = [0, 64], sizes = [64, 32], strides = [1, 1]} : vector<64x128xbf16> to vector<64x32xbf16>
    %cst_181 = arith.constant dense<0.000000e+00> : vector<1x32xf32>
    %607 = tpu.matmul %605, %606, %cst_181 {dimension_numbers = #tpu.dot_dimension_numbers<[1], [0], [0], [1], [0, 0, 1, 1], [], []>} : vector<1x64xbf16>, vector<64x32xbf16>, vector<1x32xf32> -> vector<1x32xf32>
    %608 = vector.extract_strided_slice %598 {offsets = [3, 0], sizes = [1, 64], strides = [1, 1]} : vector<4x64xbf16> to vector<1x64xbf16>
    %609 = vector.extract_strided_slice %574 {offsets = [0, 96], sizes = [64, 32], strides = [1, 1]} : vector<64x128xbf16> to vector<64x32xbf16>
    %cst_182 = arith.constant dense<0.000000e+00> : vector<1x32xf32>
    %610 = tpu.matmul %608, %609, %cst_182 {dimension_numbers = #tpu.dot_dimension_numbers<[1], [0], [0], [1], [0, 0, 1, 1], [], []>} : vector<1x64xbf16>, vector<64x32xbf16>, vector<1x32xf32> -> vector<1x32xf32>
    %611 = tpu.concatenate %601, %604, %607, %610 in 1 : vector<1x32xf32>, vector<1x32xf32>, vector<1x32xf32>, vector<1x32xf32> -> vector<1x128xf32>
    %612 = arith.truncf %611 : vector<1x128xf32> to vector<1x128xbf16>
    %c0_183 = arith.constant 0 : index
    %c0_184 = arith.constant 0 : index
    %c0_185 = arith.constant 0 : index
    %613 = vector.load %arg23[%c0_183, %c0_184, %c0_185] : memref<2x128x128xbf16, #tpu.memory_space<vmem>>, vector<1x128x128xbf16>
    %614 = vector.shape_cast %613 : vector<1x128x128xbf16> to vector<128x128xbf16>
    %cst_186 = arith.constant dense<0.000000e+00> : vector<1x128xf32>
    %615 = tpu.matmul %612, %614, %cst_186 {dimension_numbers = #tpu.dot_dimension_numbers<[1], [0], [0], [1], [0, 0, 1, 1], [], []>} : vector<1x128xbf16>, vector<128x128xbf16>, vector<1x128xf32> -> vector<1x128xf32>
    %616 = vector.extract_strided_slice %552 {offsets = [4, 0], sizes = [1, 128], strides = [1, 1]} : vector<11x128xf32> to vector<1x128xf32>
    %617 = arith.addf %615, %616 : vector<1x128xf32>
    %618 = arith.addf %557, %617 : vector<1x128xf32>
    %619 = vector.extract_strided_slice %552 {offsets = [6, 0], sizes = [1, 128], strides = [1, 1]} : vector<11x128xf32> to vector<1x128xf32>
    %620 = vector.extract_strided_slice %552 {offsets = [7, 0], sizes = [1, 128], strides = [1, 1]} : vector<11x128xf32> to vector<1x128xf32>
    %cst_187 = arith.constant dense<0.000000e+00> : vector<1xf32>
    %621 = vector.multi_reduction <add>, %618, %cst_187 [1] : vector<1x128xf32> to vector<1xf32>
    %622 = vector.shape_cast %621 : vector<1xf32> to vector<1x1xf32>
    %cst_188 = arith.constant 1.280000e+02 : f32
    %623 = vector.broadcast %cst_188 : f32 to vector<1x1xf32>
    %624 = arith.divf %622, %623 : vector<1x1xf32>
    %625 = vector.broadcast %624 : vector<1x1xf32> to vector<1x128xf32>
    %626 = arith.subf %618, %625 : vector<1x128xf32>
    %627 = arith.mulf %626, %626 : vector<1x128xf32>
    %cst_189 = arith.constant dense<0.000000e+00> : vector<1xf32>
    %628 = vector.multi_reduction <add>, %627, %cst_189 [1] : vector<1x128xf32> to vector<1xf32>
    %629 = vector.shape_cast %628 : vector<1xf32> to vector<1x1xf32>
    %cst_190 = arith.constant 1.280000e+02 : f32
    %630 = vector.broadcast %cst_190 : f32 to vector<1x1xf32>
    %631 = arith.divf %629, %630 : vector<1x1xf32>
    %cst_191 = arith.constant 9.99999974E-6 : f32
    %632 = vector.broadcast %cst_191 : f32 to vector<1x1xf32>
    %633 = arith.addf %631, %632 : vector<1x1xf32>
    %634 = math.rsqrt %633 : vector<1x1xf32>
    %635 = vector.broadcast %634 : vector<1x1xf32> to vector<1x128xf32>
    %636 = arith.mulf %626, %635 : vector<1x128xf32>
    %637 = arith.mulf %636, %619 : vector<1x128xf32>
    %638 = arith.addf %637, %620 : vector<1x128xf32>
    %639 = arith.truncf %638 : vector<1x128xf32> to vector<1x128xbf16>
    %c1_192 = arith.constant 1 : index
    %c0_193 = arith.constant 0 : index
    %c0_194 = arith.constant 0 : index
    %640 = vector.load %arg23[%c1_192, %c0_193, %c0_194] : memref<2x128x128xbf16, #tpu.memory_space<vmem>>, vector<1x128x128xbf16>
    %641 = vector.shape_cast %640 : vector<1x128x128xbf16> to vector<128x128xbf16>
    %cst_195 = arith.constant dense<0.000000e+00> : vector<1x128xf32>
    %642 = tpu.matmul %639, %641, %cst_195 {dimension_numbers = #tpu.dot_dimension_numbers<[1], [0], [0], [1], [0, 0, 1, 1], [], []>} : vector<1x128xbf16>, vector<128x128xbf16>, vector<1x128xf32> -> vector<1x128xf32>
    %643 = vector.extract_strided_slice %552 {offsets = [5, 0], sizes = [1, 128], strides = [1, 1]} : vector<11x128xf32> to vector<1x128xf32>
    %644 = arith.addf %642, %643 : vector<1x128xf32>
    %cst_196 = arith.constant 0.000000e+00 : f32
    %645 = vector.broadcast %cst_196 : f32 to vector<1x128xf32>
    %646 = arith.maximumf %644, %645 : vector<1x128xf32>
    %647 = arith.addf %638, %646 : vector<1x128xf32>
    %648 = vector.extract_strided_slice %552 {offsets = [8, 0], sizes = [1, 128], strides = [1, 1]} : vector<11x128xf32> to vector<1x128xf32>
    %649 = vector.extract_strided_slice %552 {offsets = [9, 0], sizes = [1, 128], strides = [1, 1]} : vector<11x128xf32> to vector<1x128xf32>
    %cst_197 = arith.constant dense<0.000000e+00> : vector<1xf32>
    %650 = vector.multi_reduction <add>, %647, %cst_197 [1] : vector<1x128xf32> to vector<1xf32>
    %651 = vector.shape_cast %650 : vector<1xf32> to vector<1x1xf32>
    %cst_198 = arith.constant 1.280000e+02 : f32
    %652 = vector.broadcast %cst_198 : f32 to vector<1x1xf32>
    %653 = arith.divf %651, %652 : vector<1x1xf32>
    %654 = vector.broadcast %653 : vector<1x1xf32> to vector<1x128xf32>
    %655 = arith.subf %647, %654 : vector<1x128xf32>
    %656 = arith.mulf %655, %655 : vector<1x128xf32>
    %cst_199 = arith.constant dense<0.000000e+00> : vector<1xf32>
    %657 = vector.multi_reduction <add>, %656, %cst_199 [1] : vector<1x128xf32> to vector<1xf32>
    %658 = vector.shape_cast %657 : vector<1xf32> to vector<1x1xf32>
    %cst_200 = arith.constant 1.280000e+02 : f32
    %659 = vector.broadcast %cst_200 : f32 to vector<1x1xf32>
    %660 = arith.divf %658, %659 : vector<1x1xf32>
    %cst_201 = arith.constant 9.99999974E-6 : f32
    %661 = vector.broadcast %cst_201 : f32 to vector<1x1xf32>
    %662 = arith.addf %660, %661 : vector<1x1xf32>
    %663 = math.rsqrt %662 : vector<1x1xf32>
    %664 = vector.broadcast %663 : vector<1x1xf32> to vector<1x128xf32>
    %665 = arith.mulf %655, %664 : vector<1x128xf32>
    %666 = arith.mulf %665, %648 : vector<1x128xf32>
    %667 = arith.addf %666, %649 : vector<1x128xf32>
    %c0_202 = arith.constant 0 : index
    %c0_203 = arith.constant 0 : index
    %668 = vector.load %arg25[%c0_202, %c0_203] : memref<128x4xf32, #tpu.memory_space<vmem>>, vector<128x4xf32>
    %cst_204 = arith.constant dense<0.000000e+00> : vector<1x4xf32>
    %669 = tpu.matmul %667, %668, %cst_204 {dimension_numbers = #tpu.dot_dimension_numbers<[1], [0], [0], [1], [0, 0, 1, 1], [], []>} : vector<1x128xf32>, vector<128x4xf32>, vector<1x4xf32> -> vector<1x4xf32>
    %c0_205 = arith.constant 0 : index
    %c0_206 = arith.constant 0 : index
    %670 = vector.load %arg26[%c0_205, %c0_206] : memref<1x4xf32, #tpu.memory_space<vmem>>, vector<1x4xf32>
    %671 = arith.addf %669, %670 : vector<1x4xf32>
    %c0_207 = arith.constant 0 : index
    %c0_208 = arith.constant 0 : index
    %c0_209 = arith.constant 0 : index
    %672 = vector.load %arg27[%c0_207, %c0_208, %c0_209] : memref<1x1x4xf32, #tpu.memory_space<vmem>>, vector<1x1x4xf32>
    %673 = vector.shape_cast %672 : vector<1x1x4xf32> to vector<1x4xf32>
    %674 = vector.shape_cast %671 : vector<1x4xf32> to vector<1x1x4xf32>
    tpu.vector_store %arg27[%c0_207, %c0_208, %c0_209], %674 {strides = array<i32>} : memref<1x1x4xf32, #tpu.memory_space<vmem>>, vector<1x1x4xf32>,
    return
  }
  func.func @transform_0(%arg0: i32) -> (i32, i32, i32) {
    %c0_i32 = arith.constant 0 : i32
    %c0_i32_0 = arith.constant 0 : i32
    %c0_i32_1 = arith.constant 0 : i32
    return %arg0, %c0_i32, %c0_i32_0 : i32, i32, i32
  }
  func.func @transform_1(%arg0: i32) -> (i32, i32, i32) {
    %c0_i32 = arith.constant 0 : i32
    %c0_i32_0 = arith.constant 0 : i32
    %c0_i32_1 = arith.constant 0 : i32
    %c0_i32_2 = arith.constant 0 : i32
    return %c0_i32, %c0_i32_0, %c0_i32_1 : i32, i32, i32
  }
  func.func @transform_2(%arg0: i32) -> (i32, i32) {
    %c0_i32 = arith.constant 0 : i32
    %c0_i32_0 = arith.constant 0 : i32
    %c0_i32_1 = arith.constant 0 : i32
    return %c0_i32, %c0_i32_0 : i32, i32
  }
  func.func @transform_3(%arg0: i32) -> (i32, i32) {
    %c0_i32 = arith.constant 0 : i32
    %c0_i32_0 = arith.constant 0 : i32
    %c0_i32_1 = arith.constant 0 : i32
    return %c0_i32, %c0_i32_0 : i32, i32
  }
  func.func @transform_4(%arg0: i32) -> (i32, i32, i32) {
    %c0_i32 = arith.constant 0 : i32
    %c0_i32_0 = arith.constant 0 : i32
    %c0_i32_1 = arith.constant 0 : i32
    %c0_i32_2 = arith.constant 0 : i32
    return %c0_i32, %c0_i32_0, %c0_i32_1 : i32, i32, i32
  }
  func.func @transform_5(%arg0: i32) -> (i32, i32) {
    %c0_i32 = arith.constant 0 : i32
    %c0_i32_0 = arith.constant 0 : i32
    %c0_i32_1 = arith.constant 0 : i32
    return %c0_i32, %c0_i32_0 : i32, i32
  }
  func.func @transform_6(%arg0: i32) -> (i32, i32) {
    %c0_i32 = arith.constant 0 : i32
    %c0_i32_0 = arith.constant 0 : i32
    %c0_i32_1 = arith.constant 0 : i32
    return %c0_i32, %c0_i32_0 : i32, i32
  }
  func.func @transform_7(%arg0: i32) -> (i32, i32) {
    %c0_i32 = arith.constant 0 : i32
    %c0_i32_0 = arith.constant 0 : i32
    %c0_i32_1 = arith.constant 0 : i32
    return %c0_i32, %c0_i32_0 : i32, i32
  }
  func.func @transform_8(%arg0: i32) -> (i32, i32, i32) {
    %c0_i32 = arith.constant 0 : i32
    %c0_i32_0 = arith.constant 0 : i32
    %c0_i32_1 = arith.constant 0 : i32
    %c0_i32_2 = arith.constant 0 : i32
    return %c0_i32, %c0_i32_0, %c0_i32_1 : i32, i32, i32
  }
  func.func @transform_9(%arg0: i32) -> (i32, i32) {
    %c0_i32 = arith.constant 0 : i32
    %c0_i32_0 = arith.constant 0 : i32
    %c0_i32_1 = arith.constant 0 : i32
    return %c0_i32, %c0_i32_0 : i32, i32
  }
  func.func @transform_10(%arg0: i32) -> (i32, i32, i32) {
    %c0_i32 = arith.constant 0 : i32
    %c0_i32_0 = arith.constant 0 : i32
    %c0_i32_1 = arith.constant 0 : i32
    %c0_i32_2 = arith.constant 0 : i32
    return %c0_i32, %c0_i32_0, %c0_i32_1 : i32, i32, i32
  }
  func.func @transform_11(%arg0: i32) -> (i32, i32) {
    %c0_i32 = arith.constant 0 : i32
    %c0_i32_0 = arith.constant 0 : i32
    %c0_i32_1 = arith.constant 0 : i32
    return %c0_i32, %c0_i32_0 : i32, i32
  }
  func.func @transform_12(%arg0: i32) -> (i32, i32) {
    %c0_i32 = arith.constant 0 : i32
    %c0_i32_0 = arith.constant 0 : i32
    %c0_i32_1 = arith.constant 0 : i32
    return %c0_i32, %c0_i32_0 : i32, i32
  }
  func.func @transform_13(%arg0: i32) -> (i32, i32, i32) {
    %c0_i32 = arith.constant 0 : i32
    %c0_i32_0 = arith.constant 0 : i32
    %c0_i32_1 = arith.constant 0 : i32
    %c0_i32_2 = arith.constant 0 : i32
    return %c0_i32, %c0_i32_0, %c0_i32_1 : i32, i32, i32
  }
  func.func @transform_14(%arg0: i32) -> (i32, i32) {
    %c0_i32 = arith.constant 0 : i32
    %c0_i32_0 = arith.constant 0 : i32
    %c0_i32_1 = arith.constant 0 : i32
    return %c0_i32, %c0_i32_0 : i32, i32
  }
  func.func @transform_15(%arg0: i32) -> (i32, i32) {
    %c0_i32 = arith.constant 0 : i32
    %c0_i32_0 = arith.constant 0 : i32
    %c0_i32_1 = arith.constant 0 : i32
    return %c0_i32, %c0_i32_0 : i32, i32
  }
  func.func @transform_16(%arg0: i32) -> (i32, i32) {
    %c0_i32 = arith.constant 0 : i32
    %c0_i32_0 = arith.constant 0 : i32
    %c0_i32_1 = arith.constant 0 : i32
    return %c0_i32, %c0_i32_0 : i32, i32
  }
  func.func @transform_17(%arg0: i32) -> (i32, i32, i32) {
    %c0_i32 = arith.constant 0 : i32
    %c0_i32_0 = arith.constant 0 : i32
    %c0_i32_1 = arith.constant 0 : i32
    %c0_i32_2 = arith.constant 0 : i32
    return %c0_i32, %c0_i32_0, %c0_i32_1 : i32, i32, i32
  }
  func.func @transform_18(%arg0: i32) -> (i32, i32) {
    %c0_i32 = arith.constant 0 : i32
    %c0_i32_0 = arith.constant 0 : i32
    %c0_i32_1 = arith.constant 0 : i32
    return %c0_i32, %c0_i32_0 : i32, i32
  }
  func.func @transform_19(%arg0: i32) -> (i32, i32, i32) {
    %c0_i32 = arith.constant 0 : i32
    %c0_i32_0 = arith.constant 0 : i32
    %c0_i32_1 = arith.constant 0 : i32
    %c0_i32_2 = arith.constant 0 : i32
    return %c0_i32, %c0_i32_0, %c0_i32_1 : i32, i32, i32
  }
  func.func @transform_20(%arg0: i32) -> (i32, i32) {
    %c0_i32 = arith.constant 0 : i32
    %c0_i32_0 = arith.constant 0 : i32
    %c0_i32_1 = arith.constant 0 : i32
    return %c0_i32, %c0_i32_0 : i32, i32
  }
  func.func @transform_21(%arg0: i32) -> (i32, i32) {
    %c0_i32 = arith.constant 0 : i32
    %c0_i32_0 = arith.constant 0 : i32
    %c0_i32_1 = arith.constant 0 : i32
    return %c0_i32, %c0_i32_0 : i32, i32
  }
  func.func @transform_22(%arg0: i32) -> (i32, i32, i32) {
    %c0_i32 = arith.constant 0 : i32
    %c0_i32_0 = arith.constant 0 : i32
    %c0_i32_1 = arith.constant 0 : i32
    %c0_i32_2 = arith.constant 0 : i32
    return %c0_i32, %c0_i32_0, %c0_i32_1 : i32, i32, i32
  }
  func.func @transform_23(%arg0: i32) -> (i32, i32) {
    %c0_i32 = arith.constant 0 : i32
    %c0_i32_0 = arith.constant 0 : i32
    %c0_i32_1 = arith.constant 0 : i32
    return %c0_i32, %c0_i32_0 : i32, i32
  }
  func.func @transform_24(%arg0: i32) -> (i32, i32) {
    %c0_i32 = arith.constant 0 : i32
    %c0_i32_0 = arith.constant 0 : i32
    %c0_i32_1 = arith.constant 0 : i32
    return %c0_i32, %c0_i32_0 : i32, i32
  }
  func.func @transform_25(%arg0: i32) -> (i32, i32) {
    %c0_i32 = arith.constant 0 : i32
    %c0_i32_0 = arith.constant 0 : i32
    %c0_i32_1 = arith.constant 0 : i32
    return %c0_i32, %c0_i32_0 : i32, i32
  }
  func.func @transform_26(%arg0: i32) -> (i32, i32, i32) {
    %c0_i32 = arith.constant 0 : i32
    %c0_i32_0 = arith.constant 0 : i32
    %c0_i32_1 = arith.constant 0 : i32
    return %arg0, %c0_i32, %c0_i32_0 : i32, i32, i32
  }
}

</mosaic_0001>

<llo_original>
// kernel: _lambda_.1
$region0: #{_lambda_.1}
  #allocation0 [shape = 'u32[]', space=smem, size = 0x4, offset = 0x4, fixed_abs, tag = 'smem constant byte address 0x4 - core index']
  #allocation1 [shape = 'u32[144,128]{1,0:T(1,128)}', space=vmem, size = 0x12000, scoped, tag = 'internal scratch']
  %s0 = inlined_call_operand.vmem [shape: bf16[2,64,64], index: 0, kind: input, shape index: {}]
  %s1 = inlined_call_operand.vmem [shape: bf16[1,16,128], index: 1, kind: input, shape index: {}]
  %s2 = inlined_call_operand.vmem [shape: bf16[128,384], index: 2, kind: input, shape index: {}]
  %s3 = inlined_call_operand.vmem [shape: bf16[64,256], index: 3, kind: input, shape index: {}]
  %s4 = inlined_call_operand.vmem [shape: bf16[2,128,128], index: 4, kind: input, shape index: {}]
  %s5 = inlined_call_operand.vmem [shape: f32[11,128], index: 5, kind: input, shape index: {}]
  %s6 = inlined_call_operand.vmem [shape: bf16[64,384], index: 6, kind: input, shape index: {}]
  %s7 = inlined_call_operand.vmem [shape: bf16[128,256], index: 7, kind: input, shape index: {}]
  %s8 = inlined_call_operand.vmem [shape: bf16[2,128,128], index: 8, kind: input, shape index: {}]
  %s9 = inlined_call_operand.vmem [shape: f32[11,128], index: 9, kind: input, shape index: {}]
  %s10 = inlined_call_operand.vmem [shape: bf16[1,16,128], index: 10, kind: input, shape index: {}]
  %s11 = inlined_call_operand.vmem [shape: bf16[128,384], index: 11, kind: input, shape index: {}]
  %s12 = inlined_call_operand.vmem [shape: bf16[128,256], index: 12, kind: input, shape index: {}]
  %s13 = inlined_call_operand.vmem [shape: bf16[2,128,128], index: 13, kind: input, shape index: {}]
  %s14 = inlined_call_operand.vmem [shape: f32[11,128], index: 14, kind: input, shape index: {}]
  %s15 = inlined_call_operand.vmem [shape: bf16[128,384], index: 15, kind: input, shape index: {}]
  %s16 = inlined_call_operand.vmem [shape: bf16[128,256], index: 16, kind: input, shape index: {}]
  %s17 = inlined_call_operand.vmem [shape: bf16[2,128,128], index: 17, kind: input, shape index: {}]
  %s18 = inlined_call_operand.vmem [shape: f32[11,128], index: 18, kind: input, shape index: {}]
  %s19 = inlined_call_operand.vmem [shape: bf16[1,1,128], index: 19, kind: input, shape index: {}]
  %s20 = inlined_call_operand.vmem [shape: bf16[128,256], index: 20, kind: input, shape index: {}]
  %s21 = inlined_call_operand.vmem [shape: bf16[128,256], index: 21, kind: input, shape index: {}]
  %s22 = inlined_call_operand.vmem [shape: bf16[2,128,128], index: 22, kind: input, shape index: {}]
  %s23 = inlined_call_operand.vmem [shape: f32[11,128], index: 23, kind: input, shape index: {}]
  %s24 = inlined_call_operand.vmem [shape: f32[128,4], index: 24, kind: input, shape index: {}]
  %s25 = inlined_call_operand.vmem [shape: f32[1,4], index: 25, kind: input, shape index: {}]
  %s26 = inlined_call_operand.hbm [shape: f32[2,1,4], index: 26, kind: output, shape index: {}]
  %s27 = sld [smem:[#allocation0]]
  $region137: #{_lambda_.1} parent=0
    _
  %s29 = ssub.s32 1, %s27
  %s30 = scalar_select 0, %s29, %s27
  $region1: #{_lambda_.1} parent=0
    #allocation2 [shape = 'u8[1024]{0}', space=vmem, size = 0x400, scoped, tag = 'output window, operand 0']
    #allocation3 [shape = 's32[2]{0}', space=sflag, size = 0x8, scoped, tag = 'scoped memory for _lambda_.1']
    %31 = vsyncpa [#allocation3], 0
    %s32 = scalar_lea.sflag [#allocation3], 1
    %33 = vsyncpa %s32, 0
    loop: start=0, step=1, limit=4
    $region2: #{_lambda_.1} parent=1 // loop_pre_header
      _
    $region3: #{_lambda_.1} parent=1 // loop_header
      %s35 = sphi 0, %s39
      %p36 = scmp.ge.s32.totalorder %s35, 4
      %s45 = sphi 0, %s47
      %s48 = sphi 0, %s45
      %s49 = sphi 0, %s48
      %s65 = sphi 0, %s49
      %s69 = sphi 0, %s69
      %s71 = sphi 0, %s69
      %s72 = sphi 0, %s71
      %s86 = sphi 0, %s72
      %s90 = sphi 0, %s90
      %s92 = sphi 0, %s90
      %s93 = sphi 0, %s92
      %s107 = sphi 0, %s93
      %s111 = sphi 0, %s111
      %s113 = sphi 0, %s111
      %s114 = sphi 0, %s113
      %s128 = sphi 0, %s114
      %s132 = sphi 0, %s132
      %s134 = sphi 0, %s132
      %s135 = sphi 0, %s134
      %s149 = sphi 0, %s135
      %s153 = sphi 0, %s153
      %s155 = sphi 0, %s153
      %s156 = sphi 0, %s155
      %s170 = sphi 0, %s156
      %s174 = sphi 0, %s174
      %s176 = sphi 0, %s174
      %s177 = sphi 0, %s176
      %s191 = sphi 0, %s177
      %s195 = sphi 0, %s195
      %s197 = sphi 0, %s195
      %s198 = sphi 0, %s197
      %s212 = sphi 0, %s198
      %s216 = sphi 0, %s216
      %s218 = sphi 0, %s216
      %s219 = sphi 0, %s218
      %s233 = sphi 0, %s219
      %s237 = sphi 0, %s237
      %s239 = sphi 0, %s237
      %s240 = sphi 0, %s239
      %s254 = sphi 0, %s240
      %s258 = sphi 0, %s258
      %s260 = sphi 0, %s258
      %s261 = sphi 0, %s260
      %s275 = sphi 0, %s261
      %s279 = sphi 0, %s279
      %s281 = sphi 0, %s279
      %s282 = sphi 0, %s281
      %s296 = sphi 0, %s282
      %s300 = sphi 0, %s300
      %s302 = sphi 0, %s300
      %s303 = sphi 0, %s302
      %s317 = sphi 0, %s303
      %s321 = sphi 0, %s321
      %s323 = sphi 0, %s321
      %s324 = sphi 0, %s323
      %s338 = sphi 0, %s324
      %s342 = sphi 0, %s342
      %s344 = sphi 0, %s342
      %s345 = sphi 0, %s344
      %s359 = sphi 0, %s345
      %s363 = sphi 0, %s363
      %s365 = sphi 0, %s363
      %s366 = sphi 0, %s365
      %s380 = sphi 0, %s366
      %s384 = sphi 0, %s384
      %s386 = sphi 0, %s384
      %s387 = sphi 0, %s386
      %s401 = sphi 0, %s387
      %s405 = sphi 0, %s405
      %s407 = sphi 0, %s405
      %s408 = sphi 0, %s407
      %s422 = sphi 0, %s408
      %s426 = sphi 0, %s426
      %s428 = sphi 0, %s426
      %s429 = sphi 0, %s428
      %s443 = sphi 0, %s429
      %s447 = sphi 0, %s447
      %s449 = sphi 0, %s447
      %s450 = sphi 0, %s449
      %s464 = sphi 0, %s450
      %s468 = sphi 0, %s468
      %s470 = sphi 0, %s468
      %s471 = sphi 0, %s470
      %s485 = sphi 0, %s471
      %s489 = sphi 0, %s489
      %s491 = sphi 0, %s489
      %s492 = sphi 0, %s491
      %s506 = sphi 0, %s492
      %s510 = sphi 0, %s510
      %s512 = sphi 0, %s510
      %s513 = sphi 0, %s512
      %s527 = sphi 0, %s513
      %s531 = sphi 0, %s531
      %s533 = sphi 0, %s531
      %s534 = sphi 0, %s533
      %s548 = sphi 0, %s534
      %s552 = sphi 0, %s552
      %s554 = sphi 0, %s552
      %s555 = sphi 0, %s554
      %s569 = sphi 0, %s555
      %s573 = sphi 0, %s573
      %s575 = sphi 0, %s573
      %s576 = sphi 0, %s575
      %s590 = sphi 0, %s576
      %s596 = sphi 0, %s598
      %s599 = sphi 0, %s596
      %s600 = sphi 0, %s599
      %s616 = sphi 0, %s600
    $region4: #{_lambda_.1} parent=1 // loop_header_branch
      %38 = sbr.rel (%p36) target = $region8
    $region5: #{_lambda_.1} parent=1 // loop_body
      %s40 = ssub.s32 %s35, 1
      %s41 = ssub.s32 %s35, 2
      %s42 = sadd.s32 %s35, 1
      %s43 = ssub.s32 %s35, %s42
      %p44 = scmp.eq.s32.totalorder %s43, 0
      %s46 = sadd.s32 %s45, 1
      %s47 = scalar_select %p44, %s45, %s46
      %p50 = pneg %p44
      %p51 = scmp.eq.s32.totalorder %s35, 1
      %p52 = por %p50, %p51
      %p53 = scmp.ne.s32.totalorder %s45, %s48
      %p54 = scmp.eq.s32.totalorder %s35, 0
      %p55 = por %p53, %p54
      %p56 = scmp.ne.s32.totalorder %s45, %s48
      %p57 = scmp.eq.s32.totalorder %s40, 1
      %p58 = por %p56, %p57
      %p59 = scmp.ne.s32.totalorder %s48, %s49
      %p60 = scmp.eq.s32.totalorder %s40, 0
      %p61 = por %p59, %p60
      %p62 = scmp.ne.s32.totalorder %s48, %s49
      %p63 = scmp.eq.s32.totalorder %s41, 1
      %p64 = por %p62, %p63
      %p66 = scmp.ne.s32.totalorder %s49, %s65
      %p67 = scmp.eq.s32.totalorder %s41, 0
      %p68 = por %p66, %p67
      %s70 = sadd.s32 %s69, 1
      %p73 = scmp.eq.s32.totalorder %s35, 1
      %p74 = scmp.ne.s32.totalorder %s69, %s71
      %p75 = scmp.eq.s32.totalorder %s35, 0
      %p76 = por %p74, %p75
      %p77 = scmp.ne.s32.totalorder %s69, %s71
      %p78 = scmp.eq.s32.totalorder %s40, 1
      %p79 = por %p77, %p78
      %p80 = scmp.ne.s32.totalorder %s71, %s72
      %p81 = scmp.eq.s32.totalorder %s40, 0
      %p82 = por %p80, %p81
      %p83 = scmp.ne.s32.totalorder %s71, %s72
      %p84 = scmp.eq.s32.totalorder %s41, 1
      %p85 = por %p83, %p84
      %p87 = scmp.ne.s32.totalorder %s72, %s86
      %p88 = scmp.eq.s32.totalorder %s41, 0
      %p89 = por %p87, %p88
      %s91 = sadd.s32 %s90, 1
      %p94 = scmp.eq.s32.totalorder %s35, 1
      %p95 = scmp.ne.s32.totalorder %s90, %s92
      %p96 = scmp.eq.s32.totalorder %s35, 0
      %p97 = por %p95, %p96
      %p98 = scmp.ne.s32.totalorder %s90, %s92
      %p99 = scmp.eq.s32.totalorder %s40, 1
      %p100 = por %p98, %p99
      %p101 = scmp.ne.s32.totalorder %s92, %s93
      %p102 = scmp.eq.s32.totalorder %s40, 0
      %p103 = por %p101, %p102
      %p104 = scmp.ne.s32.totalorder %s92, %s93
      %p105 = scmp.eq.s32.totalorder %s41, 1
      %p106 = por %p104, %p105
      %p108 = scmp.ne.s32.totalorder %s93, %s107
      %p109 = scmp.eq.s32.totalorder %s41, 0
      %p110 = por %p108, %p109
      %s112 = sadd.s32 %s111, 1
      %p115 = scmp.eq.s32.totalorder %s35, 1
      %p116 = scmp.ne.s32.totalorder %s111, %s113
      %p117 = scmp.eq.s32.totalorder %s35, 0
      %p118 = por %p116, %p117
      %p119 = scmp.ne.s32.totalorder %s111, %s113
      %p120 = scmp.eq.s32.totalorder %s40, 1
      %p121 = por %p119, %p120
      %p122 = scmp.ne.s32.totalorder %s113, %s114
      %p123 = scmp.eq.s32.totalorder %s40, 0
      %p124 = por %p122, %p123
      %p125 = scmp.ne.s32.totalorder %s113, %s114
      %p126 = scmp.eq.s32.totalorder %s41, 1
      %p127 = por %p125, %p126
      %p129 = scmp.ne.s32.totalorder %s114, %s128
      %p130 = scmp.eq.s32.totalorder %s41, 0
      %p131 = por %p129, %p130
      %s133 = sadd.s32 %s132, 1
      %p136 = scmp.eq.s32.totalorder %s35, 1
      %p137 = scmp.ne.s32.totalorder %s132, %s134
      %p138 = scmp.eq.s32.totalorder %s35, 0
      %p139 = por %p137, %p138
      %p140 = scmp.ne.s32.totalorder %s132, %s134
      %p141 = scmp.eq.s32.totalorder %s40, 1
      %p142 = por %p140, %p141
      %p143 = scmp.ne.s32.totalorder %s134, %s135
      %p144 = scmp.eq.s32.totalorder %s40, 0
      %p145 = por %p143, %p144
      %p146 = scmp.ne.s32.totalorder %s134, %s135
      %p147 = scmp.eq.s32.totalorder %s41, 1
      %p148 = por %p146, %p147
      %p150 = scmp.ne.s32.totalorder %s135, %s149
      %p151 = scmp.eq.s32.totalorder %s41, 0
      %p152 = por %p150, %p151
      %s154 = sadd.s32 %s153, 1
      %p157 = scmp.eq.s32.totalorder %s35, 1
      %p158 = scmp.ne.s32.totalorder %s153, %s155
      %p159 = scmp.eq.s32.totalorder %s35, 0
      %p160 = por %p158, %p159
      %p161 = scmp.ne.s32.totalorder %s153, %s155
      %p162 = scmp.eq.s32.totalorder %s40, 1
      %p163 = por %p161, %p162
      %p164 = scmp.ne.s32.totalorder %s155, %s156
      %p165 = scmp.eq.s32.totalorder %s40, 0
      %p166 = por %p164, %p165
      %p167 = scmp.ne.s32.totalorder %s155, %s156
      %p168 = scmp.eq.s32.totalorder %s41, 1
      %p169 = por %p167, %p168
      %p171 = scmp.ne.s32.totalorder %s156, %s170
      %p172 = scmp.eq.s32.totalorder %s41, 0
      %p173 = por %p171, %p172
      %s175 = sadd.s32 %s174, 1
      %p178 = scmp.eq.s32.totalorder %s35, 1
      %p179 = scmp.ne.s32.totalorder %s174, %s176
      %p180 = scmp.eq.s32.totalorder %s35, 0
      %p181 = por %p179, %p180
      %p182 = scmp.ne.s32.totalorder %s174, %s176
      %p183 = scmp.eq.s32.totalorder %s40, 1
      %p184 = por %p182, %p183
      %p185 = scmp.ne.s32.totalorder %s176, %s177
      %p186 = scmp.eq.s32.totalorder %s40, 0
      %p187 = por %p185, %p186
      %p188 = scmp.ne.s32.totalorder %s176, %s177
      %p189 = scmp.eq.s32.totalorder %s41, 1
      %p190 = por %p188, %p189
      %p192 = scmp.ne.s32.totalorder %s177, %s191
      %p193 = scmp.eq.s32.totalorder %s41, 0
      %p194 = por %p192, %p193
      %s196 = sadd.s32 %s195, 1
      %p199 = scmp.eq.s32.totalorder %s35, 1
      %p200 = scmp.ne.s32.totalorder %s195, %s197
      %p201 = scmp.eq.s32.totalorder %s35, 0
      %p202 = por %p200, %p201
      %p203 = scmp.ne.s32.totalorder %s195, %s197
      %p204 = scmp.eq.s32.totalorder %s40, 1
      %p205 = por %p203, %p204
      %p206 = scmp.ne.s32.totalorder %s197, %s198
      %p207 = scmp.eq.s32.totalorder %s40, 0
      %p208 = por %p206, %p207
      %p209 = scmp.ne.s32.totalorder %s197, %s198
      %p210 = scmp.eq.s32.totalorder %s41, 1
      %p211 = por %p209, %p210
      %p213 = scmp.ne.s32.totalorder %s198, %s212
      %p214 = scmp.eq.s32.totalorder %s41, 0
      %p215 = por %p213, %p214
      %s217 = sadd.s32 %s216, 1
      %p220 = scmp.eq.s32.totalorder %s35, 1
      %p221 = scmp.ne.s32.totalorder %s216, %s218
      %p222 = scmp.eq.s32.totalorder %s35, 0
      %p223 = por %p221, %p222
      %p224 = scmp.ne.s32.totalorder %s216, %s218
      %p225 = scmp.eq.s32.totalorder %s40, 1
      %p226 = por %p224, %p225
      %p227 = scmp.ne.s32.totalorder %s218, %s219
      %p228 = scmp.eq.s32.totalorder %s40, 0
      %p229 = por %p227, %p228
      %p230 = scmp.ne.s32.totalorder %s218, %s219
      %p231 = scmp.eq.s32.totalorder %s41, 1
      %p232 = por %p230, %p231
      %p234 = scmp.ne.s32.totalorder %s219, %s233
      %p235 = scmp.eq.s32.totalorder %s41, 0
      %p236 = por %p234, %p235
      %s238 = sadd.s32 %s237, 1
      %p241 = scmp.eq.s32.totalorder %s35, 1
      %p242 = scmp.ne.s32.totalorder %s237, %s239
      %p243 = scmp.eq.s32.totalorder %s35, 0
      %p244 = por %p242, %p243
      %p245 = scmp.ne.s32.totalorder %s237, %s239
      %p246 = scmp.eq.s32.totalorder %s40, 1
      %p247 = por %p245, %p246
      %p248 = scmp.ne.s32.totalorder %s239, %s240
      %p249 = scmp.eq.s32.totalorder %s40, 0
      %p250 = por %p248, %p249
      %p251 = scmp.ne.s32.totalorder %s239, %s240
      %p252 = scmp.eq.s32.totalorder %s41, 1
      %p253 = por %p251, %p252
      %p255 = scmp.ne.s32.totalorder %s240, %s254
      %p256 = scmp.eq.s32.totalorder %s41, 0
      %p257 = por %p255, %p256
      %s259 = sadd.s32 %s258, 1
      %p262 = scmp.eq.s32.totalorder %s35, 1
      %p263 = scmp.ne.s32.totalorder %s258, %s260
      %p264 = scmp.eq.s32.totalorder %s35, 0
      %p265 = por %p263, %p264
      %p266 = scmp.ne.s32.totalorder %s258, %s260
      %p267 = scmp.eq.s32.totalorder %s40, 1
      %p268 = por %p266, %p267
      %p269 = scmp.ne.s32.totalorder %s260, %s261
      %p270 = scmp.eq.s32.totalorder %s40, 0
      %p271 = por %p269, %p270
      %p272 = scmp.ne.s32.totalorder %s260, %s261
      %p273 = scmp.eq.s32.totalorder %s41, 1
      %p274 = por %p272, %p273
      %p276 = scmp.ne.s32.totalorder %s261, %s275
      %p277 = scmp.eq.s32.totalorder %s41, 0
      %p278 = por %p276, %p277
      %s280 = sadd.s32 %s279, 1
      %p283 = scmp.eq.s32.totalorder %s35, 1
      %p284 = scmp.ne.s32.totalorder %s279, %s281
      %p285 = scmp.eq.s32.totalorder %s35, 0
      %p286 = por %p284, %p285
      %p287 = scmp.ne.s32.totalorder %s279, %s281
      %p288 = scmp.eq.s32.totalorder %s40, 1
      %p289 = por %p287, %p288
      %p290 = scmp.ne.s32.totalorder %s281, %s282
      %p291 = scmp.eq.s32.totalorder %s40, 0
      %p292 = por %p290, %p291
      %p293 = scmp.ne.s32.totalorder %s281, %s282
      %p294 = scmp.eq.s32.totalorder %s41, 1
      %p295 = por %p293, %p294
      %p297 = scmp.ne.s32.totalorder %s282, %s296
      %p298 = scmp.eq.s32.totalorder %s41, 0
      %p299 = por %p297, %p298
      %s301 = sadd.s32 %s300, 1
      %p304 = scmp.eq.s32.totalorder %s35, 1
      %p305 = scmp.ne.s32.totalorder %s300, %s302
      %p306 = scmp.eq.s32.totalorder %s35, 0
      %p307 = por %p305, %p306
      %p308 = scmp.ne.s32.totalorder %s300, %s302
      %p309 = scmp.eq.s32.totalorder %s40, 1
      %p310 = por %p308, %p309
      %p311 = scmp.ne.s32.totalorder %s302, %s303
      %p312 = scmp.eq.s32.totalorder %s40, 0
      %p313 = por %p311, %p312
      %p314 = scmp.ne.s32.totalorder %s302, %s303
      %p315 = scmp.eq.s32.totalorder %s41, 1
      %p316 = por %p314, %p315
      %p318 = scmp.ne.s32.totalorder %s303, %s317
      %p319 = scmp.eq.s32.totalorder %s41, 0
      %p320 = por %p318, %p319
      %s322 = sadd.s32 %s321, 1
      %p325 = scmp.eq.s32.totalorder %s35, 1
      %p326 = scmp.ne.s32.totalorder %s321, %s323
      %p327 = scmp.eq.s32.totalorder %s35, 0
      %p328 = por %p326, %p327
      %p329 = scmp.ne.s32.totalorder %s321, %s323
      %p330 = scmp.eq.s32.totalorder %s40, 1
      %p331 = por %p329, %p330
      %p332 = scmp.ne.s32.totalorder %s323, %s324
      %p333 = scmp.eq.s32.totalorder %s40, 0
      %p334 = por %p332, %p333
      %p335 = scmp.ne.s32.totalorder %s323, %s324
      %p336 = scmp.eq.s32.totalorder %s41, 1
      %p337 = por %p335, %p336
      %p339 = scmp.ne.s32.totalorder %s324, %s338
      %p340 = scmp.eq.s32.totalorder %s41, 0
      %p341 = por %p339, %p340
      %s343 = sadd.s32 %s342, 1
      %p346 = scmp.eq.s32.totalorder %s35, 1
      %p347 = scmp.ne.s32.totalorder %s342, %s344
      %p348 = scmp.eq.s32.totalorder %s35, 0
      %p349 = por %p347, %p348
      %p350 = scmp.ne.s32.totalorder %s342, %s344
      %p351 = scmp.eq.s32.totalorder %s40, 1
      %p352 = por %p350, %p351
      %p353 = scmp.ne.s32.totalorder %s344, %s345
      %p354 = scmp.eq.s32.totalorder %s40, 0
      %p355 = por %p353, %p354
      %p356 = scmp.ne.s32.totalorder %s344, %s345
      %p357 = scmp.eq.s32.totalorder %s41, 1
      %p358 = por %p356, %p357
      %p360 = scmp.ne.s32.totalorder %s345, %s359
      %p361 = scmp.eq.s32.totalorder %s41, 0
      %p362 = por %p360, %p361
      %s364 = sadd.s32 %s363, 1
      %p367 = scmp.eq.s32.totalorder %s35, 1
      %p368 = scmp.ne.s32.totalorder %s363, %s365
      %p369 = scmp.eq.s32.totalorder %s35, 0
      %p370 = por %p368, %p369
      %p371 = scmp.ne.s32.totalorder %s363, %s365
      %p372 = scmp.eq.s32.totalorder %s40, 1
      %p373 = por %p371, %p372
      %p374 = scmp.ne.s32.totalorder %s365, %s366
      %p375 = scmp.eq.s32.totalorder %s40, 0
      %p376 = por %p374, %p375
      %p377 = scmp.ne.s32.totalorder %s365, %s366
      %p378 = scmp.eq.s32.totalorder %s41, 1
      %p379 = por %p377, %p378
      %p381 = scmp.ne.s32.totalorder %s366, %s380
      %p382 = scmp.eq.s32.totalorder %s41, 0
      %p383 = por %p381, %p382
      %s385 = sadd.s32 %s384, 1
      %p388 = scmp.eq.s32.totalorder %s35, 1
      %p389 = scmp.ne.s32.totalorder %s384, %s386
      %p390 = scmp.eq.s32.totalorder %s35, 0
      %p391 = por %p389, %p390
      %p392 = scmp.ne.s32.totalorder %s384, %s386
      %p393 = scmp.eq.s32.totalorder %s40, 1
      %p394 = por %p392, %p393
      %p395 = scmp.ne.s32.totalorder %s386, %s387
      %p396 = scmp.eq.s32.totalorder %s40, 0
      %p397 = por %p395, %p396
      %p398 = scmp.ne.s32.totalorder %s386, %s387
      %p399 = scmp.eq.s32.totalorder %s41, 1
      %p400 = por %p398, %p399
      %p402 = scmp.ne.s32.totalorder %s387, %s401
      %p403 = scmp.eq.s32.totalorder %s41, 0
      %p404 = por %p402, %p403
      %s406 = sadd.s32 %s405, 1
      %p409 = scmp.eq.s32.totalorder %s35, 1
      %p410 = scmp.ne.s32.totalorder %s405, %s407
      %p411 = scmp.eq.s32.totalorder %s35, 0
      %p412 = por %p410, %p411
      %p413 = scmp.ne.s32.totalorder %s405, %s407
      %p414 = scmp.eq.s32.totalorder %s40, 1
      %p415 = por %p413, %p414
      %p416 = scmp.ne.s32.totalorder %s407, %s408
      %p417 = scmp.eq.s32.totalorder %s40, 0
      %p418 = por %p416, %p417
      %p419 = scmp.ne.s32.totalorder %s407, %s408
      %p420 = scmp.eq.s32.totalorder %s41, 1
      %p421 = por %p419, %p420
      %p423 = scmp.ne.s32.totalorder %s408, %s422
      %p424 = scmp.eq.s32.totalorder %s41, 0
      %p425 = por %p423, %p424
      %s427 = sadd.s32 %s426, 1
      %p430 = scmp.eq.s32.totalorder %s35, 1
      %p431 = scmp.ne.s32.totalorder %s426, %s428
      %p432 = scmp.eq.s32.totalorder %s35, 0
      %p433 = por %p431, %p432
      %p434 = scmp.ne.s32.totalorder %s426, %s428
      %p435 = scmp.eq.s32.totalorder %s40, 1
      %p436 = por %p434, %p435
      %p437 = scmp.ne.s32.totalorder %s428, %s429
      %p438 = scmp.eq.s32.totalorder %s40, 0
      %p439 = por %p437, %p438
      %p440 = scmp.ne.s32.totalorder %s428, %s429
      %p441 = scmp.eq.s32.totalorder %s41, 1
      %p442 = por %p440, %p441
      %p444 = scmp.ne.s32.totalorder %s429, %s443
      %p445 = scmp.eq.s32.totalorder %s41, 0
      %p446 = por %p444, %p445
      %s448 = sadd.s32 %s447, 1
      %p451 = scmp.eq.s32.totalorder %s35, 1
      %p452 = scmp.ne.s32.totalorder %s447, %s449
      %p453 = scmp.eq.s32.totalorder %s35, 0
      %p454 = por %p452, %p453
      %p455 = scmp.ne.s32.totalorder %s447, %s449
      %p456 = scmp.eq.s32.totalorder %s40, 1
      %p457 = por %p455, %p456
      %p458 = scmp.ne.s32.totalorder %s449, %s450
      %p459 = scmp.eq.s32.totalorder %s40, 0
      %p460 = por %p458, %p459
      %p461 = scmp.ne.s32.totalorder %s449, %s450
      %p462 = scmp.eq.s32.totalorder %s41, 1
      %p463 = por %p461, %p462
      %p465 = scmp.ne.s32.totalorder %s450, %s464
      %p466 = scmp.eq.s32.totalorder %s41, 0
      %p467 = por %p465, %p466
      %s469 = sadd.s32 %s468, 1
      %p472 = scmp.eq.s32.totalorder %s35, 1
      %p473 = scmp.ne.s32.totalorder %s468, %s470
      %p474 = scmp.eq.s32.totalorder %s35, 0
      %p475 = por %p473, %p474
      %p476 = scmp.ne.s32.totalorder %s468, %s470
      %p477 = scmp.eq.s32.totalorder %s40, 1
      %p478 = por %p476, %p477
      %p479 = scmp.ne.s32.totalorder %s470, %s471
      %p480 = scmp.eq.s32.totalorder %s40, 0
      %p481 = por %p479, %p480
      %p482 = scmp.ne.s32.totalorder %s470, %s471
      %p483 = scmp.eq.s32.totalorder %s41, 1
      %p484 = por %p482, %p483
      %p486 = scmp.ne.s32.totalorder %s471, %s485
      %p487 = scmp.eq.s32.totalorder %s41, 0
      %p488 = por %p486, %p487
      %s490 = sadd.s32 %s489, 1
      %p493 = scmp.eq.s32.totalorder %s35, 1
      %p494 = scmp.ne.s32.totalorder %s489, %s491
      %p495 = scmp.eq.s32.totalorder %s35, 0
      %p496 = por %p494, %p495
      %p497 = scmp.ne.s32.totalorder %s489, %s491
      %p498 = scmp.eq.s32.totalorder %s40, 1
      %p499 = por %p497, %p498
      %p500 = scmp.ne.s32.totalorder %s491, %s492
      %p501 = scmp.eq.s32.totalorder %s40, 0
      %p502 = por %p500, %p501
      %p503 = scmp.ne.s32.totalorder %s491, %s492
      %p504 = scmp.eq.s32.totalorder %s41, 1
      %p505 = por %p503, %p504
      %p507 = scmp.ne.s32.totalorder %s492, %s506
      %p508 = scmp.eq.s32.totalorder %s41, 0
      %p509 = por %p507, %p508
      %s511 = sadd.s32 %s510, 1
      %p514 = scmp.eq.s32.totalorder %s35, 1
      %p515 = scmp.ne.s32.totalorder %s510, %s512
      %p516 = scmp.eq.s32.totalorder %s35, 0
      %p517 = por %p515, %p516
      %p518 = scmp.ne.s32.totalorder %s510, %s512
      %p519 = scmp.eq.s32.totalorder %s40, 1
      %p520 = por %p518, %p519
      %p521 = scmp.ne.s32.totalorder %s512, %s513
      %p522 = scmp.eq.s32.totalorder %s40, 0
      %p523 = por %p521, %p522
      %p524 = scmp.ne.s32.totalorder %s512, %s513
      %p525 = scmp.eq.s32.totalorder %s41, 1
      %p526 = por %p524, %p525
      %p528 = scmp.ne.s32.totalorder %s513, %s527
      %p529 = scmp.eq.s32.totalorder %s41, 0
      %p530 = por %p528, %p529
      %s532 = sadd.s32 %s531, 1
      %p535 = scmp.eq.s32.totalorder %s35, 1
      %p536 = scmp.ne.s32.totalorder %s531, %s533
      %p537 = scmp.eq.s32.totalorder %s35, 0
      %p538 = por %p536, %p537
      %p539 = scmp.ne.s32.totalorder %s531, %s533
      %p540 = scmp.eq.s32.totalorder %s40, 1
      %p541 = por %p539, %p540
      %p542 = scmp.ne.s32.totalorder %s533, %s534
      %p543 = scmp.eq.s32.totalorder %s40, 0
      %p544 = por %p542, %p543
      %p545 = scmp.ne.s32.totalorder %s533, %s534
      %p546 = scmp.eq.s32.totalorder %s41, 1
      %p547 = por %p545, %p546
      %p549 = scmp.ne.s32.totalorder %s534, %s548
      %p550 = scmp.eq.s32.totalorder %s41, 0
      %p551 = por %p549, %p550
      %s553 = sadd.s32 %s552, 1
      %p556 = scmp.eq.s32.totalorder %s35, 1
      %p557 = scmp.ne.s32.totalorder %s552, %s554
      %p558 = scmp.eq.s32.totalorder %s35, 0
      %p559 = por %p557, %p558
      %p560 = scmp.ne.s32.totalorder %s552, %s554
      %p561 = scmp.eq.s32.totalorder %s40, 1
      %p562 = por %p560, %p561
      %p563 = scmp.ne.s32.totalorder %s554, %s555
      %p564 = scmp.eq.s32.totalorder %s40, 0
      %p565 = por %p563, %p564
      %p566 = scmp.ne.s32.totalorder %s554, %s555
      %p567 = scmp.eq.s32.totalorder %s41, 1
      %p568 = por %p566, %p567
      %p570 = scmp.ne.s32.totalorder %s555, %s569
      %p571 = scmp.eq.s32.totalorder %s41, 0
      %p572 = por %p570, %p571
      %s574 = sadd.s32 %s573, 1
      %p577 = scmp.eq.s32.totalorder %s35, 1
      %p578 = scmp.ne.s32.totalorder %s573, %s575
      %p579 = scmp.eq.s32.totalorder %s35, 0
      %p580 = por %p578, %p579
      %p581 = scmp.ne.s32.totalorder %s573, %s575
      %p582 = scmp.eq.s32.totalorder %s40, 1
      %p583 = por %p581, %p582
      %p584 = scmp.ne.s32.totalorder %s575, %s576
      %p585 = scmp.eq.s32.totalorder %s40, 0
      %p586 = por %p584, %p585
      %p587 = scmp.ne.s32.totalorder %s575, %s576
      %p588 = scmp.eq.s32.totalorder %s41, 1
      %p589 = por %p587, %p588
      %p591 = scmp.ne.s32.totalorder %s576, %s590
      %p592 = scmp.eq.s32.totalorder %s41, 0
      %p593 = por %p591, %p592
      %s594 = ssub.s32 %s35, %s42
      %p595 = scmp.eq.s32.totalorder %s594, 0
      %s597 = sadd.s32 %s596, 1
      %s598 = scalar_select %p595, %s596, %s597
      %p601 = pneg %p595
      %p602 = scmp.eq.s32.totalorder %s35, 1
      %p603 = por %p601, %p602
      %p604 = scmp.ne.s32.totalorder %s596, %s599
      %p605 = scmp.eq.s32.totalorder %s35, 0
      %p606 = por %p604, %p605
      %p607 = scmp.ne.s32.totalorder %s596, %s599
      %p608 = scmp.eq.s32.totalorder %s40, 1
      %p609 = por %p607, %p608
      %p610 = scmp.ne.s32.totalorder %s599, %s600
      %p611 = scmp.eq.s32.totalorder %s40, 0
      %p612 = por %p610, %p611
      %p613 = scmp.ne.s32.totalorder %s599, %s600
      %p614 = scmp.eq.s32.totalorder %s41, 1
      %p615 = por %p613, %p614
      %p617 = scmp.ne.s32.totalorder %s600, %s616
      %p618 = scmp.eq.s32.totalorder %s41, 0
      %p619 = por %p617, %p618
      %p620 = scmp.le.s32.totalorder 1, %s35
      %p621 = scmp.lt.s32.totalorder %s35, 3
      %p622 = pnand %p620, %p621
      %p623 = pneg %p622
      // Predicated region
      $region9: #{_lambda_.1} parent=5 // pred_check
        _
      $region10: #{_lambda_.1} parent=5 // pred_check_branch
        %625 = sbr.rel (%p622) target = $region12
      $region11: #{_lambda_.1} parent=5 // pred_region
        %s626 = ssub.s32 %s35, 1
        // Predicated region
        $region13: #{_lambda_.1} parent=11 // pred_check
          %p627 = pneg %p82
        $region14: #{_lambda_.1} parent=11 // pred_check_branch
          %629 = sbr.rel (%p627) target = $region16
        $region15: #{_lambda_.1} parent=11 // pred_region
          _
        $region16: #{_lambda_.1} parent=11 // pred_fallthru
          _
        // Predicated region
        $region17: #{_lambda_.1} parent=11 // pred_check
          %p630 = pneg %p103
        $region18: #{_lambda_.1} parent=11 // pred_check_branch
          %632 = sbr.rel (%p630) target = $region20
        $region19: #{_lambda_.1} parent=11 // pred_region
          _
        $region20: #{_lambda_.1} parent=11 // pred_fallthru
          _
        // Predicated region
        $region21: #{_lambda_.1} parent=11 // pred_check
          %p633 = pneg %p124
        $region22: #{_lambda_.1} parent=11 // pred_check_branch
          %635 = sbr.rel (%p633) target = $region24
        $region23: #{_lambda_.1} parent=11 // pred_region
          _
        $region24: #{_lambda_.1} parent=11 // pred_fallthru
          _
        // Predicated region
        $region25: #{_lambda_.1} parent=11 // pred_check
          %p636 = pneg %p145
        $region26: #{_lambda_.1} parent=11 // pred_check_branch
          %638 = sbr.rel (%p636) target = $region28
        $region27: #{_lambda_.1} parent=11 // pred_region
          _
        $region28: #{_lambda_.1} parent=11 // pred_fallthru
          _
        // Predicated region
        $region29: #{_lambda_.1} parent=11 // pred_check
          %p639 = pneg %p166
        $region30: #{_lambda_.1} parent=11 // pred_check_branch
          %641 = sbr.rel (%p639) target = $region32
        $region31: #{_lambda_.1} parent=11 // pred_region
          _
        $region32: #{_lambda_.1} parent=11 // pred_fallthru
          _
        // Predicated region
        $region33: #{_lambda_.1} parent=11 // pred_check
          %p642 = pneg %p187
        $region34: #{_lambda_.1} parent=11 // pred_check_branch
          %644 = sbr.rel (%p642) target = $region36
        $region35: #{_lambda_.1} parent=11 // pred_region
          _
        $region36: #{_lambda_.1} parent=11 // pred_fallthru
          _
        // Predicated region
        $region37: #{_lambda_.1} parent=11 // pred_check
          %p645 = pneg %p208
        $region38: #{_lambda_.1} parent=11 // pred_check_branch
          %647 = sbr.rel (%p645) target = $region40
        $region39: #{_lambda_.1} parent=11 // pred_region
          _
        $region40: #{_lambda_.1} parent=11 // pred_fallthru
          _
        // Predicated region
        $region41: #{_lambda_.1} parent=11 // pred_check
          %p648 = pneg %p229
        $region42: #{_lambda_.1} parent=11 // pred_check_branch
          %650 = sbr.rel (%p648) target = $region44
        $region43: #{_lambda_.1} parent=11 // pred_region
          _
        $region44: #{_lambda_.1} parent=11 // pred_fallthru
          _
        // Predicated region
        $region45: #{_lambda_.1} parent=11 // pred_check
          %p651 = pneg %p250
        $region46: #{_lambda_.1} parent=11 // pred_check_branch
          %653 = sbr.rel (%p651) target = $region48
        $region47: #{_lambda_.1} parent=11 // pred_region
          _
        $region48: #{_lambda_.1} parent=11 // pred_fallthru
          _
        // Predicated region
        $region49: #{_lambda_.1} parent=11 // pred_check
          %p654 = pneg %p271
        $region50: #{_lambda_.1} parent=11 // pred_check_branch
          %656 = sbr.rel (%p654) target = $region52
        $region51: #{_lambda_.1} parent=11 // pred_region
          _
        $region52: #{_lambda_.1} parent=11 // pred_fallthru
          _
        // Predicated region
        $region53: #{_lambda_.1} parent=11 // pred_check
          %p657 = pneg %p292
        $region54: #{_lambda_.1} parent=11 // pred_check_branch
          %659 = sbr.rel (%p657) target = $region56
        $region55: #{_lambda_.1} parent=11 // pred_region
          _
        $region56: #{_lambda_.1} parent=11 // pred_fallthru
          _
        // Predicated region
        $region57: #{_lambda_.1} parent=11 // pred_check
          %p660 = pneg %p313
        $region58: #{_lambda_.1} parent=11 // pred_check_branch
          %662 = sbr.rel (%p660) target = $region60
        $region59: #{_lambda_.1} parent=11 // pred_region
          _
        $region60: #{_lambda_.1} parent=11 // pred_fallthru
          _
        // Predicated region
        $region61: #{_lambda_.1} parent=11 // pred_check
          %p663 = pneg %p334
        $region62: #{_lambda_.1} parent=11 // pred_check_branch
          %665 = sbr.rel (%p663) target = $region64
        $region63: #{_lambda_.1} parent=11 // pred_region
          _
        $region64: #{_lambda_.1} parent=11 // pred_fallthru
          _
        // Predicated region
        $region65: #{_lambda_.1} parent=11 // pred_check
          %p666 = pneg %p355
        $region66: #{_lambda_.1} parent=11 // pred_check_branch
          %668 = sbr.rel (%p666) target = $region68
        $region67: #{_lambda_.1} parent=11 // pred_region
          _
        $region68: #{_lambda_.1} parent=11 // pred_fallthru
          _
        // Predicated region
        $region69: #{_lambda_.1} parent=11 // pred_check
          %p669 = pneg %p376
        $region70: #{_lambda_.1} parent=11 // pred_check_branch
          %671 = sbr.rel (%p669) target = $region72
        $region71: #{_lambda_.1} parent=11 // pred_region
          _
        $region72: #{_lambda_.1} parent=11 // pred_fallthru
          _
        // Predicated region
        $region73: #{_lambda_.1} parent=11 // pred_check
          %p672 = pneg %p397
        $region74: #{_lambda_.1} parent=11 // pred_check_branch
          %674 = sbr.rel (%p672) target = $region76
        $region75: #{_lambda_.1} parent=11 // pred_region
          _
        $region76: #{_lambda_.1} parent=11 // pred_fallthru
          _
        // Predicated region
        $region77: #{_lambda_.1} parent=11 // pred_check
          %p675 = pneg %p418
        $region78: #{_lambda_.1} parent=11 // pred_check_branch
          %677 = sbr.rel (%p675) target = $region80
        $region79: #{_lambda_.1} parent=11 // pred_region
          _
        $region80: #{_lambda_.1} parent=11 // pred_fallthru
          _
        // Predicated region
        $region81: #{_lambda_.1} parent=11 // pred_check
          %p678 = pneg %p439
        $region82: #{_lambda_.1} parent=11 // pred_check_branch
          %680 = sbr.rel (%p678) target = $region84
        $region83: #{_lambda_.1} parent=11 // pred_region
          _
        $region84: #{_lambda_.1} parent=11 // pred_fallthru
          _
        // Predicated region
        $region85: #{_lambda_.1} parent=11 // pred_check
          %p681 = pneg %p460
        $region86: #{_lambda_.1} parent=11 // pred_check_branch
          %683 = sbr.rel (%p681) target = $region88
        $region87: #{_lambda_.1} parent=11 // pred_region
          _
        $region88: #{_lambda_.1} parent=11 // pred_fallthru
          _
        // Predicated region
        $region89: #{_lambda_.1} parent=11 // pred_check
          %p684 = pneg %p481
        $region90: #{_lambda_.1} parent=11 // pred_check_branch
          %686 = sbr.rel (%p684) target = $region92
        $region91: #{_lambda_.1} parent=11 // pred_region
          _
        $region92: #{_lambda_.1} parent=11 // pred_fallthru
          _
        // Predicated region
        $region93: #{_lambda_.1} parent=11 // pred_check
          %p687 = pneg %p502
        $region94: #{_lambda_.1} parent=11 // pred_check_branch
          %689 = sbr.rel (%p687) target = $region96
        $region95: #{_lambda_.1} parent=11 // pred_region
          _
        $region96: #{_lambda_.1} parent=11 // pred_fallthru
          _
        // Predicated region
        $region97: #{_lambda_.1} parent=11 // pred_check
          %p690 = pneg %p523
        $region98: #{_lambda_.1} parent=11 // pred_check_branch
          %692 = sbr.rel (%p690) target = $region100
        $region99: #{_lambda_.1} parent=11 // pred_region
          _
        $region100: #{_lambda_.1} parent=11 // pred_fallthru
          _
        // Predicated region
        $region101: #{_lambda_.1} parent=11 // pred_check
          %p693 = pneg %p544
        $region102: #{_lambda_.1} parent=11 // pred_check_branch
          %695 = sbr.rel (%p693) target = $region104
        $region103: #{_lambda_.1} parent=11 // pred_region
          _
        $region104: #{_lambda_.1} parent=11 // pred_fallthru
          _
        // Predicated region
        $region105: #{_lambda_.1} parent=11 // pred_check
          %p696 = pneg %p565
        $region106: #{_lambda_.1} parent=11 // pred_check_branch
          %698 = sbr.rel (%p696) target = $region108
        $region107: #{_lambda_.1} parent=11 // pred_region
          _
        $region108: #{_lambda_.1} parent=11 // pred_fallthru
          _
        // Predicated region
        $region109: #{_lambda_.1} parent=11 // pred_check
          %p699 = pneg %p586
        $region110: #{_lambda_.1} parent=11 // pred_check_branch
          %701 = sbr.rel (%p699) target = $region112
        $region111: #{_lambda_.1} parent=11 // pred_region
          _
        $region112: #{_lambda_.1} parent=11 // pred_fallthru
          _
      $region12: #{_lambda_.1} parent=5 // pred_fallthru
        _
      %p702 = scmp.lt.s32.totalorder %s35, 2
      // Predicated region
      $region113: #{_lambda_.1} parent=5 // pred_check
        %p703 = pneg %p702
      $region114: #{_lambda_.1} parent=5 // pred_check_branch
        %705 = sbr.rel (%p703) target = $region116
      $region115: #{_lambda_.1} parent=5 // pred_region
        // Predicated region
        $region117: #{_lambda_.1} parent=115 // pred_check
          %p706 = pneg %p55
        $region118: #{_lambda_.1} parent=115 // pred_check_branch
          %708 = sbr.rel (%p706) target = $region120
        $region119: #{_lambda_.1} parent=115 // pred_region
          %p709 = scmp.lt.s32.totalorder %s35, 1
          %s710 = scalar_select %p709, %s35, 1
          %s711 = smul.addr %s710, 8
          %s712 = smul.addr %s711, 4
          %s713 = scalar_lea.vmem %s0, %s712
        $region120: #{_lambda_.1} parent=115 // pred_fallthru
          _
      $region116: #{_lambda_.1} parent=5 // pred_fallthru
        _
      %p714 = scmp.le.s32.totalorder 1, %s35
      %p715 = scmp.lt.s32.totalorder %s35, 3
      %p716 = pnand %p714, %p715
      %p717 = pneg %p716
      // Predicated region
      $region121: #{_lambda_.1} parent=5 // pred_check
        _
      $region122: #{_lambda_.1} parent=5 // pred_check_branch
        %719 = sbr.rel (%p716) target = $region124
      $region123: #{_lambda_.1} parent=5 // pred_region
        %s720 = ssub.s32 %s35, 1
        %p721 = scmp.lt.s32.totalorder %s40, 1
        %s722 = scalar_select %p721, %s40, 1
        %s723 = smul.addr %s722, 8
        %s724 = smul.addr %s723, 4
        %s725 = scalar_lea.vmem %s0, %s724
        %p726 = pneg %p61
        %p727 = pneg %p58
        %p728 = pneg %p82
        %p729 = pneg %p79
        %p730 = pneg %p103
        %p731 = pneg %p100
        %p732 = pneg %p124
        %p733 = pneg %p121
        %p734 = pneg %p145
        %p735 = pneg %p142
        %p736 = pneg %p166
        %p737 = pneg %p163
        %p738 = pneg %p187
        %p739 = pneg %p184
        %p740 = pneg %p208
        %p741 = pneg %p205
        %p742 = pneg %p229
        %p743 = pneg %p226
        %p744 = pneg %p250
        %p745 = pneg %p247
        %p746 = pneg %p271
        %p747 = pneg %p268
        %p748 = pneg %p292
        %p749 = pneg %p289
        %p750 = pneg %p313
        %p751 = pneg %p310
        %p752 = pneg %p334
        %p753 = pneg %p331
        %p754 = pneg %p355
        %p755 = pneg %p352
        %p756 = pneg %p376
        %p757 = pneg %p373
        %p758 = pneg %p397
        %p759 = pneg %p394
        %p760 = pneg %p418
        %p761 = pneg %p415
        %p762 = pneg %p439
        %p763 = pneg %p436
        %p764 = pneg %p460
        %p765 = pneg %p457
        %p766 = pneg %p481
        %p767 = pneg %p478
        %p768 = pneg %p502
        %p769 = pneg %p499
        %p770 = pneg %p523
        %p771 = pneg %p520
        %p772 = pneg %p544
        %p773 = pneg %p541
        %p774 = pneg %p565
        %p775 = pneg %p562
        %p776 = pneg %p586
        %p777 = pneg %p583
        %p778 = pneg %p612
        %p779 = pneg %p609
        %s780 = sand.u32 %s599, 1
        %s781 = scalar_lea.sflag [#allocation3], %s780
        %s782 = sand.u32 %s599, 1
        %s783 = scalar_lea.vmem [#allocation2], %s782
        %p784 = scmp.lt.s32.totalorder %s40, 1
        %s785 = scalar_select %p784, %s40, 1
        %s786 = smul.addr %s785, 8
        %s787 = smul.addr %s786, 4
        %s788 = scalar_lea.vmem %s0, %s787
        %v790 = vld [vmem:[%s788] sm:$0xf]
        %v791 = vld [vmem:[%s788 + $0x4] sm:$0xf]
        %v792 = vld [vmem:[%s788 + $0x8] sm:$0xf]
        %v793 = vld [vmem:[%s788 + $0xc] sm:$0xf]
        %v794 = vld [vmem:[%s788 + $0x10] sm:$0xf]
        %v795 = vld [vmem:[%s788 + $0x14] sm:$0xf]
        %v796 = vld [vmem:[%s788 + $0x18] sm:$0xf]
        %v797 = vld [vmem:[%s788 + $0x1c] sm:$0xf]
        %v798 = vld [vmem:[%s1] sm:$0xf]
        %v799 = vld [vmem:[%s1 + $0x4] sm:$0xf]
        %v800 = vld [vmem:[%s5] sm:$0xff]
        %v801 = vld [vmem:[%s5 + $0x8] sm:$0x7]
        %v802 = vld [vmem:[%s2] sm:$0xff]
        %v803 = vld [vmem:[%s2 + $0x8] sm:$0xf]
        %v804 = vld [vmem:[%s2 + $0xc] sm:$0xff]
        %v805 = vld [vmem:[%s2 + $0x14] sm:$0xf]
        %v806 = vld [vmem:[%s2 + $0x18] sm:$0xff]
        %v807 = vld [vmem:[%s2 + $0x20] sm:$0xf]
        %v808 = vld [vmem:[%s2 + $0x24] sm:$0xff]
        %v809 = vld [vmem:[%s2 + $0x2c] sm:$0xf]
        %v810 = vld [vmem:[%s2 + $0x30] sm:$0xff]
        %v811 = vld [vmem:[%s2 + $0x38] sm:$0xf]
        %v812 = vld [vmem:[%s2 + $0x3c] sm:$0xff]
        %v813 = vld [vmem:[%s2 + $0x44] sm:$0xf]
        %v814 = vld [vmem:[%s2 + $0x48] sm:$0xff]
        %v815 = vld [vmem:[%s2 + $0x50] sm:$0xf]
        %v816 = vld [vmem:[%s2 + $0x54] sm:$0xff]
        %v817 = vld [vmem:[%s2 + $0x5c] sm:$0xf]
        %v818 = vld [vmem:[%s2 + $0x60] sm:$0xff]
        %v819 = vld [vmem:[%s2 + $0x68] sm:$0xf]
        %v820 = vld [vmem:[%s2 + $0x6c] sm:$0xff]
        %v821 = vld [vmem:[%s2 + $0x74] sm:$0xf]
        %v822 = vld [vmem:[%s2 + $0x78] sm:$0xff]
        %v823 = vld [vmem:[%s2 + $0x80] sm:$0xf]
        %v824 = vld [vmem:[%s2 + $0x84] sm:$0xff]
        %v825 = vld [vmem:[%s2 + $0x8c] sm:$0xf]
        %v826 = vld [vmem:[%s2 + $0x90] sm:$0xff]
        %v827 = vld [vmem:[%s2 + $0x98] sm:$0xf]
        %v828 = vld [vmem:[%s2 + $0x9c] sm:$0xff]
        %v829 = vld [vmem:[%s2 + $0xa4] sm:$0xf]
        %v830 = vld [vmem:[%s2 + $0xa8] sm:$0xff]
        %v831 = vld [vmem:[%s2 + $0xb0] sm:$0xf]
        %v832 = vld [vmem:[%s2 + $0xb4] sm:$0xff]
        %v833 = vld [vmem:[%s2 + $0xbc] sm:$0xf]
        %v836 = vunpack.c.l.b16 %v798
        %v837 = vunpack.c.l.b16 %v799
        %v838 = vpack.c.b16 %v837, %v836
        %v872 = vunpack.c.l.b16 %v802
        %v873 = vunpack.c.h.b16 %v802
        %v874 = vunpack.c.l.b16 %v803
        %v875 = vunpack.c.l.b16 %v804
        %v876 = vunpack.c.h.b16 %v804
        %v877 = vunpack.c.l.b16 %v805
        %v878 = vunpack.c.l.b16 %v806
        %v879 = vunpack.c.h.b16 %v806
        %v880 = vunpack.c.l.b16 %v807
        %v881 = vunpack.c.l.b16 %v808
        %v882 = vunpack.c.h.b16 %v808
        %v883 = vunpack.c.l.b16 %v809
        %v884 = vunpack.c.l.b16 %v810
        %v885 = vunpack.c.h.b16 %v810
        %v886 = vunpack.c.l.b16 %v811
        %v887 = vunpack.c.l.b16 %v812
        %v888 = vunpack.c.h.b16 %v812
        %v889 = vunpack.c.l.b16 %v813
        %v890 = vunpack.c.l.b16 %v814
        %v891 = vunpack.c.h.b16 %v814
        %v892 = vunpack.c.l.b16 %v815
        %v893 = vunpack.c.l.b16 %v816
        %v894 = vunpack.c.h.b16 %v816
        %v895 = vunpack.c.l.b16 %v817
        %v896 = vunpack.c.l.b16 %v818
        %v897 = vunpack.c.h.b16 %v818
        %v898 = vunpack.c.l.b16 %v819
        %v899 = vunpack.c.l.b16 %v820
        %v900 = vunpack.c.h.b16 %v820
        %v901 = vunpack.c.l.b16 %v821
        %v902 = vunpack.c.l.b16 %v822
        %v903 = vunpack.c.h.b16 %v822
        %v904 = vunpack.c.l.b16 %v823
        %v905 = vunpack.c.l.b16 %v824
        %v906 = vunpack.c.h.b16 %v824
        %v907 = vunpack.c.l.b16 %v825
        %v908 = vunpack.c.l.b16 %v826
        %v909 = vunpack.c.h.b16 %v826
        %v910 = vunpack.c.l.b16 %v827
        %v911 = vunpack.c.l.b16 %v828
        %v912 = vunpack.c.h.b16 %v828
        %v913 = vunpack.c.l.b16 %v829
        %v914 = vunpack.c.l.b16 %v830
        %v915 = vunpack.c.h.b16 %v830
        %v916 = vunpack.c.l.b16 %v831
        %v917 = vunpack.c.l.b16 %v832
        %v918 = vunpack.c.h.b16 %v832
        %v919 = vunpack.c.l.b16 %v833
        %v920 = vpack.c.b16 %v875, %v872
        %v921 = vpack.c.b16 %v876, %v873
        %v922 = vpack.c.b16 %v877, %v874
        %v923 = vpack.c.b16 %v881, %v878
        %v924 = vpack.c.b16 %v882, %v879
        %v925 = vpack.c.b16 %v883, %v880
        %v926 = vpack.c.b16 %v887, %v884
        %v927 = vpack.c.b16 %v888, %v885
        %v928 = vpack.c.b16 %v889, %v886
        %v929 = vpack.c.b16 %v893, %v890
        %v930 = vpack.c.b16 %v894, %v891
        %v931 = vpack.c.b16 %v895, %v892
        %v932 = vpack.c.b16 %v899, %v896
        %v933 = vpack.c.b16 %v900, %v897
        %v934 = vpack.c.b16 %v901, %v898
        %v935 = vpack.c.b16 %v905, %v902
        %v936 = vpack.c.b16 %v906, %v903
        %v937 = vpack.c.b16 %v907, %v904
        %v938 = vpack.c.b16 %v911, %v908
        %v939 = vpack.c.b16 %v912, %v909
        %v940 = vpack.c.b16 %v913, %v910
        %v941 = vpack.c.b16 %v917, %v914
        %v942 = vpack.c.b16 %v918, %v915
        %v943 = vpack.c.b16 %v919, %v916
        %968 = vmatprep.subr.bf16.mxu0 %v942
        %969 = vmatpush1.bf16.msra.mxu0 %v941
        %970 = vmatprep.subr.bf16.mxu0 %v939
        %971 = vmatpush1.bf16.msra.mxu0 %v938
        %972 = vmatprep.subr.bf16.mxu0 %v936
        %973 = vmatpush1.bf16.msra.mxu0 %v935
        %974 = vmatprep.subr.bf16.mxu0 %v933
        %975 = vmatpush1.bf16.msra.mxu0 %v932
        %976 = vmatprep.subr.bf16.mxu0 %v930
        %977 = vmatpush1.bf16.msra.mxu0 %v929
        %978 = vmatprep.subr.bf16.mxu0 %v927
        %979 = vmatpush1.bf16.msra.mxu0 %v926
        %980 = vmatprep.subr.bf16.mxu0 %v924
        %981 = vmatpush1.bf16.msra.mxu0 %v923
        %982 = vmatprep.subr.bf16.mxu0 %v921
        %983 = vmatpush1.bf16.msra.mxu0 %v920
        %984 = vmatprep.subr.bf16.mxu0 0
        %985 = vmatpush2.bf16.msra.mxu0 0
        %986 = vmatprep.subr.bf16.mxu0 0
        %987 = vmatpush2.bf16.msra.mxu0 0
        %988 = vmatprep.subr.bf16.mxu0 0
        %989 = vmatpush2.bf16.msra.mxu0 0
        %990 = vmatprep.subr.bf16.mxu0 0
        %991 = vmatpush2.bf16.msra.mxu0 0
        %992 = vmatprep.subr.bf16.mxu0 0
        %993 = vmatpush2.bf16.msra.mxu0 0
        %994 = vmatprep.subr.bf16.mxu0 0
        %995 = vmatpush2.bf16.msra.mxu0 0
        %996 = vmatprep.subr.bf16.mxu0 0
        %997 = vmatpush2.bf16.msra.mxu0 0
        %998 = vmatprep.subr.bf16.mxu0 0
        %999 = vmatpush2.bf16.msra.mxu0 0
        %1000 = vmatprep.mubr.bf16.mxu0 0
        %1001 = vmatmul.mubr.bf16.gmra.mxu0 %v838
        %v1002 = vpop.f32.mrf.mxu0
        %v1003 = vadd.f32 0.0, %v1002
        %v1004 = vpop.f32.mrf.mxu0
        %v1005 = vadd.f32 0.0, %v1004
        %v1006 = vpop.f32.mrf.mxu0
        %v1007 = vadd.f32 0.0, %v1006
        %v1008 = vpop.f32.mrf.mxu0
        %v1009 = vadd.f32 0.0, %v1008
        %1010 = vdwg.mxu0
        %1011 = vmatprep.subr.bf16.mxu0 0
        %1012 = vmatpush1.bf16.msra.mxu0 %v943
        %1013 = vmatprep.subr.bf16.mxu0 0
        %1014 = vmatpush1.bf16.msra.mxu0 %v940
        %1015 = vmatprep.subr.bf16.mxu0 0
        %1016 = vmatpush1.bf16.msra.mxu0 %v937
        %1017 = vmatprep.subr.bf16.mxu0 0
        %1018 = vmatpush1.bf16.msra.mxu0 %v934
        %1019 = vmatprep.subr.bf16.mxu0 0
        %1020 = vmatpush1.bf16.msra.mxu0 %v931
        %1021 = vmatprep.subr.bf16.mxu0 0
        %1022 = vmatpush1.bf16.msra.mxu0 %v928
        %1023 = vmatprep.subr.bf16.mxu0 0
        %1024 = vmatpush1.bf16.msra.mxu0 %v925
        %1025 = vmatprep.subr.bf16.mxu0 0
        %1026 = vmatpush1.bf16.msra.mxu0 %v922
        %1027 = vmatprep.subr.bf16.mxu0 0
        %1028 = vmatpush2.bf16.msra.mxu0 0
        %1029 = vmatprep.subr.bf16.mxu0 0
        %1030 = vmatpush2.bf16.msra.mxu0 0
        %1031 = vmatprep.subr.bf16.mxu0 0
        %1032 = vmatpush2.bf16.msra.mxu0 0
        %1033 = vmatprep.subr.bf16.mxu0 0
        %1034 = vmatpush2.bf16.msra.mxu0 0
        %1035 = vmatprep.subr.bf16.mxu0 0
        %1036 = vmatpush2.bf16.msra.mxu0 0
        %1037 = vmatprep.subr.bf16.mxu0 0
        %1038 = vmatpush2.bf16.msra.mxu0 0
        %1039 = vmatprep.subr.bf16.mxu0 0
        %1040 = vmatpush2.bf16.msra.mxu0 0
        %1041 = vmatprep.subr.bf16.mxu0 0
        %1042 = vmatpush2.bf16.msra.mxu0 0
        %1043 = vmatprep.mubr.bf16.mxu0 0
        %1044 = vmatmul.mubr.bf16.gmra.mxu0 %v838
        %v1045 = vpop.f32.mrf.mxu0
        %v1046 = vadd.f32 0.0, %v1045
        %v1047 = vpop.f32.mrf.mxu0
        %v1048 = vpop.f32.mrf.mxu0
        %v1049 = vadd.f32 0.0, %v1048
        %v1050 = vpop.f32.mrf.mxu0
        %1051 = vdwg.mxu0
        %v1052 = vlaneseq
        %v1053 = vshrl.u32 %v1052, 7
        %v1054 = vsub.s32 0, %v1053
        %v1055 = vrot.slane %v800, %v1054
        %v1056 = vadd.f32 %v1003, %v1055
        %v1057 = vadd.f32 %v1007, %v1055
        %v1058 = vlaneseq
        %v1059 = vshrl.u32 %v1058, 7
        %v1060 = vsub.s32 1, %v1059
        %v1061 = vrot.slane %v800, %v1060
        %v1062 = vadd.f32 %v1005, %v1061
        %v1063 = vadd.f32 %v1009, %v1061
        %v1064 = vld [vmem:[%s3] sm:$0xff]
        %v1065 = vld [vmem:[%s3 + $0x8] sm:$0xff]
        %v1066 = vld [vmem:[%s3 + $0x10] sm:$0xff]
        %v1067 = vld [vmem:[%s3 + $0x18] sm:$0xff]
        %v1068 = vld [vmem:[%s3 + $0x20] sm:$0xff]
        %v1069 = vld [vmem:[%s3 + $0x28] sm:$0xff]
        %v1070 = vld [vmem:[%s3 + $0x30] sm:$0xff]
        %v1071 = vld [vmem:[%s3 + $0x38] sm:$0xff]
        %v1080 = vunpack.c.l.b16 %v790
        %v1081 = vunpack.c.l.b16 %v791
        %v1082 = vunpack.c.l.b16 %v792
        %v1083 = vunpack.c.l.b16 %v793
        %v1084 = vunpack.c.l.b16 %v794
        %v1085 = vunpack.c.l.b16 %v795
        %v1086 = vunpack.c.l.b16 %v796
        %v1087 = vunpack.c.l.b16 %v797
        %v1088 = vpack.c.b16 %v1081, %v1080
        %v1089 = vpack.c.b16 %v1083, %v1082
        %v1090 = vpack.c.b16 %v1085, %v1084
        %v1091 = vpack.c.b16 %v1087, %v1086
        %v1100 = vunpack.c.l.b16 %v1064
        %v1101 = vunpack.c.h.b16 %v1064
        %v1102 = vunpack.c.l.b16 %v1065
        %v1103 = vunpack.c.h.b16 %v1065
        %v1104 = vunpack.c.l.b16 %v1066
        %v1105 = vunpack.c.h.b16 %v1066
        %v1106 = vunpack.c.l.b16 %v1067
        %v1107 = vunpack.c.h.b16 %v1067
        %v1108 = vunpack.c.l.b16 %v1068
        %v1109 = vunpack.c.h.b16 %v1068
        %v1110 = vunpack.c.l.b16 %v1069
        %v1111 = vunpack.c.h.b16 %v1069
        %v1112 = vunpack.c.l.b16 %v1070
        %v1113 = vunpack.c.h.b16 %v1070
        %v1114 = vunpack.c.l.b16 %v1071
        %v1115 = vunpack.c.h.b16 %v1071
        %v1116 = vpack.c.b16 %v1102, %v1100
        %v1117 = vpack.c.b16 %v1103, %v1101
        %v1118 = vpack.c.b16 %v1106, %v1104
        %v1119 = vpack.c.b16 %v1107, %v1105
        %v1120 = vpack.c.b16 %v1110, %v1108
        %v1121 = vpack.c.b16 %v1111, %v1109
        %v1122 = vpack.c.b16 %v1114, %v1112
        %v1123 = vpack.c.b16 %v1115, %v1113
        %vm1132 = vcmask 523264
        %v1134 = vsel %vm1132, %v1088, 0
        %v1137 = vsel %vm1132, %v1089, 0
        %v1140 = vsel %vm1132, %v1090, 0
        %v1143 = vsel %vm1132, %v1091, 0
        %1145 = vmatprep.subr.bf16.mxu0 0
        %1146 = vmatpush1.bf16.msra.mxu0 0
        %1147 = vmatprep.subr.bf16.mxu0 0
        %1148 = vmatpush1.bf16.msra.mxu0 0
        %1149 = vmatprep.subr.bf16.mxu0 0
        %1150 = vmatpush1.bf16.msra.mxu0 0
        %1151 = vmatprep.subr.bf16.mxu0 0
        %1152 = vmatpush1.bf16.msra.mxu0 0
        %1153 = vmatprep.subr.bf16.mxu0 %v1123
        %1154 = vmatpush1.bf16.msra.mxu0 %v1122
        %1155 = vmatprep.subr.bf16.mxu0 %v1121
        %1156 = vmatpush1.bf16.msra.mxu0 %v1120
        %1157 = vmatprep.subr.bf16.mxu0 %v1119
        %1158 = vmatpush1.bf16.msra.mxu0 %v1118
        %1159 = vmatprep.subr.bf16.mxu0 %v1117
        %1160 = vmatpush1.bf16.msra.mxu0 %v1116
        %1161 = vmatprep.subr.bf16.mxu0 0
        %1162 = vmatpush2.bf16.msra.mxu0 0
        %1163 = vmatprep.subr.bf16.mxu0 0
        %1164 = vmatpush2.bf16.msra.mxu0 0
        %1165 = vmatprep.subr.bf16.mxu0 0
        %1166 = vmatpush2.bf16.msra.mxu0 0
        %1167 = vmatprep.subr.bf16.mxu0 0
        %1168 = vmatpush2.bf16.msra.mxu0 0
        %1169 = vmatprep.subr.bf16.mxu0 0
        %1170 = vmatpush2.bf16.msra.mxu0 0
        %1171 = vmatprep.subr.bf16.mxu0 0
        %1172 = vmatpush2.bf16.msra.mxu0 0
        %1173 = vmatprep.subr.bf16.mxu0 0
        %1174 = vmatpush2.bf16.msra.mxu0 0
        %1175 = vmatprep.subr.bf16.mxu0 0
        %1176 = vmatpush2.bf16.msra.mxu0 0
        %1177 = vmatprep.mubr.bf16.mxu0 0
        %1178 = vmatmul.mubr.bf16.gmra.mxu0 %v1134
        %v1179 = vpop.f32.mrf.mxu0
        %v1180 = vadd.f32 0.0, %v1179
        %v1181 = vpop.f32.mrf.mxu0
        %v1182 = vadd.f32 0.0, %v1181
        %v1183 = vpop.f32.mrf.mxu0
        %v1184 = vadd.f32 0.0, %v1183
        %v1185 = vpop.f32.mrf.mxu0
        %v1186 = vadd.f32 0.0, %v1185
        %1187 = vmatprep.mubr.bf16.mxu0 0
        %1188 = vmatmul.mubr.bf16.gmra.mxu0 %v1137
        %v1189 = vpop.f32.mrf.mxu0
        %v1190 = vadd.f32 0.0, %v1189
        %v1191 = vpop.f32.mrf.mxu0
        %v1192 = vadd.f32 0.0, %v1191
        %v1193 = vpop.f32.mrf.mxu0
        %v1194 = vadd.f32 0.0, %v1193
        %v1195 = vpop.f32.mrf.mxu0
        %v1196 = vadd.f32 0.0, %v1195
        %1197 = vmatprep.mubr.bf16.mxu0 0
        %1198 = vmatmul.mubr.bf16.gmra.mxu0 %v1140
        %v1199 = vpop.f32.mrf.mxu0
        %v1200 = vadd.f32 0.0, %v1199
        %v1201 = vpop.f32.mrf.mxu0
        %v1202 = vadd.f32 0.0, %v1201
        %v1203 = vpop.f32.mrf.mxu0
        %v1204 = vadd.f32 0.0, %v1203
        %v1205 = vpop.f32.mrf.mxu0
        %v1206 = vadd.f32 0.0, %v1205
        %1207 = vmatprep.mubr.bf16.mxu0 0
        %1208 = vmatmul.mubr.bf16.gmra.mxu0 %v1143
        %v1209 = vpop.f32.mrf.mxu0
        %v1210 = vadd.f32 0.0, %v1209
        %v1211 = vpop.f32.mrf.mxu0
        %v1212 = vadd.f32 0.0, %v1211
        %v1213 = vpop.f32.mrf.mxu0
        %v1214 = vadd.f32 0.0, %v1213
        %v1215 = vpop.f32.mrf.mxu0
        %v1216 = vadd.f32 0.0, %v1215
        %1217 = vdwg.mxu0
        %v1218 = vlaneseq
        %v1219 = vshrl.u32 %v1218, 7
        %v1220 = vsub.s32 2, %v1219
        %v1221 = vrot.slane %v800, %v1220
        %v1222 = vadd.f32 %v1180, %v1221
        %v1223 = vadd.f32 %v1184, %v1221
        %v1224 = vadd.f32 %v1190, %v1221
        %v1225 = vadd.f32 %v1194, %v1221
        %v1226 = vadd.f32 %v1200, %v1221
        %v1227 = vadd.f32 %v1204, %v1221
        %v1228 = vadd.f32 %v1210, %v1221
        %v1229 = vadd.f32 %v1214, %v1221
        %v1230 = vlaneseq
        %v1231 = vshrl.u32 %v1230, 7
        %v1232 = vsub.s32 3, %v1231
        %v1233 = vrot.slane %v800, %v1232
        %v1234 = vadd.f32 %v1182, %v1233
        %v1235 = vadd.f32 %v1186, %v1233
        %v1236 = vadd.f32 %v1192, %v1233
        %v1237 = vadd.f32 %v1196, %v1233
        %v1238 = vadd.f32 %v1202, %v1233
        %v1239 = vadd.f32 %v1206, %v1233
        %v1240 = vadd.f32 %v1212, %v1233
        %v1241 = vadd.f32 %v1216, %v1233
        %v1242 = vpack.c.bf16 %v1063, %v1062
        %v1243 = vpack.c.bf16 %v1223, %v1222
        %v1244 = vpack.c.bf16 %v1225, %v1224
        %v1245 = vpack.c.bf16 %v1227, %v1226
        %v1246 = vpack.c.bf16 %v1229, %v1228
        %v1247 = vpack.c.bf16 %v1235, %v1234
        %v1248 = vpack.c.bf16 %v1237, %v1236
        %v1249 = vpack.c.bf16 %v1239, %v1238
        %v1250 = vpack.c.bf16 %v1241, %v1240
        %vm1251 = vcmask 261120
        %v1253 = vsel %vm1251, %v1242, 0
        %v1256 = vsel %vm1251, %v1243, 0
        %v1259 = vsel %vm1251, %v1244, 0
        %v1262 = vsel %vm1251, %v1245, 0
        %v1265 = vsel %vm1251, %v1246, 0
        %1267 = vmatprep.subr.bf16.mxu0 0
        %1268 = vmatpush1.bf16.xpose.msra.mxu0 0
        %1269 = vmatprep.subr.bf16.mxu0 0
        %1270 = vmatpush1.bf16.xpose.msra.mxu0 0
        %1271 = vmatprep.subr.bf16.mxu0 0
        %1272 = vmatpush1.bf16.xpose.msra.mxu0 0
        %1273 = vmatprep.subr.bf16.mxu0 0
        %1274 = vmatpush1.bf16.xpose.msra.mxu0 0
        %1275 = vmatprep.subr.bf16.mxu0 0
        %1276 = vmatpush1.bf16.xpose.msra.mxu0 %v1265
        %1277 = vmatprep.subr.bf16.mxu0 0
        %1278 = vmatpush1.bf16.xpose.msra.mxu0 %v1262
        %1279 = vmatprep.subr.bf16.mxu0 0
        %1280 = vmatpush1.bf16.xpose.msra.mxu0 %v1259
        %1281 = vmatprep.subr.bf16.mxu0 0
        %1282 = vmatpush1.bf16.xpose.msra.mxu0 %v1256
        %1283 = vmatprep.subr.bf16.mxu0 0
        %1284 = vmatpush2.bf16.xpose.msra.mxu0 0
        %1285 = vmatprep.subr.bf16.mxu0 0
        %1286 = vmatpush2.bf16.xpose.msra.mxu0 0
        %1287 = vmatprep.subr.bf16.mxu0 0
        %1288 = vmatpush2.bf16.xpose.msra.mxu0 0
        %1289 = vmatprep.subr.bf16.mxu0 0
        %1290 = vmatpush2.bf16.xpose.msra.mxu0 0
        %1291 = vmatprep.subr.bf16.mxu0 0
        %1292 = vmatpush2.bf16.xpose.msra.mxu0 0
        %1293 = vmatprep.subr.bf16.mxu0 0
        %1294 = vmatpush2.bf16.xpose.msra.mxu0 0
        %1295 = vmatprep.subr.bf16.mxu0 0
        %1296 = vmatpush2.bf16.xpose.msra.mxu0 0
        %1297 = vmatprep.subr.bf16.mxu0 0
        %1298 = vmatpush2.bf16.xpose.msra.mxu0 0
        %1299 = vmatprep.mubr.bf16.mxu0 0
        %1300 = vmatmul.mubr.bf16.gmra.mxu0 %v1253
        %v1301 = vpop.f32.mrf.mxu0
        %v1302 = vadd.f32 0.0, %v1301
        %v1303 = vpop.f32.mrf.mxu0
        %v1304 = vpop.f32.mrf.mxu0
        %v1305 = vadd.f32 0.0, %v1304
        %v1306 = vpop.f32.mrf.mxu0
        %1307 = vdwg.mxu0
        %1309 = vrot.lane.b32.xlu0 %v1242, 96
        %v1310 = vpop.permute.xlu0 %1309
        %1315 = vrot.lane.b32.xlu0 %v1243, 96
        %v1316 = vpop.permute.xlu0 %1315
        %1317 = vrot.lane.b32.xlu0 %v1244, 96
        %v1318 = vpop.permute.xlu0 %1317
        %1319 = vrot.lane.b32.xlu0 %v1245, 96
        %v1320 = vpop.permute.xlu0 %1319
        %1321 = vrot.lane.b32.xlu0 %v1246, 96
        %v1322 = vpop.permute.xlu0 %1321
        %v1324 = vsel %vm1251, %v1310, 0
        %v1327 = vsel %vm1251, %v1316, 0
        %v1330 = vsel %vm1251, %v1318, 0
        %v1333 = vsel %vm1251, %v1320, 0
        %v1336 = vsel %vm1251, %v1322, 0
        %1338 = vmatprep.subr.bf16.mxu0 0
        %1339 = vmatpush1.bf16.xpose.msra.mxu0 0
        %1340 = vmatprep.subr.bf16.mxu0 0
        %1341 = vmatpush1.bf16.xpose.msra.mxu0 0
        %1342 = vmatprep.subr.bf16.mxu0 0
        %1343 = vmatpush1.bf16.xpose.msra.mxu0 0
        %1344 = vmatprep.subr.bf16.mxu0 0
        %1345 = vmatpush1.bf16.xpose.msra.mxu0 0
        %1346 = vmatprep.subr.bf16.mxu0 0
        %1347 = vmatpush1.bf16.xpose.msra.mxu0 %v1336
        %1348 = vmatprep.subr.bf16.mxu0 0
        %1349 = vmatpush1.bf16.xpose.msra.mxu0 %v1333
        %1350 = vmatprep.subr.bf16.mxu0 0
        %1351 = vmatpush1.bf16.xpose.msra.mxu0 %v1330
        %1352 = vmatprep.subr.bf16.mxu0 0
        %1353 = vmatpush1.bf16.xpose.msra.mxu0 %v1327
        %1354 = vmatprep.subr.bf16.mxu0 0
        %1355 = vmatpush2.bf16.xpose.msra.mxu0 0
        %1356 = vmatprep.subr.bf16.mxu0 0
        %1357 = vmatpush2.bf16.xpose.msra.mxu0 0
        %1358 = vmatprep.subr.bf16.mxu0 0
        %1359 = vmatpush2.bf16.xpose.msra.mxu0 0
        %1360 = vmatprep.subr.bf16.mxu0 0
        %1361 = vmatpush2.bf16.xpose.msra.mxu0 0
        %1362 = vmatprep.subr.bf16.mxu0 0
        %1363 = vmatpush2.bf16.xpose.msra.mxu0 0
        %1364 = vmatprep.subr.bf16.mxu0 0
        %1365 = vmatpush2.bf16.xpose.msra.mxu0 0
        %1366 = vmatprep.subr.bf16.mxu0 0
        %1367 = vmatpush2.bf16.xpose.msra.mxu0 0
        %1368 = vmatprep.subr.bf16.mxu0 0
        %1369 = vmatpush2.bf16.xpose.msra.mxu0 0
        %1370 = vmatprep.mubr.bf16.mxu0 0
        %1371 = vmatmul.mubr.bf16.gmra.mxu0 %v1324
        %v1372 = vpop.f32.mrf.mxu0
        %v1373 = vadd.f32 0.0, %v1372
        %v1374 = vpop.f32.mrf.mxu0
        %v1375 = vpop.f32.mrf.mxu0
        %v1376 = vadd.f32 0.0, %v1375
        %v1377 = vpop.f32.mrf.mxu0
        %1378 = vdwg.mxu0
        %1379 = vrot.lane.b32.xlu0 %v1242, 64
        %v1380 = vpop.permute.xlu0 %1379
        %1381 = vrot.lane.b32.xlu0 %v1243, 64
        %v1382 = vpop.permute.xlu0 %1381
        %1383 = vrot.lane.b32.xlu0 %v1244, 64
        %v1384 = vpop.permute.xlu0 %1383
        %1385 = vrot.lane.b32.xlu0 %v1245, 64
        %v1386 = vpop.permute.xlu0 %1385
        %1387 = vrot.lane.b32.xlu0 %v1246, 64
        %v1388 = vpop.permute.xlu0 %1387
        %v1390 = vsel %vm1251, %v1380, 0
        %v1393 = vsel %vm1251, %v1382, 0
        %v1396 = vsel %vm1251, %v1384, 0
        %v1399 = vsel %vm1251, %v1386, 0
        %v1402 = vsel %vm1251, %v1388, 0
        %1404 = vmatprep.subr.bf16.mxu0 0
        %1405 = vmatpush1.bf16.xpose.msra.mxu0 0
        %1406 = vmatprep.subr.bf16.mxu0 0
        %1407 = vmatpush1.bf16.xpose.msra.mxu0 0
        %1408 = vmatprep.subr.bf16.mxu0 0
        %1409 = vmatpush1.bf16.xpose.msra.mxu0 0
        %1410 = vmatprep.subr.bf16.mxu0 0
        %1411 = vmatpush1.bf16.xpose.msra.mxu0 0
        %1412 = vmatprep.subr.bf16.mxu0 0
        %1413 = vmatpush1.bf16.xpose.msra.mxu0 %v1402
        %1414 = vmatprep.subr.bf16.mxu0 0
        %1415 = vmatpush1.bf16.xpose.msra.mxu0 %v1399
        %1416 = vmatprep.subr.bf16.mxu0 0
        %1417 = vmatpush1.bf16.xpose.msra.mxu0 %v1396
        %1418 = vmatprep.subr.bf16.mxu0 0
        %1419 = vmatpush1.bf16.xpose.msra.mxu0 %v1393
        %1420 = vmatprep.subr.bf16.mxu0 0
        %1421 = vmatpush2.bf16.xpose.msra.mxu0 0
        %1422 = vmatprep.subr.bf16.mxu0 0
        %1423 = vmatpush2.bf16.xpose.msra.mxu0 0
        %1424 = vmatprep.subr.bf16.mxu0 0
        %1425 = vmatpush2.bf16.xpose.msra.mxu0 0
        %1426 = vmatprep.subr.bf16.mxu0 0
        %1427 = vmatpush2.bf16.xpose.msra.mxu0 0
        %1428 = vmatprep.subr.bf16.mxu0 0
        %1429 = vmatpush2.bf16.xpose.msra.mxu0 0
        %1430 = vmatprep.subr.bf16.mxu0 0
        %1431 = vmatpush2.bf16.xpose.msra.mxu0 0
        %1432 = vmatprep.subr.bf16.mxu0 0
        %1433 = vmatpush2.bf16.xpose.msra.mxu0 0
        %1434 = vmatprep.subr.bf16.mxu0 0
        %1435 = vmatpush2.bf16.xpose.msra.mxu0 0
        %1436 = vmatprep.mubr.bf16.mxu0 0
        %1437 = vmatmul.mubr.bf16.gmra.mxu0 %v1390
        %v1438 = vpop.f32.mrf.mxu0
        %v1439 = vadd.f32 0.0, %v1438
        %v1440 = vpop.f32.mrf.mxu0
        %v1441 = vpop.f32.mrf.mxu0
        %v1442 = vadd.f32 0.0, %v1441
        %v1443 = vpop.f32.mrf.mxu0
        %1444 = vdwg.mxu0
        %1445 = vrot.lane.b32.xlu0 %v1242, 32
        %v1446 = vpop.permute.xlu0 %1445
        %1447 = vrot.lane.b32.xlu0 %v1243, 32
        %v1448 = vpop.permute.xlu0 %1447
        %1449 = vrot.lane.b32.xlu0 %v1244, 32
        %v1450 = vpop.permute.xlu0 %1449
        %1451 = vrot.lane.b32.xlu0 %v1245, 32
        %v1452 = vpop.permute.xlu0 %1451
        %1453 = vrot.lane.b32.xlu0 %v1246, 32
        %v1454 = vpop.permute.xlu0 %1453
        %v1456 = vsel %vm1251, %v1446, 0
        %v1459 = vsel %vm1251, %v1448, 0
        %v1462 = vsel %vm1251, %v1450, 0
        %v1465 = vsel %vm1251, %v1452, 0
        %v1468 = vsel %vm1251, %v1454, 0
        %1470 = vmatprep.subr.bf16.mxu0 0
        %1471 = vmatpush1.bf16.xpose.msra.mxu0 0
        %1472 = vmatprep.subr.bf16.mxu0 0
        %1473 = vmatpush1.bf16.xpose.msra.mxu0 0
        %1474 = vmatprep.subr.bf16.mxu0 0
        %1475 = vmatpush1.bf16.xpose.msra.mxu0 0
        %1476 = vmatprep.subr.bf16.mxu0 0
        %1477 = vmatpush1.bf16.xpose.msra.mxu0 0
        %1478 = vmatprep.subr.bf16.mxu0 0
        %1479 = vmatpush1.bf16.xpose.msra.mxu0 %v1468
        %1480 = vmatprep.subr.bf16.mxu0 0
        %1481 = vmatpush1.bf16.xpose.msra.mxu0 %v1465
        %1482 = vmatprep.subr.bf16.mxu0 0
        %1483 = vmatpush1.bf16.xpose.msra.mxu0 %v1462
        %1484 = vmatprep.subr.bf16.mxu0 0
        %1485 = vmatpush1.bf16.xpose.msra.mxu0 %v1459
        %1486 = vmatprep.subr.bf16.mxu0 0
        %1487 = vmatpush2.bf16.xpose.msra.mxu0 0
        %1488 = vmatprep.subr.bf16.mxu0 0
        %1489 = vmatpush2.bf16.xpose.msra.mxu0 0
        %1490 = vmatprep.subr.bf16.mxu0 0
        %1491 = vmatpush2.bf16.xpose.msra.mxu0 0
        %1492 = vmatprep.subr.bf16.mxu0 0
        %1493 = vmatpush2.bf16.xpose.msra.mxu0 0
        %1494 = vmatprep.subr.bf16.mxu0 0
        %1495 = vmatpush2.bf16.xpose.msra.mxu0 0
        %1496 = vmatprep.subr.bf16.mxu0 0
        %1497 = vmatpush2.bf16.xpose.msra.mxu0 0
        %1498 = vmatprep.subr.bf16.mxu0 0
        %1499 = vmatpush2.bf16.xpose.msra.mxu0 0
        %1500 = vmatprep.subr.bf16.mxu0 0
        %1501 = vmatpush2.bf16.xpose.msra.mxu0 0
        %1502 = vmatprep.mubr.bf16.mxu0 0
        %1503 = vmatmul.mubr.bf16.gmra.mxu0 %v1456
        %v1504 = vpop.f32.mrf.mxu0
        %v1505 = vadd.f32 0.0, %v1504
        %v1506 = vpop.f32.mrf.mxu0
        %v1507 = vpop.f32.mrf.mxu0
        %v1508 = vadd.f32 0.0, %v1507
        %v1509 = vpop.f32.mrf.mxu0
        %1510 = vdwg.mxu0
        %v1511 = vsel %vm1132, %v1302, -inf
        %1512 = vmax.xlane.f32.xlu0 %v1511
        %v1513 = vpop.xlane.xlu0 %1512
        %v1514 = vsel %vm1132, %v1305, -inf
        %1515 = vmax.xlane.f32.xlu0 %v1514
        %v1516 = vpop.xlane.xlu0 %1515
        %v1517 = vsel %vm1132, %v1373, -inf
        %1518 = vmax.xlane.f32.xlu0 %v1517
        %v1519 = vpop.xlane.xlu0 %1518
        %v1520 = vsel %vm1132, %v1376, -inf
        %1521 = vmax.xlane.f32.xlu0 %v1520
        %v1522 = vpop.xlane.xlu0 %1521
        %v1523 = vsel %vm1132, %v1439, -inf
        %1524 = vmax.xlane.f32.xlu0 %v1523
        %v1525 = vpop.xlane.xlu0 %1524
        %v1526 = vsel %vm1132, %v1442, -inf
        %1527 = vmax.xlane.f32.xlu0 %v1526
        %v1528 = vpop.xlane.xlu0 %1527
        %v1529 = vsel %vm1132, %v1505, -inf
        %1530 = vmax.xlane.f32.xlu0 %v1529
        %v1531 = vpop.xlane.xlu0 %1530
        %v1532 = vsel %vm1132, %v1508, -inf
        %1533 = vmax.xlane.f32.xlu0 %v1532
        %v1534 = vpop.xlane.xlu0 %1533
        %v1535 = vsub.f32 %v1302, %v1513
        %v1536 = vsub.f32 %v1305, %v1516
        %v1537 = vsub.f32 %v1373, %v1519
        %v1538 = vsub.f32 %v1376, %v1522
        %v1539 = vsub.f32 %v1439, %v1525
        %v1540 = vsub.f32 %v1442, %v1528
        %v1541 = vsub.f32 %v1505, %v1531
        %v1542 = vsub.f32 %v1508, %v1534
        %v1543 = vmul.f32 %v1535, 1.442695
        %v1544 = vpow.pop %v1543
        %v1545 = vmul.f32 %v1536, 1.442695
        %v1546 = vpow.pop %v1545
        %v1547 = vmul.f32 %v1537, 1.442695
        %v1548 = vpow.pop %v1547
        %v1549 = vmul.f32 %v1538, 1.442695
        %v1550 = vpow.pop %v1549
        %v1551 = vmul.f32 %v1539, 1.442695
        %v1552 = vpow.pop %v1551
        %v1553 = vmul.f32 %v1540, 1.442695
        %v1554 = vpow.pop %v1553
        %v1555 = vmul.f32 %v1541, 1.442695
        %v1556 = vpow.pop %v1555
        %v1557 = vmul.f32 %v1542, 1.442695
        %v1558 = vpow.pop %v1557
        %v1559 = vsel %vm1132, %v1544, 0.0
        %1560 = vadd.xlane.f32.xlu0 %v1559
        %v1561 = vpop.xlane.xlu0 %1560
        %v1562 = vsel %vm1132, %v1546, 0.0
        %1563 = vadd.xlane.f32.xlu0 %v1562
        %v1564 = vpop.xlane.xlu0 %1563
        %v1565 = vsel %vm1132, %v1548, 0.0
        %1566 = vadd.xlane.f32.xlu0 %v1565
        %v1567 = vpop.xlane.xlu0 %1566
        %v1568 = vsel %vm1132, %v1550, 0.0
        %1569 = vadd.xlane.f32.xlu0 %v1568
        %v1570 = vpop.xlane.xlu0 %1569
        %v1571 = vsel %vm1132, %v1552, 0.0
        %1572 = vadd.xlane.f32.xlu0 %v1571
        %v1573 = vpop.xlane.xlu0 %1572
        %v1574 = vsel %vm1132, %v1554, 0.0
        %1575 = vadd.xlane.f32.xlu0 %v1574
        %v1576 = vpop.xlane.xlu0 %1575
        %v1577 = vsel %vm1132, %v1556, 0.0
        %1578 = vadd.xlane.f32.xlu0 %v1577
        %v1579 = vpop.xlane.xlu0 %1578
        %v1580 = vsel %vm1132, %v1558, 0.0
        %1581 = vadd.xlane.f32.xlu0 %v1580
        %v1582 = vpop.xlane.xlu0 %1581
        %v1583 = vrcp.pop %v1561
        %v1584 = vrcp.pop %v1564
        %v1585 = vrcp.pop %v1567
        %v1586 = vrcp.pop %v1570
        %v1587 = vrcp.pop %v1573
        %v1588 = vrcp.pop %v1576
        %v1589 = vrcp.pop %v1579
        %v1590 = vrcp.pop %v1582
        %v1591 = vmul.f32 %v1544, %v1583
        %v1592 = vmul.f32 %v1546, %v1584
        %v1593 = vmul.f32 %v1548, %v1585
        %v1594 = vmul.f32 %v1550, %v1586
        %v1595 = vmul.f32 %v1552, %v1587
        %v1596 = vmul.f32 %v1554, %v1588
        %v1597 = vmul.f32 %v1556, %v1589
        %v1598 = vmul.f32 %v1558, %v1590
        %v1599 = vpack.c.bf16 %v1592, %v1591
        %v1600 = vpack.c.bf16 %v1594, %v1593
        %v1601 = vpack.c.bf16 %v1596, %v1595
        %v1602 = vpack.c.bf16 %v1598, %v1597
        %v1604 = vsel %vm1132, %v1599, 0
        %1606 = vmatprep.subr.bf16.mxu0 0
        %1607 = vmatpush1.bf16.msra.mxu0 0
        %1608 = vmatprep.subr.bf16.mxu0 0
        %1609 = vmatpush1.bf16.msra.mxu0 0
        %1610 = vmatprep.subr.bf16.mxu0 0
        %1611 = vmatpush1.bf16.msra.mxu0 0
        %1612 = vmatprep.subr.bf16.mxu0 0
        %1613 = vmatpush1.bf16.msra.mxu0 0
        %1614 = vmatprep.subr.bf16.mxu0 0
        %1615 = vmatpush1.bf16.msra.mxu0 %v1250
        %1616 = vmatprep.subr.bf16.mxu0 0
        %1617 = vmatpush1.bf16.msra.mxu0 %v1249
        %1618 = vmatprep.subr.bf16.mxu0 0
        %1619 = vmatpush1.bf16.msra.mxu0 %v1248
        %1620 = vmatprep.subr.bf16.mxu0 0
        %1621 = vmatpush1.bf16.msra.mxu0 %v1247
        %1622 = vmatprep.subr.bf16.mxu0 0
        %1623 = vmatpush2.bf16.msra.mxu0 0
        %1624 = vmatprep.subr.bf16.mxu0 0
        %1625 = vmatpush2.bf16.msra.mxu0 0
        %1626 = vmatprep.subr.bf16.mxu0 0
        %1627 = vmatpush2.bf16.msra.mxu0 0
        %1628 = vmatprep.subr.bf16.mxu0 0
        %1629 = vmatpush2.bf16.msra.mxu0 0
        %1630 = vmatprep.subr.bf16.mxu0 0
        %1631 = vmatpush2.bf16.msra.mxu0 0
        %1632 = vmatprep.subr.bf16.mxu0 0
        %1633 = vmatpush2.bf16.msra.mxu0 0
        %1634 = vmatprep.subr.bf16.mxu0 0
        %1635 = vmatpush2.bf16.msra.mxu0 0
        %1636 = vmatprep.subr.bf16.mxu0 0
        %1637 = vmatpush2.bf16.msra.mxu0 0
        %1638 = vmatprep.mubr.bf16.mxu0 0
        %1639 = vmatmul.mubr.bf16.gmra.mxu0 %v1604
        %v1640 = vpop.f32.mrf.mxu0
        %v1641 = vadd.f32 0.0, %v1640
        %v1642 = vpop.f32.mrf.mxu0
        %v1643 = vpop.f32.mrf.mxu0
        %v1644 = vadd.f32 0.0, %v1643
        %v1645 = vpop.f32.mrf.mxu0
        %1646 = vdwg.mxu0
        %1651 = vrot.lane.b32.xlu0 %v1247, 96
        %v1652 = vpop.permute.xlu0 %1651
        %1653 = vrot.lane.b32.xlu0 %v1248, 96
        %v1654 = vpop.permute.xlu0 %1653
        %1655 = vrot.lane.b32.xlu0 %v1249, 96
        %v1656 = vpop.permute.xlu0 %1655
        %1657 = vrot.lane.b32.xlu0 %v1250, 96
        %v1658 = vpop.permute.xlu0 %1657
        %v1664 = vsel %vm1132, %v1600, 0
        %1666 = vmatprep.subr.bf16.mxu0 0
        %1667 = vmatpush1.bf16.msra.mxu0 0
        %1668 = vmatprep.subr.bf16.mxu0 0
        %1669 = vmatpush1.bf16.msra.mxu0 0
        %1670 = vmatprep.subr.bf16.mxu0 0
        %1671 = vmatpush1.bf16.msra.mxu0 0
        %1672 = vmatprep.subr.bf16.mxu0 0
        %1673 = vmatpush1.bf16.msra.mxu0 0
        %1674 = vmatprep.subr.bf16.mxu0 0
        %1675 = vmatpush1.bf16.msra.mxu0 %v1658
        %1676 = vmatprep.subr.bf16.mxu0 0
        %1677 = vmatpush1.bf16.msra.mxu0 %v1656
        %1678 = vmatprep.subr.bf16.mxu0 0
        %1679 = vmatpush1.bf16.msra.mxu0 %v1654
        %1680 = vmatprep.subr.bf16.mxu0 0
        %1681 = vmatpush1.bf16.msra.mxu0 %v1652
        %1682 = vmatprep.subr.bf16.mxu0 0
        %1683 = vmatpush2.bf16.msra.mxu0 0
        %1684 = vmatprep.subr.bf16.mxu0 0
        %1685 = vmatpush2.bf16.msra.mxu0 0
        %1686 = vmatprep.subr.bf16.mxu0 0
        %1687 = vmatpush2.bf16.msra.mxu0 0
        %1688 = vmatprep.subr.bf16.mxu0 0
        %1689 = vmatpush2.bf16.msra.mxu0 0
        %1690 = vmatprep.subr.bf16.mxu0 0
        %1691 = vmatpush2.bf16.msra.mxu0 0
        %1692 = vmatprep.subr.bf16.mxu0 0
        %1693 = vmatpush2.bf16.msra.mxu0 0
        %1694 = vmatprep.subr.bf16.mxu0 0
        %1695 = vmatpush2.bf16.msra.mxu0 0
        %1696 = vmatprep.subr.bf16.mxu0 0
        %1697 = vmatpush2.bf16.msra.mxu0 0
        %1698 = vmatprep.mubr.bf16.mxu0 0
        %1699 = vmatmul.mubr.bf16.gmra.mxu0 %v1664
        %v1700 = vpop.f32.mrf.mxu0
        %v1701 = vadd.f32 0.0, %v1700
        %v1702 = vpop.f32.mrf.mxu0
        %v1703 = vpop.f32.mrf.mxu0
        %v1704 = vadd.f32 0.0, %v1703
        %v1705 = vpop.f32.mrf.mxu0
        %1706 = vdwg.mxu0
        %1707 = vrot.lane.b32.xlu0 %v1247, 64
        %v1708 = vpop.permute.xlu0 %1707
        %1709 = vrot.lane.b32.xlu0 %v1248, 64
        %v1710 = vpop.permute.xlu0 %1709
        %1711 = vrot.lane.b32.xlu0 %v1249, 64
        %v1712 = vpop.permute.xlu0 %1711
        %1713 = vrot.lane.b32.xlu0 %v1250, 64
        %v1714 = vpop.permute.xlu0 %1713
        %v1720 = vsel %vm1132, %v1601, 0
        %1722 = vmatprep.subr.bf16.mxu0 0
        %1723 = vmatpush1.bf16.msra.mxu0 0
        %1724 = vmatprep.subr.bf16.mxu0 0
        %1725 = vmatpush1.bf16.msra.mxu0 0
        %1726 = vmatprep.subr.bf16.mxu0 0
        %1727 = vmatpush1.bf16.msra.mxu0 0
        %1728 = vmatprep.subr.bf16.mxu0 0
        %1729 = vmatpush1.bf16.msra.mxu0 0
        %1730 = vmatprep.subr.bf16.mxu0 0
        %1731 = vmatpush1.bf16.msra.mxu0 %v1714
        %1732 = vmatprep.subr.bf16.mxu0 0
        %1733 = vmatpush1.bf16.msra.mxu0 %v1712
        %1734 = vmatprep.subr.bf16.mxu0 0
        %1735 = vmatpush1.bf16.msra.mxu0 %v1710
        %1736 = vmatprep.subr.bf16.mxu0 0
        %1737 = vmatpush1.bf16.msra.mxu0 %v1708
        %1738 = vmatprep.subr.bf16.mxu0 0
        %1739 = vmatpush2.bf16.msra.mxu0 0
        %1740 = vmatprep.subr.bf16.mxu0 0
        %1741 = vmatpush2.bf16.msra.mxu0 0
        %1742 = vmatprep.subr.bf16.mxu0 0
        %1743 = vmatpush2.bf16.msra.mxu0 0
        %1744 = vmatprep.subr.bf16.mxu0 0
        %1745 = vmatpush2.bf16.msra.mxu0 0
        %1746 = vmatprep.subr.bf16.mxu0 0
        %1747 = vmatpush2.bf16.msra.mxu0 0
        %1748 = vmatprep.subr.bf16.mxu0 0
        %1749 = vmatpush2.bf16.msra.mxu0 0
        %1750 = vmatprep.subr.bf16.mxu0 0
        %1751 = vmatpush2.bf16.msra.mxu0 0
        %1752 = vmatprep.subr.bf16.mxu0 0
        %1753 = vmatpush2.bf16.msra.mxu0 0
        %1754 = vmatprep.mubr.bf16.mxu0 0
        %1755 = vmatmul.mubr.bf16.gmra.mxu0 %v1720
        %v1756 = vpop.f32.mrf.mxu0
        %v1757 = vadd.f32 0.0, %v1756
        %v1758 = vpop.f32.mrf.mxu0
        %v1759 = vpop.f32.mrf.mxu0
        %v1760 = vadd.f32 0.0, %v1759
        %v1761 = vpop.f32.mrf.mxu0
        %1762 = vdwg.mxu0
        %1763 = vrot.lane.b32.xlu0 %v1247, 32
        %v1764 = vpop.permute.xlu0 %1763
        %1765 = vrot.lane.b32.xlu0 %v1248, 32
        %v1766 = vpop.permute.xlu0 %1765
        %1767 = vrot.lane.b32.xlu0 %v1249, 32
        %v1768 = vpop.permute.xlu0 %1767
        %1769 = vrot.lane.b32.xlu0 %v1250, 32
        %v1770 = vpop.permute.xlu0 %1769
        %v1776 = vsel %vm1132, %v1602, 0
        %1778 = vmatprep.subr.bf16.mxu0 0
        %1779 = vmatpush1.bf16.msra.mxu0 0
        %1780 = vmatprep.subr.bf16.mxu0 0
        %1781 = vmatpush1.bf16.msra.mxu0 0
        %1782 = vmatprep.subr.bf16.mxu0 0
        %1783 = vmatpush1.bf16.msra.mxu0 0
        %1784 = vmatprep.subr.bf16.mxu0 0
        %1785 = vmatpush1.bf16.msra.mxu0 0
        %1786 = vmatprep.subr.bf16.mxu0 0
        %1787 = vmatpush1.bf16.msra.mxu0 %v1770
        %1788 = vmatprep.subr.bf16.mxu0 0
        %1789 = vmatpush1.bf16.msra.mxu0 %v1768
        %1790 = vmatprep.subr.bf16.mxu0 0
        %1791 = vmatpush1.bf16.msra.mxu0 %v1766
        %1792 = vmatprep.subr.bf16.mxu0 0
        %1793 = vmatpush1.bf16.msra.mxu0 %v1764
        %1794 = vmatprep.subr.bf16.mxu0 0
        %1795 = vmatpush2.bf16.msra.mxu0 0
        %1796 = vmatprep.subr.bf16.mxu0 0
        %1797 = vmatpush2.bf16.msra.mxu0 0
        %1798 = vmatprep.subr.bf16.mxu0 0
        %1799 = vmatpush2.bf16.msra.mxu0 0
        %1800 = vmatprep.subr.bf16.mxu0 0
        %1801 = vmatpush2.bf16.msra.mxu0 0
        %1802 = vmatprep.subr.bf16.mxu0 0
        %1803 = vmatpush2.bf16.msra.mxu0 0
        %1804 = vmatprep.subr.bf16.mxu0 0
        %1805 = vmatpush2.bf16.msra.mxu0 0
        %1806 = vmatprep.subr.bf16.mxu0 0
        %1807 = vmatpush2.bf16.msra.mxu0 0
        %1808 = vmatprep.subr.bf16.mxu0 0
        %1809 = vmatpush2.bf16.msra.mxu0 0
        %1810 = vmatprep.mubr.bf16.mxu0 0
        %1811 = vmatmul.mubr.bf16.gmra.mxu0 %v1776
        %v1812 = vpop.f32.mrf.mxu0
        %v1813 = vadd.f32 0.0, %v1812
        %v1814 = vpop.f32.mrf.mxu0
        %v1815 = vpop.f32.mrf.mxu0
        %v1816 = vadd.f32 0.0, %v1815
        %v1817 = vpop.f32.mrf.mxu0
        %1818 = vdwg.mxu0
        %1821 = vrot.lane.b32.xlu0 %v1701, 32
        %v1822 = vpop.permute.xlu0 %1821
        %1823 = vrot.lane.b32.xlu0 %v1704, 32
        %v1824 = vpop.permute.xlu0 %1823
        %1829 = vrot.lane.b32.xlu0 %v1757, 64
        %v1830 = vpop.permute.xlu0 %1829
        %1831 = vrot.lane.b32.xlu0 %v1760, 64
        %v1832 = vpop.permute.xlu0 %1831
        %1837 = vrot.lane.b32.xlu0 %v1813, 96
        %v1838 = vpop.permute.xlu0 %1837
        %1839 = vrot.lane.b32.xlu0 %v1816, 96
        %v1840 = vpop.permute.xlu0 %1839
        %v1843 = vsel %vm1251, %v1641, %v1822
        %v1844 = vsel %vm1251, %v1644, %v1824
        %v1845 = vsel %vm1132, %v1843, %v1830
        %v1846 = vsel %vm1132, %v1844, %v1832
        %vm1847 = vcmask 785408
        %v1848 = vsel %vm1847, %v1845, %v1838
        %v1849 = vsel %vm1847, %v1846, %v1840
        %v1850 = vpack.c.bf16 %v1849, %v1848
        %v1851 = vld [vmem:[%s4] sm:$0xf]
        %v1852 = vld [vmem:[%s4 + $0x4] sm:$0xf]
        %v1853 = vld [vmem:[%s4 + $0x8] sm:$0xf]
        %v1854 = vld [vmem:[%s4 + $0xc] sm:$0xf]
        %v1855 = vld [vmem:[%s4 + $0x10] sm:$0xf]
        %v1856 = vld [vmem:[%s4 + $0x14] sm:$0xf]
        %v1857 = vld [vmem:[%s4 + $0x18] sm:$0xf]
        %v1858 = vld [vmem:[%s4 + $0x1c] sm:$0xf]
        %v1859 = vld [vmem:[%s4 + $0x20] sm:$0xf]
        %v1860 = vld [vmem:[%s4 + $0x24] sm:$0xf]
        %v1861 = vld [vmem:[%s4 + $0x28] sm:$0xf]
        %v1862 = vld [vmem:[%s4 + $0x2c] sm:$0xf]
        %v1863 = vld [vmem:[%s4 + $0x30] sm:$0xf]
        %v1864 = vld [vmem:[%s4 + $0x34] sm:$0xf]
        %v1865 = vld [vmem:[%s4 + $0x38] sm:$0xf]
        %v1866 = vld [vmem:[%s4 + $0x3c] sm:$0xf]
        %v1867 = vlaneseq
        %v1868 = vshrl.u32 %v1867, 7
        %v1869 = vsub.s32 4, %v1868
        %v1870 = vrot.slane %v800, %v1869
        %v1887 = vunpack.c.l.b16 %v1851
        %v1888 = vunpack.c.l.b16 %v1852
        %v1889 = vunpack.c.l.b16 %v1853
        %v1890 = vunpack.c.l.b16 %v1854
        %v1891 = vunpack.c.l.b16 %v1855
        %v1892 = vunpack.c.l.b16 %v1856
        %v1893 = vunpack.c.l.b16 %v1857
        %v1894 = vunpack.c.l.b16 %v1858
        %v1895 = vunpack.c.l.b16 %v1859
        %v1896 = vunpack.c.l.b16 %v1860
        %v1897 = vunpack.c.l.b16 %v1861
        %v1898 = vunpack.c.l.b16 %v1862
        %v1899 = vunpack.c.l.b16 %v1863
        %v1900 = vunpack.c.l.b16 %v1864
        %v1901 = vunpack.c.l.b16 %v1865
        %v1902 = vunpack.c.l.b16 %v1866
        %v1903 = vpack.c.b16 %v1888, %v1887
        %v1904 = vpack.c.b16 %v1890, %v1889
        %v1905 = vpack.c.b16 %v1892, %v1891
        %v1906 = vpack.c.b16 %v1894, %v1893
        %v1907 = vpack.c.b16 %v1896, %v1895
        %v1908 = vpack.c.b16 %v1898, %v1897
        %v1909 = vpack.c.b16 %v1900, %v1899
        %v1910 = vpack.c.b16 %v1902, %v1901
        %1919 = vmatprep.subr.bf16.mxu0 0
        %1920 = vmatpush1.bf16.msra.mxu0 %v1910
        %1921 = vmatprep.subr.bf16.mxu0 0
        %1922 = vmatpush1.bf16.msra.mxu0 %v1909
        %1923 = vmatprep.subr.bf16.mxu0 0
        %1924 = vmatpush1.bf16.msra.mxu0 %v1908
        %1925 = vmatprep.subr.bf16.mxu0 0
        %1926 = vmatpush1.bf16.msra.mxu0 %v1907
        %1927 = vmatprep.subr.bf16.mxu0 0
        %1928 = vmatpush1.bf16.msra.mxu0 %v1906
        %1929 = vmatprep.subr.bf16.mxu0 0
        %1930 = vmatpush1.bf16.msra.mxu0 %v1905
        %1931 = vmatprep.subr.bf16.mxu0 0
        %1932 = vmatpush1.bf16.msra.mxu0 %v1904
        %1933 = vmatprep.subr.bf16.mxu0 0
        %1934 = vmatpush1.bf16.msra.mxu0 %v1903
        %1935 = vmatprep.subr.bf16.mxu0 0
        %1936 = vmatpush2.bf16.msra.mxu0 0
        %1937 = vmatprep.subr.bf16.mxu0 0
        %1938 = vmatpush2.bf16.msra.mxu0 0
        %1939 = vmatprep.subr.bf16.mxu0 0
        %1940 = vmatpush2.bf16.msra.mxu0 0
        %1941 = vmatprep.subr.bf16.mxu0 0
        %1942 = vmatpush2.bf16.msra.mxu0 0
        %1943 = vmatprep.subr.bf16.mxu0 0
        %1944 = vmatpush2.bf16.msra.mxu0 0
        %1945 = vmatprep.subr.bf16.mxu0 0
        %1946 = vmatpush2.bf16.msra.mxu0 0
        %1947 = vmatprep.subr.bf16.mxu0 0
        %1948 = vmatpush2.bf16.msra.mxu0 0
        %1949 = vmatprep.subr.bf16.mxu0 0
        %1950 = vmatpush2.bf16.msra.mxu0 0
        %1951 = vmatprep.mubr.bf16.mxu0 0
        %1952 = vmatmul.mubr.bf16.gmra.mxu0 %v1850
        %v1953 = vpop.f32.mrf.mxu0
        %v1954 = vadd.f32 %v1870, %v1953
        %v1955 = vpop.f32.mrf.mxu0
        %v1956 = vpop.f32.mrf.mxu0
        %v1957 = vadd.f32 %v1870, %v1956
        %v1958 = vpop.f32.mrf.mxu0
        %1959 = vdwg.mxu0
        %v1960 = vadd.f32 %v1056, %v1954
        %v1961 = vadd.f32 %v1057, %v1957
        %1962 = vadd.xlane.f32.xlu0 %v1960
        %v1963 = vpop.xlane.xlu0 %1962
        %1964 = vadd.xlane.f32.xlu0 %v1961
        %v1965 = vpop.xlane.xlu0 %1964
        %v1966 = vrcp.pop 128.0
        %v1967 = vmul.f32 %v1963, %v1966
        %v1968 = vmul.f32 %v1965, %v1966
        %v1969 = vsub.f32 %v1960, %v1967
        %v1970 = vsub.f32 %v1961, %v1968
        %v1971 = vmul.f32 %v1969, %v1969
        %v1972 = vmul.f32 %v1970, %v1970
        %1973 = vadd.xlane.f32.xlu0 %v1971
        %v1974 = vpop.xlane.xlu0 %1973
        %1975 = vadd.xlane.f32.xlu0 %v1972
        %v1976 = vpop.xlane.xlu0 %1975
        %v1977 = vmul.f32 %v1974, %v1966
        %v1978 = vmul.f32 %v1976, %v1966
        %v1979 = vadd.f32 %v1977, 1e-05
        %v1980 = vadd.f32 %v1978, 1e-05
        %v1981 = vrsqrt.pop %v1979
        %v1982 = vrsqrt.pop %v1980
        %v1983 = vmul.f32 %v1969, %v1981
        %v1984 = vmul.f32 %v1970, %v1982
        %v1985 = vlaneseq
        %v1986 = vshrl.u32 %v1985, 7
        %v1987 = vsub.s32 6, %v1986
        %v1988 = vrot.slane %v800, %v1987
        %v1989 = vmul.f32 %v1983, %v1988
        %v1990 = vmul.f32 %v1984, %v1988
        %v1991 = vlaneseq
        %v1992 = vshrl.u32 %v1991, 7
        %v1993 = vsub.s32 7, %v1992
        %v1994 = vrot.slane %v800, %v1993
        %v1995 = vadd.f32 %v1989, %v1994
        %v1996 = vadd.f32 %v1990, %v1994
        %v1997 = vpack.c.bf16 %v1996, %v1995
        %s1998 = scalar_lea.vmem %s4, 64
        %v1999 = vld [vmem:[%s1998] sm:$0xf]
        %v2000 = vld [vmem:[%s1998 + $0x4] sm:$0xf]
        %v2001 = vld [vmem:[%s1998 + $0x8] sm:$0xf]
        %v2002 = vld [vmem:[%s1998 + $0xc] sm:$0xf]
        %v2003 = vld [vmem:[%s1998 + $0x10] sm:$0xf]
        %v2004 = vld [vmem:[%s1998 + $0x14] sm:$0xf]
        %v2005 = vld [vmem:[%s1998 + $0x18] sm:$0xf]
        %v2006 = vld [vmem:[%s1998 + $0x1c] sm:$0xf]
        %v2007 = vld [vmem:[%s1998 + $0x20] sm:$0xf]
        %v2008 = vld [vmem:[%s1998 + $0x24] sm:$0xf]
        %v2009 = vld [vmem:[%s1998 + $0x28] sm:$0xf]
        %v2010 = vld [vmem:[%s1998 + $0x2c] sm:$0xf]
        %v2011 = vld [vmem:[%s1998 + $0x30] sm:$0xf]
        %v2012 = vld [vmem:[%s1998 + $0x34] sm:$0xf]
        %v2013 = vld [vmem:[%s1998 + $0x38] sm:$0xf]
        %v2014 = vld [vmem:[%s1998 + $0x3c] sm:$0xf]
        %v2015 = vlaneseq
        %v2016 = vshrl.u32 %v2015, 7
        %v2017 = vsub.s32 5, %v2016
        %v2018 = vrot.slane %v800, %v2017
        %v2035 = vunpack.c.l.b16 %v1999
        %v2036 = vunpack.c.l.b16 %v2000
        %v2037 = vunpack.c.l.b16 %v2001
        %v2038 = vunpack.c.l.b16 %v2002
        %v2039 = vunpack.c.l.b16 %v2003
        %v2040 = vunpack.c.l.b16 %v2004
        %v2041 = vunpack.c.l.b16 %v2005
        %v2042 = vunpack.c.l.b16 %v2006
        %v2043 = vunpack.c.l.b16 %v2007
        %v2044 = vunpack.c.l.b16 %v2008
        %v2045 = vunpack.c.l.b16 %v2009
        %v2046 = vunpack.c.l.b16 %v2010
        %v2047 = vunpack.c.l.b16 %v2011
        %v2048 = vunpack.c.l.b16 %v2012
        %v2049 = vunpack.c.l.b16 %v2013
        %v2050 = vunpack.c.l.b16 %v2014
        %v2051 = vpack.c.b16 %v2036, %v2035
        %v2052 = vpack.c.b16 %v2038, %v2037
        %v2053 = vpack.c.b16 %v2040, %v2039
        %v2054 = vpack.c.b16 %v2042, %v2041
        %v2055 = vpack.c.b16 %v2044, %v2043
        %v2056 = vpack.c.b16 %v2046, %v2045
        %v2057 = vpack.c.b16 %v2048, %v2047
        %v2058 = vpack.c.b16 %v2050, %v2049
        %2067 = vmatprep.subr.bf16.mxu0 0
        %2068 = vmatpush1.bf16.msra.mxu0 %v2058
        %2069 = vmatprep.subr.bf16.mxu0 0
        %2070 = vmatpush1.bf16.msra.mxu0 %v2057
        %2071 = vmatprep.subr.bf16.mxu0 0
        %2072 = vmatpush1.bf16.msra.mxu0 %v2056
        %2073 = vmatprep.subr.bf16.mxu0 0
        %2074 = vmatpush1.bf16.msra.mxu0 %v2055
        %2075 = vmatprep.subr.bf16.mxu0 0
        %2076 = vmatpush1.bf16.msra.mxu0 %v2054
        %2077 = vmatprep.subr.bf16.mxu0 0
        %2078 = vmatpush1.bf16.msra.mxu0 %v2053
        %2079 = vmatprep.subr.bf16.mxu0 0
        %2080 = vmatpush1.bf16.msra.mxu0 %v2052
        %2081 = vmatprep.subr.bf16.mxu0 0
        %2082 = vmatpush1.bf16.msra.mxu0 %v2051
        %2083 = vmatprep.subr.bf16.mxu0 0
        %2084 = vmatpush2.bf16.msra.mxu0 0
        %2085 = vmatprep.subr.bf16.mxu0 0
        %2086 = vmatpush2.bf16.msra.mxu0 0
        %2087 = vmatprep.subr.bf16.mxu0 0
        %2088 = vmatpush2.bf16.msra.mxu0 0
        %2089 = vmatprep.subr.bf16.mxu0 0
        %2090 = vmatpush2.bf16.msra.mxu0 0
        %2091 = vmatprep.subr.bf16.mxu0 0
        %2092 = vmatpush2.bf16.msra.mxu0 0
        %2093 = vmatprep.subr.bf16.mxu0 0
        %2094 = vmatpush2.bf16.msra.mxu0 0
        %2095 = vmatprep.subr.bf16.mxu0 0
        %2096 = vmatpush2.bf16.msra.mxu0 0
        %2097 = vmatprep.subr.bf16.mxu0 0
        %2098 = vmatpush2.bf16.msra.mxu0 0
        %2099 = vmatprep.mubr.bf16.mxu0 0
        %2100 = vmatmul.mubr.bf16.gmra.mxu0 %v1997
        %v2101 = vpop.f32.mrf.mxu0
        %v2102 = vadd.f32 %v2018, %v2101
        %v2103 = vpop.f32.mrf.mxu0
        %v2104 = vpop.f32.mrf.mxu0
        %v2105 = vadd.f32 %v2018, %v2104
        %v2106 = vpop.f32.mrf.mxu0
        %2107 = vdwg.mxu0
        %v2108 = vmax.f32 %v2102, 0.0
        %v2109 = vmax.f32 %v2105, 0.0
        %v2110 = vadd.f32 %v1995, %v2108
        %v2111 = vadd.f32 %v1996, %v2109
        %2112 = vadd.xlane.f32.xlu0 %v2110
        %v2113 = vpop.xlane.xlu0 %2112
        %2114 = vadd.xlane.f32.xlu0 %v2111
        %v2115 = vpop.xlane.xlu0 %2114
        %v2116 = vmul.f32 %v2113, %v1966
        %v2117 = vmul.f32 %v2115, %v1966
        %v2118 = vsub.f32 %v2110, %v2116
        %v2119 = vsub.f32 %v2111, %v2117
        %v2120 = vmul.f32 %v2118, %v2118
        %v2121 = vmul.f32 %v2119, %v2119
        %2122 = vadd.xlane.f32.xlu0 %v2120
        %v2123 = vpop.xlane.xlu0 %2122
        %2124 = vadd.xlane.f32.xlu0 %v2121
        %v2125 = vpop.xlane.xlu0 %2124
        %v2126 = vmul.f32 %v2123, %v1966
        %v2127 = vmul.f32 %v2125, %v1966
        %v2128 = vadd.f32 %v2126, 1e-05
        %v2129 = vadd.f32 %v2127, 1e-05
        %v2130 = vrsqrt.pop %v2128
        %v2131 = vrsqrt.pop %v2129
        %v2132 = vmul.f32 %v2118, %v2130
        %v2133 = vmul.f32 %v2119, %v2131
        %v2134 = vlaneseq
        %v2135 = vshrl.u32 %v2134, 7
        %v2136 = vsub.s32 0, %v2135
        %v2137 = vrot.slane %v801, %v2136
        %v2138 = vmul.f32 %v2132, %v2137
        %v2139 = vmul.f32 %v2133, %v2137
        %v2140 = vlaneseq
        %v2141 = vshrl.u32 %v2140, 7
        %v2142 = vsub.s32 1, %v2141
        %v2143 = vrot.slane %v801, %v2142
        %v2144 = vadd.f32 %v2138, %v2143
        %v2145 = vadd.f32 %v2139, %v2143
        %v2146 = vlaneseq
        %v2147 = vshrl.u32 %v2146, 7
        %v2148 = vsub.s32 2, %v2147
        %v2149 = vrot.slane %v801, %v2148
        %v2150 = vadd.f32 %v1046, %v2149
        %v2151 = vadd.f32 %v1049, %v2149
        %v2152 = vsub.f32 0.0, %v2150
        %v2153 = vsub.f32 0.0, %v2151
        %v2154 = vmul.f32 %v2152, 1.442695
        %v2155 = vpow.pop %v2154
        %v2156 = vmul.f32 %v2153, 1.442695
        %v2157 = vpow.pop %v2156
        %v2158 = vadd.f32 %v2155, 1.0
        %v2159 = vadd.f32 %v2157, 1.0
        %v2160 = vrcp.pop %v2158
        %v2161 = vrcp.pop %v2159
        %v2162 = vmul.f32 %v2150, %v2160
        %v2163 = vmul.f32 %v2151, %v2161
        %v2164 = vmul.f32 %v2144, %v2162
        %v2165 = vmul.f32 %v2145, %v2163
        %v2166 = vld [vmem:[%s9] sm:$0xff]
        %v2167 = vld [vmem:[%s9 + $0x8] sm:$0x7]
        %v2168 = vld [vmem:[%s6] sm:$0xff]
        %v2169 = vld [vmem:[%s6 + $0x8] sm:$0xf]
        %v2170 = vld [vmem:[%s6 + $0xc] sm:$0xff]
        %v2171 = vld [vmem:[%s6 + $0x14] sm:$0xf]
        %v2172 = vld [vmem:[%s6 + $0x18] sm:$0xff]
        %v2173 = vld [vmem:[%s6 + $0x20] sm:$0xf]
        %v2174 = vld [vmem:[%s6 + $0x24] sm:$0xff]
        %v2175 = vld [vmem:[%s6 + $0x2c] sm:$0xf]
        %v2176 = vld [vmem:[%s6 + $0x30] sm:$0xff]
        %v2177 = vld [vmem:[%s6 + $0x38] sm:$0xf]
        %v2178 = vld [vmem:[%s6 + $0x3c] sm:$0xff]
        %v2179 = vld [vmem:[%s6 + $0x44] sm:$0xf]
        %v2180 = vld [vmem:[%s6 + $0x48] sm:$0xff]
        %v2181 = vld [vmem:[%s6 + $0x50] sm:$0xf]
        %v2182 = vld [vmem:[%s6 + $0x54] sm:$0xff]
        %v2183 = vld [vmem:[%s6 + $0x5c] sm:$0xf]
        %v2200 = vunpack.c.l.b16 %v2168
        %v2201 = vunpack.c.h.b16 %v2168
        %v2202 = vunpack.c.l.b16 %v2169
        %v2203 = vunpack.c.l.b16 %v2170
        %v2204 = vunpack.c.h.b16 %v2170
        %v2205 = vunpack.c.l.b16 %v2171
        %v2206 = vunpack.c.l.b16 %v2172
        %v2207 = vunpack.c.h.b16 %v2172
        %v2208 = vunpack.c.l.b16 %v2173
        %v2209 = vunpack.c.l.b16 %v2174
        %v2210 = vunpack.c.h.b16 %v2174
        %v2211 = vunpack.c.l.b16 %v2175
        %v2212 = vunpack.c.l.b16 %v2176
        %v2213 = vunpack.c.h.b16 %v2176
        %v2214 = vunpack.c.l.b16 %v2177
        %v2215 = vunpack.c.l.b16 %v2178
        %v2216 = vunpack.c.h.b16 %v2178
        %v2217 = vunpack.c.l.b16 %v2179
        %v2218 = vunpack.c.l.b16 %v2180
        %v2219 = vunpack.c.h.b16 %v2180
        %v2220 = vunpack.c.l.b16 %v2181
        %v2221 = vunpack.c.l.b16 %v2182
        %v2222 = vunpack.c.h.b16 %v2182
        %v2223 = vunpack.c.l.b16 %v2183
        %v2224 = vpack.c.b16 %v2203, %v2200
        %v2225 = vpack.c.b16 %v2204, %v2201
        %v2226 = vpack.c.b16 %v2205, %v2202
        %v2227 = vpack.c.b16 %v2209, %v2206
        %v2228 = vpack.c.b16 %v2210, %v2207
        %v2229 = vpack.c.b16 %v2211, %v2208
        %v2230 = vpack.c.b16 %v2215, %v2212
        %v2231 = vpack.c.b16 %v2216, %v2213
        %v2232 = vpack.c.b16 %v2217, %v2214
        %v2233 = vpack.c.b16 %v2221, %v2218
        %v2234 = vpack.c.b16 %v2222, %v2219
        %v2235 = vpack.c.b16 %v2223, %v2220
        %2248 = vmatprep.subr.bf16.mxu0 0
        %2249 = vmatpush1.bf16.msra.mxu0 0
        %2250 = vmatprep.subr.bf16.mxu0 0
        %2251 = vmatpush1.bf16.msra.mxu0 0
        %2252 = vmatprep.subr.bf16.mxu0 0
        %2253 = vmatpush1.bf16.msra.mxu0 0
        %2254 = vmatprep.subr.bf16.mxu0 0
        %2255 = vmatpush1.bf16.msra.mxu0 0
        %2256 = vmatprep.subr.bf16.mxu0 %v2234
        %2257 = vmatpush1.bf16.msra.mxu0 %v2233
        %2258 = vmatprep.subr.bf16.mxu0 %v2231
        %2259 = vmatpush1.bf16.msra.mxu0 %v2230
        %2260 = vmatprep.subr.bf16.mxu0 %v2228
        %2261 = vmatpush1.bf16.msra.mxu0 %v2227
        %2262 = vmatprep.subr.bf16.mxu0 %v2225
        %2263 = vmatpush1.bf16.msra.mxu0 %v2224
        %2264 = vmatprep.subr.bf16.mxu0 0
        %2265 = vmatpush2.bf16.msra.mxu0 0
        %2266 = vmatprep.subr.bf16.mxu0 0
        %2267 = vmatpush2.bf16.msra.mxu0 0
        %2268 = vmatprep.subr.bf16.mxu0 0
        %2269 = vmatpush2.bf16.msra.mxu0 0
        %2270 = vmatprep.subr.bf16.mxu0 0
        %2271 = vmatpush2.bf16.msra.mxu0 0
        %2272 = vmatprep.subr.bf16.mxu0 0
        %2273 = vmatpush2.bf16.msra.mxu0 0
        %2274 = vmatprep.subr.bf16.mxu0 0
        %2275 = vmatpush2.bf16.msra.mxu0 0
        %2276 = vmatprep.subr.bf16.mxu0 0
        %2277 = vmatpush2.bf16.msra.mxu0 0
        %2278 = vmatprep.subr.bf16.mxu0 0
        %2279 = vmatpush2.bf16.msra.mxu0 0
        %2280 = vmatprep.mubr.bf16.mxu0 0
        %2281 = vmatmul.mubr.bf16.gmra.mxu0 %v1134
        %v2282 = vpop.f32.mrf.mxu0
        %v2283 = vadd.f32 0.0, %v2282
        %v2284 = vpop.f32.mrf.mxu0
        %v2285 = vadd.f32 0.0, %v2284
        %v2286 = vpop.f32.mrf.mxu0
        %v2287 = vadd.f32 0.0, %v2286
        %v2288 = vpop.f32.mrf.mxu0
        %v2289 = vadd.f32 0.0, %v2288
        %2290 = vmatprep.mubr.bf16.mxu0 0
        %2291 = vmatmul.mubr.bf16.gmra.mxu0 %v1137
        %v2292 = vpop.f32.mrf.mxu0
        %v2293 = vadd.f32 0.0, %v2292
        %v2294 = vpop.f32.mrf.mxu0
        %v2295 = vadd.f32 0.0, %v2294
        %v2296 = vpop.f32.mrf.mxu0
        %v2297 = vadd.f32 0.0, %v2296
        %v2298 = vpop.f32.mrf.mxu0
        %v2299 = vadd.f32 0.0, %v2298
        %2300 = vmatprep.mubr.bf16.mxu0 0
        %2301 = vmatmul.mubr.bf16.gmra.mxu0 %v1140
        %v2302 = vpop.f32.mrf.mxu0
        %v2303 = vadd.f32 0.0, %v2302
        %v2304 = vpop.f32.mrf.mxu0
        %v2305 = vadd.f32 0.0, %v2304
        %v2306 = vpop.f32.mrf.mxu0
        %v2307 = vadd.f32 0.0, %v2306
        %v2308 = vpop.f32.mrf.mxu0
        %v2309 = vadd.f32 0.0, %v2308
        %2310 = vmatprep.mubr.bf16.mxu0 0
        %2311 = vmatmul.mubr.bf16.gmra.mxu0 %v1143
        %v2312 = vpop.f32.mrf.mxu0
        %v2313 = vadd.f32 0.0, %v2312
        %v2314 = vpop.f32.mrf.mxu0
        %v2315 = vadd.f32 0.0, %v2314
        %v2316 = vpop.f32.mrf.mxu0
        %v2317 = vadd.f32 0.0, %v2316
        %v2318 = vpop.f32.mrf.mxu0
        %v2319 = vadd.f32 0.0, %v2318
        %2320 = vdwg.mxu0
        %2321 = vmatprep.subr.bf16.mxu0 0
        %2322 = vmatpush1.bf16.msra.mxu0 0
        %2323 = vmatprep.subr.bf16.mxu0 0
        %2324 = vmatpush1.bf16.msra.mxu0 0
        %2325 = vmatprep.subr.bf16.mxu0 0
        %2326 = vmatpush1.bf16.msra.mxu0 0
        %2327 = vmatprep.subr.bf16.mxu0 0
        %2328 = vmatpush1.bf16.msra.mxu0 0
        %2329 = vmatprep.subr.bf16.mxu0 0
        %2330 = vmatpush1.bf16.msra.mxu0 %v2235
        %2331 = vmatprep.subr.bf16.mxu0 0
        %2332 = vmatpush1.bf16.msra.mxu0 %v2232
        %2333 = vmatprep.subr.bf16.mxu0 0
        %2334 = vmatpush1.bf16.msra.mxu0 %v2229
        %2335 = vmatprep.subr.bf16.mxu0 0
        %2336 = vmatpush1.bf16.msra.mxu0 %v2226
        %2337 = vmatprep.subr.bf16.mxu0 0
        %2338 = vmatpush2.bf16.msra.mxu0 0
        %2339 = vmatprep.subr.bf16.mxu0 0
        %2340 = vmatpush2.bf16.msra.mxu0 0
        %2341 = vmatprep.subr.bf16.mxu0 0
        %2342 = vmatpush2.bf16.msra.mxu0 0
        %2343 = vmatprep.subr.bf16.mxu0 0
        %2344 = vmatpush2.bf16.msra.mxu0 0
        %2345 = vmatprep.subr.bf16.mxu0 0
        %2346 = vmatpush2.bf16.msra.mxu0 0
        %2347 = vmatprep.subr.bf16.mxu0 0
        %2348 = vmatpush2.bf16.msra.mxu0 0
        %2349 = vmatprep.subr.bf16.mxu0 0
        %2350 = vmatpush2.bf16.msra.mxu0 0
        %2351 = vmatprep.subr.bf16.mxu0 0
        %2352 = vmatpush2.bf16.msra.mxu0 0
        %2353 = vmatprep.mubr.bf16.mxu0 0
        %2354 = vmatmul.mubr.bf16.gmra.mxu0 %v1134
        %v2355 = vpop.f32.mrf.mxu0
        %v2356 = vadd.f32 0.0, %v2355
        %v2357 = vpop.f32.mrf.mxu0
        %v2358 = vpop.f32.mrf.mxu0
        %v2359 = vadd.f32 0.0, %v2358
        %v2360 = vpop.f32.mrf.mxu0
        %2361 = vmatprep.mubr.bf16.mxu0 0
        %2362 = vmatmul.mubr.bf16.gmra.mxu0 %v1137
        %v2363 = vpop.f32.mrf.mxu0
        %v2364 = vadd.f32 0.0, %v2363
        %v2365 = vpop.f32.mrf.mxu0
        %v2366 = vpop.f32.mrf.mxu0
        %v2367 = vadd.f32 0.0, %v2366
        %v2368 = vpop.f32.mrf.mxu0
        %2369 = vmatprep.mubr.bf16.mxu0 0
        %2370 = vmatmul.mubr.bf16.gmra.mxu0 %v1140
        %v2371 = vpop.f32.mrf.mxu0
        %v2372 = vadd.f32 0.0, %v2371
        %v2373 = vpop.f32.mrf.mxu0
        %v2374 = vpop.f32.mrf.mxu0
        %v2375 = vadd.f32 0.0, %v2374
        %v2376 = vpop.f32.mrf.mxu0
        %2377 = vmatprep.mubr.bf16.mxu0 0
        %2378 = vmatmul.mubr.bf16.gmra.mxu0 %v1143
        %v2379 = vpop.f32.mrf.mxu0
        %v2380 = vadd.f32 0.0, %v2379
        %v2381 = vpop.f32.mrf.mxu0
        %v2382 = vpop.f32.mrf.mxu0
        %v2383 = vadd.f32 0.0, %v2382
        %v2384 = vpop.f32.mrf.mxu0
        %2385 = vdwg.mxu0
        %v2386 = vlaneseq
        %v2387 = vshrl.u32 %v2386, 7
        %v2388 = vsub.s32 0, %v2387
        %v2389 = vrot.slane %v2166, %v2388
        %v2390 = vadd.f32 %v2283, %v2389
        %v2391 = vadd.f32 %v2287, %v2389
        %v2392 = vadd.f32 %v2293, %v2389
        %v2393 = vadd.f32 %v2297, %v2389
        %v2394 = vadd.f32 %v2303, %v2389
        %v2395 = vadd.f32 %v2307, %v2389
        %v2396 = vadd.f32 %v2313, %v2389
        %v2397 = vadd.f32 %v2317, %v2389
        %v2398 = vlaneseq
        %v2399 = vshrl.u32 %v2398, 7
        %v2400 = vsub.s32 1, %v2399
        %v2401 = vrot.slane %v2166, %v2400
        %v2402 = vadd.f32 %v2285, %v2401
        %v2403 = vadd.f32 %v2289, %v2401
        %v2404 = vadd.f32 %v2295, %v2401
        %v2405 = vadd.f32 %v2299, %v2401
        %v2406 = vadd.f32 %v2305, %v2401
        %v2407 = vadd.f32 %v2309, %v2401
        %v2408 = vadd.f32 %v2315, %v2401
        %v2409 = vadd.f32 %v2319, %v2401
        %v2410 = vpack.c.bf16 %v2165, %v2164
        %v2411 = vld [vmem:[%s7] sm:$0xff]
        %v2412 = vld [vmem:[%s7 + $0x8] sm:$0xff]
        %v2413 = vld [vmem:[%s7 + $0x10] sm:$0xff]
        %v2414 = vld [vmem:[%s7 + $0x18] sm:$0xff]
        %v2415 = vld [vmem:[%s7 + $0x20] sm:$0xff]
        %v2416 = vld [vmem:[%s7 + $0x28] sm:$0xff]
        %v2417 = vld [vmem:[%s7 + $0x30] sm:$0xff]
        %v2418 = vld [vmem:[%s7 + $0x38] sm:$0xff]
        %v2419 = vld [vmem:[%s7 + $0x40] sm:$0xff]
        %v2420 = vld [vmem:[%s7 + $0x48] sm:$0xff]
        %v2421 = vld [vmem:[%s7 + $0x50] sm:$0xff]
        %v2422 = vld [vmem:[%s7 + $0x58] sm:$0xff]
        %v2423 = vld [vmem:[%s7 + $0x60] sm:$0xff]
        %v2424 = vld [vmem:[%s7 + $0x68] sm:$0xff]
        %v2425 = vld [vmem:[%s7 + $0x70] sm:$0xff]
        %v2426 = vld [vmem:[%s7 + $0x78] sm:$0xff]
        %v2443 = vunpack.c.l.b16 %v2411
        %v2444 = vunpack.c.h.b16 %v2411
        %v2445 = vunpack.c.l.b16 %v2412
        %v2446 = vunpack.c.h.b16 %v2412
        %v2447 = vunpack.c.l.b16 %v2413
        %v2448 = vunpack.c.h.b16 %v2413
        %v2449 = vunpack.c.l.b16 %v2414
        %v2450 = vunpack.c.h.b16 %v2414
        %v2451 = vunpack.c.l.b16 %v2415
        %v2452 = vunpack.c.h.b16 %v2415
        %v2453 = vunpack.c.l.b16 %v2416
        %v2454 = vunpack.c.h.b16 %v2416
        %v2455 = vunpack.c.l.b16 %v2417
        %v2456 = vunpack.c.h.b16 %v2417
        %v2457 = vunpack.c.l.b16 %v2418
        %v2458 = vunpack.c.h.b16 %v2418
        %v2459 = vunpack.c.l.b16 %v2419
        %v2460 = vunpack.c.h.b16 %v2419
        %v2461 = vunpack.c.l.b16 %v2420
        %v2462 = vunpack.c.h.b16 %v2420
        %v2463 = vunpack.c.l.b16 %v2421
        %v2464 = vunpack.c.h.b16 %v2421
        %v2465 = vunpack.c.l.b16 %v2422
        %v2466 = vunpack.c.h.b16 %v2422
        %v2467 = vunpack.c.l.b16 %v2423
        %v2468 = vunpack.c.h.b16 %v2423
        %v2469 = vunpack.c.l.b16 %v2424
        %v2470 = vunpack.c.h.b16 %v2424
        %v2471 = vunpack.c.l.b16 %v2425
        %v2472 = vunpack.c.h.b16 %v2425
        %v2473 = vunpack.c.l.b16 %v2426
        %v2474 = vunpack.c.h.b16 %v2426
        %v2475 = vpack.c.b16 %v2445, %v2443
        %v2476 = vpack.c.b16 %v2446, %v2444
        %v2477 = vpack.c.b16 %v2449, %v2447
        %v2478 = vpack.c.b16 %v2450, %v2448
        %v2479 = vpack.c.b16 %v2453, %v2451
        %v2480 = vpack.c.b16 %v2454, %v2452
        %v2481 = vpack.c.b16 %v2457, %v2455
        %v2482 = vpack.c.b16 %v2458, %v2456
        %v2483 = vpack.c.b16 %v2461, %v2459
        %v2484 = vpack.c.b16 %v2462, %v2460
        %v2485 = vpack.c.b16 %v2465, %v2463
        %v2486 = vpack.c.b16 %v2466, %v2464
        %v2487 = vpack.c.b16 %v2469, %v2467
        %v2488 = vpack.c.b16 %v2470, %v2468
        %v2489 = vpack.c.b16 %v2473, %v2471
        %v2490 = vpack.c.b16 %v2474, %v2472
        %2507 = vmatprep.subr.bf16.mxu0 %v2490
        %2508 = vmatpush1.bf16.msra.mxu0 %v2489
        %2509 = vmatprep.subr.bf16.mxu0 %v2488
        %2510 = vmatpush1.bf16.msra.mxu0 %v2487
        %2511 = vmatprep.subr.bf16.mxu0 %v2486
        %2512 = vmatpush1.bf16.msra.mxu0 %v2485
        %2513 = vmatprep.subr.bf16.mxu0 %v2484
        %2514 = vmatpush1.bf16.msra.mxu0 %v2483
        %2515 = vmatprep.subr.bf16.mxu0 %v2482
        %2516 = vmatpush1.bf16.msra.mxu0 %v2481
        %2517 = vmatprep.subr.bf16.mxu0 %v2480
        %2518 = vmatpush1.bf16.msra.mxu0 %v2479
        %2519 = vmatprep.subr.bf16.mxu0 %v2478
        %2520 = vmatpush1.bf16.msra.mxu0 %v2477
        %2521 = vmatprep.subr.bf16.mxu0 %v2476
        %2522 = vmatpush1.bf16.msra.mxu0 %v2475
        %2523 = vmatprep.subr.bf16.mxu0 0
        %2524 = vmatpush2.bf16.msra.mxu0 0
        %2525 = vmatprep.subr.bf16.mxu0 0
        %2526 = vmatpush2.bf16.msra.mxu0 0
        %2527 = vmatprep.subr.bf16.mxu0 0
        %2528 = vmatpush2.bf16.msra.mxu0 0
        %2529 = vmatprep.subr.bf16.mxu0 0
        %2530 = vmatpush2.bf16.msra.mxu0 0
        %2531 = vmatprep.subr.bf16.mxu0 0
        %2532 = vmatpush2.bf16.msra.mxu0 0
        %2533 = vmatprep.subr.bf16.mxu0 0
        %2534 = vmatpush2.bf16.msra.mxu0 0
        %2535 = vmatprep.subr.bf16.mxu0 0
        %2536 = vmatpush2.bf16.msra.mxu0 0
        %2537 = vmatprep.subr.bf16.mxu0 0
        %2538 = vmatpush2.bf16.msra.mxu0 0
        %2539 = vmatprep.mubr.bf16.mxu0 0
        %2540 = vmatmul.mubr.bf16.gmra.mxu0 %v2410
        %v2541 = vpop.f32.mrf.mxu0
        %v2542 = vadd.f32 0.0, %v2541
        %v2543 = vpop.f32.mrf.mxu0
        %v2544 = vadd.f32 0.0, %v2543
        %v2545 = vpop.f32.mrf.mxu0
        %v2546 = vadd.f32 0.0, %v2545
        %v2547 = vpop.f32.mrf.mxu0
        %v2548 = vadd.f32 0.0, %v2547
        %2549 = vdwg.mxu0
        %v2550 = vlaneseq
        %v2551 = vshrl.u32 %v2550, 7
        %v2552 = vsub.s32 2, %v2551
        %v2553 = vrot.slane %v2166, %v2552
        %v2554 = vadd.f32 %v2542, %v2553
        %v2555 = vadd.f32 %v2546, %v2553
        %v2556 = vlaneseq
        %v2557 = vshrl.u32 %v2556, 7
        %v2558 = vsub.s32 3, %v2557
        %v2559 = vrot.slane %v2166, %v2558
        %v2560 = vadd.f32 %v2544, %v2559
        %v2561 = vadd.f32 %v2548, %v2559
        %v2562 = vpack.c.bf16 %v2403, %v2402
        %v2563 = vpack.c.bf16 %v2405, %v2404
        %v2564 = vpack.c.bf16 %v2407, %v2406
        %v2565 = vpack.c.bf16 %v2409, %v2408
        %v2566 = vpack.c.bf16 %v2555, %v2554
        %v2567 = vpack.c.bf16 %v2561, %v2560
        %v2569 = vsel %vm1251, %v2562, 0
        %v2572 = vsel %vm1251, %v2563, 0
        %v2575 = vsel %vm1251, %v2564, 0
        %v2578 = vsel %vm1251, %v2565, 0
        %v2581 = vsel %vm1251, %v2566, 0
        %2583 = vmatprep.subr.bf16.mxu0 0
        %2584 = vmatpush1.bf16.xpose.msra.mxu0 0
        %2585 = vmatprep.subr.bf16.mxu0 0
        %2586 = vmatpush1.bf16.xpose.msra.mxu0 0
        %2587 = vmatprep.subr.bf16.mxu0 0
        %2588 = vmatpush1.bf16.xpose.msra.mxu0 0
        %2589 = vmatprep.subr.bf16.mxu0 0
        %2590 = vmatpush1.bf16.xpose.msra.mxu0 0
        %2591 = vmatprep.subr.bf16.mxu0 0
        %2592 = vmatpush1.bf16.xpose.msra.mxu0 0
        %2593 = vmatprep.subr.bf16.mxu0 0
        %2594 = vmatpush1.bf16.xpose.msra.mxu0 0
        %2595 = vmatprep.subr.bf16.mxu0 0
        %2596 = vmatpush1.bf16.xpose.msra.mxu0 0
        %2597 = vmatprep.subr.bf16.mxu0 0
        %2598 = vmatpush1.bf16.xpose.msra.mxu0 %v2581
        %2599 = vmatprep.subr.bf16.mxu0 0
        %2600 = vmatpush2.bf16.xpose.msra.mxu0 0
        %2601 = vmatprep.subr.bf16.mxu0 0
        %2602 = vmatpush2.bf16.xpose.msra.mxu0 0
        %2603 = vmatprep.subr.bf16.mxu0 0
        %2604 = vmatpush2.bf16.xpose.msra.mxu0 0
        %2605 = vmatprep.subr.bf16.mxu0 0
        %2606 = vmatpush2.bf16.xpose.msra.mxu0 0
        %2607 = vmatprep.subr.bf16.mxu0 0
        %2608 = vmatpush2.bf16.xpose.msra.mxu0 0
        %2609 = vmatprep.subr.bf16.mxu0 0
        %2610 = vmatpush2.bf16.xpose.msra.mxu0 0
        %2611 = vmatprep.subr.bf16.mxu0 0
        %2612 = vmatpush2.bf16.xpose.msra.mxu0 0
        %2613 = vmatprep.subr.bf16.mxu0 0
        %2614 = vmatpush2.bf16.xpose.msra.mxu0 0
        %2615 = vmatprep.mubr.bf16.mxu0 0
        %2616 = vmatmul.mubr.bf16.gmra.mxu0 %v2569
        %v2617 = vpop.f32.mrf.mxu0
        %v2618 = vadd.f32 0.0, %v2617
        %v2619 = vpop.f32.mrf.mxu0
        %v2620 = vpop.f32.mrf.mxu0
        %v2621 = vadd.f32 0.0, %v2620
        %v2622 = vpop.f32.mrf.mxu0
        %2623 = vmatprep.mubr.bf16.mxu0 0
        %2624 = vmatmul.mubr.bf16.gmra.mxu0 %v2572
        %v2625 = vpop.f32.mrf.mxu0
        %v2626 = vadd.f32 0.0, %v2625
        %v2627 = vpop.f32.mrf.mxu0
        %v2628 = vpop.f32.mrf.mxu0
        %v2629 = vadd.f32 0.0, %v2628
        %v2630 = vpop.f32.mrf.mxu0
        %2631 = vmatprep.mubr.bf16.mxu0 0
        %2632 = vmatmul.mubr.bf16.gmra.mxu0 %v2575
        %v2633 = vpop.f32.mrf.mxu0
        %v2634 = vadd.f32 0.0, %v2633
        %v2635 = vpop.f32.mrf.mxu0
        %v2636 = vpop.f32.mrf.mxu0
        %v2637 = vadd.f32 0.0, %v2636
        %v2638 = vpop.f32.mrf.mxu0
        %2639 = vmatprep.mubr.bf16.mxu0 0
        %2640 = vmatmul.mubr.bf16.gmra.mxu0 %v2578
        %v2641 = vpop.f32.mrf.mxu0
        %v2642 = vadd.f32 0.0, %v2641
        %v2643 = vpop.f32.mrf.mxu0
        %v2644 = vpop.f32.mrf.mxu0
        %v2645 = vadd.f32 0.0, %v2644
        %v2646 = vpop.f32.mrf.mxu0
        %2647 = vdwg.mxu0
        %2652 = vrot.lane.b32.xlu0 %v2562, 96
        %v2653 = vpop.permute.xlu0 %2652
        %2654 = vrot.lane.b32.xlu0 %v2563, 96
        %v2655 = vpop.permute.xlu0 %2654
        %2656 = vrot.lane.b32.xlu0 %v2564, 96
        %v2657 = vpop.permute.xlu0 %2656
        %2658 = vrot.lane.b32.xlu0 %v2565, 96
        %v2659 = vpop.permute.xlu0 %2658
        %2661 = vrot.lane.b32.xlu0 %v2566, 96
        %v2662 = vpop.permute.xlu0 %2661
        %v2664 = vsel %vm1251, %v2653, 0
        %v2667 = vsel %vm1251, %v2655, 0
        %v2670 = vsel %vm1251, %v2657, 0
        %v2673 = vsel %vm1251, %v2659, 0
        %v2676 = vsel %vm1251, %v2662, 0
        %2678 = vmatprep.subr.bf16.mxu0 0
        %2679 = vmatpush1.bf16.xpose.msra.mxu0 0
        %2680 = vmatprep.subr.bf16.mxu0 0
        %2681 = vmatpush1.bf16.xpose.msra.mxu0 0
        %2682 = vmatprep.subr.bf16.mxu0 0
        %2683 = vmatpush1.bf16.xpose.msra.mxu0 0
        %2684 = vmatprep.subr.bf16.mxu0 0
        %2685 = vmatpush1.bf16.xpose.msra.mxu0 0
        %2686 = vmatprep.subr.bf16.mxu0 0
        %2687 = vmatpush1.bf16.xpose.msra.mxu0 0
        %2688 = vmatprep.subr.bf16.mxu0 0
        %2689 = vmatpush1.bf16.xpose.msra.mxu0 0
        %2690 = vmatprep.subr.bf16.mxu0 0
        %2691 = vmatpush1.bf16.xpose.msra.mxu0 0
        %2692 = vmatprep.subr.bf16.mxu0 0
        %2693 = vmatpush1.bf16.xpose.msra.mxu0 %v2676
        %2694 = vmatprep.subr.bf16.mxu0 0
        %2695 = vmatpush2.bf16.xpose.msra.mxu0 0
        %2696 = vmatprep.subr.bf16.mxu0 0
        %2697 = vmatpush2.bf16.xpose.msra.mxu0 0
        %2698 = vmatprep.subr.bf16.mxu0 0
        %2699 = vmatpush2.bf16.xpose.msra.mxu0 0
        %2700 = vmatprep.subr.bf16.mxu0 0
        %2701 = vmatpush2.bf16.xpose.msra.mxu0 0
        %2702 = vmatprep.subr.bf16.mxu0 0
        %2703 = vmatpush2.bf16.xpose.msra.mxu0 0
        %2704 = vmatprep.subr.bf16.mxu0 0
        %2705 = vmatpush2.bf16.xpose.msra.mxu0 0
        %2706 = vmatprep.subr.bf16.mxu0 0
        %2707 = vmatpush2.bf16.xpose.msra.mxu0 0
        %2708 = vmatprep.subr.bf16.mxu0 0
        %2709 = vmatpush2.bf16.xpose.msra.mxu0 0
        %2710 = vmatprep.mubr.bf16.mxu0 0
        %2711 = vmatmul.mubr.bf16.gmra.mxu0 %v2664
        %v2712 = vpop.f32.mrf.mxu0
        %v2713 = vadd.f32 0.0, %v2712
        %v2714 = vpop.f32.mrf.mxu0
        %v2715 = vpop.f32.mrf.mxu0
        %v2716 = vadd.f32 0.0, %v2715
        %v2717 = vpop.f32.mrf.mxu0
        %2718 = vmatprep.mubr.bf16.mxu0 0
        %2719 = vmatmul.mubr.bf16.gmra.mxu0 %v2667
        %v2720 = vpop.f32.mrf.mxu0
        %v2721 = vadd.f32 0.0, %v2720
        %v2722 = vpop.f32.mrf.mxu0
        %v2723 = vpop.f32.mrf.mxu0
        %v2724 = vadd.f32 0.0, %v2723
        %v2725 = vpop.f32.mrf.mxu0
        %2726 = vmatprep.mubr.bf16.mxu0 0
        %2727 = vmatmul.mubr.bf16.gmra.mxu0 %v2670
        %v2728 = vpop.f32.mrf.mxu0
        %v2729 = vadd.f32 0.0, %v2728
        %v2730 = vpop.f32.mrf.mxu0
        %v2731 = vpop.f32.mrf.mxu0
        %v2732 = vadd.f32 0.0, %v2731
        %v2733 = vpop.f32.mrf.mxu0
        %2734 = vmatprep.mubr.bf16.mxu0 0
        %2735 = vmatmul.mubr.bf16.gmra.mxu0 %v2673
        %v2736 = vpop.f32.mrf.mxu0
        %v2737 = vadd.f32 0.0, %v2736
        %v2738 = vpop.f32.mrf.mxu0
        %v2739 = vpop.f32.mrf.mxu0
        %v2740 = vadd.f32 0.0, %v2739
        %v2741 = vpop.f32.mrf.mxu0
        %2742 = vdwg.mxu0
        %2743 = vrot.lane.b32.xlu0 %v2562, 64
        %v2744 = vpop.permute.xlu0 %2743
        %2745 = vrot.lane.b32.xlu0 %v2563, 64
        %v2746 = vpop.permute.xlu0 %2745
        %2747 = vrot.lane.b32.xlu0 %v2564, 64
        %v2748 = vpop.permute.xlu0 %2747
        %2749 = vrot.lane.b32.xlu0 %v2565, 64
        %v2750 = vpop.permute.xlu0 %2749
        %2751 = vrot.lane.b32.xlu0 %v2566, 64
        %v2752 = vpop.permute.xlu0 %2751
        %v2754 = vsel %vm1251, %v2744, 0
        %v2757 = vsel %vm1251, %v2746, 0
        %v2760 = vsel %vm1251, %v2748, 0
        %v2763 = vsel %vm1251, %v2750, 0
        %v2766 = vsel %vm1251, %v2752, 0
        %2768 = vmatprep.subr.bf16.mxu0 0
        %2769 = vmatpush1.bf16.xpose.msra.mxu0 0
        %2770 = vmatprep.subr.bf16.mxu0 0
        %2771 = vmatpush1.bf16.xpose.msra.mxu0 0
        %2772 = vmatprep.subr.bf16.mxu0 0
        %2773 = vmatpush1.bf16.xpose.msra.mxu0 0
        %2774 = vmatprep.subr.bf16.mxu0 0
        %2775 = vmatpush1.bf16.xpose.msra.mxu0 0
        %2776 = vmatprep.subr.bf16.mxu0 0
        %2777 = vmatpush1.bf16.xpose.msra.mxu0 0
        %2778 = vmatprep.subr.bf16.mxu0 0
        %2779 = vmatpush1.bf16.xpose.msra.mxu0 0
        %2780 = vmatprep.subr.bf16.mxu0 0
        %2781 = vmatpush1.bf16.xpose.msra.mxu0 0
        %2782 = vmatprep.subr.bf16.mxu0 0
        %2783 = vmatpush1.bf16.xpose.msra.mxu0 %v2766
        %2784 = vmatprep.subr.bf16.mxu0 0
        %2785 = vmatpush2.bf16.xpose.msra.mxu0 0
        %2786 = vmatprep.subr.bf16.mxu0 0
        %2787 = vmatpush2.bf16.xpose.msra.mxu0 0
        %2788 = vmatprep.subr.bf16.mxu0 0
        %2789 = vmatpush2.bf16.xpose.msra.mxu0 0
        %2790 = vmatprep.subr.bf16.mxu0 0
        %2791 = vmatpush2.bf16.xpose.msra.mxu0 0
        %2792 = vmatprep.subr.bf16.mxu0 0
        %2793 = vmatpush2.bf16.xpose.msra.mxu0 0
        %2794 = vmatprep.subr.bf16.mxu0 0
        %2795 = vmatpush2.bf16.xpose.msra.mxu0 0
        %2796 = vmatprep.subr.bf16.mxu0 0
        %2797 = vmatpush2.bf16.xpose.msra.mxu0 0
        %2798 = vmatprep.subr.bf16.mxu0 0
        %2799 = vmatpush2.bf16.xpose.msra.mxu0 0
        %2800 = vmatprep.mubr.bf16.mxu0 0
        %2801 = vmatmul.mubr.bf16.gmra.mxu0 %v2754
        %v2802 = vpop.f32.mrf.mxu0
        %v2803 = vadd.f32 0.0, %v2802
        %v2804 = vpop.f32.mrf.mxu0
        %v2805 = vpop.f32.mrf.mxu0
        %v2806 = vadd.f32 0.0, %v2805
        %v2807 = vpop.f32.mrf.mxu0
        %2808 = vmatprep.mubr.bf16.mxu0 0
        %2809 = vmatmul.mubr.bf16.gmra.mxu0 %v2757
        %v2810 = vpop.f32.mrf.mxu0
        %v2811 = vadd.f32 0.0, %v2810
        %v2812 = vpop.f32.mrf.mxu0
        %v2813 = vpop.f32.mrf.mxu0
        %v2814 = vadd.f32 0.0, %v2813
        %v2815 = vpop.f32.mrf.mxu0
        %2816 = vmatprep.mubr.bf16.mxu0 0
        %2817 = vmatmul.mubr.bf16.gmra.mxu0 %v2760
        %v2818 = vpop.f32.mrf.mxu0
        %v2819 = vadd.f32 0.0, %v2818
        %v2820 = vpop.f32.mrf.mxu0
        %v2821 = vpop.f32.mrf.mxu0
        %v2822 = vadd.f32 0.0, %v2821
        %v2823 = vpop.f32.mrf.mxu0
        %2824 = vmatprep.mubr.bf16.mxu0 0
        %2825 = vmatmul.mubr.bf16.gmra.mxu0 %v2763
        %v2826 = vpop.f32.mrf.mxu0
        %v2827 = vadd.f32 0.0, %v2826
        %v2828 = vpop.f32.mrf.mxu0
        %v2829 = vpop.f32.mrf.mxu0
        %v2830 = vadd.f32 0.0, %v2829
        %v2831 = vpop.f32.mrf.mxu0
        %2832 = vdwg.mxu0
        %2833 = vrot.lane.b32.xlu0 %v2562, 32
        %v2834 = vpop.permute.xlu0 %2833
        %2835 = vrot.lane.b32.xlu0 %v2563, 32
        %v2836 = vpop.permute.xlu0 %2835
        %2837 = vrot.lane.b32.xlu0 %v2564, 32
        %v2838 = vpop.permute.xlu0 %2837
        %2839 = vrot.lane.b32.xlu0 %v2565, 32
        %v2840 = vpop.permute.xlu0 %2839
        %2841 = vrot.lane.b32.xlu0 %v2566, 32
        %v2842 = vpop.permute.xlu0 %2841
        %v2844 = vsel %vm1251, %v2834, 0
        %v2847 = vsel %vm1251, %v2836, 0
        %v2850 = vsel %vm1251, %v2838, 0
        %v2853 = vsel %vm1251, %v2840, 0
        %v2856 = vsel %vm1251, %v2842, 0
        %2858 = vmatprep.subr.bf16.mxu0 0
        %2859 = vmatpush1.bf16.xpose.msra.mxu0 0
        %2860 = vmatprep.subr.bf16.mxu0 0
        %2861 = vmatpush1.bf16.xpose.msra.mxu0 0
        %2862 = vmatprep.subr.bf16.mxu0 0
        %2863 = vmatpush1.bf16.xpose.msra.mxu0 0
        %2864 = vmatprep.subr.bf16.mxu0 0
        %2865 = vmatpush1.bf16.xpose.msra.mxu0 0
        %2866 = vmatprep.subr.bf16.mxu0 0
        %2867 = vmatpush1.bf16.xpose.msra.mxu0 0
        %2868 = vmatprep.subr.bf16.mxu0 0
        %2869 = vmatpush1.bf16.xpose.msra.mxu0 0
        %2870 = vmatprep.subr.bf16.mxu0 0
        %2871 = vmatpush1.bf16.xpose.msra.mxu0 0
        %2872 = vmatprep.subr.bf16.mxu0 0
        %2873 = vmatpush1.bf16.xpose.msra.mxu0 %v2856
        %2874 = vmatprep.subr.bf16.mxu0 0
        %2875 = vmatpush2.bf16.xpose.msra.mxu0 0
        %2876 = vmatprep.subr.bf16.mxu0 0
        %2877 = vmatpush2.bf16.xpose.msra.mxu0 0
        %2878 = vmatprep.subr.bf16.mxu0 0
        %2879 = vmatpush2.bf16.xpose.msra.mxu0 0
        %2880 = vmatprep.subr.bf16.mxu0 0
        %2881 = vmatpush2.bf16.xpose.msra.mxu0 0
        %2882 = vmatprep.subr.bf16.mxu0 0
        %2883 = vmatpush2.bf16.xpose.msra.mxu0 0
        %2884 = vmatprep.subr.bf16.mxu0 0
        %2885 = vmatpush2.bf16.xpose.msra.mxu0 0
        %2886 = vmatprep.subr.bf16.mxu0 0
        %2887 = vmatpush2.bf16.xpose.msra.mxu0 0
        %2888 = vmatprep.subr.bf16.mxu0 0
        %2889 = vmatpush2.bf16.xpose.msra.mxu0 0
        %2890 = vmatprep.mubr.bf16.mxu0 0
        %2891 = vmatmul.mubr.bf16.gmra.mxu0 %v2844
        %v2892 = vpop.f32.mrf.mxu0
        %v2893 = vadd.f32 0.0, %v2892
        %v2894 = vpop.f32.mrf.mxu0
        %v2895 = vpop.f32.mrf.mxu0
        %v2896 = vadd.f32 0.0, %v2895
        %v2897 = vpop.f32.mrf.mxu0
        %2898 = vmatprep.mubr.bf16.mxu0 0
        %2899 = vmatmul.mubr.bf16.gmra.mxu0 %v2847
        %v2900 = vpop.f32.mrf.mxu0
        %v2901 = vadd.f32 0.0, %v2900
        %v2902 = vpop.f32.mrf.mxu0
        %v2903 = vpop.f32.mrf.mxu0
        %v2904 = vadd.f32 0.0, %v2903
        %v2905 = vpop.f32.mrf.mxu0
        %2906 = vmatprep.mubr.bf16.mxu0 0
        %2907 = vmatmul.mubr.bf16.gmra.mxu0 %v2850
        %v2908 = vpop.f32.mrf.mxu0
        %v2909 = vadd.f32 0.0, %v2908
        %v2910 = vpop.f32.mrf.mxu0
        %v2911 = vpop.f32.mrf.mxu0
        %v2912 = vadd.f32 0.0, %v2911
        %v2913 = vpop.f32.mrf.mxu0
        %2914 = vmatprep.mubr.bf16.mxu0 0
        %2915 = vmatmul.mubr.bf16.gmra.mxu0 %v2853
        %v2916 = vpop.f32.mrf.mxu0
        %v2917 = vadd.f32 0.0, %v2916
        %v2918 = vpop.f32.mrf.mxu0
        %v2919 = vpop.f32.mrf.mxu0
        %v2920 = vadd.f32 0.0, %v2919
        %v2921 = vpop.f32.mrf.mxu0
        %2922 = vdwg.mxu0
        %vm2923 = vcmask 130048
        %v2924 = vsel %vm2923, %v2618, -inf
        %2925 = vmax.xlane.f32.xlu0 %v2924
        %v2926 = vpop.xlane.xlu0 %2925
        %v2927 = vsel %vm2923, %v2621, -inf
        %2928 = vmax.xlane.f32.xlu0 %v2927
        %v2929 = vpop.xlane.xlu0 %2928
        %v2930 = vsel %vm2923, %v2626, -inf
        %2931 = vmax.xlane.f32.xlu0 %v2930
        %v2932 = vpop.xlane.xlu0 %2931
        %v2933 = vsel %vm2923, %v2629, -inf
        %2934 = vmax.xlane.f32.xlu0 %v2933
        %v2935 = vpop.xlane.xlu0 %2934
        %v2936 = vsel %vm2923, %v2634, -inf
        %2937 = vmax.xlane.f32.xlu0 %v2936
        %v2938 = vpop.xlane.xlu0 %2937
        %v2939 = vsel %vm2923, %v2637, -inf
        %2940 = vmax.xlane.f32.xlu0 %v2939
        %v2941 = vpop.xlane.xlu0 %2940
        %v2942 = vsel %vm2923, %v2642, -inf
        %2943 = vmax.xlane.f32.xlu0 %v2942
        %v2944 = vpop.xlane.xlu0 %2943
        %v2945 = vsel %vm2923, %v2645, -inf
        %2946 = vmax.xlane.f32.xlu0 %v2945
        %v2947 = vpop.xlane.xlu0 %2946
        %v2948 = vsel %vm2923, %v2713, -inf
        %2949 = vmax.xlane.f32.xlu0 %v2948
        %v2950 = vpop.xlane.xlu0 %2949
        %v2951 = vsel %vm2923, %v2716, -inf
        %2952 = vmax.xlane.f32.xlu0 %v2951
        %v2953 = vpop.xlane.xlu0 %2952
        %v2954 = vsel %vm2923, %v2721, -inf
        %2955 = vmax.xlane.f32.xlu0 %v2954
        %v2956 = vpop.xlane.xlu0 %2955
        %v2957 = vsel %vm2923, %v2724, -inf
        %2958 = vmax.xlane.f32.xlu0 %v2957
        %v2959 = vpop.xlane.xlu0 %2958
        %v2960 = vsel %vm2923, %v2729, -inf
        %2961 = vmax.xlane.f32.xlu0 %v2960
        %v2962 = vpop.xlane.xlu0 %2961
        %v2963 = vsel %vm2923, %v2732, -inf
        %2964 = vmax.xlane.f32.xlu0 %v2963
        %v2965 = vpop.xlane.xlu0 %2964
        %v2966 = vsel %vm2923, %v2737, -inf
        %2967 = vmax.xlane.f32.xlu0 %v2966
        %v2968 = vpop.xlane.xlu0 %2967
        %v2969 = vsel %vm2923, %v2740, -inf
        %2970 = vmax.xlane.f32.xlu0 %v2969
        %v2971 = vpop.xlane.xlu0 %2970
        %v2972 = vsel %vm2923, %v2803, -inf
        %2973 = vmax.xlane.f32.xlu0 %v2972
        %v2974 = vpop.xlane.xlu0 %2973
        %v2975 = vsel %vm2923, %v2806, -inf
        %2976 = vmax.xlane.f32.xlu0 %v2975
        %v2977 = vpop.xlane.xlu0 %2976
        %v2978 = vsel %vm2923, %v2811, -inf
        %2979 = vmax.xlane.f32.xlu0 %v2978
        %v2980 = vpop.xlane.xlu0 %2979
        %v2981 = vsel %vm2923, %v2814, -inf
        %2982 = vmax.xlane.f32.xlu0 %v2981
        %v2983 = vpop.xlane.xlu0 %2982
        %v2984 = vsel %vm2923, %v2819, -inf
        %2985 = vmax.xlane.f32.xlu0 %v2984
        %v2986 = vpop.xlane.xlu0 %2985
        %v2987 = vsel %vm2923, %v2822, -inf
        %2988 = vmax.xlane.f32.xlu0 %v2987
        %v2989 = vpop.xlane.xlu0 %2988
        %v2990 = vsel %vm2923, %v2827, -inf
        %2991 = vmax.xlane.f32.xlu0 %v2990
        %v2992 = vpop.xlane.xlu0 %2991
        %v2993 = vsel %vm2923, %v2830, -inf
        %2994 = vmax.xlane.f32.xlu0 %v2993
        %v2995 = vpop.xlane.xlu0 %2994
        %v2996 = vsel %vm2923, %v2893, -inf
        %2997 = vmax.xlane.f32.xlu0 %v2996
        %v2998 = vpop.xlane.xlu0 %2997
        %v2999 = vsel %vm2923, %v2896, -inf
        %3000 = vmax.xlane.f32.xlu0 %v2999
        %v3001 = vpop.xlane.xlu0 %3000
        %v3002 = vsel %vm2923, %v2901, -inf
        %3003 = vmax.xlane.f32.xlu0 %v3002
        %v3004 = vpop.xlane.xlu0 %3003
        %v3005 = vsel %vm2923, %v2904, -inf
        %3006 = vmax.xlane.f32.xlu0 %v3005
        %v3007 = vpop.xlane.xlu0 %3006
        %v3008 = vsel %vm2923, %v2909, -inf
        %3009 = vmax.xlane.f32.xlu0 %v3008
        %v3010 = vpop.xlane.xlu0 %3009
        %v3011 = vsel %vm2923, %v2912, -inf
        %3012 = vmax.xlane.f32.xlu0 %v3011
        %v3013 = vpop.xlane.xlu0 %3012
        %v3014 = vsel %vm2923, %v2917, -inf
        %3015 = vmax.xlane.f32.xlu0 %v3014
        %v3016 = vpop.xlane.xlu0 %3015
        %v3017 = vsel %vm2923, %v2920, -inf
        %3018 = vmax.xlane.f32.xlu0 %v3017
        %v3019 = vpop.xlane.xlu0 %3018
        %v3020 = vsub.f32 %v2618, %v2926
        %v3021 = vsub.f32 %v2621, %v2929
        %v3022 = vsub.f32 %v2626, %v2932
        %v3023 = vsub.f32 %v2629, %v2935
        %v3024 = vsub.f32 %v2634, %v2938
        %v3025 = vsub.f32 %v2637, %v2941
        %v3026 = vsub.f32 %v2642, %v2944
        %v3027 = vsub.f32 %v2645, %v2947
        %v3028 = vsub.f32 %v2713, %v2950
        %v3029 = vsub.f32 %v2716, %v2953
        %v3030 = vsub.f32 %v2721, %v2956
        %v3031 = vsub.f32 %v2724, %v2959
        %v3032 = vsub.f32 %v2729, %v2962
        %v3033 = vsub.f32 %v2732, %v2965
        %v3034 = vsub.f32 %v2737, %v2968
        %v3035 = vsub.f32 %v2740, %v2971
        %v3036 = vsub.f32 %v2803, %v2974
        %v3037 = vsub.f32 %v2806, %v2977
        %v3038 = vsub.f32 %v2811, %v2980
        %v3039 = vsub.f32 %v2814, %v2983
        %v3040 = vsub.f32 %v2819, %v2986
        %v3041 = vsub.f32 %v2822, %v2989
        %v3042 = vsub.f32 %v2827, %v2992
        %v3043 = vsub.f32 %v2830, %v2995
        %v3044 = vsub.f32 %v2893, %v2998
        %v3045 = vsub.f32 %v2896, %v3001
        %v3046 = vsub.f32 %v2901, %v3004
        %v3047 = vsub.f32 %v2904, %v3007
        %v3048 = vsub.f32 %v2909, %v3010
        %v3049 = vsub.f32 %v2912, %v3013
        %v3050 = vsub.f32 %v2917, %v3016
        %v3051 = vsub.f32 %v2920, %v3019
        %v3052 = vmul.f32 %v3020, 1.442695
        %v3053 = vpow.pop %v3052
        %v3054 = vmul.f32 %v3021, 1.442695
        %v3055 = vpow.pop %v3054
        %v3056 = vmul.f32 %v3022, 1.442695
        %v3057 = vpow.pop %v3056
        %v3058 = vmul.f32 %v3023, 1.442695
        %v3059 = vpow.pop %v3058
        %v3060 = vmul.f32 %v3024, 1.442695
        %v3061 = vpow.pop %v3060
        %v3062 = vmul.f32 %v3025, 1.442695
        %v3063 = vpow.pop %v3062
        %v3064 = vmul.f32 %v3026, 1.442695
        %v3065 = vpow.pop %v3064
        %v3066 = vmul.f32 %v3027, 1.442695
        %v3067 = vpow.pop %v3066
        %v3068 = vmul.f32 %v3028, 1.442695
        %v3069 = vpow.pop %v3068
        %v3070 = vmul.f32 %v3029, 1.442695
        %v3071 = vpow.pop %v3070
        %v3072 = vmul.f32 %v3030, 1.442695
        %v3073 = vpow.pop %v3072
        %v3074 = vmul.f32 %v3031, 1.442695
        %v3075 = vpow.pop %v3074
        %v3076 = vmul.f32 %v3032, 1.442695
        %v3077 = vpow.pop %v3076
        %v3078 = vmul.f32 %v3033, 1.442695
        %v3079 = vpow.pop %v3078
        %v3080 = vmul.f32 %v3034, 1.442695
        %v3081 = vpow.pop %v3080
        %v3082 = vmul.f32 %v3035, 1.442695
        %v3083 = vpow.pop %v3082
        %v3084 = vmul.f32 %v3036, 1.442695
        %v3085 = vpow.pop %v3084
        %v3086 = vmul.f32 %v3037, 1.442695
        %v3087 = vpow.pop %v3086
        %v3088 = vmul.f32 %v3038, 1.442695
        %v3089 = vpow.pop %v3088
        %v3090 = vmul.f32 %v3039, 1.442695
        %v3091 = vpow.pop %v3090
        %v3092 = vmul.f32 %v3040, 1.442695
        %v3093 = vpow.pop %v3092
        %v3094 = vmul.f32 %v3041, 1.442695
        %v3095 = vpow.pop %v3094
        %v3096 = vmul.f32 %v3042, 1.442695
        %v3097 = vpow.pop %v3096
        %v3098 = vmul.f32 %v3043, 1.442695
        %v3099 = vpow.pop %v3098
        %v3100 = vmul.f32 %v3044, 1.442695
        %v3101 = vpow.pop %v3100
        %v3102 = vmul.f32 %v3045, 1.442695
        %v3103 = vpow.pop %v3102
        %v3104 = vmul.f32 %v3046, 1.442695
        %v3105 = vpow.pop %v3104
        %v3106 = vmul.f32 %v3047, 1.442695
        %v3107 = vpow.pop %v3106
        %v3108 = vmul.f32 %v3048, 1.442695
        %v3109 = vpow.pop %v3108
        %v3110 = vmul.f32 %v3049, 1.442695
        %v3111 = vpow.pop %v3110
        %v3112 = vmul.f32 %v3050, 1.442695
        %v3113 = vpow.pop %v3112
        %v3114 = vmul.f32 %v3051, 1.442695
        %v3115 = vpow.pop %v3114
        %v3116 = vsel %vm2923, %v3053, 0.0
        %3117 = vadd.xlane.f32.xlu0 %v3116
        %v3118 = vpop.xlane.xlu0 %3117
        %v3119 = vsel %vm2923, %v3055, 0.0
        %3120 = vadd.xlane.f32.xlu0 %v3119
        %v3121 = vpop.xlane.xlu0 %3120
        %v3122 = vsel %vm2923, %v3057, 0.0
        %3123 = vadd.xlane.f32.xlu0 %v3122
        %v3124 = vpop.xlane.xlu0 %3123
        %v3125 = vsel %vm2923, %v3059, 0.0
        %3126 = vadd.xlane.f32.xlu0 %v3125
        %v3127 = vpop.xlane.xlu0 %3126
        %v3128 = vsel %vm2923, %v3061, 0.0
        %3129 = vadd.xlane.f32.xlu0 %v3128
        %v3130 = vpop.xlane.xlu0 %3129
        %v3131 = vsel %vm2923, %v3063, 0.0
        %3132 = vadd.xlane.f32.xlu0 %v3131
        %v3133 = vpop.xlane.xlu0 %3132
        %v3134 = vsel %vm2923, %v3065, 0.0
        %3135 = vadd.xlane.f32.xlu0 %v3134
        %v3136 = vpop.xlane.xlu0 %3135
        %v3137 = vsel %vm2923, %v3067, 0.0
        %3138 = vadd.xlane.f32.xlu0 %v3137
        %v3139 = vpop.xlane.xlu0 %3138
        %v3140 = vsel %vm2923, %v3069, 0.0
        %3141 = vadd.xlane.f32.xlu0 %v3140
        %v3142 = vpop.xlane.xlu0 %3141
        %v3143 = vsel %vm2923, %v3071, 0.0
        %3144 = vadd.xlane.f32.xlu0 %v3143
        %v3145 = vpop.xlane.xlu0 %3144
        %v3146 = vsel %vm2923, %v3073, 0.0
        %3147 = vadd.xlane.f32.xlu0 %v3146
        %v3148 = vpop.xlane.xlu0 %3147
        %v3149 = vsel %vm2923, %v3075, 0.0
        %3150 = vadd.xlane.f32.xlu0 %v3149
        %v3151 = vpop.xlane.xlu0 %3150
        %v3152 = vsel %vm2923, %v3077, 0.0
        %3153 = vadd.xlane.f32.xlu0 %v3152
        %v3154 = vpop.xlane.xlu0 %3153
        %v3155 = vsel %vm2923, %v3079, 0.0
        %3156 = vadd.xlane.f32.xlu0 %v3155
        %v3157 = vpop.xlane.xlu0 %3156
        %v3158 = vsel %vm2923, %v3081, 0.0
        %3159 = vadd.xlane.f32.xlu0 %v3158
        %v3160 = vpop.xlane.xlu0 %3159
        %v3161 = vsel %vm2923, %v3083, 0.0
        %3162 = vadd.xlane.f32.xlu0 %v3161
        %v3163 = vpop.xlane.xlu0 %3162
        %v3164 = vsel %vm2923, %v3085, 0.0
        %3165 = vadd.xlane.f32.xlu0 %v3164
        %v3166 = vpop.xlane.xlu0 %3165
        %v3167 = vsel %vm2923, %v3087, 0.0
        %3168 = vadd.xlane.f32.xlu0 %v3167
        %v3169 = vpop.xlane.xlu0 %3168
        %v3170 = vsel %vm2923, %v3089, 0.0
        %3171 = vadd.xlane.f32.xlu0 %v3170
        %v3172 = vpop.xlane.xlu0 %3171
        %v3173 = vsel %vm2923, %v3091, 0.0
        %3174 = vadd.xlane.f32.xlu0 %v3173
        %v3175 = vpop.xlane.xlu0 %3174
        %v3176 = vsel %vm2923, %v3093, 0.0
        %3177 = vadd.xlane.f32.xlu0 %v3176
        %v3178 = vpop.xlane.xlu0 %3177
        %v3179 = vsel %vm2923, %v3095, 0.0
        %3180 = vadd.xlane.f32.xlu0 %v3179
        %v3181 = vpop.xlane.xlu0 %3180
        %v3182 = vsel %vm2923, %v3097, 0.0
        %3183 = vadd.xlane.f32.xlu0 %v3182
        %v3184 = vpop.xlane.xlu0 %3183
        %v3185 = vsel %vm2923, %v3099, 0.0
        %3186 = vadd.xlane.f32.xlu0 %v3185
        %v3187 = vpop.xlane.xlu0 %3186
        %v3188 = vsel %vm2923, %v3101, 0.0
        %3189 = vadd.xlane.f32.xlu0 %v3188
        %v3190 = vpop.xlane.xlu0 %3189
        %v3191 = vsel %vm2923, %v3103, 0.0
        %3192 = vadd.xlane.f32.xlu0 %v3191
        %v3193 = vpop.xlane.xlu0 %3192
        %v3194 = vsel %vm2923, %v3105, 0.0
        %3195 = vadd.xlane.f32.xlu0 %v3194
        %v3196 = vpop.xlane.xlu0 %3195
        %v3197 = vsel %vm2923, %v3107, 0.0
        %3198 = vadd.xlane.f32.xlu0 %v3197
        %v3199 = vpop.xlane.xlu0 %3198
        %v3200 = vsel %vm2923, %v3109, 0.0
        %3201 = vadd.xlane.f32.xlu0 %v3200
        %v3202 = vpop.xlane.xlu0 %3201
        %v3203 = vsel %vm2923, %v3111, 0.0
        %3204 = vadd.xlane.f32.xlu0 %v3203
        %v3205 = vpop.xlane.xlu0 %3204
        %v3206 = vsel %vm2923, %v3113, 0.0
        %3207 = vadd.xlane.f32.xlu0 %v3206
        %v3208 = vpop.xlane.xlu0 %3207
        %v3209 = vsel %vm2923, %v3115, 0.0
        %3210 = vadd.xlane.f32.xlu0 %v3209
        %v3211 = vpop.xlane.xlu0 %3210
        %v3212 = vrcp.pop %v3118
        %v3213 = vrcp.pop %v3121
        %v3214 = vrcp.pop %v3124
        %v3215 = vrcp.pop %v3127
        %v3216 = vrcp.pop %v3130
        %v3217 = vrcp.pop %v3133
        %v3218 = vrcp.pop %v3136
        %v3219 = vrcp.pop %v3139
        %v3220 = vrcp.pop %v3142
        %v3221 = vrcp.pop %v3145
        %v3222 = vrcp.pop %v3148
        %v3223 = vrcp.pop %v3151
        %v3224 = vrcp.pop %v3154
        %v3225 = vrcp.pop %v3157
        %v3226 = vrcp.pop %v3160
        %v3227 = vrcp.pop %v3163
        %v3228 = vrcp.pop %v3166
        %v3229 = vrcp.pop %v3169
        %v3230 = vrcp.pop %v3172
        %v3231 = vrcp.pop %v3175
        %v3232 = vrcp.pop %v3178
        %v3233 = vrcp.pop %v3181
        %v3234 = vrcp.pop %v3184
        %v3235 = vrcp.pop %v3187
        %v3236 = vrcp.pop %v3190
        %v3237 = vrcp.pop %v3193
        %v3238 = vrcp.pop %v3196
        %v3239 = vrcp.pop %v3199
        %v3240 = vrcp.pop %v3202
        %v3241 = vrcp.pop %v3205
        %v3242 = vrcp.pop %v3208
        %v3243 = vrcp.pop %v3211
        %v3244 = vmul.f32 %v3053, %v3212
        %v3245 = vmul.f32 %v3055, %v3213
        %v3246 = vmul.f32 %v3057, %v3214
        %v3247 = vmul.f32 %v3059, %v3215
        %v3248 = vmul.f32 %v3061, %v3216
        %v3249 = vmul.f32 %v3063, %v3217
        %v3250 = vmul.f32 %v3065, %v3218
        %v3251 = vmul.f32 %v3067, %v3219
        %v3252 = vmul.f32 %v3069, %v3220
        %v3253 = vmul.f32 %v3071, %v3221
        %v3254 = vmul.f32 %v3073, %v3222
        %v3255 = vmul.f32 %v3075, %v3223
        %v3256 = vmul.f32 %v3077, %v3224
        %v3257 = vmul.f32 %v3079, %v3225
        %v3258 = vmul.f32 %v3081, %v3226
        %v3259 = vmul.f32 %v3083, %v3227
        %v3260 = vmul.f32 %v3085, %v3228
        %v3261 = vmul.f32 %v3087, %v3229
        %v3262 = vmul.f32 %v3089, %v3230
        %v3263 = vmul.f32 %v3091, %v3231
        %v3264 = vmul.f32 %v3093, %v3232
        %v3265 = vmul.f32 %v3095, %v3233
        %v3266 = vmul.f32 %v3097, %v3234
        %v3267 = vmul.f32 %v3099, %v3235
        %v3268 = vmul.f32 %v3101, %v3236
        %v3269 = vmul.f32 %v3103, %v3237
        %v3270 = vmul.f32 %v3105, %v3238
        %v3271 = vmul.f32 %v3107, %v3239
        %v3272 = vmul.f32 %v3109, %v3240
        %v3273 = vmul.f32 %v3111, %v3241
        %v3274 = vmul.f32 %v3113, %v3242
        %v3275 = vmul.f32 %v3115, %v3243
        %v3276 = vpack.c.bf16 %v3245, %v3244
        %v3277 = vpack.c.bf16 %v3247, %v3246
        %v3278 = vpack.c.bf16 %v3249, %v3248
        %v3279 = vpack.c.bf16 %v3251, %v3250
        %v3280 = vpack.c.bf16 %v3253, %v3252
        %v3281 = vpack.c.bf16 %v3255, %v3254
        %v3282 = vpack.c.bf16 %v3257, %v3256
        %v3283 = vpack.c.bf16 %v3259, %v3258
        %v3284 = vpack.c.bf16 %v3261, %v3260
        %v3285 = vpack.c.bf16 %v3263, %v3262
        %v3286 = vpack.c.bf16 %v3265, %v3264
        %v3287 = vpack.c.bf16 %v3267, %v3266
        %v3288 = vpack.c.bf16 %v3269, %v3268
        %v3289 = vpack.c.bf16 %v3271, %v3270
        %v3290 = vpack.c.bf16 %v3273, %v3272
        %v3291 = vpack.c.bf16 %v3275, %v3274
        %v3293 = vsel %vm2923, %v3276, 0
        %v3296 = vsel %vm2923, %v3277, 0
        %v3299 = vsel %vm2923, %v3278, 0
        %v3302 = vsel %vm2923, %v3279, 0
        %3304 = vmatprep.subr.bf16.mxu0 0
        %3305 = vmatpush1.bf16.msra.mxu0 0
        %3306 = vmatprep.subr.bf16.mxu0 0
        %3307 = vmatpush1.bf16.msra.mxu0 0
        %3308 = vmatprep.subr.bf16.mxu0 0
        %3309 = vmatpush1.bf16.msra.mxu0 0
        %3310 = vmatprep.subr.bf16.mxu0 0
        %3311 = vmatpush1.bf16.msra.mxu0 0
        %3312 = vmatprep.subr.bf16.mxu0 0
        %3313 = vmatpush1.bf16.msra.mxu0 0
        %3314 = vmatprep.subr.bf16.mxu0 0
        %3315 = vmatpush1.bf16.msra.mxu0 0
        %3316 = vmatprep.subr.bf16.mxu0 0
        %3317 = vmatpush1.bf16.msra.mxu0 0
        %3318 = vmatprep.subr.bf16.mxu0 0
        %3319 = vmatpush1.bf16.msra.mxu0 %v2567
        %3320 = vmatprep.subr.bf16.mxu0 0
        %3321 = vmatpush2.bf16.msra.mxu0 0
        %3322 = vmatprep.subr.bf16.mxu0 0
        %3323 = vmatpush2.bf16.msra.mxu0 0
        %3324 = vmatprep.subr.bf16.mxu0 0
        %3325 = vmatpush2.bf16.msra.mxu0 0
        %3326 = vmatprep.subr.bf16.mxu0 0
        %3327 = vmatpush2.bf16.msra.mxu0 0
        %3328 = vmatprep.subr.bf16.mxu0 0
        %3329 = vmatpush2.bf16.msra.mxu0 0
        %3330 = vmatprep.subr.bf16.mxu0 0
        %3331 = vmatpush2.bf16.msra.mxu0 0
        %3332 = vmatprep.subr.bf16.mxu0 0
        %3333 = vmatpush2.bf16.msra.mxu0 0
        %3334 = vmatprep.subr.bf16.mxu0 0
        %3335 = vmatpush2.bf16.msra.mxu0 0
        %3336 = vmatprep.mubr.bf16.mxu0 0
        %3337 = vmatmul.mubr.bf16.gmra.mxu0 %v3293
        %v3338 = vpop.f32.mrf.mxu0
        %v3339 = vadd.f32 0.0, %v3338
        %v3340 = vpop.f32.mrf.mxu0
        %v3341 = vpop.f32.mrf.mxu0
        %v3342 = vadd.f32 0.0, %v3341
        %v3343 = vpop.f32.mrf.mxu0
        %3344 = vmatprep.mubr.bf16.mxu0 0
        %3345 = vmatmul.mubr.bf16.gmra.mxu0 %v3296
        %v3346 = vpop.f32.mrf.mxu0
        %v3347 = vadd.f32 0.0, %v3346
        %v3348 = vpop.f32.mrf.mxu0
        %v3349 = vpop.f32.mrf.mxu0
        %v3350 = vadd.f32 0.0, %v3349
        %v3351 = vpop.f32.mrf.mxu0
        %3352 = vmatprep.mubr.bf16.mxu0 0
        %3353 = vmatmul.mubr.bf16.gmra.mxu0 %v3299
        %v3354 = vpop.f32.mrf.mxu0
        %v3355 = vadd.f32 0.0, %v3354
        %v3356 = vpop.f32.mrf.mxu0
        %v3357 = vpop.f32.mrf.mxu0
        %v3358 = vadd.f32 0.0, %v3357
        %v3359 = vpop.f32.mrf.mxu0
        %3360 = vmatprep.mubr.bf16.mxu0 0
        %3361 = vmatmul.mubr.bf16.gmra.mxu0 %v3302
        %v3362 = vpop.f32.mrf.mxu0
        %v3363 = vadd.f32 0.0, %v3362
        %v3364 = vpop.f32.mrf.mxu0
        %v3365 = vpop.f32.mrf.mxu0
        %v3366 = vadd.f32 0.0, %v3365
        %v3367 = vpop.f32.mrf.mxu0
        %3368 = vdwg.mxu0
        %3370 = vrot.lane.b32.xlu0 %v2567, 96
        %v3371 = vpop.permute.xlu0 %3370
        %v3374 = vsel %vm2923, %v3280, 0
        %v3377 = vsel %vm2923, %v3281, 0
        %v3380 = vsel %vm2923, %v3282, 0
        %v3383 = vsel %vm2923, %v3283, 0
        %3385 = vmatprep.subr.bf16.mxu0 0
        %3386 = vmatpush1.bf16.msra.mxu0 0
        %3387 = vmatprep.subr.bf16.mxu0 0
        %3388 = vmatpush1.bf16.msra.mxu0 0
        %3389 = vmatprep.subr.bf16.mxu0 0
        %3390 = vmatpush1.bf16.msra.mxu0 0
        %3391 = vmatprep.subr.bf16.mxu0 0
        %3392 = vmatpush1.bf16.msra.mxu0 0
        %3393 = vmatprep.subr.bf16.mxu0 0
        %3394 = vmatpush1.bf16.msra.mxu0 0
        %3395 = vmatprep.subr.bf16.mxu0 0
        %3396 = vmatpush1.bf16.msra.mxu0 0
        %3397 = vmatprep.subr.bf16.mxu0 0
        %3398 = vmatpush1.bf16.msra.mxu0 0
        %3399 = vmatprep.subr.bf16.mxu0 0
        %3400 = vmatpush1.bf16.msra.mxu0 %v3371
        %3401 = vmatprep.subr.bf16.mxu0 0
        %3402 = vmatpush2.bf16.msra.mxu0 0
        %3403 = vmatprep.subr.bf16.mxu0 0
        %3404 = vmatpush2.bf16.msra.mxu0 0
        %3405 = vmatprep.subr.bf16.mxu0 0
        %3406 = vmatpush2.bf16.msra.mxu0 0
        %3407 = vmatprep.subr.bf16.mxu0 0
        %3408 = vmatpush2.bf16.msra.mxu0 0
        %3409 = vmatprep.subr.bf16.mxu0 0
        %3410 = vmatpush2.bf16.msra.mxu0 0
        %3411 = vmatprep.subr.bf16.mxu0 0
        %3412 = vmatpush2.bf16.msra.mxu0 0
        %3413 = vmatprep.subr.bf16.mxu0 0
        %3414 = vmatpush2.bf16.msra.mxu0 0
        %3415 = vmatprep.subr.bf16.mxu0 0
        %3416 = vmatpush2.bf16.msra.mxu0 0
        %3417 = vmatprep.mubr.bf16.mxu0 0
        %3418 = vmatmul.mubr.bf16.gmra.mxu0 %v3374
        %v3419 = vpop.f32.mrf.mxu0
        %v3420 = vadd.f32 0.0, %v3419
        %v3421 = vpop.f32.mrf.mxu0
        %v3422 = vpop.f32.mrf.mxu0
        %v3423 = vadd.f32 0.0, %v3422
        %v3424 = vpop.f32.mrf.mxu0
        %3425 = vmatprep.mubr.bf16.mxu0 0
        %3426 = vmatmul.mubr.bf16.gmra.mxu0 %v3377
        %v3427 = vpop.f32.mrf.mxu0
        %v3428 = vadd.f32 0.0, %v3427
        %v3429 = vpop.f32.mrf.mxu0
        %v3430 = vpop.f32.mrf.mxu0
        %v3431 = vadd.f32 0.0, %v3430
        %v3432 = vpop.f32.mrf.mxu0
        %3433 = vmatprep.mubr.bf16.mxu0 0
        %3434 = vmatmul.mubr.bf16.gmra.mxu0 %v3380
        %v3435 = vpop.f32.mrf.mxu0
        %v3436 = vadd.f32 0.0, %v3435
        %v3437 = vpop.f32.mrf.mxu0
        %v3438 = vpop.f32.mrf.mxu0
        %v3439 = vadd.f32 0.0, %v3438
        %v3440 = vpop.f32.mrf.mxu0
        %3441 = vmatprep.mubr.bf16.mxu0 0
        %3442 = vmatmul.mubr.bf16.gmra.mxu0 %v3383
        %v3443 = vpop.f32.mrf.mxu0
        %v3444 = vadd.f32 0.0, %v3443
        %v3445 = vpop.f32.mrf.mxu0
        %v3446 = vpop.f32.mrf.mxu0
        %v3447 = vadd.f32 0.0, %v3446
        %v3448 = vpop.f32.mrf.mxu0
        %3449 = vdwg.mxu0
        %3450 = vrot.lane.b32.xlu0 %v2567, 64
        %v3451 = vpop.permute.xlu0 %3450
        %v3454 = vsel %vm2923, %v3284, 0
        %v3457 = vsel %vm2923, %v3285, 0
        %v3460 = vsel %vm2923, %v3286, 0
        %v3463 = vsel %vm2923, %v3287, 0
        %3465 = vmatprep.subr.bf16.mxu0 0
        %3466 = vmatpush1.bf16.msra.mxu0 0
        %3467 = vmatprep.subr.bf16.mxu0 0
        %3468 = vmatpush1.bf16.msra.mxu0 0
        %3469 = vmatprep.subr.bf16.mxu0 0
        %3470 = vmatpush1.bf16.msra.mxu0 0
        %3471 = vmatprep.subr.bf16.mxu0 0
        %3472 = vmatpush1.bf16.msra.mxu0 0
        %3473 = vmatprep.subr.bf16.mxu0 0
        %3474 = vmatpush1.bf16.msra.mxu0 0
        %3475 = vmatprep.subr.bf16.mxu0 0
        %3476 = vmatpush1.bf16.msra.mxu0 0
        %3477 = vmatprep.subr.bf16.mxu0 0
        %3478 = vmatpush1.bf16.msra.mxu0 0
        %3479 = vmatprep.subr.bf16.mxu0 0
        %3480 = vmatpush1.bf16.msra.mxu0 %v3451
        %3481 = vmatprep.subr.bf16.mxu0 0
        %3482 = vmatpush2.bf16.msra.mxu0 0
        %3483 = vmatprep.subr.bf16.mxu0 0
        %3484 = vmatpush2.bf16.msra.mxu0 0
        %3485 = vmatprep.subr.bf16.mxu0 0
        %3486 = vmatpush2.bf16.msra.mxu0 0
        %3487 = vmatprep.subr.bf16.mxu0 0
        %3488 = vmatpush2.bf16.msra.mxu0 0
        %3489 = vmatprep.subr.bf16.mxu0 0
        %3490 = vmatpush2.bf16.msra.mxu0 0
        %3491 = vmatprep.subr.bf16.mxu0 0
        %3492 = vmatpush2.bf16.msra.mxu0 0
        %3493 = vmatprep.subr.bf16.mxu0 0
        %3494 = vmatpush2.bf16.msra.mxu0 0
        %3495 = vmatprep.subr.bf16.mxu0 0
        %3496 = vmatpush2.bf16.msra.mxu0 0
        %3497 = vmatprep.mubr.bf16.mxu0 0
        %3498 = vmatmul.mubr.bf16.gmra.mxu0 %v3454
        %v3499 = vpop.f32.mrf.mxu0
        %v3500 = vadd.f32 0.0, %v3499
        %v3501 = vpop.f32.mrf.mxu0
        %v3502 = vpop.f32.mrf.mxu0
        %v3503 = vadd.f32 0.0, %v3502
        %v3504 = vpop.f32.mrf.mxu0
        %3505 = vmatprep.mubr.bf16.mxu0 0
        %3506 = vmatmul.mubr.bf16.gmra.mxu0 %v3457
        %v3507 = vpop.f32.mrf.mxu0
        %v3508 = vadd.f32 0.0, %v3507
        %v3509 = vpop.f32.mrf.mxu0
        %v3510 = vpop.f32.mrf.mxu0
        %v3511 = vadd.f32 0.0, %v3510
        %v3512 = vpop.f32.mrf.mxu0
        %3513 = vmatprep.mubr.bf16.mxu0 0
        %3514 = vmatmul.mubr.bf16.gmra.mxu0 %v3460
        %v3515 = vpop.f32.mrf.mxu0
        %v3516 = vadd.f32 0.0, %v3515
        %v3517 = vpop.f32.mrf.mxu0
        %v3518 = vpop.f32.mrf.mxu0
        %v3519 = vadd.f32 0.0, %v3518
        %v3520 = vpop.f32.mrf.mxu0
        %3521 = vmatprep.mubr.bf16.mxu0 0
        %3522 = vmatmul.mubr.bf16.gmra.mxu0 %v3463
        %v3523 = vpop.f32.mrf.mxu0
        %v3524 = vadd.f32 0.0, %v3523
        %v3525 = vpop.f32.mrf.mxu0
        %v3526 = vpop.f32.mrf.mxu0
        %v3527 = vadd.f32 0.0, %v3526
        %v3528 = vpop.f32.mrf.mxu0
        %3529 = vdwg.mxu0
        %3530 = vrot.lane.b32.xlu0 %v2567, 32
        %v3531 = vpop.permute.xlu0 %3530
        %v3534 = vsel %vm2923, %v3288, 0
        %v3537 = vsel %vm2923, %v3289, 0
        %v3540 = vsel %vm2923, %v3290, 0
        %v3543 = vsel %vm2923, %v3291, 0
        %3545 = vmatprep.subr.bf16.mxu0 0
        %3546 = vmatpush1.bf16.msra.mxu0 0
        %3547 = vmatprep.subr.bf16.mxu0 0
        %3548 = vmatpush1.bf16.msra.mxu0 0
        %3549 = vmatprep.subr.bf16.mxu0 0
        %3550 = vmatpush1.bf16.msra.mxu0 0
        %3551 = vmatprep.subr.bf16.mxu0 0
        %3552 = vmatpush1.bf16.msra.mxu0 0
        %3553 = vmatprep.subr.bf16.mxu0 0
        %3554 = vmatpush1.bf16.msra.mxu0 0
        %3555 = vmatprep.subr.bf16.mxu0 0
        %3556 = vmatpush1.bf16.msra.mxu0 0
        %3557 = vmatprep.subr.bf16.mxu0 0
        %3558 = vmatpush1.bf16.msra.mxu0 0
        %3559 = vmatprep.subr.bf16.mxu0 0
        %3560 = vmatpush1.bf16.msra.mxu0 %v3531
        %3561 = vmatprep.subr.bf16.mxu0 0
        %3562 = vmatpush2.bf16.msra.mxu0 0
        %3563 = vmatprep.subr.bf16.mxu0 0
        %3564 = vmatpush2.bf16.msra.mxu0 0
        %3565 = vmatprep.subr.bf16.mxu0 0
        %3566 = vmatpush2.bf16.msra.mxu0 0
        %3567 = vmatprep.subr.bf16.mxu0 0
        %3568 = vmatpush2.bf16.msra.mxu0 0
        %3569 = vmatprep.subr.bf16.mxu0 0
        %3570 = vmatpush2.bf16.msra.mxu0 0
        %3571 = vmatprep.subr.bf16.mxu0 0
        %3572 = vmatpush2.bf16.msra.mxu0 0
        %3573 = vmatprep.subr.bf16.mxu0 0
        %3574 = vmatpush2.bf16.msra.mxu0 0
        %3575 = vmatprep.subr.bf16.mxu0 0
        %3576 = vmatpush2.bf16.msra.mxu0 0
        %3577 = vmatprep.mubr.bf16.mxu0 0
        %3578 = vmatmul.mubr.bf16.gmra.mxu0 %v3534
        %v3579 = vpop.f32.mrf.mxu0
        %v3580 = vadd.f32 0.0, %v3579
        %v3581 = vpop.f32.mrf.mxu0
        %v3582 = vpop.f32.mrf.mxu0
        %v3583 = vadd.f32 0.0, %v3582
        %v3584 = vpop.f32.mrf.mxu0
        %3585 = vmatprep.mubr.bf16.mxu0 0
        %3586 = vmatmul.mubr.bf16.gmra.mxu0 %v3537
        %v3587 = vpop.f32.mrf.mxu0
        %v3588 = vadd.f32 0.0, %v3587
        %v3589 = vpop.f32.mrf.mxu0
        %v3590 = vpop.f32.mrf.mxu0
        %v3591 = vadd.f32 0.0, %v3590
        %v3592 = vpop.f32.mrf.mxu0
        %3593 = vmatprep.mubr.bf16.mxu0 0
        %3594 = vmatmul.mubr.bf16.gmra.mxu0 %v3540
        %v3595 = vpop.f32.mrf.mxu0
        %v3596 = vadd.f32 0.0, %v3595
        %v3597 = vpop.f32.mrf.mxu0
        %v3598 = vpop.f32.mrf.mxu0
        %v3599 = vadd.f32 0.0, %v3598
        %v3600 = vpop.f32.mrf.mxu0
        %3601 = vmatprep.mubr.bf16.mxu0 0
        %3602 = vmatmul.mubr.bf16.gmra.mxu0 %v3543
        %v3603 = vpop.f32.mrf.mxu0
        %v3604 = vadd.f32 0.0, %v3603
        %v3605 = vpop.f32.mrf.mxu0
        %v3606 = vpop.f32.mrf.mxu0
        %v3607 = vadd.f32 0.0, %v3606
        %v3608 = vpop.f32.mrf.mxu0
        %3609 = vdwg.mxu0
        %3618 = vrot.lane.b32.xlu0 %v3420, 32
        %v3619 = vpop.permute.xlu0 %3618
        %3620 = vrot.lane.b32.xlu0 %v3423, 32
        %v3621 = vpop.permute.xlu0 %3620
        %3622 = vrot.lane.b32.xlu0 %v3428, 32
        %v3623 = vpop.permute.xlu0 %3622
        %3624 = vrot.lane.b32.xlu0 %v3431, 32
        %v3625 = vpop.permute.xlu0 %3624
        %3626 = vrot.lane.b32.xlu0 %v3436, 32
        %v3627 = vpop.permute.xlu0 %3626
        %3628 = vrot.lane.b32.xlu0 %v3439, 32
        %v3629 = vpop.permute.xlu0 %3628
        %3630 = vrot.lane.b32.xlu0 %v3444, 32
        %v3631 = vpop.permute.xlu0 %3630
        %3632 = vrot.lane.b32.xlu0 %v3447, 32
        %v3633 = vpop.permute.xlu0 %3632
        %3650 = vrot.lane.b32.xlu0 %v3500, 64
        %v3651 = vpop.permute.xlu0 %3650
        %3652 = vrot.lane.b32.xlu0 %v3503, 64
        %v3653 = vpop.permute.xlu0 %3652
        %3654 = vrot.lane.b32.xlu0 %v3508, 64
        %v3655 = vpop.permute.xlu0 %3654
        %3656 = vrot.lane.b32.xlu0 %v3511, 64
        %v3657 = vpop.permute.xlu0 %3656
        %3658 = vrot.lane.b32.xlu0 %v3516, 64
        %v3659 = vpop.permute.xlu0 %3658
        %3660 = vrot.lane.b32.xlu0 %v3519, 64
        %v3661 = vpop.permute.xlu0 %3660
        %3662 = vrot.lane.b32.xlu0 %v3524, 64
        %v3663 = vpop.permute.xlu0 %3662
        %3664 = vrot.lane.b32.xlu0 %v3527, 64
        %v3665 = vpop.permute.xlu0 %3664
        %3682 = vrot.lane.b32.xlu0 %v3580, 96
        %v3683 = vpop.permute.xlu0 %3682
        %3684 = vrot.lane.b32.xlu0 %v3583, 96
        %v3685 = vpop.permute.xlu0 %3684
        %3686 = vrot.lane.b32.xlu0 %v3588, 96
        %v3687 = vpop.permute.xlu0 %3686
        %3688 = vrot.lane.b32.xlu0 %v3591, 96
        %v3689 = vpop.permute.xlu0 %3688
        %3690 = vrot.lane.b32.xlu0 %v3596, 96
        %v3691 = vpop.permute.xlu0 %3690
        %3692 = vrot.lane.b32.xlu0 %v3599, 96
        %v3693 = vpop.permute.xlu0 %3692
        %3694 = vrot.lane.b32.xlu0 %v3604, 96
        %v3695 = vpop.permute.xlu0 %3694
        %3696 = vrot.lane.b32.xlu0 %v3607, 96
        %v3697 = vpop.permute.xlu0 %3696
        %v3706 = vsel %vm1251, %v3339, %v3619
        %v3707 = vsel %vm1251, %v3342, %v3621
        %v3708 = vsel %vm1251, %v3347, %v3623
        %v3709 = vsel %vm1251, %v3350, %v3625
        %v3710 = vsel %vm1251, %v3355, %v3627
        %v3711 = vsel %vm1251, %v3358, %v3629
        %v3712 = vsel %vm1251, %v3363, %v3631
        %v3713 = vsel %vm1251, %v3366, %v3633
        %v3714 = vsel %vm1132, %v3706, %v3651
        %v3715 = vsel %vm1132, %v3707, %v3653
        %v3716 = vsel %vm1132, %v3708, %v3655
        %v3717 = vsel %vm1132, %v3709, %v3657
        %v3718 = vsel %vm1132, %v3710, %v3659
        %v3719 = vsel %vm1132, %v3711, %v3661
        %v3720 = vsel %vm1132, %v3712, %v3663
        %v3721 = vsel %vm1132, %v3713, %v3665
        %v3722 = vsel %vm1847, %v3714, %v3683
        %v3723 = vsel %vm1847, %v3715, %v3685
        %v3724 = vsel %vm1847, %v3716, %v3687
        %v3725 = vsel %vm1847, %v3717, %v3689
        %v3726 = vsel %vm1847, %v3718, %v3691
        %v3727 = vsel %vm1847, %v3719, %v3693
        %v3728 = vsel %vm1847, %v3720, %v3695
        %v3729 = vsel %vm1847, %v3721, %v3697
        %v3730 = vpack.c.bf16 %v3723, %v3722
        %v3731 = vpack.c.bf16 %v3725, %v3724
        %v3732 = vpack.c.bf16 %v3727, %v3726
        %v3733 = vpack.c.bf16 %v3729, %v3728
        %v3734 = vld [vmem:[%s8] sm:$0xf]
        %v3735 = vld [vmem:[%s8 + $0x4] sm:$0xf]
        %v3736 = vld [vmem:[%s8 + $0x8] sm:$0xf]
        %v3737 = vld [vmem:[%s8 + $0xc] sm:$0xf]
        %v3738 = vld [vmem:[%s8 + $0x10] sm:$0xf]
        %v3739 = vld [vmem:[%s8 + $0x14] sm:$0xf]
        %v3740 = vld [vmem:[%s8 + $0x18] sm:$0xf]
        %v3741 = vld [vmem:[%s8 + $0x1c] sm:$0xf]
        %v3742 = vld [vmem:[%s8 + $0x20] sm:$0xf]
        %v3743 = vld [vmem:[%s8 + $0x24] sm:$0xf]
        %v3744 = vld [vmem:[%s8 + $0x28] sm:$0xf]
        %v3745 = vld [vmem:[%s8 + $0x2c] sm:$0xf]
        %v3746 = vld [vmem:[%s8 + $0x30] sm:$0xf]
        %v3747 = vld [vmem:[%s8 + $0x34] sm:$0xf]
        %v3748 = vld [vmem:[%s8 + $0x38] sm:$0xf]
        %v3749 = vld [vmem:[%s8 + $0x3c] sm:$0xf]
        %v3750 = vlaneseq
        %v3751 = vshrl.u32 %v3750, 7
        %v3752 = vsub.s32 4, %v3751
        %v3753 = vrot.slane %v2166, %v3752
        %v3770 = vunpack.c.l.b16 %v3734
        %v3771 = vunpack.c.l.b16 %v3735
        %v3772 = vunpack.c.l.b16 %v3736
        %v3773 = vunpack.c.l.b16 %v3737
        %v3774 = vunpack.c.l.b16 %v3738
        %v3775 = vunpack.c.l.b16 %v3739
        %v3776 = vunpack.c.l.b16 %v3740
        %v3777 = vunpack.c.l.b16 %v3741
        %v3778 = vunpack.c.l.b16 %v3742
        %v3779 = vunpack.c.l.b16 %v3743
        %v3780 = vunpack.c.l.b16 %v3744
        %v3781 = vunpack.c.l.b16 %v3745
        %v3782 = vunpack.c.l.b16 %v3746
        %v3783 = vunpack.c.l.b16 %v3747
        %v3784 = vunpack.c.l.b16 %v3748
        %v3785 = vunpack.c.l.b16 %v3749
        %v3786 = vpack.c.b16 %v3771, %v3770
        %v3787 = vpack.c.b16 %v3773, %v3772
        %v3788 = vpack.c.b16 %v3775, %v3774
        %v3789 = vpack.c.b16 %v3777, %v3776
        %v3790 = vpack.c.b16 %v3779, %v3778
        %v3791 = vpack.c.b16 %v3781, %v3780
        %v3792 = vpack.c.b16 %v3783, %v3782
        %v3793 = vpack.c.b16 %v3785, %v3784
        %3802 = vmatprep.subr.bf16.mxu0 0
        %3803 = vmatpush1.bf16.msra.mxu0 %v3793
        %3804 = vmatprep.subr.bf16.mxu0 0
        %3805 = vmatpush1.bf16.msra.mxu0 %v3792
        %3806 = vmatprep.subr.bf16.mxu0 0
        %3807 = vmatpush1.bf16.msra.mxu0 %v3791
        %3808 = vmatprep.subr.bf16.mxu0 0
        %3809 = vmatpush1.bf16.msra.mxu0 %v3790
        %3810 = vmatprep.subr.bf16.mxu0 0
        %3811 = vmatpush1.bf16.msra.mxu0 %v3789
        %3812 = vmatprep.subr.bf16.mxu0 0
        %3813 = vmatpush1.bf16.msra.mxu0 %v3788
        %3814 = vmatprep.subr.bf16.mxu0 0
        %3815 = vmatpush1.bf16.msra.mxu0 %v3787
        %3816 = vmatprep.subr.bf16.mxu0 0
        %3817 = vmatpush1.bf16.msra.mxu0 %v3786
        %3818 = vmatprep.subr.bf16.mxu0 0
        %3819 = vmatpush2.bf16.msra.mxu0 0
        %3820 = vmatprep.subr.bf16.mxu0 0
        %3821 = vmatpush2.bf16.msra.mxu0 0
        %3822 = vmatprep.subr.bf16.mxu0 0
        %3823 = vmatpush2.bf16.msra.mxu0 0
        %3824 = vmatprep.subr.bf16.mxu0 0
        %3825 = vmatpush2.bf16.msra.mxu0 0
        %3826 = vmatprep.subr.bf16.mxu0 0
        %3827 = vmatpush2.bf16.msra.mxu0 0
        %3828 = vmatprep.subr.bf16.mxu0 0
        %3829 = vmatpush2.bf16.msra.mxu0 0
        %3830 = vmatprep.subr.bf16.mxu0 0
        %3831 = vmatpush2.bf16.msra.mxu0 0
        %3832 = vmatprep.subr.bf16.mxu0 0
        %3833 = vmatpush2.bf16.msra.mxu0 0
        %3834 = vmatprep.mubr.bf16.mxu0 0
        %3835 = vmatmul.mubr.bf16.gmra.mxu0 %v3730
        %v3836 = vpop.f32.mrf.mxu0
        %v3837 = vadd.f32 %v3753, %v3836
        %v3838 = vpop.f32.mrf.mxu0
        %v3839 = vpop.f32.mrf.mxu0
        %v3840 = vadd.f32 %v3753, %v3839
        %v3841 = vpop.f32.mrf.mxu0
        %3842 = vmatprep.mubr.bf16.mxu0 0
        %3843 = vmatmul.mubr.bf16.gmra.mxu0 %v3731
        %v3844 = vpop.f32.mrf.mxu0
        %v3845 = vadd.f32 %v3753, %v3844
        %v3846 = vpop.f32.mrf.mxu0
        %v3847 = vpop.f32.mrf.mxu0
        %v3848 = vadd.f32 %v3753, %v3847
        %v3849 = vpop.f32.mrf.mxu0
        %3850 = vmatprep.mubr.bf16.mxu0 0
        %3851 = vmatmul.mubr.bf16.gmra.mxu0 %v3732
        %v3852 = vpop.f32.mrf.mxu0
        %v3853 = vadd.f32 %v3753, %v3852
        %v3854 = vpop.f32.mrf.mxu0
        %v3855 = vpop.f32.mrf.mxu0
        %v3856 = vadd.f32 %v3753, %v3855
        %v3857 = vpop.f32.mrf.mxu0
        %3858 = vmatprep.mubr.bf16.mxu0 0
        %3859 = vmatmul.mubr.bf16.gmra.mxu0 %v3733
        %v3860 = vpop.f32.mrf.mxu0
        %v3861 = vadd.f32 %v3753, %v3860
        %v3862 = vpop.f32.mrf.mxu0
        %v3863 = vpop.f32.mrf.mxu0
        %v3864 = vadd.f32 %v3753, %v3863
        %v3865 = vpop.f32.mrf.mxu0
        %3866 = vdwg.mxu0
        %v3867 = vadd.f32 %v2390, %v3837
        %v3868 = vadd.f32 %v2391, %v3840
        %v3869 = vadd.f32 %v2392, %v3845
        %v3870 = vadd.f32 %v2393, %v3848
        %v3871 = vadd.f32 %v2394, %v3853
        %v3872 = vadd.f32 %v2395, %v3856
        %v3873 = vadd.f32 %v2396, %v3861
        %v3874 = vadd.f32 %v2397, %v3864
        %3875 = vadd.xlane.f32.xlu0 %v3867
        %v3876 = vpop.xlane.xlu0 %3875
        %3877 = vadd.xlane.f32.xlu0 %v3868
        %v3878 = vpop.xlane.xlu0 %3877
        %3879 = vadd.xlane.f32.xlu0 %v3869
        %v3880 = vpop.xlane.xlu0 %3879
        %3881 = vadd.xlane.f32.xlu0 %v3870
        %v3882 = vpop.xlane.xlu0 %3881
        %3883 = vadd.xlane.f32.xlu0 %v3871
        %v3884 = vpop.xlane.xlu0 %3883
        %3885 = vadd.xlane.f32.xlu0 %v3872
        %v3886 = vpop.xlane.xlu0 %3885
        %3887 = vadd.xlane.f32.xlu0 %v3873
        %v3888 = vpop.xlane.xlu0 %3887
        %3889 = vadd.xlane.f32.xlu0 %v3874
        %v3890 = vpop.xlane.xlu0 %3889
        %v3891 = vmul.f32 %v3876, %v1966
        %v3892 = vmul.f32 %v3878, %v1966
        %v3893 = vmul.f32 %v3880, %v1966
        %v3894 = vmul.f32 %v3882, %v1966
        %v3895 = vmul.f32 %v3884, %v1966
        %v3896 = vmul.f32 %v3886, %v1966
        %v3897 = vmul.f32 %v3888, %v1966
        %v3898 = vmul.f32 %v3890, %v1966
        %v3899 = vsub.f32 %v3867, %v3891
        %v3900 = vsub.f32 %v3868, %v3892
        %v3901 = vsub.f32 %v3869, %v3893
        %v3902 = vsub.f32 %v3870, %v3894
        %v3903 = vsub.f32 %v3871, %v3895
        %v3904 = vsub.f32 %v3872, %v3896
        %v3905 = vsub.f32 %v3873, %v3897
        %v3906 = vsub.f32 %v3874, %v3898
        %v3907 = vmul.f32 %v3899, %v3899
        %v3908 = vmul.f32 %v3900, %v3900
        %v3909 = vmul.f32 %v3901, %v3901
        %v3910 = vmul.f32 %v3902, %v3902
        %v3911 = vmul.f32 %v3903, %v3903
        %v3912 = vmul.f32 %v3904, %v3904
        %v3913 = vmul.f32 %v3905, %v3905
        %v3914 = vmul.f32 %v3906, %v3906
        %3915 = vadd.xlane.f32.xlu0 %v3907
        %v3916 = vpop.xlane.xlu0 %3915
        %3917 = vadd.xlane.f32.xlu0 %v3908
        %v3918 = vpop.xlane.xlu0 %3917
        %3919 = vadd.xlane.f32.xlu0 %v3909
        %v3920 = vpop.xlane.xlu0 %3919
        %3921 = vadd.xlane.f32.xlu0 %v3910
        %v3922 = vpop.xlane.xlu0 %3921
        %3923 = vadd.xlane.f32.xlu0 %v3911
        %v3924 = vpop.xlane.xlu0 %3923
        %3925 = vadd.xlane.f32.xlu0 %v3912
        %v3926 = vpop.xlane.xlu0 %3925
        %3927 = vadd.xlane.f32.xlu0 %v3913
        %v3928 = vpop.xlane.xlu0 %3927
        %3929 = vadd.xlane.f32.xlu0 %v3914
        %v3930 = vpop.xlane.xlu0 %3929
        %v3931 = vmul.f32 %v3916, %v1966
        %v3932 = vmul.f32 %v3918, %v1966
        %v3933 = vmul.f32 %v3920, %v1966
        %v3934 = vmul.f32 %v3922, %v1966
        %v3935 = vmul.f32 %v3924, %v1966
        %v3936 = vmul.f32 %v3926, %v1966
        %v3937 = vmul.f32 %v3928, %v1966
        %v3938 = vmul.f32 %v3930, %v1966
        %v3939 = vadd.f32 %v3931, 1e-05
        %v3940 = vadd.f32 %v3932, 1e-05
        %v3941 = vadd.f32 %v3933, 1e-05
        %v3942 = vadd.f32 %v3934, 1e-05
        %v3943 = vadd.f32 %v3935, 1e-05
        %v3944 = vadd.f32 %v3936, 1e-05
        %v3945 = vadd.f32 %v3937, 1e-05
        %v3946 = vadd.f32 %v3938, 1e-05
        %v3947 = vrsqrt.pop %v3939
        %v3948 = vrsqrt.pop %v3940
        %v3949 = vrsqrt.pop %v3941
        %v3950 = vrsqrt.pop %v3942
        %v3951 = vrsqrt.pop %v3943
        %v3952 = vrsqrt.pop %v3944
        %v3953 = vrsqrt.pop %v3945
        %v3954 = vrsqrt.pop %v3946
        %v3955 = vmul.f32 %v3899, %v3947
        %v3956 = vmul.f32 %v3900, %v3948
        %v3957 = vmul.f32 %v3901, %v3949
        %v3958 = vmul.f32 %v3902, %v3950
        %v3959 = vmul.f32 %v3903, %v3951
        %v3960 = vmul.f32 %v3904, %v3952
        %v3961 = vmul.f32 %v3905, %v3953
        %v3962 = vmul.f32 %v3906, %v3954
        %v3963 = vlaneseq
        %v3964 = vshrl.u32 %v3963, 7
        %v3965 = vsub.s32 6, %v3964
        %v3966 = vrot.slane %v2166, %v3965
        %v3967 = vmul.f32 %v3955, %v3966
        %v3968 = vmul.f32 %v3956, %v3966
        %v3969 = vmul.f32 %v3957, %v3966
        %v3970 = vmul.f32 %v3958, %v3966
        %v3971 = vmul.f32 %v3959, %v3966
        %v3972 = vmul.f32 %v3960, %v3966
        %v3973 = vmul.f32 %v3961, %v3966
        %v3974 = vmul.f32 %v3962, %v3966
        %v3975 = vlaneseq
        %v3976 = vshrl.u32 %v3975, 7
        %v3977 = vsub.s32 7, %v3976
        %v3978 = vrot.slane %v2166, %v3977
        %v3979 = vadd.f32 %v3967, %v3978
        %v3980 = vadd.f32 %v3968, %v3978
        %v3981 = vadd.f32 %v3969, %v3978
        %v3982 = vadd.f32 %v3970, %v3978
        %v3983 = vadd.f32 %v3971, %v3978
        %v3984 = vadd.f32 %v3972, %v3978
        %v3985 = vadd.f32 %v3973, %v3978
        %v3986 = vadd.f32 %v3974, %v3978
        %v3987 = vpack.c.bf16 %v3980, %v3979
        %v3988 = vpack.c.bf16 %v3982, %v3981
        %v3989 = vpack.c.bf16 %v3984, %v3983
        %v3990 = vpack.c.bf16 %v3986, %v3985
        %s3991 = scalar_lea.vmem %s8, 64
        %v3992 = vld [vmem:[%s3991] sm:$0xf]
        %v3993 = vld [vmem:[%s3991 + $0x4] sm:$0xf]
        %v3994 = vld [vmem:[%s3991 + $0x8] sm:$0xf]
        %v3995 = vld [vmem:[%s3991 + $0xc] sm:$0xf]
        %v3996 = vld [vmem:[%s3991 + $0x10] sm:$0xf]
        %v3997 = vld [vmem:[%s3991 + $0x14] sm:$0xf]
        %v3998 = vld [vmem:[%s3991 + $0x18] sm:$0xf]
        %v3999 = vld [vmem:[%s3991 + $0x1c] sm:$0xf]
        %v4000 = vld [vmem:[%s3991 + $0x20] sm:$0xf]
        %v4001 = vld [vmem:[%s3991 + $0x24] sm:$0xf]
        %v4002 = vld [vmem:[%s3991 + $0x28] sm:$0xf]
        %v4003 = vld [vmem:[%s3991 + $0x2c] sm:$0xf]
        %v4004 = vld [vmem:[%s3991 + $0x30] sm:$0xf]
        %v4005 = vld [vmem:[%s3991 + $0x34] sm:$0xf]
        %v4006 = vld [vmem:[%s3991 + $0x38] sm:$0xf]
        %v4007 = vld [vmem:[%s3991 + $0x3c] sm:$0xf]
        %v4008 = vlaneseq
        %v4009 = vshrl.u32 %v4008, 7
        %v4010 = vsub.s32 5, %v4009
        %v4011 = vrot.slane %v2166, %v4010
        %v4028 = vunpack.c.l.b16 %v3992
        %v4029 = vunpack.c.l.b16 %v3993
        %v4030 = vunpack.c.l.b16 %v3994
        %v4031 = vunpack.c.l.b16 %v3995
        %v4032 = vunpack.c.l.b16 %v3996
        %v4033 = vunpack.c.l.b16 %v3997
        %v4034 = vunpack.c.l.b16 %v3998
        %v4035 = vunpack.c.l.b16 %v3999
        %v4036 = vunpack.c.l.b16 %v4000
        %v4037 = vunpack.c.l.b16 %v4001
        %v4038 = vunpack.c.l.b16 %v4002
        %v4039 = vunpack.c.l.b16 %v4003
        %v4040 = vunpack.c.l.b16 %v4004
        %v4041 = vunpack.c.l.b16 %v4005
        %v4042 = vunpack.c.l.b16 %v4006
        %v4043 = vunpack.c.l.b16 %v4007
        %v4044 = vpack.c.b16 %v4029, %v4028
        %v4045 = vpack.c.b16 %v4031, %v4030
        %v4046 = vpack.c.b16 %v4033, %v4032
        %v4047 = vpack.c.b16 %v4035, %v4034
        %v4048 = vpack.c.b16 %v4037, %v4036
        %v4049 = vpack.c.b16 %v4039, %v4038
        %v4050 = vpack.c.b16 %v4041, %v4040
        %v4051 = vpack.c.b16 %v4043, %v4042
        %4060 = vmatprep.subr.bf16.mxu0 0
        %4061 = vmatpush1.bf16.msra.mxu0 %v4051
        %4062 = vmatprep.subr.bf16.mxu0 0
        %4063 = vmatpush1.bf16.msra.mxu0 %v4050
        %4064 = vmatprep.subr.bf16.mxu0 0
        %4065 = vmatpush1.bf16.msra.mxu0 %v4049
        %4066 = vmatprep.subr.bf16.mxu0 0
        %4067 = vmatpush1.bf16.msra.mxu0 %v4048
        %4068 = vmatprep.subr.bf16.mxu0 0
        %4069 = vmatpush1.bf16.msra.mxu0 %v4047
        %4070 = vmatprep.subr.bf16.mxu0 0
        %4071 = vmatpush1.bf16.msra.mxu0 %v4046
        %4072 = vmatprep.subr.bf16.mxu0 0
        %4073 = vmatpush1.bf16.msra.mxu0 %v4045
        %4074 = vmatprep.subr.bf16.mxu0 0
        %4075 = vmatpush1.bf16.msra.mxu0 %v4044
        %4076 = vmatprep.subr.bf16.mxu0 0
        %4077 = vmatpush2.bf16.msra.mxu0 0
        %4078 = vmatprep.subr.bf16.mxu0 0
        %4079 = vmatpush2.bf16.msra.mxu0 0
        %4080 = vmatprep.subr.bf16.mxu0 0
        %4081 = vmatpush2.bf16.msra.mxu0 0
        %4082 = vmatprep.subr.bf16.mxu0 0
        %4083 = vmatpush2.bf16.msra.mxu0 0
        %4084 = vmatprep.subr.bf16.mxu0 0
        %4085 = vmatpush2.bf16.msra.mxu0 0
        %4086 = vmatprep.subr.bf16.mxu0 0
        %4087 = vmatpush2.bf16.msra.mxu0 0
        %4088 = vmatprep.subr.bf16.mxu0 0
        %4089 = vmatpush2.bf16.msra.mxu0 0
        %4090 = vmatprep.subr.bf16.mxu0 0
        %4091 = vmatpush2.bf16.msra.mxu0 0
        %4092 = vmatprep.mubr.bf16.mxu0 0
        %4093 = vmatmul.mubr.bf16.gmra.mxu0 %v3987
        %v4094 = vpop.f32.mrf.mxu0
        %v4095 = vadd.f32 %v4011, %v4094
        %v4096 = vpop.f32.mrf.mxu0
        %v4097 = vpop.f32.mrf.mxu0
        %v4098 = vadd.f32 %v4011, %v4097
        %v4099 = vpop.f32.mrf.mxu0
        %4100 = vmatprep.mubr.bf16.mxu0 0
        %4101 = vmatmul.mubr.bf16.gmra.mxu0 %v3988
        %v4102 = vpop.f32.mrf.mxu0
        %v4103 = vadd.f32 %v4011, %v4102
        %v4104 = vpop.f32.mrf.mxu0
        %v4105 = vpop.f32.mrf.mxu0
        %v4106 = vadd.f32 %v4011, %v4105
        %v4107 = vpop.f32.mrf.mxu0
        %4108 = vmatprep.mubr.bf16.mxu0 0
        %4109 = vmatmul.mubr.bf16.gmra.mxu0 %v3989
        %v4110 = vpop.f32.mrf.mxu0
        %v4111 = vadd.f32 %v4011, %v4110
        %v4112 = vpop.f32.mrf.mxu0
        %v4113 = vpop.f32.mrf.mxu0
        %v4114 = vadd.f32 %v4011, %v4113
        %v4115 = vpop.f32.mrf.mxu0
        %4116 = vmatprep.mubr.bf16.mxu0 0
        %4117 = vmatmul.mubr.bf16.gmra.mxu0 %v3990
        %v4118 = vpop.f32.mrf.mxu0
        %v4119 = vadd.f32 %v4011, %v4118
        %v4120 = vpop.f32.mrf.mxu0
        %v4121 = vpop.f32.mrf.mxu0
        %v4122 = vadd.f32 %v4011, %v4121
        %v4123 = vpop.f32.mrf.mxu0
        %4124 = vdwg.mxu0
        %v4125 = vmax.f32 %v4095, 0.0
        %v4126 = vmax.f32 %v4098, 0.0
        %v4127 = vmax.f32 %v4103, 0.0
        %v4128 = vmax.f32 %v4106, 0.0
        %v4129 = vmax.f32 %v4111, 0.0
        %v4130 = vmax.f32 %v4114, 0.0
        %v4131 = vmax.f32 %v4119, 0.0
        %v4132 = vmax.f32 %v4122, 0.0
        %v4133 = vadd.f32 %v3979, %v4125
        %v4134 = vadd.f32 %v3980, %v4126
        %v4135 = vadd.f32 %v3981, %v4127
        %v4136 = vadd.f32 %v3982, %v4128
        %v4137 = vadd.f32 %v3983, %v4129
        %v4138 = vadd.f32 %v3984, %v4130
        %v4139 = vadd.f32 %v3985, %v4131
        %v4140 = vadd.f32 %v3986, %v4132
        %4141 = vadd.xlane.f32.xlu0 %v4133
        %v4142 = vpop.xlane.xlu0 %4141
        %4143 = vadd.xlane.f32.xlu0 %v4134
        %v4144 = vpop.xlane.xlu0 %4143
        %4145 = vadd.xlane.f32.xlu0 %v4135
        %v4146 = vpop.xlane.xlu0 %4145
        %4147 = vadd.xlane.f32.xlu0 %v4136
        %v4148 = vpop.xlane.xlu0 %4147
        %4149 = vadd.xlane.f32.xlu0 %v4137
        %v4150 = vpop.xlane.xlu0 %4149
        %4151 = vadd.xlane.f32.xlu0 %v4138
        %v4152 = vpop.xlane.xlu0 %4151
        %4153 = vadd.xlane.f32.xlu0 %v4139
        %v4154 = vpop.xlane.xlu0 %4153
        %4155 = vadd.xlane.f32.xlu0 %v4140
        %v4156 = vpop.xlane.xlu0 %4155
        %v4157 = vmul.f32 %v4142, %v1966
        %v4158 = vmul.f32 %v4144, %v1966
        %v4159 = vmul.f32 %v4146, %v1966
        %v4160 = vmul.f32 %v4148, %v1966
        %v4161 = vmul.f32 %v4150, %v1966
        %v4162 = vmul.f32 %v4152, %v1966
        %v4163 = vmul.f32 %v4154, %v1966
        %v4164 = vmul.f32 %v4156, %v1966
        %v4165 = vsub.f32 %v4133, %v4157
        %v4166 = vsub.f32 %v4134, %v4158
        %v4167 = vsub.f32 %v4135, %v4159
        %v4168 = vsub.f32 %v4136, %v4160
        %v4169 = vsub.f32 %v4137, %v4161
        %v4170 = vsub.f32 %v4138, %v4162
        %v4171 = vsub.f32 %v4139, %v4163
        %v4172 = vsub.f32 %v4140, %v4164
        %v4173 = vmul.f32 %v4165, %v4165
        %v4174 = vmul.f32 %v4166, %v4166
        %v4175 = vmul.f32 %v4167, %v4167
        %v4176 = vmul.f32 %v4168, %v4168
        %v4177 = vmul.f32 %v4169, %v4169
        %v4178 = vmul.f32 %v4170, %v4170
        %v4179 = vmul.f32 %v4171, %v4171
        %v4180 = vmul.f32 %v4172, %v4172
        %4181 = vadd.xlane.f32.xlu0 %v4173
        %v4182 = vpop.xlane.xlu0 %4181
        %4183 = vadd.xlane.f32.xlu0 %v4174
        %v4184 = vpop.xlane.xlu0 %4183
        %4185 = vadd.xlane.f32.xlu0 %v4175
        %v4186 = vpop.xlane.xlu0 %4185
        %4187 = vadd.xlane.f32.xlu0 %v4176
        %v4188 = vpop.xlane.xlu0 %4187
        %4189 = vadd.xlane.f32.xlu0 %v4177
        %v4190 = vpop.xlane.xlu0 %4189
        %4191 = vadd.xlane.f32.xlu0 %v4178
        %v4192 = vpop.xlane.xlu0 %4191
        %4193 = vadd.xlane.f32.xlu0 %v4179
        %v4194 = vpop.xlane.xlu0 %4193
        %4195 = vadd.xlane.f32.xlu0 %v4180
        %v4196 = vpop.xlane.xlu0 %4195
        %v4197 = vmul.f32 %v4182, %v1966
        %v4198 = vmul.f32 %v4184, %v1966
        %v4199 = vmul.f32 %v4186, %v1966
        %v4200 = vmul.f32 %v4188, %v1966
        %v4201 = vmul.f32 %v4190, %v1966
        %v4202 = vmul.f32 %v4192, %v1966
        %v4203 = vmul.f32 %v4194, %v1966
        %v4204 = vmul.f32 %v4196, %v1966
        %v4205 = vadd.f32 %v4197, 1e-05
        %v4206 = vadd.f32 %v4198, 1e-05
        %v4207 = vadd.f32 %v4199, 1e-05
        %v4208 = vadd.f32 %v4200, 1e-05
        %v4209 = vadd.f32 %v4201, 1e-05
        %v4210 = vadd.f32 %v4202, 1e-05
        %v4211 = vadd.f32 %v4203, 1e-05
        %v4212 = vadd.f32 %v4204, 1e-05
        %v4213 = vrsqrt.pop %v4205
        %v4214 = vrsqrt.pop %v4206
        %v4215 = vrsqrt.pop %v4207
        %v4216 = vrsqrt.pop %v4208
        %v4217 = vrsqrt.pop %v4209
        %v4218 = vrsqrt.pop %v4210
        %v4219 = vrsqrt.pop %v4211
        %v4220 = vrsqrt.pop %v4212
        %v4221 = vmul.f32 %v4165, %v4213
        %v4222 = vmul.f32 %v4166, %v4214
        %v4223 = vmul.f32 %v4167, %v4215
        %v4224 = vmul.f32 %v4168, %v4216
        %v4225 = vmul.f32 %v4169, %v4217
        %v4226 = vmul.f32 %v4170, %v4218
        %v4227 = vmul.f32 %v4171, %v4219
        %v4228 = vmul.f32 %v4172, %v4220
        %v4229 = vlaneseq
        %v4230 = vshrl.u32 %v4229, 7
        %v4231 = vsub.s32 0, %v4230
        %v4232 = vrot.slane %v2167, %v4231
        %v4233 = vmul.f32 %v4221, %v4232
        %v4234 = vmul.f32 %v4222, %v4232
        %v4235 = vmul.f32 %v4223, %v4232
        %v4236 = vmul.f32 %v4224, %v4232
        %v4237 = vmul.f32 %v4225, %v4232
        %v4238 = vmul.f32 %v4226, %v4232
        %v4239 = vmul.f32 %v4227, %v4232
        %v4240 = vmul.f32 %v4228, %v4232
        %v4241 = vlaneseq
        %v4242 = vshrl.u32 %v4241, 7
        %v4243 = vsub.s32 1, %v4242
        %v4244 = vrot.slane %v2167, %v4243
        %v4245 = vadd.f32 %v4233, %v4244
        %v4246 = vadd.f32 %v4234, %v4244
        %v4247 = vadd.f32 %v4235, %v4244
        %v4248 = vadd.f32 %v4236, %v4244
        %v4249 = vadd.f32 %v4237, %v4244
        %v4250 = vadd.f32 %v4238, %v4244
        %v4251 = vadd.f32 %v4239, %v4244
        %v4252 = vadd.f32 %v4240, %v4244
        %v4253 = vlaneseq
        %v4254 = vshrl.u32 %v4253, 7
        %v4255 = vsub.s32 2, %v4254
        %v4256 = vrot.slane %v2167, %v4255
        %v4257 = vadd.f32 %v2356, %v4256
        %v4258 = vadd.f32 %v2359, %v4256
        %v4259 = vadd.f32 %v2364, %v4256
        %v4260 = vadd.f32 %v2367, %v4256
        %v4261 = vadd.f32 %v2372, %v4256
        %v4262 = vadd.f32 %v2375, %v4256
        %v4263 = vadd.f32 %v2380, %v4256
        %v4264 = vadd.f32 %v2383, %v4256
        %v4265 = vsub.f32 0.0, %v4257
        %v4266 = vsub.f32 0.0, %v4258
        %v4267 = vsub.f32 0.0, %v4259
        %v4268 = vsub.f32 0.0, %v4260
        %v4269 = vsub.f32 0.0, %v4261
        %v4270 = vsub.f32 0.0, %v4262
        %v4271 = vsub.f32 0.0, %v4263
        %v4272 = vsub.f32 0.0, %v4264
        %v4273 = vmul.f32 %v4265, 1.442695
        %v4274 = vpow.pop %v4273
        %v4275 = vmul.f32 %v4266, 1.442695
        %v4276 = vpow.pop %v4275
        %v4277 = vmul.f32 %v4267, 1.442695
        %v4278 = vpow.pop %v4277
        %v4279 = vmul.f32 %v4268, 1.442695
        %v4280 = vpow.pop %v4279
        %v4281 = vmul.f32 %v4269, 1.442695
        %v4282 = vpow.pop %v4281
        %v4283 = vmul.f32 %v4270, 1.442695
        %v4284 = vpow.pop %v4283
        %v4285 = vmul.f32 %v4271, 1.442695
        %v4286 = vpow.pop %v4285
        %v4287 = vmul.f32 %v4272, 1.442695
        %v4288 = vpow.pop %v4287
        %v4289 = vadd.f32 %v4274, 1.0
        %v4290 = vadd.f32 %v4276, 1.0
        %v4291 = vadd.f32 %v4278, 1.0
        %v4292 = vadd.f32 %v4280, 1.0
        %v4293 = vadd.f32 %v4282, 1.0
        %v4294 = vadd.f32 %v4284, 1.0
        %v4295 = vadd.f32 %v4286, 1.0
        %v4296 = vadd.f32 %v4288, 1.0
        %v4297 = vrcp.pop %v4289
        %v4298 = vrcp.pop %v4290
        %v4299 = vrcp.pop %v4291
        %v4300 = vrcp.pop %v4292
        %v4301 = vrcp.pop %v4293
        %v4302 = vrcp.pop %v4294
        %v4303 = vrcp.pop %v4295
        %v4304 = vrcp.pop %v4296
        %v4305 = vmul.f32 %v4257, %v4297
        %v4306 = vmul.f32 %v4258, %v4298
        %v4307 = vmul.f32 %v4259, %v4299
        %v4308 = vmul.f32 %v4260, %v4300
        %v4309 = vmul.f32 %v4261, %v4301
        %v4310 = vmul.f32 %v4262, %v4302
        %v4311 = vmul.f32 %v4263, %v4303
        %v4312 = vmul.f32 %v4264, %v4304
        %v4313 = vmul.f32 %v4245, %v4305
        %v4314 = vmul.f32 %v4246, %v4306
        %v4315 = vmul.f32 %v4247, %v4307
        %v4316 = vmul.f32 %v4248, %v4308
        %v4317 = vmul.f32 %v4249, %v4309
        %v4318 = vmul.f32 %v4250, %v4310
        %v4319 = vmul.f32 %v4251, %v4311
        %v4320 = vmul.f32 %v4252, %v4312
        %v4321 = vld [vmem:[%s10] sm:$0xf]
        %v4322 = vld [vmem:[%s10 + $0x4] sm:$0xf]
        %v4323 = vld [vmem:[%s14] sm:$0xff]
        %v4324 = vld [vmem:[%s14 + $0x8] sm:$0x7]
        %v4325 = vld [vmem:[%s11] sm:$0xff]
        %v4326 = vld [vmem:[%s11 + $0x8] sm:$0xf]
        %v4327 = vld [vmem:[%s11 + $0xc] sm:$0xff]
        %v4328 = vld [vmem:[%s11 + $0x14] sm:$0xf]
        %v4329 = vld [vmem:[%s11 + $0x18] sm:$0xff]
        %v4330 = vld [vmem:[%s11 + $0x20] sm:$0xf]
        %v4331 = vld [vmem:[%s11 + $0x24] sm:$0xff]
        %v4332 = vld [vmem:[%s11 + $0x2c] sm:$0xf]
        %v4333 = vld [vmem:[%s11 + $0x30] sm:$0xff]
        %v4334 = vld [vmem:[%s11 + $0x38] sm:$0xf]
        %v4335 = vld [vmem:[%s11 + $0x3c] sm:$0xff]
        %v4336 = vld [vmem:[%s11 + $0x44] sm:$0xf]
        %v4337 = vld [vmem:[%s11 + $0x48] sm:$0xff]
        %v4338 = vld [vmem:[%s11 + $0x50] sm:$0xf]
        %v4339 = vld [vmem:[%s11 + $0x54] sm:$0xff]
        %v4340 = vld [vmem:[%s11 + $0x5c] sm:$0xf]
        %v4341 = vld [vmem:[%s11 + $0x60] sm:$0xff]
        %v4342 = vld [vmem:[%s11 + $0x68] sm:$0xf]
        %v4343 = vld [vmem:[%s11 + $0x6c] sm:$0xff]
        %v4344 = vld [vmem:[%s11 + $0x74] sm:$0xf]
        %v4345 = vld [vmem:[%s11 + $0x78] sm:$0xff]
        %v4346 = vld [vmem:[%s11 + $0x80] sm:$0xf]
        %v4347 = vld [vmem:[%s11 + $0x84] sm:$0xff]
        %v4348 = vld [vmem:[%s11 + $0x8c] sm:$0xf]
        %v4349 = vld [vmem:[%s11 + $0x90] sm:$0xff]
        %v4350 = vld [vmem:[%s11 + $0x98] sm:$0xf]
        %v4351 = vld [vmem:[%s11 + $0x9c] sm:$0xff]
        %v4352 = vld [vmem:[%s11 + $0xa4] sm:$0xf]
        %v4353 = vld [vmem:[%s11 + $0xa8] sm:$0xff]
        %v4354 = vld [vmem:[%s11 + $0xb0] sm:$0xf]
        %v4355 = vld [vmem:[%s11 + $0xb4] sm:$0xff]
        %v4356 = vld [vmem:[%s11 + $0xbc] sm:$0xf]
        %v4359 = vunpack.c.l.b16 %v4321
        %v4360 = vunpack.c.l.b16 %v4322
        %v4361 = vpack.c.b16 %v4360, %v4359
        %v4395 = vunpack.c.l.b16 %v4325
        %v4396 = vunpack.c.h.b16 %v4325
        %v4397 = vunpack.c.l.b16 %v4326
        %v4398 = vunpack.c.l.b16 %v4327
        %v4399 = vunpack.c.h.b16 %v4327
        %v4400 = vunpack.c.l.b16 %v4328
        %v4401 = vunpack.c.l.b16 %v4329
        %v4402 = vunpack.c.h.b16 %v4329
        %v4403 = vunpack.c.l.b16 %v4330
        %v4404 = vunpack.c.l.b16 %v4331
        %v4405 = vunpack.c.h.b16 %v4331
        %v4406 = vunpack.c.l.b16 %v4332
        %v4407 = vunpack.c.l.b16 %v4333
        %v4408 = vunpack.c.h.b16 %v4333
        %v4409 = vunpack.c.l.b16 %v4334
        %v4410 = vunpack.c.l.b16 %v4335
        %v4411 = vunpack.c.h.b16 %v4335
        %v4412 = vunpack.c.l.b16 %v4336
        %v4413 = vunpack.c.l.b16 %v4337
        %v4414 = vunpack.c.h.b16 %v4337
        %v4415 = vunpack.c.l.b16 %v4338
        %v4416 = vunpack.c.l.b16 %v4339
        %v4417 = vunpack.c.h.b16 %v4339
        %v4418 = vunpack.c.l.b16 %v4340
        %v4419 = vunpack.c.l.b16 %v4341
        %v4420 = vunpack.c.h.b16 %v4341
        %v4421 = vunpack.c.l.b16 %v4342
        %v4422 = vunpack.c.l.b16 %v4343
        %v4423 = vunpack.c.h.b16 %v4343
        %v4424 = vunpack.c.l.b16 %v4344
        %v4425 = vunpack.c.l.b16 %v4345
        %v4426 = vunpack.c.h.b16 %v4345
        %v4427 = vunpack.c.l.b16 %v4346
        %v4428 = vunpack.c.l.b16 %v4347
        %v4429 = vunpack.c.h.b16 %v4347
        %v4430 = vunpack.c.l.b16 %v4348
        %v4431 = vunpack.c.l.b16 %v4349
        %v4432 = vunpack.c.h.b16 %v4349
        %v4433 = vunpack.c.l.b16 %v4350
        %v4434 = vunpack.c.l.b16 %v4351
        %v4435 = vunpack.c.h.b16 %v4351
        %v4436 = vunpack.c.l.b16 %v4352
        %v4437 = vunpack.c.l.b16 %v4353
        %v4438 = vunpack.c.h.b16 %v4353
        %v4439 = vunpack.c.l.b16 %v4354
        %v4440 = vunpack.c.l.b16 %v4355
        %v4441 = vunpack.c.h.b16 %v4355
        %v4442 = vunpack.c.l.b16 %v4356
        %v4443 = vpack.c.b16 %v4398, %v4395
        %v4444 = vpack.c.b16 %v4399, %v4396
        %v4445 = vpack.c.b16 %v4400, %v4397
        %v4446 = vpack.c.b16 %v4404, %v4401
        %v4447 = vpack.c.b16 %v4405, %v4402
        %v4448 = vpack.c.b16 %v4406, %v4403
        %v4449 = vpack.c.b16 %v4410, %v4407
        %v4450 = vpack.c.b16 %v4411, %v4408
        %v4451 = vpack.c.b16 %v4412, %v4409
        %v4452 = vpack.c.b16 %v4416, %v4413
        %v4453 = vpack.c.b16 %v4417, %v4414
        %v4454 = vpack.c.b16 %v4418, %v4415
        %v4455 = vpack.c.b16 %v4422, %v4419
        %v4456 = vpack.c.b16 %v4423, %v4420
        %v4457 = vpack.c.b16 %v4424, %v4421
        %v4458 = vpack.c.b16 %v4428, %v4425
        %v4459 = vpack.c.b16 %v4429, %v4426
        %v4460 = vpack.c.b16 %v4430, %v4427
        %v4461 = vpack.c.b16 %v4434, %v4431
        %v4462 = vpack.c.b16 %v4435, %v4432
        %v4463 = vpack.c.b16 %v4436, %v4433
        %v4464 = vpack.c.b16 %v4440, %v4437
        %v4465 = vpack.c.b16 %v4441, %v4438
        %v4466 = vpack.c.b16 %v4442, %v4439
        %4491 = vmatprep.subr.bf16.mxu0 %v4465
        %4492 = vmatpush1.bf16.msra.mxu0 %v4464
        %4493 = vmatprep.subr.bf16.mxu0 %v4462
        %4494 = vmatpush1.bf16.msra.mxu0 %v4461
        %4495 = vmatprep.subr.bf16.mxu0 %v4459
        %4496 = vmatpush1.bf16.msra.mxu0 %v4458
        %4497 = vmatprep.subr.bf16.mxu0 %v4456
        %4498 = vmatpush1.bf16.msra.mxu0 %v4455
        %4499 = vmatprep.subr.bf16.mxu0 %v4453
        %4500 = vmatpush1.bf16.msra.mxu0 %v4452
        %4501 = vmatprep.subr.bf16.mxu0 %v4450
        %4502 = vmatpush1.bf16.msra.mxu0 %v4449
        %4503 = vmatprep.subr.bf16.mxu0 %v4447
        %4504 = vmatpush1.bf16.msra.mxu0 %v4446
        %4505 = vmatprep.subr.bf16.mxu0 %v4444
        %4506 = vmatpush1.bf16.msra.mxu0 %v4443
        %4507 = vmatprep.subr.bf16.mxu0 0
        %4508 = vmatpush2.bf16.msra.mxu0 0
        %4509 = vmatprep.subr.bf16.mxu0 0
        %4510 = vmatpush2.bf16.msra.mxu0 0
        %4511 = vmatprep.subr.bf16.mxu0 0
        %4512 = vmatpush2.bf16.msra.mxu0 0
        %4513 = vmatprep.subr.bf16.mxu0 0
        %4514 = vmatpush2.bf16.msra.mxu0 0
        %4515 = vmatprep.subr.bf16.mxu0 0
        %4516 = vmatpush2.bf16.msra.mxu0 0
        %4517 = vmatprep.subr.bf16.mxu0 0
        %4518 = vmatpush2.bf16.msra.mxu0 0
        %4519 = vmatprep.subr.bf16.mxu0 0
        %4520 = vmatpush2.bf16.msra.mxu0 0
        %4521 = vmatprep.subr.bf16.mxu0 0
        %4522 = vmatpush2.bf16.msra.mxu0 0
        %4523 = vmatprep.mubr.bf16.mxu0 0
        %4524 = vmatmul.mubr.bf16.gmra.mxu0 %v4361
        %v4525 = vpop.f32.mrf.mxu0
        %v4526 = vadd.f32 0.0, %v4525
        %v4527 = vpop.f32.mrf.mxu0
        %v4528 = vadd.f32 0.0, %v4527
        %v4529 = vpop.f32.mrf.mxu0
        %v4530 = vadd.f32 0.0, %v4529
        %v4531 = vpop.f32.mrf.mxu0
        %v4532 = vadd.f32 0.0, %v4531
        %4533 = vdwg.mxu0
        %4534 = vmatprep.subr.bf16.mxu0 0
        %4535 = vmatpush1.bf16.msra.mxu0 %v4466
        %4536 = vmatprep.subr.bf16.mxu0 0
        %4537 = vmatpush1.bf16.msra.mxu0 %v4463
        %4538 = vmatprep.subr.bf16.mxu0 0
        %4539 = vmatpush1.bf16.msra.mxu0 %v4460
        %4540 = vmatprep.subr.bf16.mxu0 0
        %4541 = vmatpush1.bf16.msra.mxu0 %v4457
        %4542 = vmatprep.subr.bf16.mxu0 0
        %4543 = vmatpush1.bf16.msra.mxu0 %v4454
        %4544 = vmatprep.subr.bf16.mxu0 0
        %4545 = vmatpush1.bf16.msra.mxu0 %v4451
        %4546 = vmatprep.subr.bf16.mxu0 0
        %4547 = vmatpush1.bf16.msra.mxu0 %v4448
        %4548 = vmatprep.subr.bf16.mxu0 0
        %4549 = vmatpush1.bf16.msra.mxu0 %v4445
        %4550 = vmatprep.subr.bf16.mxu0 0
        %4551 = vmatpush2.bf16.msra.mxu0 0
        %4552 = vmatprep.subr.bf16.mxu0 0
        %4553 = vmatpush2.bf16.msra.mxu0 0
        %4554 = vmatprep.subr.bf16.mxu0 0
        %4555 = vmatpush2.bf16.msra.mxu0 0
        %4556 = vmatprep.subr.bf16.mxu0 0
        %4557 = vmatpush2.bf16.msra.mxu0 0
        %4558 = vmatprep.subr.bf16.mxu0 0
        %4559 = vmatpush2.bf16.msra.mxu0 0
        %4560 = vmatprep.subr.bf16.mxu0 0
        %4561 = vmatpush2.bf16.msra.mxu0 0
        %4562 = vmatprep.subr.bf16.mxu0 0
        %4563 = vmatpush2.bf16.msra.mxu0 0
        %4564 = vmatprep.subr.bf16.mxu0 0
        %4565 = vmatpush2.bf16.msra.mxu0 0
        %4566 = vmatprep.mubr.bf16.mxu0 0
        %4567 = vmatmul.mubr.bf16.gmra.mxu0 %v4361
        %v4568 = vpop.f32.mrf.mxu0
        %v4569 = vadd.f32 0.0, %v4568
        %v4570 = vpop.f32.mrf.mxu0
        %v4571 = vpop.f32.mrf.mxu0
        %v4572 = vadd.f32 0.0, %v4571
        %v4573 = vpop.f32.mrf.mxu0
        %4574 = vdwg.mxu0
        %v4575 = vlaneseq
        %v4576 = vshrl.u32 %v4575, 7
        %v4577 = vsub.s32 0, %v4576
        %v4578 = vrot.slane %v4323, %v4577
        %v4579 = vadd.f32 %v4526, %v4578
        %v4580 = vadd.f32 %v4530, %v4578
        %v4581 = vlaneseq
        %v4582 = vshrl.u32 %v4581, 7
        %v4583 = vsub.s32 1, %v4582
        %v4584 = vrot.slane %v4323, %v4583
        %v4585 = vadd.f32 %v4528, %v4584
        %v4586 = vadd.f32 %v4532, %v4584
        %v4587 = vpack.c.bf16 %v4314, %v4313
        %v4588 = vpack.c.bf16 %v4316, %v4315
        %v4589 = vpack.c.bf16 %v4318, %v4317
        %v4590 = vpack.c.bf16 %v4320, %v4319
        %v4591 = vld [vmem:[%s12] sm:$0xff]
        %v4592 = vld [vmem:[%s12 + $0x8] sm:$0xff]
        %v4593 = vld [vmem:[%s12 + $0x10] sm:$0xff]
        %v4594 = vld [vmem:[%s12 + $0x18] sm:$0xff]
        %v4595 = vld [vmem:[%s12 + $0x20] sm:$0xff]
        %v4596 = vld [vmem:[%s12 + $0x28] sm:$0xff]
        %v4597 = vld [vmem:[%s12 + $0x30] sm:$0xff]
        %v4598 = vld [vmem:[%s12 + $0x38] sm:$0xff]
        %v4599 = vld [vmem:[%s12 + $0x40] sm:$0xff]
        %v4600 = vld [vmem:[%s12 + $0x48] sm:$0xff]
        %v4601 = vld [vmem:[%s12 + $0x50] sm:$0xff]
        %v4602 = vld [vmem:[%s12 + $0x58] sm:$0xff]
        %v4603 = vld [vmem:[%s12 + $0x60] sm:$0xff]
        %v4604 = vld [vmem:[%s12 + $0x68] sm:$0xff]
        %v4605 = vld [vmem:[%s12 + $0x70] sm:$0xff]
        %v4606 = vld [vmem:[%s12 + $0x78] sm:$0xff]
        %v4623 = vunpack.c.l.b16 %v4591
        %v4624 = vunpack.c.h.b16 %v4591
        %v4625 = vunpack.c.l.b16 %v4592
        %v4626 = vunpack.c.h.b16 %v4592
        %v4627 = vunpack.c.l.b16 %v4593
        %v4628 = vunpack.c.h.b16 %v4593
        %v4629 = vunpack.c.l.b16 %v4594
        %v4630 = vunpack.c.h.b16 %v4594
        %v4631 = vunpack.c.l.b16 %v4595
        %v4632 = vunpack.c.h.b16 %v4595
        %v4633 = vunpack.c.l.b16 %v4596
        %v4634 = vunpack.c.h.b16 %v4596
        %v4635 = vunpack.c.l.b16 %v4597
        %v4636 = vunpack.c.h.b16 %v4597
        %v4637 = vunpack.c.l.b16 %v4598
        %v4638 = vunpack.c.h.b16 %v4598
        %v4639 = vunpack.c.l.b16 %v4599
        %v4640 = vunpack.c.h.b16 %v4599
        %v4641 = vunpack.c.l.b16 %v4600
        %v4642 = vunpack.c.h.b16 %v4600
        %v4643 = vunpack.c.l.b16 %v4601
        %v4644 = vunpack.c.h.b16 %v4601
        %v4645 = vunpack.c.l.b16 %v4602
        %v4646 = vunpack.c.h.b16 %v4602
        %v4647 = vunpack.c.l.b16 %v4603
        %v4648 = vunpack.c.h.b16 %v4603
        %v4649 = vunpack.c.l.b16 %v4604
        %v4650 = vunpack.c.h.b16 %v4604
        %v4651 = vunpack.c.l.b16 %v4605
        %v4652 = vunpack.c.h.b16 %v4605
        %v4653 = vunpack.c.l.b16 %v4606
        %v4654 = vunpack.c.h.b16 %v4606
        %v4655 = vpack.c.b16 %v4625, %v4623
        %v4656 = vpack.c.b16 %v4626, %v4624
        %v4657 = vpack.c.b16 %v4629, %v4627
        %v4658 = vpack.c.b16 %v4630, %v4628
        %v4659 = vpack.c.b16 %v4633, %v4631
        %v4660 = vpack.c.b16 %v4634, %v4632
        %v4661 = vpack.c.b16 %v4637, %v4635
        %v4662 = vpack.c.b16 %v4638, %v4636
        %v4663 = vpack.c.b16 %v4641, %v4639
        %v4664 = vpack.c.b16 %v4642, %v4640
        %v4665 = vpack.c.b16 %v4645, %v4643
        %v4666 = vpack.c.b16 %v4646, %v4644
        %v4667 = vpack.c.b16 %v4649, %v4647
        %v4668 = vpack.c.b16 %v4650, %v4648
        %v4669 = vpack.c.b16 %v4653, %v4651
        %v4670 = vpack.c.b16 %v4654, %v4652
        %4687 = vmatprep.subr.bf16.mxu0 %v4670
        %4688 = vmatpush1.bf16.msra.mxu0 %v4669
        %4689 = vmatprep.subr.bf16.mxu0 %v4668
        %4690 = vmatpush1.bf16.msra.mxu0 %v4667
        %4691 = vmatprep.subr.bf16.mxu0 %v4666
        %4692 = vmatpush1.bf16.msra.mxu0 %v4665
        %4693 = vmatprep.subr.bf16.mxu0 %v4664
        %4694 = vmatpush1.bf16.msra.mxu0 %v4663
        %4695 = vmatprep.subr.bf16.mxu0 %v4662
        %4696 = vmatpush1.bf16.msra.mxu0 %v4661
        %4697 = vmatprep.subr.bf16.mxu0 %v4660
        %4698 = vmatpush1.bf16.msra.mxu0 %v4659
        %4699 = vmatprep.subr.bf16.mxu0 %v4658
        %4700 = vmatpush1.bf16.msra.mxu0 %v4657
        %4701 = vmatprep.subr.bf16.mxu0 %v4656
        %4702 = vmatpush1.bf16.msra.mxu0 %v4655
        %4703 = vmatprep.subr.bf16.mxu0 0
        %4704 = vmatpush2.bf16.msra.mxu0 0
        %4705 = vmatprep.subr.bf16.mxu0 0
        %4706 = vmatpush2.bf16.msra.mxu0 0
        %4707 = vmatprep.subr.bf16.mxu0 0
        %4708 = vmatpush2.bf16.msra.mxu0 0
        %4709 = vmatprep.subr.bf16.mxu0 0
        %4710 = vmatpush2.bf16.msra.mxu0 0
        %4711 = vmatprep.subr.bf16.mxu0 0
        %4712 = vmatpush2.bf16.msra.mxu0 0
        %4713 = vmatprep.subr.bf16.mxu0 0
        %4714 = vmatpush2.bf16.msra.mxu0 0
        %4715 = vmatprep.subr.bf16.mxu0 0
        %4716 = vmatpush2.bf16.msra.mxu0 0
        %4717 = vmatprep.subr.bf16.mxu0 0
        %4718 = vmatpush2.bf16.msra.mxu0 0
        %4719 = vmatprep.mubr.bf16.mxu0 0
        %4720 = vmatmul.mubr.bf16.gmra.mxu0 %v4587
        %v4721 = vpop.f32.mrf.mxu0
        %v4722 = vadd.f32 0.0, %v4721
        %v4723 = vpop.f32.mrf.mxu0
        %v4724 = vadd.f32 0.0, %v4723
        %v4725 = vpop.f32.mrf.mxu0
        %v4726 = vadd.f32 0.0, %v4725
        %v4727 = vpop.f32.mrf.mxu0
        %v4728 = vadd.f32 0.0, %v4727
        %4729 = vmatprep.mubr.bf16.mxu0 0
        %4730 = vmatmul.mubr.bf16.gmra.mxu0 %v4588
        %v4731 = vpop.f32.mrf.mxu0
        %v4732 = vadd.f32 0.0, %v4731
        %v4733 = vpop.f32.mrf.mxu0
        %v4734 = vadd.f32 0.0, %v4733
        %v4735 = vpop.f32.mrf.mxu0
        %v4736 = vadd.f32 0.0, %v4735
        %v4737 = vpop.f32.mrf.mxu0
        %v4738 = vadd.f32 0.0, %v4737
        %4739 = vmatprep.mubr.bf16.mxu0 0
        %4740 = vmatmul.mubr.bf16.gmra.mxu0 %v4589
        %v4741 = vpop.f32.mrf.mxu0
        %v4742 = vadd.f32 0.0, %v4741
        %v4743 = vpop.f32.mrf.mxu0
        %v4744 = vadd.f32 0.0, %v4743
        %v4745 = vpop.f32.mrf.mxu0
        %v4746 = vadd.f32 0.0, %v4745
        %v4747 = vpop.f32.mrf.mxu0
        %v4748 = vadd.f32 0.0, %v4747
        %4749 = vmatprep.mubr.bf16.mxu0 0
        %4750 = vmatmul.mubr.bf16.gmra.mxu0 %v4590
        %v4751 = vpop.f32.mrf.mxu0
        %v4752 = vadd.f32 0.0, %v4751
        %v4753 = vpop.f32.mrf.mxu0
        %v4754 = vadd.f32 0.0, %v4753
        %v4755 = vpop.f32.mrf.mxu0
        %v4756 = vadd.f32 0.0, %v4755
        %v4757 = vpop.f32.mrf.mxu0
        %v4758 = vadd.f32 0.0, %v4757
        %4759 = vdwg.mxu0
        %v4760 = vlaneseq
        %v4761 = vshrl.u32 %v4760, 7
        %v4762 = vsub.s32 2, %v4761
        %v4763 = vrot.slane %v4323, %v4762
        %v4764 = vadd.f32 %v4722, %v4763
        %v4765 = vadd.f32 %v4726, %v4763
        %v4766 = vadd.f32 %v4732, %v4763
        %v4767 = vadd.f32 %v4736, %v4763
        %v4768 = vadd.f32 %v4742, %v4763
        %v4769 = vadd.f32 %v4746, %v4763
        %v4770 = vadd.f32 %v4752, %v4763
        %v4771 = vadd.f32 %v4756, %v4763
        %v4772 = vlaneseq
        %v4773 = vshrl.u32 %v4772, 7
        %v4774 = vsub.s32 3, %v4773
        %v4775 = vrot.slane %v4323, %v4774
        %v4776 = vadd.f32 %v4724, %v4775
        %v4777 = vadd.f32 %v4728, %v4775
        %v4778 = vadd.f32 %v4734, %v4775
        %v4779 = vadd.f32 %v4738, %v4775
        %v4780 = vadd.f32 %v4744, %v4775
        %v4781 = vadd.f32 %v4748, %v4775
        %v4782 = vadd.f32 %v4754, %v4775
        %v4783 = vadd.f32 %v4758, %v4775
        %v4784 = vpack.c.bf16 %v4586, %v4585
        %v4785 = vpack.c.bf16 %v4765, %v4764
        %v4786 = vpack.c.bf16 %v4767, %v4766
        %v4787 = vpack.c.bf16 %v4769, %v4768
        %v4788 = vpack.c.bf16 %v4771, %v4770
        %v4789 = vpack.c.bf16 %v4777, %v4776
        %v4790 = vpack.c.bf16 %v4779, %v4778
        %v4791 = vpack.c.bf16 %v4781, %v4780
        %v4792 = vpack.c.bf16 %v4783, %v4782
        %v4794 = vsel %vm1251, %v4784, 0
        %v4797 = vsel %vm1251, %v4785, 0
        %v4800 = vsel %vm1251, %v4786, 0
        %v4803 = vsel %vm1251, %v4787, 0
        %v4806 = vsel %vm1251, %v4788, 0
        %4808 = vmatprep.subr.bf16.mxu0 0
        %4809 = vmatpush1.bf16.xpose.msra.mxu0 0
        %4810 = vmatprep.subr.bf16.mxu0 0
        %4811 = vmatpush1.bf16.xpose.msra.mxu0 0
        %4812 = vmatprep.subr.bf16.mxu0 0
        %4813 = vmatpush1.bf16.xpose.msra.mxu0 0
        %4814 = vmatprep.subr.bf16.mxu0 0
        %4815 = vmatpush1.bf16.xpose.msra.mxu0 0
        %4816 = vmatprep.subr.bf16.mxu0 0
        %4817 = vmatpush1.bf16.xpose.msra.mxu0 %v4806
        %4818 = vmatprep.subr.bf16.mxu0 0
        %4819 = vmatpush1.bf16.xpose.msra.mxu0 %v4803
        %4820 = vmatprep.subr.bf16.mxu0 0
        %4821 = vmatpush1.bf16.xpose.msra.mxu0 %v4800
        %4822 = vmatprep.subr.bf16.mxu0 0
        %4823 = vmatpush1.bf16.xpose.msra.mxu0 %v4797
        %4824 = vmatprep.subr.bf16.mxu0 0
        %4825 = vmatpush2.bf16.xpose.msra.mxu0 0
        %4826 = vmatprep.subr.bf16.mxu0 0
        %4827 = vmatpush2.bf16.xpose.msra.mxu0 0
        %4828 = vmatprep.subr.bf16.mxu0 0
        %4829 = vmatpush2.bf16.xpose.msra.mxu0 0
        %4830 = vmatprep.subr.bf16.mxu0 0
        %4831 = vmatpush2.bf16.xpose.msra.mxu0 0
        %4832 = vmatprep.subr.bf16.mxu0 0
        %4833 = vmatpush2.bf16.xpose.msra.mxu0 0
        %4834 = vmatprep.subr.bf16.mxu0 0
        %4835 = vmatpush2.bf16.xpose.msra.mxu0 0
        %4836 = vmatprep.subr.bf16.mxu0 0
        %4837 = vmatpush2.bf16.xpose.msra.mxu0 0
        %4838 = vmatprep.subr.bf16.mxu0 0
        %4839 = vmatpush2.bf16.xpose.msra.mxu0 0
        %4840 = vmatprep.mubr.bf16.mxu0 0
        %4841 = vmatmul.mubr.bf16.gmra.mxu0 %v4794
        %v4842 = vpop.f32.mrf.mxu0
        %v4843 = vadd.f32 0.0, %v4842
        %v4844 = vpop.f32.mrf.mxu0
        %v4845 = vpop.f32.mrf.mxu0
        %v4846 = vadd.f32 0.0, %v4845
        %v4847 = vpop.f32.mrf.mxu0
        %4848 = vdwg.mxu0
        %4850 = vrot.lane.b32.xlu0 %v4784, 96
        %v4851 = vpop.permute.xlu0 %4850
        %4856 = vrot.lane.b32.xlu0 %v4785, 96
        %v4857 = vpop.permute.xlu0 %4856
        %4858 = vrot.lane.b32.xlu0 %v4786, 96
        %v4859 = vpop.permute.xlu0 %4858
        %4860 = vrot.lane.b32.xlu0 %v4787, 96
        %v4861 = vpop.permute.xlu0 %4860
        %4862 = vrot.lane.b32.xlu0 %v4788, 96
        %v4863 = vpop.permute.xlu0 %4862
        %v4865 = vsel %vm1251, %v4851, 0
        %v4868 = vsel %vm1251, %v4857, 0
        %v4871 = vsel %vm1251, %v4859, 0
        %v4874 = vsel %vm1251, %v4861, 0
        %v4877 = vsel %vm1251, %v4863, 0
        %4879 = vmatprep.subr.bf16.mxu0 0
        %4880 = vmatpush1.bf16.xpose.msra.mxu0 0
        %4881 = vmatprep.subr.bf16.mxu0 0
        %4882 = vmatpush1.bf16.xpose.msra.mxu0 0
        %4883 = vmatprep.subr.bf16.mxu0 0
        %4884 = vmatpush1.bf16.xpose.msra.mxu0 0
        %4885 = vmatprep.subr.bf16.mxu0 0
        %4886 = vmatpush1.bf16.xpose.msra.mxu0 0
        %4887 = vmatprep.subr.bf16.mxu0 0
        %4888 = vmatpush1.bf16.xpose.msra.mxu0 %v4877
        %4889 = vmatprep.subr.bf16.mxu0 0
        %4890 = vmatpush1.bf16.xpose.msra.mxu0 %v4874
        %4891 = vmatprep.subr.bf16.mxu0 0
        %4892 = vmatpush1.bf16.xpose.msra.mxu0 %v4871
        %4893 = vmatprep.subr.bf16.mxu0 0
        %4894 = vmatpush1.bf16.xpose.msra.mxu0 %v4868
        %4895 = vmatprep.subr.bf16.mxu0 0
        %4896 = vmatpush2.bf16.xpose.msra.mxu0 0
        %4897 = vmatprep.subr.bf16.mxu0 0
        %4898 = vmatpush2.bf16.xpose.msra.mxu0 0
        %4899 = vmatprep.subr.bf16.mxu0 0
        %4900 = vmatpush2.bf16.xpose.msra.mxu0 0
        %4901 = vmatprep.subr.bf16.mxu0 0
        %4902 = vmatpush2.bf16.xpose.msra.mxu0 0
        %4903 = vmatprep.subr.bf16.mxu0 0
        %4904 = vmatpush2.bf16.xpose.msra.mxu0 0
        %4905 = vmatprep.subr.bf16.mxu0 0
        %4906 = vmatpush2.bf16.xpose.msra.mxu0 0
        %4907 = vmatprep.subr.bf16.mxu0 0
        %4908 = vmatpush2.bf16.xpose.msra.mxu0 0
        %4909 = vmatprep.subr.bf16.mxu0 0
        %4910 = vmatpush2.bf16.xpose.msra.mxu0 0
        %4911 = vmatprep.mubr.bf16.mxu0 0
        %4912 = vmatmul.mubr.bf16.gmra.mxu0 %v4865
        %v4913 = vpop.f32.mrf.mxu0
        %v4914 = vadd.f32 0.0, %v4913
        %v4915 = vpop.f32.mrf.mxu0
        %v4916 = vpop.f32.mrf.mxu0
        %v4917 = vadd.f32 0.0, %v4916
        %v4918 = vpop.f32.mrf.mxu0
        %4919 = vdwg.mxu0
        %4920 = vrot.lane.b32.xlu0 %v4784, 64
        %v4921 = vpop.permute.xlu0 %4920
        %4922 = vrot.lane.b32.xlu0 %v4785, 64
        %v4923 = vpop.permute.xlu0 %4922
        %4924 = vrot.lane.b32.xlu0 %v4786, 64
        %v4925 = vpop.permute.xlu0 %4924
        %4926 = vrot.lane.b32.xlu0 %v4787, 64
        %v4927 = vpop.permute.xlu0 %4926
        %4928 = vrot.lane.b32.xlu0 %v4788, 64
        %v4929 = vpop.permute.xlu0 %4928
        %v4931 = vsel %vm1251, %v4921, 0
        %v4934 = vsel %vm1251, %v4923, 0
        %v4937 = vsel %vm1251, %v4925, 0
        %v4940 = vsel %vm1251, %v4927, 0
        %v4943 = vsel %vm1251, %v4929, 0
        %4945 = vmatprep.subr.bf16.mxu0 0
        %4946 = vmatpush1.bf16.xpose.msra.mxu0 0
        %4947 = vmatprep.subr.bf16.mxu0 0
        %4948 = vmatpush1.bf16.xpose.msra.mxu0 0
        %4949 = vmatprep.subr.bf16.mxu0 0
        %4950 = vmatpush1.bf16.xpose.msra.mxu0 0
        %4951 = vmatprep.subr.bf16.mxu0 0
        %4952 = vmatpush1.bf16.xpose.msra.mxu0 0
        %4953 = vmatprep.subr.bf16.mxu0 0
        %4954 = vmatpush1.bf16.xpose.msra.mxu0 %v4943
        %4955 = vmatprep.subr.bf16.mxu0 0
        %4956 = vmatpush1.bf16.xpose.msra.mxu0 %v4940
        %4957 = vmatprep.subr.bf16.mxu0 0
        %4958 = vmatpush1.bf16.xpose.msra.mxu0 %v4937
        %4959 = vmatprep.subr.bf16.mxu0 0
        %4960 = vmatpush1.bf16.xpose.msra.mxu0 %v4934
        %4961 = vmatprep.subr.bf16.mxu0 0
        %4962 = vmatpush2.bf16.xpose.msra.mxu0 0
        %4963 = vmatprep.subr.bf16.mxu0 0
        %4964 = vmatpush2.bf16.xpose.msra.mxu0 0
        %4965 = vmatprep.subr.bf16.mxu0 0
        %4966 = vmatpush2.bf16.xpose.msra.mxu0 0
        %4967 = vmatprep.subr.bf16.mxu0 0
        %4968 = vmatpush2.bf16.xpose.msra.mxu0 0
        %4969 = vmatprep.subr.bf16.mxu0 0
        %4970 = vmatpush2.bf16.xpose.msra.mxu0 0
        %4971 = vmatprep.subr.bf16.mxu0 0
        %4972 = vmatpush2.bf16.xpose.msra.mxu0 0
        %4973 = vmatprep.subr.bf16.mxu0 0
        %4974 = vmatpush2.bf16.xpose.msra.mxu0 0
        %4975 = vmatprep.subr.bf16.mxu0 0
        %4976 = vmatpush2.bf16.xpose.msra.mxu0 0
        %4977 = vmatprep.mubr.bf16.mxu0 0
        %4978 = vmatmul.mubr.bf16.gmra.mxu0 %v4931
        %v4979 = vpop.f32.mrf.mxu0
        %v4980 = vadd.f32 0.0, %v4979
        %v4981 = vpop.f32.mrf.mxu0
        %v4982 = vpop.f32.mrf.mxu0
        %v4983 = vadd.f32 0.0, %v4982
        %v4984 = vpop.f32.mrf.mxu0
        %4985 = vdwg.mxu0
        %4986 = vrot.lane.b32.xlu0 %v4784, 32
        %v4987 = vpop.permute.xlu0 %4986
        %4988 = vrot.lane.b32.xlu0 %v4785, 32
        %v4989 = vpop.permute.xlu0 %4988
        %4990 = vrot.lane.b32.xlu0 %v4786, 32
        %v4991 = vpop.permute.xlu0 %4990
        %4992 = vrot.lane.b32.xlu0 %v4787, 32
        %v4993 = vpop.permute.xlu0 %4992
        %4994 = vrot.lane.b32.xlu0 %v4788, 32
        %v4995 = vpop.permute.xlu0 %4994
        %v4997 = vsel %vm1251, %v4987, 0
        %v5000 = vsel %vm1251, %v4989, 0
        %v5003 = vsel %vm1251, %v4991, 0
        %v5006 = vsel %vm1251, %v4993, 0
        %v5009 = vsel %vm1251, %v4995, 0
        %5011 = vmatprep.subr.bf16.mxu0 0
        %5012 = vmatpush1.bf16.xpose.msra.mxu0 0
        %5013 = vmatprep.subr.bf16.mxu0 0
        %5014 = vmatpush1.bf16.xpose.msra.mxu0 0
        %5015 = vmatprep.subr.bf16.mxu0 0
        %5016 = vmatpush1.bf16.xpose.msra.mxu0 0
        %5017 = vmatprep.subr.bf16.mxu0 0
        %5018 = vmatpush1.bf16.xpose.msra.mxu0 0
        %5019 = vmatprep.subr.bf16.mxu0 0
        %5020 = vmatpush1.bf16.xpose.msra.mxu0 %v5009
        %5021 = vmatprep.subr.bf16.mxu0 0
        %5022 = vmatpush1.bf16.xpose.msra.mxu0 %v5006
        %5023 = vmatprep.subr.bf16.mxu0 0
        %5024 = vmatpush1.bf16.xpose.msra.mxu0 %v5003
        %5025 = vmatprep.subr.bf16.mxu0 0
        %5026 = vmatpush1.bf16.xpose.msra.mxu0 %v5000
        %5027 = vmatprep.subr.bf16.mxu0 0
        %5028 = vmatpush2.bf16.xpose.msra.mxu0 0
        %5029 = vmatprep.subr.bf16.mxu0 0
        %5030 = vmatpush2.bf16.xpose.msra.mxu0 0
        %5031 = vmatprep.subr.bf16.mxu0 0
        %5032 = vmatpush2.bf16.xpose.msra.mxu0 0
        %5033 = vmatprep.subr.bf16.mxu0 0
        %5034 = vmatpush2.bf16.xpose.msra.mxu0 0
        %5035 = vmatprep.subr.bf16.mxu0 0
        %5036 = vmatpush2.bf16.xpose.msra.mxu0 0
        %5037 = vmatprep.subr.bf16.mxu0 0
        %5038 = vmatpush2.bf16.xpose.msra.mxu0 0
        %5039 = vmatprep.subr.bf16.mxu0 0
        %5040 = vmatpush2.bf16.xpose.msra.mxu0 0
        %5041 = vmatprep.subr.bf16.mxu0 0
        %5042 = vmatpush2.bf16.xpose.msra.mxu0 0
        %5043 = vmatprep.mubr.bf16.mxu0 0
        %5044 = vmatmul.mubr.bf16.gmra.mxu0 %v4997
        %v5045 = vpop.f32.mrf.mxu0
        %v5046 = vadd.f32 0.0, %v5045
        %v5047 = vpop.f32.mrf.mxu0
        %v5048 = vpop.f32.mrf.mxu0
        %v5049 = vadd.f32 0.0, %v5048
        %v5050 = vpop.f32.mrf.mxu0
        %5051 = vdwg.mxu0
        %v5052 = vsel %vm1132, %v4843, -inf
        %5053 = vmax.xlane.f32.xlu0 %v5052
        %v5054 = vpop.xlane.xlu0 %5053
        %v5055 = vsel %vm1132, %v4846, -inf
        %5056 = vmax.xlane.f32.xlu0 %v5055
        %v5057 = vpop.xlane.xlu0 %5056
        %v5058 = vsel %vm1132, %v4914, -inf
        %5059 = vmax.xlane.f32.xlu0 %v5058
        %v5060 = vpop.xlane.xlu0 %5059
        %v5061 = vsel %vm1132, %v4917, -inf
        %5062 = vmax.xlane.f32.xlu0 %v5061
        %v5063 = vpop.xlane.xlu0 %5062
        %v5064 = vsel %vm1132, %v4980, -inf
        %5065 = vmax.xlane.f32.xlu0 %v5064
        %v5066 = vpop.xlane.xlu0 %5065
        %v5067 = vsel %vm1132, %v4983, -inf
        %5068 = vmax.xlane.f32.xlu0 %v5067
        %v5069 = vpop.xlane.xlu0 %5068
        %v5070 = vsel %vm1132, %v5046, -inf
        %5071 = vmax.xlane.f32.xlu0 %v5070
        %v5072 = vpop.xlane.xlu0 %5071
        %v5073 = vsel %vm1132, %v5049, -inf
        %5074 = vmax.xlane.f32.xlu0 %v5073
        %v5075 = vpop.xlane.xlu0 %5074
        %v5076 = vsub.f32 %v4843, %v5054
        %v5077 = vsub.f32 %v4846, %v5057
        %v5078 = vsub.f32 %v4914, %v5060
        %v5079 = vsub.f32 %v4917, %v5063
        %v5080 = vsub.f32 %v4980, %v5066
        %v5081 = vsub.f32 %v4983, %v5069
        %v5082 = vsub.f32 %v5046, %v5072
        %v5083 = vsub.f32 %v5049, %v5075
        %v5084 = vmul.f32 %v5076, 1.442695
        %v5085 = vpow.pop %v5084
        %v5086 = vmul.f32 %v5077, 1.442695
        %v5087 = vpow.pop %v5086
        %v5088 = vmul.f32 %v5078, 1.442695
        %v5089 = vpow.pop %v5088
        %v5090 = vmul.f32 %v5079, 1.442695
        %v5091 = vpow.pop %v5090
        %v5092 = vmul.f32 %v5080, 1.442695
        %v5093 = vpow.pop %v5092
        %v5094 = vmul.f32 %v5081, 1.442695
        %v5095 = vpow.pop %v5094
        %v5096 = vmul.f32 %v5082, 1.442695
        %v5097 = vpow.pop %v5096
        %v5098 = vmul.f32 %v5083, 1.442695
        %v5099 = vpow.pop %v5098
        %v5100 = vsel %vm1132, %v5085, 0.0
        %5101 = vadd.xlane.f32.xlu0 %v5100
        %v5102 = vpop.xlane.xlu0 %5101
        %v5103 = vsel %vm1132, %v5087, 0.0
        %5104 = vadd.xlane.f32.xlu0 %v5103
        %v5105 = vpop.xlane.xlu0 %5104
        %v5106 = vsel %vm1132, %v5089, 0.0
        %5107 = vadd.xlane.f32.xlu0 %v5106
        %v5108 = vpop.xlane.xlu0 %5107
        %v5109 = vsel %vm1132, %v5091, 0.0
        %5110 = vadd.xlane.f32.xlu0 %v5109
        %v5111 = vpop.xlane.xlu0 %5110
        %v5112 = vsel %vm1132, %v5093, 0.0
        %5113 = vadd.xlane.f32.xlu0 %v5112
        %v5114 = vpop.xlane.xlu0 %5113
        %v5115 = vsel %vm1132, %v5095, 0.0
        %5116 = vadd.xlane.f32.xlu0 %v5115
        %v5117 = vpop.xlane.xlu0 %5116
        %v5118 = vsel %vm1132, %v5097, 0.0
        %5119 = vadd.xlane.f32.xlu0 %v5118
        %v5120 = vpop.xlane.xlu0 %5119
        %v5121 = vsel %vm1132, %v5099, 0.0
        %5122 = vadd.xlane.f32.xlu0 %v5121
        %v5123 = vpop.xlane.xlu0 %5122
        %v5124 = vrcp.pop %v5102
        %v5125 = vrcp.pop %v5105
        %v5126 = vrcp.pop %v5108
        %v5127 = vrcp.pop %v5111
        %v5128 = vrcp.pop %v5114
        %v5129 = vrcp.pop %v5117
        %v5130 = vrcp.pop %v5120
        %v5131 = vrcp.pop %v5123
        %v5132 = vmul.f32 %v5085, %v5124
        %v5133 = vmul.f32 %v5087, %v5125
        %v5134 = vmul.f32 %v5089, %v5126
        %v5135 = vmul.f32 %v5091, %v5127
        %v5136 = vmul.f32 %v5093, %v5128
        %v5137 = vmul.f32 %v5095, %v5129
        %v5138 = vmul.f32 %v5097, %v5130
        %v5139 = vmul.f32 %v5099, %v5131
        %v5140 = vpack.c.bf16 %v5133, %v5132
        %v5141 = vpack.c.bf16 %v5135, %v5134
        %v5142 = vpack.c.bf16 %v5137, %v5136
        %v5143 = vpack.c.bf16 %v5139, %v5138
        %v5145 = vsel %vm1132, %v5140, 0
        %5147 = vmatprep.subr.bf16.mxu0 0
        %5148 = vmatpush1.bf16.msra.mxu0 0
        %5149 = vmatprep.subr.bf16.mxu0 0
        %5150 = vmatpush1.bf16.msra.mxu0 0
        %5151 = vmatprep.subr.bf16.mxu0 0
        %5152 = vmatpush1.bf16.msra.mxu0 0
        %5153 = vmatprep.subr.bf16.mxu0 0
        %5154 = vmatpush1.bf16.msra.mxu0 0
        %5155 = vmatprep.subr.bf16.mxu0 0
        %5156 = vmatpush1.bf16.msra.mxu0 %v4792
        %5157 = vmatprep.subr.bf16.mxu0 0
        %5158 = vmatpush1.bf16.msra.mxu0 %v4791
        %5159 = vmatprep.subr.bf16.mxu0 0
        %5160 = vmatpush1.bf16.msra.mxu0 %v4790
        %5161 = vmatprep.subr.bf16.mxu0 0
        %5162 = vmatpush1.bf16.msra.mxu0 %v4789
        %5163 = vmatprep.subr.bf16.mxu0 0
        %5164 = vmatpush2.bf16.msra.mxu0 0
        %5165 = vmatprep.subr.bf16.mxu0 0
        %5166 = vmatpush2.bf16.msra.mxu0 0
        %5167 = vmatprep.subr.bf16.mxu0 0
        %5168 = vmatpush2.bf16.msra.mxu0 0
        %5169 = vmatprep.subr.bf16.mxu0 0
        %5170 = vmatpush2.bf16.msra.mxu0 0
        %5171 = vmatprep.subr.bf16.mxu0 0
        %5172 = vmatpush2.bf16.msra.mxu0 0
        %5173 = vmatprep.subr.bf16.mxu0 0
        %5174 = vmatpush2.bf16.msra.mxu0 0
        %5175 = vmatprep.subr.bf16.mxu0 0
        %5176 = vmatpush2.bf16.msra.mxu0 0
        %5177 = vmatprep.subr.bf16.mxu0 0
        %5178 = vmatpush2.bf16.msra.mxu0 0
        %5179 = vmatprep.mubr.bf16.mxu0 0
        %5180 = vmatmul.mubr.bf16.gmra.mxu0 %v5145
        %v5181 = vpop.f32.mrf.mxu0
        %v5182 = vadd.f32 0.0, %v5181
        %v5183 = vpop.f32.mrf.mxu0
        %v5184 = vpop.f32.mrf.mxu0
        %v5185 = vadd.f32 0.0, %v5184
        %v5186 = vpop.f32.mrf.mxu0
        %5187 = vdwg.mxu0
        %5192 = vrot.lane.b32.xlu0 %v4789, 96
        %v5193 = vpop.permute.xlu0 %5192
        %5194 = vrot.lane.b32.xlu0 %v4790, 96
        %v5195 = vpop.permute.xlu0 %5194
        %5196 = vrot.lane.b32.xlu0 %v4791, 96
        %v5197 = vpop.permute.xlu0 %5196
        %5198 = vrot.lane.b32.xlu0 %v4792, 96
        %v5199 = vpop.permute.xlu0 %5198
        %v5205 = vsel %vm1132, %v5141, 0
        %5207 = vmatprep.subr.bf16.mxu0 0
        %5208 = vmatpush1.bf16.msra.mxu0 0
        %5209 = vmatprep.subr.bf16.mxu0 0
        %5210 = vmatpush1.bf16.msra.mxu0 0
        %5211 = vmatprep.subr.bf16.mxu0 0
        %5212 = vmatpush1.bf16.msra.mxu0 0
        %5213 = vmatprep.subr.bf16.mxu0 0
        %5214 = vmatpush1.bf16.msra.mxu0 0
        %5215 = vmatprep.subr.bf16.mxu0 0
        %5216 = vmatpush1.bf16.msra.mxu0 %v5199
        %5217 = vmatprep.subr.bf16.mxu0 0
        %5218 = vmatpush1.bf16.msra.mxu0 %v5197
        %5219 = vmatprep.subr.bf16.mxu0 0
        %5220 = vmatpush1.bf16.msra.mxu0 %v5195
        %5221 = vmatprep.subr.bf16.mxu0 0
        %5222 = vmatpush1.bf16.msra.mxu0 %v5193
        %5223 = vmatprep.subr.bf16.mxu0 0
        %5224 = vmatpush2.bf16.msra.mxu0 0
        %5225 = vmatprep.subr.bf16.mxu0 0
        %5226 = vmatpush2.bf16.msra.mxu0 0
        %5227 = vmatprep.subr.bf16.mxu0 0
        %5228 = vmatpush2.bf16.msra.mxu0 0
        %5229 = vmatprep.subr.bf16.mxu0 0
        %5230 = vmatpush2.bf16.msra.mxu0 0
        %5231 = vmatprep.subr.bf16.mxu0 0
        %5232 = vmatpush2.bf16.msra.mxu0 0
        %5233 = vmatprep.subr.bf16.mxu0 0
        %5234 = vmatpush2.bf16.msra.mxu0 0
        %5235 = vmatprep.subr.bf16.mxu0 0
        %5236 = vmatpush2.bf16.msra.mxu0 0
        %5237 = vmatprep.subr.bf16.mxu0 0
        %5238 = vmatpush2.bf16.msra.mxu0 0
        %5239 = vmatprep.mubr.bf16.mxu0 0
        %5240 = vmatmul.mubr.bf16.gmra.mxu0 %v5205
        %v5241 = vpop.f32.mrf.mxu0
        %v5242 = vadd.f32 0.0, %v5241
        %v5243 = vpop.f32.mrf.mxu0
        %v5244 = vpop.f32.mrf.mxu0
        %v5245 = vadd.f32 0.0, %v5244
        %v5246 = vpop.f32.mrf.mxu0
        %5247 = vdwg.mxu0
        %5248 = vrot.lane.b32.xlu0 %v4789, 64
        %v5249 = vpop.permute.xlu0 %5248
        %5250 = vrot.lane.b32.xlu0 %v4790, 64
        %v5251 = vpop.permute.xlu0 %5250
        %5252 = vrot.lane.b32.xlu0 %v4791, 64
        %v5253 = vpop.permute.xlu0 %5252
        %5254 = vrot.lane.b32.xlu0 %v4792, 64
        %v5255 = vpop.permute.xlu0 %5254
        %v5261 = vsel %vm1132, %v5142, 0
        %5263 = vmatprep.subr.bf16.mxu0 0
        %5264 = vmatpush1.bf16.msra.mxu0 0
        %5265 = vmatprep.subr.bf16.mxu0 0
        %5266 = vmatpush1.bf16.msra.mxu0 0
        %5267 = vmatprep.subr.bf16.mxu0 0
        %5268 = vmatpush1.bf16.msra.mxu0 0
        %5269 = vmatprep.subr.bf16.mxu0 0
        %5270 = vmatpush1.bf16.msra.mxu0 0
        %5271 = vmatprep.subr.bf16.mxu0 0
        %5272 = vmatpush1.bf16.msra.mxu0 %v5255
        %5273 = vmatprep.subr.bf16.mxu0 0
        %5274 = vmatpush1.bf16.msra.mxu0 %v5253
        %5275 = vmatprep.subr.bf16.mxu0 0
        %5276 = vmatpush1.bf16.msra.mxu0 %v5251
        %5277 = vmatprep.subr.bf16.mxu0 0
        %5278 = vmatpush1.bf16.msra.mxu0 %v5249
        %5279 = vmatprep.subr.bf16.mxu0 0
        %5280 = vmatpush2.bf16.msra.mxu0 0
        %5281 = vmatprep.subr.bf16.mxu0 0
        %5282 = vmatpush2.bf16.msra.mxu0 0
        %5283 = vmatprep.subr.bf16.mxu0 0
        %5284 = vmatpush2.bf16.msra.mxu0 0
        %5285 = vmatprep.subr.bf16.mxu0 0
        %5286 = vmatpush2.bf16.msra.mxu0 0
        %5287 = vmatprep.subr.bf16.mxu0 0
        %5288 = vmatpush2.bf16.msra.mxu0 0
        %5289 = vmatprep.subr.bf16.mxu0 0
        %5290 = vmatpush2.bf16.msra.mxu0 0
        %5291 = vmatprep.subr.bf16.mxu0 0
        %5292 = vmatpush2.bf16.msra.mxu0 0
        %5293 = vmatprep.subr.bf16.mxu0 0
        %5294 = vmatpush2.bf16.msra.mxu0 0
        %5295 = vmatprep.mubr.bf16.mxu0 0
        %5296 = vmatmul.mubr.bf16.gmra.mxu0 %v5261
        %v5297 = vpop.f32.mrf.mxu0
        %v5298 = vadd.f32 0.0, %v5297
        %v5299 = vpop.f32.mrf.mxu0
        %v5300 = vpop.f32.mrf.mxu0
        %v5301 = vadd.f32 0.0, %v5300
        %v5302 = vpop.f32.mrf.mxu0
        %5303 = vdwg.mxu0
        %5304 = vrot.lane.b32.xlu0 %v4789, 32
        %v5305 = vpop.permute.xlu0 %5304
        %5306 = vrot.lane.b32.xlu0 %v4790, 32
        %v5307 = vpop.permute.xlu0 %5306
        %5308 = vrot.lane.b32.xlu0 %v4791, 32
        %v5309 = vpop.permute.xlu0 %5308
        %5310 = vrot.lane.b32.xlu0 %v4792, 32
        %v5311 = vpop.permute.xlu0 %5310
        %v5317 = vsel %vm1132, %v5143, 0
        %5319 = vmatprep.subr.bf16.mxu0 0
        %5320 = vmatpush1.bf16.msra.mxu0 0
        %5321 = vmatprep.subr.bf16.mxu0 0
        %5322 = vmatpush1.bf16.msra.mxu0 0
        %5323 = vmatprep.subr.bf16.mxu0 0
        %5324 = vmatpush1.bf16.msra.mxu0 0
        %5325 = vmatprep.subr.bf16.mxu0 0
        %5326 = vmatpush1.bf16.msra.mxu0 0
        %5327 = vmatprep.subr.bf16.mxu0 0
        %5328 = vmatpush1.bf16.msra.mxu0 %v5311
        %5329 = vmatprep.subr.bf16.mxu0 0
        %5330 = vmatpush1.bf16.msra.mxu0 %v5309
        %5331 = vmatprep.subr.bf16.mxu0 0
        %5332 = vmatpush1.bf16.msra.mxu0 %v5307
        %5333 = vmatprep.subr.bf16.mxu0 0
        %5334 = vmatpush1.bf16.msra.mxu0 %v5305
        %5335 = vmatprep.subr.bf16.mxu0 0
        %5336 = vmatpush2.bf16.msra.mxu0 0
        %5337 = vmatprep.subr.bf16.mxu0 0
        %5338 = vmatpush2.bf16.msra.mxu0 0
        %5339 = vmatprep.subr.bf16.mxu0 0
        %5340 = vmatpush2.bf16.msra.mxu0 0
        %5341 = vmatprep.subr.bf16.mxu0 0
        %5342 = vmatpush2.bf16.msra.mxu0 0
        %5343 = vmatprep.subr.bf16.mxu0 0
        %5344 = vmatpush2.bf16.msra.mxu0 0
        %5345 = vmatprep.subr.bf16.mxu0 0
        %5346 = vmatpush2.bf16.msra.mxu0 0
        %5347 = vmatprep.subr.bf16.mxu0 0
        %5348 = vmatpush2.bf16.msra.mxu0 0
        %5349 = vmatprep.subr.bf16.mxu0 0
        %5350 = vmatpush2.bf16.msra.mxu0 0
        %5351 = vmatprep.mubr.bf16.mxu0 0
        %5352 = vmatmul.mubr.bf16.gmra.mxu0 %v5317
        %v5353 = vpop.f32.mrf.mxu0
        %v5354 = vadd.f32 0.0, %v5353
        %v5355 = vpop.f32.mrf.mxu0
        %v5356 = vpop.f32.mrf.mxu0
        %v5357 = vadd.f32 0.0, %v5356
        %v5358 = vpop.f32.mrf.mxu0
        %5359 = vdwg.mxu0
        %5362 = vrot.lane.b32.xlu0 %v5242, 32
        %v5363 = vpop.permute.xlu0 %5362
        %5364 = vrot.lane.b32.xlu0 %v5245, 32
        %v5365 = vpop.permute.xlu0 %5364
        %5370 = vrot.lane.b32.xlu0 %v5298, 64
        %v5371 = vpop.permute.xlu0 %5370
        %5372 = vrot.lane.b32.xlu0 %v5301, 64
        %v5373 = vpop.permute.xlu0 %5372
        %5378 = vrot.lane.b32.xlu0 %v5354, 96
        %v5379 = vpop.permute.xlu0 %5378
        %5380 = vrot.lane.b32.xlu0 %v5357, 96
        %v5381 = vpop.permute.xlu0 %5380
        %v5384 = vsel %vm1251, %v5182, %v5363
        %v5385 = vsel %vm1251, %v5185, %v5365
        %v5386 = vsel %vm1132, %v5384, %v5371
        %v5387 = vsel %vm1132, %v5385, %v5373
        %v5388 = vsel %vm1847, %v5386, %v5379
        %v5389 = vsel %vm1847, %v5387, %v5381
        %v5390 = vpack.c.bf16 %v5389, %v5388
        %v5391 = vld [vmem:[%s13] sm:$0xf]
        %v5392 = vld [vmem:[%s13 + $0x4] sm:$0xf]
        %v5393 = vld [vmem:[%s13 + $0x8] sm:$0xf]
        %v5394 = vld [vmem:[%s13 + $0xc] sm:$0xf]
        %v5395 = vld [vmem:[%s13 + $0x10] sm:$0xf]
        %v5396 = vld [vmem:[%s13 + $0x14] sm:$0xf]
        %v5397 = vld [vmem:[%s13 + $0x18] sm:$0xf]
        %v5398 = vld [vmem:[%s13 + $0x1c] sm:$0xf]
        %v5399 = vld [vmem:[%s13 + $0x20] sm:$0xf]
        %v5400 = vld [vmem:[%s13 + $0x24] sm:$0xf]
        %v5401 = vld [vmem:[%s13 + $0x28] sm:$0xf]
        %v5402 = vld [vmem:[%s13 + $0x2c] sm:$0xf]
        %v5403 = vld [vmem:[%s13 + $0x30] sm:$0xf]
        %v5404 = vld [vmem:[%s13 + $0x34] sm:$0xf]
        %v5405 = vld [vmem:[%s13 + $0x38] sm:$0xf]
        %v5406 = vld [vmem:[%s13 + $0x3c] sm:$0xf]
        %v5407 = vlaneseq
        %v5408 = vshrl.u32 %v5407, 7
        %v5409 = vsub.s32 4, %v5408
        %v5410 = vrot.slane %v4323, %v5409
        %v5427 = vunpack.c.l.b16 %v5391
        %v5428 = vunpack.c.l.b16 %v5392
        %v5429 = vunpack.c.l.b16 %v5393
        %v5430 = vunpack.c.l.b16 %v5394
        %v5431 = vunpack.c.l.b16 %v5395
        %v5432 = vunpack.c.l.b16 %v5396
        %v5433 = vunpack.c.l.b16 %v5397
        %v5434 = vunpack.c.l.b16 %v5398
        %v5435 = vunpack.c.l.b16 %v5399
        %v5436 = vunpack.c.l.b16 %v5400
        %v5437 = vunpack.c.l.b16 %v5401
        %v5438 = vunpack.c.l.b16 %v5402
        %v5439 = vunpack.c.l.b16 %v5403
        %v5440 = vunpack.c.l.b16 %v5404
        %v5441 = vunpack.c.l.b16 %v5405
        %v5442 = vunpack.c.l.b16 %v5406
        %v5443 = vpack.c.b16 %v5428, %v5427
        %v5444 = vpack.c.b16 %v5430, %v5429
        %v5445 = vpack.c.b16 %v5432, %v5431
        %v5446 = vpack.c.b16 %v5434, %v5433
        %v5447 = vpack.c.b16 %v5436, %v5435
        %v5448 = vpack.c.b16 %v5438, %v5437
        %v5449 = vpack.c.b16 %v5440, %v5439
        %v5450 = vpack.c.b16 %v5442, %v5441
        %5459 = vmatprep.subr.bf16.mxu0 0
        %5460 = vmatpush1.bf16.msra.mxu0 %v5450
        %5461 = vmatprep.subr.bf16.mxu0 0
        %5462 = vmatpush1.bf16.msra.mxu0 %v5449
        %5463 = vmatprep.subr.bf16.mxu0 0
        %5464 = vmatpush1.bf16.msra.mxu0 %v5448
        %5465 = vmatprep.subr.bf16.mxu0 0
        %5466 = vmatpush1.bf16.msra.mxu0 %v5447
        %5467 = vmatprep.subr.bf16.mxu0 0
        %5468 = vmatpush1.bf16.msra.mxu0 %v5446
        %5469 = vmatprep.subr.bf16.mxu0 0
        %5470 = vmatpush1.bf16.msra.mxu0 %v5445
        %5471 = vmatprep.subr.bf16.mxu0 0
        %5472 = vmatpush1.bf16.msra.mxu0 %v5444
        %5473 = vmatprep.subr.bf16.mxu0 0
        %5474 = vmatpush1.bf16.msra.mxu0 %v5443
        %5475 = vmatprep.subr.bf16.mxu0 0
        %5476 = vmatpush2.bf16.msra.mxu0 0
        %5477 = vmatprep.subr.bf16.mxu0 0
        %5478 = vmatpush2.bf16.msra.mxu0 0
        %5479 = vmatprep.subr.bf16.mxu0 0
        %5480 = vmatpush2.bf16.msra.mxu0 0
        %5481 = vmatprep.subr.bf16.mxu0 0
        %5482 = vmatpush2.bf16.msra.mxu0 0
        %5483 = vmatprep.subr.bf16.mxu0 0
        %5484 = vmatpush2.bf16.msra.mxu0 0
        %5485 = vmatprep.subr.bf16.mxu0 0
        %5486 = vmatpush2.bf16.msra.mxu0 0
        %5487 = vmatprep.subr.bf16.mxu0 0
        %5488 = vmatpush2.bf16.msra.mxu0 0
        %5489 = vmatprep.subr.bf16.mxu0 0
        %5490 = vmatpush2.bf16.msra.mxu0 0
        %5491 = vmatprep.mubr.bf16.mxu0 0
        %5492 = vmatmul.mubr.bf16.gmra.mxu0 %v5390
        %v5493 = vpop.f32.mrf.mxu0
        %v5494 = vadd.f32 %v5410, %v5493
        %v5495 = vpop.f32.mrf.mxu0
        %v5496 = vpop.f32.mrf.mxu0
        %v5497 = vadd.f32 %v5410, %v5496
        %v5498 = vpop.f32.mrf.mxu0
        %5499 = vdwg.mxu0
        %v5500 = vadd.f32 %v4579, %v5494
        %v5501 = vadd.f32 %v4580, %v5497
        %5502 = vadd.xlane.f32.xlu0 %v5500
        %v5503 = vpop.xlane.xlu0 %5502
        %5504 = vadd.xlane.f32.xlu0 %v5501
        %v5505 = vpop.xlane.xlu0 %5504
        %v5506 = vmul.f32 %v5503, %v1966
        %v5507 = vmul.f32 %v5505, %v1966
        %v5508 = vsub.f32 %v5500, %v5506
        %v5509 = vsub.f32 %v5501, %v5507
        %v5510 = vmul.f32 %v5508, %v5508
        %v5511 = vmul.f32 %v5509, %v5509
        %5512 = vadd.xlane.f32.xlu0 %v5510
        %v5513 = vpop.xlane.xlu0 %5512
        %5514 = vadd.xlane.f32.xlu0 %v5511
        %v5515 = vpop.xlane.xlu0 %5514
        %v5516 = vmul.f32 %v5513, %v1966
        %v5517 = vmul.f32 %v5515, %v1966
        %v5518 = vadd.f32 %v5516, 1e-05
        %v5519 = vadd.f32 %v5517, 1e-05
        %v5520 = vrsqrt.pop %v5518
        %v5521 = vrsqrt.pop %v5519
        %v5522 = vmul.f32 %v5508, %v5520
        %v5523 = vmul.f32 %v5509, %v5521
        %v5524 = vlaneseq
        %v5525 = vshrl.u32 %v5524, 7
        %v5526 = vsub.s32 6, %v5525
        %v5527 = vrot.slane %v4323, %v5526
        %v5528 = vmul.f32 %v5522, %v5527
        %v5529 = vmul.f32 %v5523, %v5527
        %v5530 = vlaneseq
        %v5531 = vshrl.u32 %v5530, 7
        %v5532 = vsub.s32 7, %v5531
        %v5533 = vrot.slane %v4323, %v5532
        %v5534 = vadd.f32 %v5528, %v5533
        %v5535 = vadd.f32 %v5529, %v5533
        %v5536 = vpack.c.bf16 %v5535, %v5534
        %s5537 = scalar_lea.vmem %s13, 64
        %v5538 = vld [vmem:[%s5537] sm:$0xf]
        %v5539 = vld [vmem:[%s5537 + $0x4] sm:$0xf]
        %v5540 = vld [vmem:[%s5537 + $0x8] sm:$0xf]
        %v5541 = vld [vmem:[%s5537 + $0xc] sm:$0xf]
        %v5542 = vld [vmem:[%s5537 + $0x10] sm:$0xf]
        %v5543 = vld [vmem:[%s5537 + $0x14] sm:$0xf]
        %v5544 = vld [vmem:[%s5537 + $0x18] sm:$0xf]
        %v5545 = vld [vmem:[%s5537 + $0x1c] sm:$0xf]
        %v5546 = vld [vmem:[%s5537 + $0x20] sm:$0xf]
        %v5547 = vld [vmem:[%s5537 + $0x24] sm:$0xf]
        %v5548 = vld [vmem:[%s5537 + $0x28] sm:$0xf]
        %v5549 = vld [vmem:[%s5537 + $0x2c] sm:$0xf]
        %v5550 = vld [vmem:[%s5537 + $0x30] sm:$0xf]
        %v5551 = vld [vmem:[%s5537 + $0x34] sm:$0xf]
        %v5552 = vld [vmem:[%s5537 + $0x38] sm:$0xf]
        %v5553 = vld [vmem:[%s5537 + $0x3c] sm:$0xf]
        %v5554 = vlaneseq
        %v5555 = vshrl.u32 %v5554, 7
        %v5556 = vsub.s32 5, %v5555
        %v5557 = vrot.slane %v4323, %v5556
        %v5574 = vunpack.c.l.b16 %v5538
        %v5575 = vunpack.c.l.b16 %v5539
        %v5576 = vunpack.c.l.b16 %v5540
        %v5577 = vunpack.c.l.b16 %v5541
        %v5578 = vunpack.c.l.b16 %v5542
        %v5579 = vunpack.c.l.b16 %v5543
        %v5580 = vunpack.c.l.b16 %v5544
        %v5581 = vunpack.c.l.b16 %v5545
        %v5582 = vunpack.c.l.b16 %v5546
        %v5583 = vunpack.c.l.b16 %v5547
        %v5584 = vunpack.c.l.b16 %v5548
        %v5585 = vunpack.c.l.b16 %v5549
        %v5586 = vunpack.c.l.b16 %v5550
        %v5587 = vunpack.c.l.b16 %v5551
        %v5588 = vunpack.c.l.b16 %v5552
        %v5589 = vunpack.c.l.b16 %v5553
        %v5590 = vpack.c.b16 %v5575, %v5574
        %v5591 = vpack.c.b16 %v5577, %v5576
        %v5592 = vpack.c.b16 %v5579, %v5578
        %v5593 = vpack.c.b16 %v5581, %v5580
        %v5594 = vpack.c.b16 %v5583, %v5582
        %v5595 = vpack.c.b16 %v5585, %v5584
        %v5596 = vpack.c.b16 %v5587, %v5586
        %v5597 = vpack.c.b16 %v5589, %v5588
        %5606 = vmatprep.subr.bf16.mxu0 0
        %5607 = vmatpush1.bf16.msra.mxu0 %v5597
        %5608 = vmatprep.subr.bf16.mxu0 0
        %5609 = vmatpush1.bf16.msra.mxu0 %v5596
        %5610 = vmatprep.subr.bf16.mxu0 0
        %5611 = vmatpush1.bf16.msra.mxu0 %v5595
        %5612 = vmatprep.subr.bf16.mxu0 0
        %5613 = vmatpush1.bf16.msra.mxu0 %v5594
        %5614 = vmatprep.subr.bf16.mxu0 0
        %5615 = vmatpush1.bf16.msra.mxu0 %v5593
        %5616 = vmatprep.subr.bf16.mxu0 0
        %5617 = vmatpush1.bf16.msra.mxu0 %v5592
        %5618 = vmatprep.subr.bf16.mxu0 0
        %5619 = vmatpush1.bf16.msra.mxu0 %v5591
        %5620 = vmatprep.subr.bf16.mxu0 0
        %5621 = vmatpush1.bf16.msra.mxu0 %v5590
        %5622 = vmatprep.subr.bf16.mxu0 0
        %5623 = vmatpush2.bf16.msra.mxu0 0
        %5624 = vmatprep.subr.bf16.mxu0 0
        %5625 = vmatpush2.bf16.msra.mxu0 0
        %5626 = vmatprep.subr.bf16.mxu0 0
        %5627 = vmatpush2.bf16.msra.mxu0 0
        %5628 = vmatprep.subr.bf16.mxu0 0
        %5629 = vmatpush2.bf16.msra.mxu0 0
        %5630 = vmatprep.subr.bf16.mxu0 0
        %5631 = vmatpush2.bf16.msra.mxu0 0
        %5632 = vmatprep.subr.bf16.mxu0 0
        %5633 = vmatpush2.bf16.msra.mxu0 0
        %5634 = vmatprep.subr.bf16.mxu0 0
        %5635 = vmatpush2.bf16.msra.mxu0 0
        %5636 = vmatprep.subr.bf16.mxu0 0
        %5637 = vmatpush2.bf16.msra.mxu0 0
        %5638 = vmatprep.mubr.bf16.mxu0 0
        %5639 = vmatmul.mubr.bf16.gmra.mxu0 %v5536
        %v5640 = vpop.f32.mrf.mxu0
        %v5641 = vadd.f32 %v5557, %v5640
        %v5642 = vpop.f32.mrf.mxu0
        %v5643 = vpop.f32.mrf.mxu0
        %v5644 = vadd.f32 %v5557, %v5643
        %v5645 = vpop.f32.mrf.mxu0
        %5646 = vdwg.mxu0
        %v5647 = vmax.f32 %v5641, 0.0
        %v5648 = vmax.f32 %v5644, 0.0
        %v5649 = vadd.f32 %v5534, %v5647
        %v5650 = vadd.f32 %v5535, %v5648
        %5651 = vadd.xlane.f32.xlu0 %v5649
        %v5652 = vpop.xlane.xlu0 %5651
        %5653 = vadd.xlane.f32.xlu0 %v5650
        %v5654 = vpop.xlane.xlu0 %5653
        %v5655 = vmul.f32 %v5652, %v1966
        %v5656 = vmul.f32 %v5654, %v1966
        %v5657 = vsub.f32 %v5649, %v5655
        %v5658 = vsub.f32 %v5650, %v5656
        %v5659 = vmul.f32 %v5657, %v5657
        %v5660 = vmul.f32 %v5658, %v5658
        %5661 = vadd.xlane.f32.xlu0 %v5659
        %v5662 = vpop.xlane.xlu0 %5661
        %5663 = vadd.xlane.f32.xlu0 %v5660
        %v5664 = vpop.xlane.xlu0 %5663
        %v5665 = vmul.f32 %v5662, %v1966
        %v5666 = vmul.f32 %v5664, %v1966
        %v5667 = vadd.f32 %v5665, 1e-05
        %v5668 = vadd.f32 %v5666, 1e-05
        %v5669 = vrsqrt.pop %v5667
        %v5670 = vrsqrt.pop %v5668
        %v5671 = vmul.f32 %v5657, %v5669
        %v5672 = vmul.f32 %v5658, %v5670
        %v5673 = vlaneseq
        %v5674 = vshrl.u32 %v5673, 7
        %v5675 = vsub.s32 0, %v5674
        %v5676 = vrot.slane %v4324, %v5675
        %v5677 = vmul.f32 %v5671, %v5676
        %v5678 = vmul.f32 %v5672, %v5676
        %v5679 = vlaneseq
        %v5680 = vshrl.u32 %v5679, 7
        %v5681 = vsub.s32 1, %v5680
        %v5682 = vrot.slane %v4324, %v5681
        %v5683 = vadd.f32 %v5677, %v5682
        %v5684 = vadd.f32 %v5678, %v5682
        %v5685 = vlaneseq
        %v5686 = vshrl.u32 %v5685, 7
        %v5687 = vsub.s32 2, %v5686
        %v5688 = vrot.slane %v4324, %v5687
        %v5689 = vadd.f32 %v4569, %v5688
        %v5690 = vadd.f32 %v4572, %v5688
        %v5691 = vsub.f32 0.0, %v5689
        %v5692 = vsub.f32 0.0, %v5690
        %v5693 = vmul.f32 %v5691, 1.442695
        %v5694 = vpow.pop %v5693
        %v5695 = vmul.f32 %v5692, 1.442695
        %v5696 = vpow.pop %v5695
        %v5697 = vadd.f32 %v5694, 1.0
        %v5698 = vadd.f32 %v5696, 1.0
        %v5699 = vrcp.pop %v5697
        %v5700 = vrcp.pop %v5698
        %v5701 = vmul.f32 %v5689, %v5699
        %v5702 = vmul.f32 %v5690, %v5700
        %v5703 = vmul.f32 %v5683, %v5701
        %v5704 = vmul.f32 %v5684, %v5702
        %v5705 = vld [vmem:[%s18] sm:$0xff]
        %v5706 = vld [vmem:[%s18 + $0x8] sm:$0x7]
        %v5707 = vld [vmem:[%s15] sm:$0xff]
        %v5708 = vld [vmem:[%s15 + $0x8] sm:$0xf]
        %v5709 = vld [vmem:[%s15 + $0xc] sm:$0xff]
        %v5710 = vld [vmem:[%s15 + $0x14] sm:$0xf]
        %v5711 = vld [vmem:[%s15 + $0x18] sm:$0xff]
        %v5712 = vld [vmem:[%s15 + $0x20] sm:$0xf]
        %v5713 = vld [vmem:[%s15 + $0x24] sm:$0xff]
        %v5714 = vld [vmem:[%s15 + $0x2c] sm:$0xf]
        %v5715 = vld [vmem:[%s15 + $0x30] sm:$0xff]
        %v5716 = vld [vmem:[%s15 + $0x38] sm:$0xf]
        %v5717 = vld [vmem:[%s15 + $0x3c] sm:$0xff]
        %v5718 = vld [vmem:[%s15 + $0x44] sm:$0xf]
        %v5719 = vld [vmem:[%s15 + $0x48] sm:$0xff]
        %v5720 = vld [vmem:[%s15 + $0x50] sm:$0xf]
        %v5721 = vld [vmem:[%s15 + $0x54] sm:$0xff]
        %v5722 = vld [vmem:[%s15 + $0x5c] sm:$0xf]
        %v5723 = vld [vmem:[%s15 + $0x60] sm:$0xff]
        %v5724 = vld [vmem:[%s15 + $0x68] sm:$0xf]
        %v5725 = vld [vmem:[%s15 + $0x6c] sm:$0xff]
        %v5726 = vld [vmem:[%s15 + $0x74] sm:$0xf]
        %v5727 = vld [vmem:[%s15 + $0x78] sm:$0xff]
        %v5728 = vld [vmem:[%s15 + $0x80] sm:$0xf]
        %v5729 = vld [vmem:[%s15 + $0x84] sm:$0xff]
        %v5730 = vld [vmem:[%s15 + $0x8c] sm:$0xf]
        %v5731 = vld [vmem:[%s15 + $0x90] sm:$0xff]
        %v5732 = vld [vmem:[%s15 + $0x98] sm:$0xf]
        %v5733 = vld [vmem:[%s15 + $0x9c] sm:$0xff]
        %v5734 = vld [vmem:[%s15 + $0xa4] sm:$0xf]
        %v5735 = vld [vmem:[%s15 + $0xa8] sm:$0xff]
        %v5736 = vld [vmem:[%s15 + $0xb0] sm:$0xf]
        %v5737 = vld [vmem:[%s15 + $0xb4] sm:$0xff]
        %v5738 = vld [vmem:[%s15 + $0xbc] sm:$0xf]
        %v5771 = vunpack.c.l.b16 %v5707
        %v5772 = vunpack.c.h.b16 %v5707
        %v5773 = vunpack.c.l.b16 %v5708
        %v5774 = vunpack.c.l.b16 %v5709
        %v5775 = vunpack.c.h.b16 %v5709
        %v5776 = vunpack.c.l.b16 %v5710
        %v5777 = vunpack.c.l.b16 %v5711
        %v5778 = vunpack.c.h.b16 %v5711
        %v5779 = vunpack.c.l.b16 %v5712
        %v5780 = vunpack.c.l.b16 %v5713
        %v5781 = vunpack.c.h.b16 %v5713
        %v5782 = vunpack.c.l.b16 %v5714
        %v5783 = vunpack.c.l.b16 %v5715
        %v5784 = vunpack.c.h.b16 %v5715
        %v5785 = vunpack.c.l.b16 %v5716
        %v5786 = vunpack.c.l.b16 %v5717
        %v5787 = vunpack.c.h.b16 %v5717
        %v5788 = vunpack.c.l.b16 %v5718
        %v5789 = vunpack.c.l.b16 %v5719
        %v5790 = vunpack.c.h.b16 %v5719
        %v5791 = vunpack.c.l.b16 %v5720
        %v5792 = vunpack.c.l.b16 %v5721
        %v5793 = vunpack.c.h.b16 %v5721
        %v5794 = vunpack.c.l.b16 %v5722
        %v5795 = vunpack.c.l.b16 %v5723
        %v5796 = vunpack.c.h.b16 %v5723
        %v5797 = vunpack.c.l.b16 %v5724
        %v5798 = vunpack.c.l.b16 %v5725
        %v5799 = vunpack.c.h.b16 %v5725
        %v5800 = vunpack.c.l.b16 %v5726
        %v5801 = vunpack.c.l.b16 %v5727
        %v5802 = vunpack.c.h.b16 %v5727
        %v5803 = vunpack.c.l.b16 %v5728
        %v5804 = vunpack.c.l.b16 %v5729
        %v5805 = vunpack.c.h.b16 %v5729
        %v5806 = vunpack.c.l.b16 %v5730
        %v5807 = vunpack.c.l.b16 %v5731
        %v5808 = vunpack.c.h.b16 %v5731
        %v5809 = vunpack.c.l.b16 %v5732
        %v5810 = vunpack.c.l.b16 %v5733
        %v5811 = vunpack.c.h.b16 %v5733
        %v5812 = vunpack.c.l.b16 %v5734
        %v5813 = vunpack.c.l.b16 %v5735
        %v5814 = vunpack.c.h.b16 %v5735
        %v5815 = vunpack.c.l.b16 %v5736
        %v5816 = vunpack.c.l.b16 %v5737
        %v5817 = vunpack.c.h.b16 %v5737
        %v5818 = vunpack.c.l.b16 %v5738
        %v5819 = vpack.c.b16 %v5774, %v5771
        %v5820 = vpack.c.b16 %v5775, %v5772
        %v5821 = vpack.c.b16 %v5776, %v5773
        %v5822 = vpack.c.b16 %v5780, %v5777
        %v5823 = vpack.c.b16 %v5781, %v5778
        %v5824 = vpack.c.b16 %v5782, %v5779
        %v5825 = vpack.c.b16 %v5786, %v5783
        %v5826 = vpack.c.b16 %v5787, %v5784
        %v5827 = vpack.c.b16 %v5788, %v5785
        %v5828 = vpack.c.b16 %v5792, %v5789
        %v5829 = vpack.c.b16 %v5793, %v5790
        %v5830 = vpack.c.b16 %v5794, %v5791
        %v5831 = vpack.c.b16 %v5798, %v5795
        %v5832 = vpack.c.b16 %v5799, %v5796
        %v5833 = vpack.c.b16 %v5800, %v5797
        %v5834 = vpack.c.b16 %v5804, %v5801
        %v5835 = vpack.c.b16 %v5805, %v5802
        %v5836 = vpack.c.b16 %v5806, %v5803
        %v5837 = vpack.c.b16 %v5810, %v5807
        %v5838 = vpack.c.b16 %v5811, %v5808
        %v5839 = vpack.c.b16 %v5812, %v5809
        %v5840 = vpack.c.b16 %v5816, %v5813
        %v5841 = vpack.c.b16 %v5817, %v5814
        %v5842 = vpack.c.b16 %v5818, %v5815
        %5867 = vmatprep.subr.bf16.mxu0 %v5841
        %5868 = vmatpush1.bf16.msra.mxu0 %v5840
        %5869 = vmatprep.subr.bf16.mxu0 %v5838
        %5870 = vmatpush1.bf16.msra.mxu0 %v5837
        %5871 = vmatprep.subr.bf16.mxu0 %v5835
        %5872 = vmatpush1.bf16.msra.mxu0 %v5834
        %5873 = vmatprep.subr.bf16.mxu0 %v5832
        %5874 = vmatpush1.bf16.msra.mxu0 %v5831
        %5875 = vmatprep.subr.bf16.mxu0 %v5829
        %5876 = vmatpush1.bf16.msra.mxu0 %v5828
        %5877 = vmatprep.subr.bf16.mxu0 %v5826
        %5878 = vmatpush1.bf16.msra.mxu0 %v5825
        %5879 = vmatprep.subr.bf16.mxu0 %v5823
        %5880 = vmatpush1.bf16.msra.mxu0 %v5822
        %5881 = vmatprep.subr.bf16.mxu0 %v5820
        %5882 = vmatpush1.bf16.msra.mxu0 %v5819
        %5883 = vmatprep.subr.bf16.mxu0 0
        %5884 = vmatpush2.bf16.msra.mxu0 0
        %5885 = vmatprep.subr.bf16.mxu0 0
        %5886 = vmatpush2.bf16.msra.mxu0 0
        %5887 = vmatprep.subr.bf16.mxu0 0
        %5888 = vmatpush2.bf16.msra.mxu0 0
        %5889 = vmatprep.subr.bf16.mxu0 0
        %5890 = vmatpush2.bf16.msra.mxu0 0
        %5891 = vmatprep.subr.bf16.mxu0 0
        %5892 = vmatpush2.bf16.msra.mxu0 0
        %5893 = vmatprep.subr.bf16.mxu0 0
        %5894 = vmatpush2.bf16.msra.mxu0 0
        %5895 = vmatprep.subr.bf16.mxu0 0
        %5896 = vmatpush2.bf16.msra.mxu0 0
        %5897 = vmatprep.subr.bf16.mxu0 0
        %5898 = vmatpush2.bf16.msra.mxu0 0
        %5899 = vmatprep.mubr.bf16.mxu0 0
        %5900 = vmatmul.mubr.bf16.gmra.mxu0 %v4587
        %v5901 = vpop.f32.mrf.mxu0
        %v5902 = vadd.f32 0.0, %v5901
        %v5903 = vpop.f32.mrf.mxu0
        %v5904 = vadd.f32 0.0, %v5903
        %v5905 = vpop.f32.mrf.mxu0
        %v5906 = vadd.f32 0.0, %v5905
        %v5907 = vpop.f32.mrf.mxu0
        %v5908 = vadd.f32 0.0, %v5907
        %5909 = vmatprep.mubr.bf16.mxu0 0
        %5910 = vmatmul.mubr.bf16.gmra.mxu0 %v4588
        %v5911 = vpop.f32.mrf.mxu0
        %v5912 = vadd.f32 0.0, %v5911
        %v5913 = vpop.f32.mrf.mxu0
        %v5914 = vadd.f32 0.0, %v5913
        %v5915 = vpop.f32.mrf.mxu0
        %v5916 = vadd.f32 0.0, %v5915
        %v5917 = vpop.f32.mrf.mxu0
        %v5918 = vadd.f32 0.0, %v5917
        %5919 = vmatprep.mubr.bf16.mxu0 0
        %5920 = vmatmul.mubr.bf16.gmra.mxu0 %v4589
        %v5921 = vpop.f32.mrf.mxu0
        %v5922 = vadd.f32 0.0, %v5921
        %v5923 = vpop.f32.mrf.mxu0
        %v5924 = vadd.f32 0.0, %v5923
        %v5925 = vpop.f32.mrf.mxu0
        %v5926 = vadd.f32 0.0, %v5925
        %v5927 = vpop.f32.mrf.mxu0
        %v5928 = vadd.f32 0.0, %v5927
        %5929 = vmatprep.mubr.bf16.mxu0 0
        %5930 = vmatmul.mubr.bf16.gmra.mxu0 %v4590
        %v5931 = vpop.f32.mrf.mxu0
        %v5932 = vadd.f32 0.0, %v5931
        %v5933 = vpop.f32.mrf.mxu0
        %v5934 = vadd.f32 0.0, %v5933
        %v5935 = vpop.f32.mrf.mxu0
        %v5936 = vadd.f32 0.0, %v5935
        %v5937 = vpop.f32.mrf.mxu0
        %v5938 = vadd.f32 0.0, %v5937
        %5939 = vdwg.mxu0
        %5940 = vmatprep.subr.bf16.mxu0 0
        %5941 = vmatpush1.bf16.msra.mxu0 %v5842
        %5942 = vmatprep.subr.bf16.mxu0 0
        %5943 = vmatpush1.bf16.msra.mxu0 %v5839
        %5944 = vmatprep.subr.bf16.mxu0 0
        %5945 = vmatpush1.bf16.msra.mxu0 %v5836
        %5946 = vmatprep.subr.bf16.mxu0 0
        %5947 = vmatpush1.bf16.msra.mxu0 %v5833
        %5948 = vmatprep.subr.bf16.mxu0 0
        %5949 = vmatpush1.bf16.msra.mxu0 %v5830
        %5950 = vmatprep.subr.bf16.mxu0 0
        %5951 = vmatpush1.bf16.msra.mxu0 %v5827
        %5952 = vmatprep.subr.bf16.mxu0 0
        %5953 = vmatpush1.bf16.msra.mxu0 %v5824
        %5954 = vmatprep.subr.bf16.mxu0 0
        %5955 = vmatpush1.bf16.msra.mxu0 %v5821
        %5956 = vmatprep.subr.bf16.mxu0 0
        %5957 = vmatpush2.bf16.msra.mxu0 0
        %5958 = vmatprep.subr.bf16.mxu0 0
        %5959 = vmatpush2.bf16.msra.mxu0 0
        %5960 = vmatprep.subr.bf16.mxu0 0
        %5961 = vmatpush2.bf16.msra.mxu0 0
        %5962 = vmatprep.subr.bf16.mxu0 0
        %5963 = vmatpush2.bf16.msra.mxu0 0
        %5964 = vmatprep.subr.bf16.mxu0 0
        %5965 = vmatpush2.bf16.msra.mxu0 0
        %5966 = vmatprep.subr.bf16.mxu0 0
        %5967 = vmatpush2.bf16.msra.mxu0 0
        %5968 = vmatprep.subr.bf16.mxu0 0
        %5969 = vmatpush2.bf16.msra.mxu0 0
        %5970 = vmatprep.subr.bf16.mxu0 0
        %5971 = vmatpush2.bf16.msra.mxu0 0
        %5972 = vmatprep.mubr.bf16.mxu0 0
        %5973 = vmatmul.mubr.bf16.gmra.mxu0 %v4587
        %v5974 = vpop.f32.mrf.mxu0
        %v5975 = vadd.f32 0.0, %v5974
        %v5976 = vpop.f32.mrf.mxu0
        %v5977 = vpop.f32.mrf.mxu0
        %v5978 = vadd.f32 0.0, %v5977
        %v5979 = vpop.f32.mrf.mxu0
        %5980 = vmatprep.mubr.bf16.mxu0 0
        %5981 = vmatmul.mubr.bf16.gmra.mxu0 %v4588
        %v5982 = vpop.f32.mrf.mxu0
        %v5983 = vadd.f32 0.0, %v5982
        %v5984 = vpop.f32.mrf.mxu0
        %v5985 = vpop.f32.mrf.mxu0
        %v5986 = vadd.f32 0.0, %v5985
        %v5987 = vpop.f32.mrf.mxu0
        %5988 = vmatprep.mubr.bf16.mxu0 0
        %5989 = vmatmul.mubr.bf16.gmra.mxu0 %v4589
        %v5990 = vpop.f32.mrf.mxu0
        %v5991 = vadd.f32 0.0, %v5990
        %v5992 = vpop.f32.mrf.mxu0
        %v5993 = vpop.f32.mrf.mxu0
        %v5994 = vadd.f32 0.0, %v5993
        %v5995 = vpop.f32.mrf.mxu0
        %5996 = vmatprep.mubr.bf16.mxu0 0
        %5997 = vmatmul.mubr.bf16.gmra.mxu0 %v4590
        %v5998 = vpop.f32.mrf.mxu0
        %v5999 = vadd.f32 0.0, %v5998
        %v6000 = vpop.f32.mrf.mxu0
        %v6001 = vpop.f32.mrf.mxu0
        %v6002 = vadd.f32 0.0, %v6001
        %v6003 = vpop.f32.mrf.mxu0
        %6004 = vdwg.mxu0
        %v6005 = vlaneseq
        %v6006 = vshrl.u32 %v6005, 7
        %v6007 = vsub.s32 0, %v6006
        %v6008 = vrot.slane %v5705, %v6007
        %v6009 = vadd.f32 %v5902, %v6008
        %v6010 = vadd.f32 %v5906, %v6008
        %v6011 = vadd.f32 %v5912, %v6008
        %v6012 = vadd.f32 %v5916, %v6008
        %v6013 = vadd.f32 %v5922, %v6008
        %v6014 = vadd.f32 %v5926, %v6008
        %v6015 = vadd.f32 %v5932, %v6008
        %v6016 = vadd.f32 %v5936, %v6008
        %v6017 = vlaneseq
        %v6018 = vshrl.u32 %v6017, 7
        %v6019 = vsub.s32 1, %v6018
        %v6020 = vrot.slane %v5705, %v6019
        %v6021 = vadd.f32 %v5904, %v6020
        %v6022 = vadd.f32 %v5908, %v6020
        %v6023 = vadd.f32 %v5914, %v6020
        %v6024 = vadd.f32 %v5918, %v6020
        %v6025 = vadd.f32 %v5924, %v6020
        %v6026 = vadd.f32 %v5928, %v6020
        %v6027 = vadd.f32 %v5934, %v6020
        %v6028 = vadd.f32 %v5938, %v6020
        %v6029 = vpack.c.bf16 %v5704, %v5703
        %v6030 = vld [vmem:[%s16] sm:$0xff]
        %v6031 = vld [vmem:[%s16 + $0x8] sm:$0xff]
        %v6032 = vld [vmem:[%s16 + $0x10] sm:$0xff]
        %v6033 = vld [vmem:[%s16 + $0x18] sm:$0xff]
        %v6034 = vld [vmem:[%s16 + $0x20] sm:$0xff]
        %v6035 = vld [vmem:[%s16 + $0x28] sm:$0xff]
        %v6036 = vld [vmem:[%s16 + $0x30] sm:$0xff]
        %v6037 = vld [vmem:[%s16 + $0x38] sm:$0xff]
        %v6038 = vld [vmem:[%s16 + $0x40] sm:$0xff]
        %v6039 = vld [vmem:[%s16 + $0x48] sm:$0xff]
        %v6040 = vld [vmem:[%s16 + $0x50] sm:$0xff]
        %v6041 = vld [vmem:[%s16 + $0x58] sm:$0xff]
        %v6042 = vld [vmem:[%s16 + $0x60] sm:$0xff]
        %v6043 = vld [vmem:[%s16 + $0x68] sm:$0xff]
        %v6044 = vld [vmem:[%s16 + $0x70] sm:$0xff]
        %v6045 = vld [vmem:[%s16 + $0x78] sm:$0xff]
        %v6062 = vunpack.c.l.b16 %v6030
        %v6063 = vunpack.c.h.b16 %v6030
        %v6064 = vunpack.c.l.b16 %v6031
        %v6065 = vunpack.c.h.b16 %v6031
        %v6066 = vunpack.c.l.b16 %v6032
        %v6067 = vunpack.c.h.b16 %v6032
        %v6068 = vunpack.c.l.b16 %v6033
        %v6069 = vunpack.c.h.b16 %v6033
        %v6070 = vunpack.c.l.b16 %v6034
        %v6071 = vunpack.c.h.b16 %v6034
        %v6072 = vunpack.c.l.b16 %v6035
        %v6073 = vunpack.c.h.b16 %v6035
        %v6074 = vunpack.c.l.b16 %v6036
        %v6075 = vunpack.c.h.b16 %v6036
        %v6076 = vunpack.c.l.b16 %v6037
        %v6077 = vunpack.c.h.b16 %v6037
        %v6078 = vunpack.c.l.b16 %v6038
        %v6079 = vunpack.c.h.b16 %v6038
        %v6080 = vunpack.c.l.b16 %v6039
        %v6081 = vunpack.c.h.b16 %v6039
        %v6082 = vunpack.c.l.b16 %v6040
        %v6083 = vunpack.c.h.b16 %v6040
        %v6084 = vunpack.c.l.b16 %v6041
        %v6085 = vunpack.c.h.b16 %v6041
        %v6086 = vunpack.c.l.b16 %v6042
        %v6087 = vunpack.c.h.b16 %v6042
        %v6088 = vunpack.c.l.b16 %v6043
        %v6089 = vunpack.c.h.b16 %v6043
        %v6090 = vunpack.c.l.b16 %v6044
        %v6091 = vunpack.c.h.b16 %v6044
        %v6092 = vunpack.c.l.b16 %v6045
        %v6093 = vunpack.c.h.b16 %v6045
        %v6094 = vpack.c.b16 %v6064, %v6062
        %v6095 = vpack.c.b16 %v6065, %v6063
        %v6096 = vpack.c.b16 %v6068, %v6066
        %v6097 = vpack.c.b16 %v6069, %v6067
        %v6098 = vpack.c.b16 %v6072, %v6070
        %v6099 = vpack.c.b16 %v6073, %v6071
        %v6100 = vpack.c.b16 %v6076, %v6074
        %v6101 = vpack.c.b16 %v6077, %v6075
        %v6102 = vpack.c.b16 %v6080, %v6078
        %v6103 = vpack.c.b16 %v6081, %v6079
        %v6104 = vpack.c.b16 %v6084, %v6082
        %v6105 = vpack.c.b16 %v6085, %v6083
        %v6106 = vpack.c.b16 %v6088, %v6086
        %v6107 = vpack.c.b16 %v6089, %v6087
        %v6108 = vpack.c.b16 %v6092, %v6090
        %v6109 = vpack.c.b16 %v6093, %v6091
        %6126 = vmatprep.subr.bf16.mxu0 %v6109
        %6127 = vmatpush1.bf16.msra.mxu0 %v6108
        %6128 = vmatprep.subr.bf16.mxu0 %v6107
        %6129 = vmatpush1.bf16.msra.mxu0 %v6106
        %6130 = vmatprep.subr.bf16.mxu0 %v6105
        %6131 = vmatpush1.bf16.msra.mxu0 %v6104
        %6132 = vmatprep.subr.bf16.mxu0 %v6103
        %6133 = vmatpush1.bf16.msra.mxu0 %v6102
        %6134 = vmatprep.subr.bf16.mxu0 %v6101
        %6135 = vmatpush1.bf16.msra.mxu0 %v6100
        %6136 = vmatprep.subr.bf16.mxu0 %v6099
        %6137 = vmatpush1.bf16.msra.mxu0 %v6098
        %6138 = vmatprep.subr.bf16.mxu0 %v6097
        %6139 = vmatpush1.bf16.msra.mxu0 %v6096
        %6140 = vmatprep.subr.bf16.mxu0 %v6095
        %6141 = vmatpush1.bf16.msra.mxu0 %v6094
        %6142 = vmatprep.subr.bf16.mxu0 0
        %6143 = vmatpush2.bf16.msra.mxu0 0
        %6144 = vmatprep.subr.bf16.mxu0 0
        %6145 = vmatpush2.bf16.msra.mxu0 0
        %6146 = vmatprep.subr.bf16.mxu0 0
        %6147 = vmatpush2.bf16.msra.mxu0 0
        %6148 = vmatprep.subr.bf16.mxu0 0
        %6149 = vmatpush2.bf16.msra.mxu0 0
        %6150 = vmatprep.subr.bf16.mxu0 0
        %6151 = vmatpush2.bf16.msra.mxu0 0
        %6152 = vmatprep.subr.bf16.mxu0 0
        %6153 = vmatpush2.bf16.msra.mxu0 0
        %6154 = vmatprep.subr.bf16.mxu0 0
        %6155 = vmatpush2.bf16.msra.mxu0 0
        %6156 = vmatprep.subr.bf16.mxu0 0
        %6157 = vmatpush2.bf16.msra.mxu0 0
        %6158 = vmatprep.mubr.bf16.mxu0 0
        %6159 = vmatmul.mubr.bf16.gmra.mxu0 %v6029
        %v6160 = vpop.f32.mrf.mxu0
        %v6161 = vadd.f32 0.0, %v6160
        %v6162 = vpop.f32.mrf.mxu0
        %v6163 = vadd.f32 0.0, %v6162
        %v6164 = vpop.f32.mrf.mxu0
        %v6165 = vadd.f32 0.0, %v6164
        %v6166 = vpop.f32.mrf.mxu0
        %v6167 = vadd.f32 0.0, %v6166
        %6168 = vdwg.mxu0
        %v6169 = vlaneseq
        %v6170 = vshrl.u32 %v6169, 7
        %v6171 = vsub.s32 2, %v6170
        %v6172 = vrot.slane %v5705, %v6171
        %v6173 = vadd.f32 %v6161, %v6172
        %v6174 = vadd.f32 %v6165, %v6172
        %v6175 = vlaneseq
        %v6176 = vshrl.u32 %v6175, 7
        %v6177 = vsub.s32 3, %v6176
        %v6178 = vrot.slane %v5705, %v6177
        %v6179 = vadd.f32 %v6163, %v6178
        %v6180 = vadd.f32 %v6167, %v6178
        %v6181 = vpack.c.bf16 %v6022, %v6021
        %v6182 = vpack.c.bf16 %v6024, %v6023
        %v6183 = vpack.c.bf16 %v6026, %v6025
        %v6184 = vpack.c.bf16 %v6028, %v6027
        %v6185 = vpack.c.bf16 %v6174, %v6173
        %v6186 = vpack.c.bf16 %v6180, %v6179
        %v6188 = vsel %vm1251, %v6181, 0
        %v6191 = vsel %vm1251, %v6182, 0
        %v6194 = vsel %vm1251, %v6183, 0
        %v6197 = vsel %vm1251, %v6184, 0
        %v6200 = vsel %vm1251, %v6185, 0
        %6202 = vmatprep.subr.bf16.mxu0 0
        %6203 = vmatpush1.bf16.xpose.msra.mxu0 0
        %6204 = vmatprep.subr.bf16.mxu0 0
        %6205 = vmatpush1.bf16.xpose.msra.mxu0 0
        %6206 = vmatprep.subr.bf16.mxu0 0
        %6207 = vmatpush1.bf16.xpose.msra.mxu0 0
        %6208 = vmatprep.subr.bf16.mxu0 0
        %6209 = vmatpush1.bf16.xpose.msra.mxu0 0
        %6210 = vmatprep.subr.bf16.mxu0 0
        %6211 = vmatpush1.bf16.xpose.msra.mxu0 0
        %6212 = vmatprep.subr.bf16.mxu0 0
        %6213 = vmatpush1.bf16.xpose.msra.mxu0 0
        %6214 = vmatprep.subr.bf16.mxu0 0
        %6215 = vmatpush1.bf16.xpose.msra.mxu0 0
        %6216 = vmatprep.subr.bf16.mxu0 0
        %6217 = vmatpush1.bf16.xpose.msra.mxu0 %v6200
        %6218 = vmatprep.subr.bf16.mxu0 0
        %6219 = vmatpush2.bf16.xpose.msra.mxu0 0
        %6220 = vmatprep.subr.bf16.mxu0 0
        %6221 = vmatpush2.bf16.xpose.msra.mxu0 0
        %6222 = vmatprep.subr.bf16.mxu0 0
        %6223 = vmatpush2.bf16.xpose.msra.mxu0 0
        %6224 = vmatprep.subr.bf16.mxu0 0
        %6225 = vmatpush2.bf16.xpose.msra.mxu0 0
        %6226 = vmatprep.subr.bf16.mxu0 0
        %6227 = vmatpush2.bf16.xpose.msra.mxu0 0
        %6228 = vmatprep.subr.bf16.mxu0 0
        %6229 = vmatpush2.bf16.xpose.msra.mxu0 0
        %6230 = vmatprep.subr.bf16.mxu0 0
        %6231 = vmatpush2.bf16.xpose.msra.mxu0 0
        %6232 = vmatprep.subr.bf16.mxu0 0
        %6233 = vmatpush2.bf16.xpose.msra.mxu0 0
        %6234 = vmatprep.mubr.bf16.mxu0 0
        %6235 = vmatmul.mubr.bf16.gmra.mxu0 %v6188
        %v6236 = vpop.f32.mrf.mxu0
        %v6237 = vadd.f32 0.0, %v6236
        %v6238 = vpop.f32.mrf.mxu0
        %v6239 = vpop.f32.mrf.mxu0
        %v6240 = vadd.f32 0.0, %v6239
        %v6241 = vpop.f32.mrf.mxu0
        %6242 = vmatprep.mubr.bf16.mxu0 0
        %6243 = vmatmul.mubr.bf16.gmra.mxu0 %v6191
        %v6244 = vpop.f32.mrf.mxu0
        %v6245 = vadd.f32 0.0, %v6244
        %v6246 = vpop.f32.mrf.mxu0
        %v6247 = vpop.f32.mrf.mxu0
        %v6248 = vadd.f32 0.0, %v6247
        %v6249 = vpop.f32.mrf.mxu0
        %6250 = vmatprep.mubr.bf16.mxu0 0
        %6251 = vmatmul.mubr.bf16.gmra.mxu0 %v6194
        %v6252 = vpop.f32.mrf.mxu0
        %v6253 = vadd.f32 0.0, %v6252
        %v6254 = vpop.f32.mrf.mxu0
        %v6255 = vpop.f32.mrf.mxu0
        %v6256 = vadd.f32 0.0, %v6255
        %v6257 = vpop.f32.mrf.mxu0
        %6258 = vmatprep.mubr.bf16.mxu0 0
        %6259 = vmatmul.mubr.bf16.gmra.mxu0 %v6197
        %v6260 = vpop.f32.mrf.mxu0
        %v6261 = vadd.f32 0.0, %v6260
        %v6262 = vpop.f32.mrf.mxu0
        %v6263 = vpop.f32.mrf.mxu0
        %v6264 = vadd.f32 0.0, %v6263
        %v6265 = vpop.f32.mrf.mxu0
        %6266 = vdwg.mxu0
        %6271 = vrot.lane.b32.xlu0 %v6181, 96
        %v6272 = vpop.permute.xlu0 %6271
        %6273 = vrot.lane.b32.xlu0 %v6182, 96
        %v6274 = vpop.permute.xlu0 %6273
        %6275 = vrot.lane.b32.xlu0 %v6183, 96
        %v6276 = vpop.permute.xlu0 %6275
        %6277 = vrot.lane.b32.xlu0 %v6184, 96
        %v6278 = vpop.permute.xlu0 %6277
        %6280 = vrot.lane.b32.xlu0 %v6185, 96
        %v6281 = vpop.permute.xlu0 %6280
        %v6283 = vsel %vm1251, %v6272, 0
        %v6286 = vsel %vm1251, %v6274, 0
        %v6289 = vsel %vm1251, %v6276, 0
        %v6292 = vsel %vm1251, %v6278, 0
        %v6295 = vsel %vm1251, %v6281, 0
        %6297 = vmatprep.subr.bf16.mxu0 0
        %6298 = vmatpush1.bf16.xpose.msra.mxu0 0
        %6299 = vmatprep.subr.bf16.mxu0 0
        %6300 = vmatpush1.bf16.xpose.msra.mxu0 0
        %6301 = vmatprep.subr.bf16.mxu0 0
        %6302 = vmatpush1.bf16.xpose.msra.mxu0 0
        %6303 = vmatprep.subr.bf16.mxu0 0
        %6304 = vmatpush1.bf16.xpose.msra.mxu0 0
        %6305 = vmatprep.subr.bf16.mxu0 0
        %6306 = vmatpush1.bf16.xpose.msra.mxu0 0
        %6307 = vmatprep.subr.bf16.mxu0 0
        %6308 = vmatpush1.bf16.xpose.msra.mxu0 0
        %6309 = vmatprep.subr.bf16.mxu0 0
        %6310 = vmatpush1.bf16.xpose.msra.mxu0 0
        %6311 = vmatprep.subr.bf16.mxu0 0
        %6312 = vmatpush1.bf16.xpose.msra.mxu0 %v6295
        %6313 = vmatprep.subr.bf16.mxu0 0
        %6314 = vmatpush2.bf16.xpose.msra.mxu0 0
        %6315 = vmatprep.subr.bf16.mxu0 0
        %6316 = vmatpush2.bf16.xpose.msra.mxu0 0
        %6317 = vmatprep.subr.bf16.mxu0 0
        %6318 = vmatpush2.bf16.xpose.msra.mxu0 0
        %6319 = vmatprep.subr.bf16.mxu0 0
        %6320 = vmatpush2.bf16.xpose.msra.mxu0 0
        %6321 = vmatprep.subr.bf16.mxu0 0
        %6322 = vmatpush2.bf16.xpose.msra.mxu0 0
        %6323 = vmatprep.subr.bf16.mxu0 0
        %6324 = vmatpush2.bf16.xpose.msra.mxu0 0
        %6325 = vmatprep.subr.bf16.mxu0 0
        %6326 = vmatpush2.bf16.xpose.msra.mxu0 0
        %6327 = vmatprep.subr.bf16.mxu0 0
        %6328 = vmatpush2.bf16.xpose.msra.mxu0 0
        %6329 = vmatprep.mubr.bf16.mxu0 0
        %6330 = vmatmul.mubr.bf16.gmra.mxu0 %v6283
        %v6331 = vpop.f32.mrf.mxu0
        %v6332 = vadd.f32 0.0, %v6331
        %v6333 = vpop.f32.mrf.mxu0
        %v6334 = vpop.f32.mrf.mxu0
        %v6335 = vadd.f32 0.0, %v6334
        %v6336 = vpop.f32.mrf.mxu0
        %6337 = vmatprep.mubr.bf16.mxu0 0
        %6338 = vmatmul.mubr.bf16.gmra.mxu0 %v6286
        %v6339 = vpop.f32.mrf.mxu0
        %v6340 = vadd.f32 0.0, %v6339
        %v6341 = vpop.f32.mrf.mxu0
        %v6342 = vpop.f32.mrf.mxu0
        %v6343 = vadd.f32 0.0, %v6342
        %v6344 = vpop.f32.mrf.mxu0
        %6345 = vmatprep.mubr.bf16.mxu0 0
        %6346 = vmatmul.mubr.bf16.gmra.mxu0 %v6289
        %v6347 = vpop.f32.mrf.mxu0
        %v6348 = vadd.f32 0.0, %v6347
        %v6349 = vpop.f32.mrf.mxu0
        %v6350 = vpop.f32.mrf.mxu0
        %v6351 = vadd.f32 0.0, %v6350
        %v6352 = vpop.f32.mrf.mxu0
        %6353 = vmatprep.mubr.bf16.mxu0 0
        %6354 = vmatmul.mubr.bf16.gmra.mxu0 %v6292
        %v6355 = vpop.f32.mrf.mxu0
        %v6356 = vadd.f32 0.0, %v6355
        %v6357 = vpop.f32.mrf.mxu0
        %v6358 = vpop.f32.mrf.mxu0
        %v6359 = vadd.f32 0.0, %v6358
        %v6360 = vpop.f32.mrf.mxu0
        %6361 = vdwg.mxu0
        %6362 = vrot.lane.b32.xlu0 %v6181, 64
        %v6363 = vpop.permute.xlu0 %6362
        %6364 = vrot.lane.b32.xlu0 %v6182, 64
        %v6365 = vpop.permute.xlu0 %6364
        %6366 = vrot.lane.b32.xlu0 %v6183, 64
        %v6367 = vpop.permute.xlu0 %6366
        %6368 = vrot.lane.b32.xlu0 %v6184, 64
        %v6369 = vpop.permute.xlu0 %6368
        %6370 = vrot.lane.b32.xlu0 %v6185, 64
        %v6371 = vpop.permute.xlu0 %6370
        %v6373 = vsel %vm1251, %v6363, 0
        %v6376 = vsel %vm1251, %v6365, 0
        %v6379 = vsel %vm1251, %v6367, 0
        %v6382 = vsel %vm1251, %v6369, 0
        %v6385 = vsel %vm1251, %v6371, 0
        %6387 = vmatprep.subr.bf16.mxu0 0
        %6388 = vmatpush1.bf16.xpose.msra.mxu0 0
        %6389 = vmatprep.subr.bf16.mxu0 0
        %6390 = vmatpush1.bf16.xpose.msra.mxu0 0
        %6391 = vmatprep.subr.bf16.mxu0 0
        %6392 = vmatpush1.bf16.xpose.msra.mxu0 0
        %6393 = vmatprep.subr.bf16.mxu0 0
        %6394 = vmatpush1.bf16.xpose.msra.mxu0 0
        %6395 = vmatprep.subr.bf16.mxu0 0
        %6396 = vmatpush1.bf16.xpose.msra.mxu0 0
        %6397 = vmatprep.subr.bf16.mxu0 0
        %6398 = vmatpush1.bf16.xpose.msra.mxu0 0
        %6399 = vmatprep.subr.bf16.mxu0 0
        %6400 = vmatpush1.bf16.xpose.msra.mxu0 0
        %6401 = vmatprep.subr.bf16.mxu0 0
        %6402 = vmatpush1.bf16.xpose.msra.mxu0 %v6385
        %6403 = vmatprep.subr.bf16.mxu0 0
        %6404 = vmatpush2.bf16.xpose.msra.mxu0 0
        %6405 = vmatprep.subr.bf16.mxu0 0
        %6406 = vmatpush2.bf16.xpose.msra.mxu0 0
        %6407 = vmatprep.subr.bf16.mxu0 0
        %6408 = vmatpush2.bf16.xpose.msra.mxu0 0
        %6409 = vmatprep.subr.bf16.mxu0 0
        %6410 = vmatpush2.bf16.xpose.msra.mxu0 0
        %6411 = vmatprep.subr.bf16.mxu0 0
        %6412 = vmatpush2.bf16.xpose.msra.mxu0 0
        %6413 = vmatprep.subr.bf16.mxu0 0
        %6414 = vmatpush2.bf16.xpose.msra.mxu0 0
        %6415 = vmatprep.subr.bf16.mxu0 0
        %6416 = vmatpush2.bf16.xpose.msra.mxu0 0
        %6417 = vmatprep.subr.bf16.mxu0 0
        %6418 = vmatpush2.bf16.xpose.msra.mxu0 0
        %6419 = vmatprep.mubr.bf16.mxu0 0
        %6420 = vmatmul.mubr.bf16.gmra.mxu0 %v6373
        %v6421 = vpop.f32.mrf.mxu0
        %v6422 = vadd.f32 0.0, %v6421
        %v6423 = vpop.f32.mrf.mxu0
        %v6424 = vpop.f32.mrf.mxu0
        %v6425 = vadd.f32 0.0, %v6424
        %v6426 = vpop.f32.mrf.mxu0
        %6427 = vmatprep.mubr.bf16.mxu0 0
        %6428 = vmatmul.mubr.bf16.gmra.mxu0 %v6376
        %v6429 = vpop.f32.mrf.mxu0
        %v6430 = vadd.f32 0.0, %v6429
        %v6431 = vpop.f32.mrf.mxu0
        %v6432 = vpop.f32.mrf.mxu0
        %v6433 = vadd.f32 0.0, %v6432
        %v6434 = vpop.f32.mrf.mxu0
        %6435 = vmatprep.mubr.bf16.mxu0 0
        %6436 = vmatmul.mubr.bf16.gmra.mxu0 %v6379
        %v6437 = vpop.f32.mrf.mxu0
        %v6438 = vadd.f32 0.0, %v6437
        %v6439 = vpop.f32.mrf.mxu0
        %v6440 = vpop.f32.mrf.mxu0
        %v6441 = vadd.f32 0.0, %v6440
        %v6442 = vpop.f32.mrf.mxu0
        %6443 = vmatprep.mubr.bf16.mxu0 0
        %6444 = vmatmul.mubr.bf16.gmra.mxu0 %v6382
        %v6445 = vpop.f32.mrf.mxu0
        %v6446 = vadd.f32 0.0, %v6445
        %v6447 = vpop.f32.mrf.mxu0
        %v6448 = vpop.f32.mrf.mxu0
        %v6449 = vadd.f32 0.0, %v6448
        %v6450 = vpop.f32.mrf.mxu0
        %6451 = vdwg.mxu0
        %6452 = vrot.lane.b32.xlu0 %v6181, 32
        %v6453 = vpop.permute.xlu0 %6452
        %6454 = vrot.lane.b32.xlu0 %v6182, 32
        %v6455 = vpop.permute.xlu0 %6454
        %6456 = vrot.lane.b32.xlu0 %v6183, 32
        %v6457 = vpop.permute.xlu0 %6456
        %6458 = vrot.lane.b32.xlu0 %v6184, 32
        %v6459 = vpop.permute.xlu0 %6458
        %6460 = vrot.lane.b32.xlu0 %v6185, 32
        %v6461 = vpop.permute.xlu0 %6460
        %v6463 = vsel %vm1251, %v6453, 0
        %v6466 = vsel %vm1251, %v6455, 0
        %v6469 = vsel %vm1251, %v6457, 0
        %v6472 = vsel %vm1251, %v6459, 0
        %v6475 = vsel %vm1251, %v6461, 0
        %6477 = vmatprep.subr.bf16.mxu0 0
        %6478 = vmatpush1.bf16.xpose.msra.mxu0 0
        %6479 = vmatprep.subr.bf16.mxu0 0
        %6480 = vmatpush1.bf16.xpose.msra.mxu0 0
        %6481 = vmatprep.subr.bf16.mxu0 0
        %6482 = vmatpush1.bf16.xpose.msra.mxu0 0
        %6483 = vmatprep.subr.bf16.mxu0 0
        %6484 = vmatpush1.bf16.xpose.msra.mxu0 0
        %6485 = vmatprep.subr.bf16.mxu0 0
        %6486 = vmatpush1.bf16.xpose.msra.mxu0 0
        %6487 = vmatprep.subr.bf16.mxu0 0
        %6488 = vmatpush1.bf16.xpose.msra.mxu0 0
        %6489 = vmatprep.subr.bf16.mxu0 0
        %6490 = vmatpush1.bf16.xpose.msra.mxu0 0
        %6491 = vmatprep.subr.bf16.mxu0 0
        %6492 = vmatpush1.bf16.xpose.msra.mxu0 %v6475
        %6493 = vmatprep.subr.bf16.mxu0 0
        %6494 = vmatpush2.bf16.xpose.msra.mxu0 0
        %6495 = vmatprep.subr.bf16.mxu0 0
        %6496 = vmatpush2.bf16.xpose.msra.mxu0 0
        %6497 = vmatprep.subr.bf16.mxu0 0
        %6498 = vmatpush2.bf16.xpose.msra.mxu0 0
        %6499 = vmatprep.subr.bf16.mxu0 0
        %6500 = vmatpush2.bf16.xpose.msra.mxu0 0
        %6501 = vmatprep.subr.bf16.mxu0 0
        %6502 = vmatpush2.bf16.xpose.msra.mxu0 0
        %6503 = vmatprep.subr.bf16.mxu0 0
        %6504 = vmatpush2.bf16.xpose.msra.mxu0 0
        %6505 = vmatprep.subr.bf16.mxu0 0
        %6506 = vmatpush2.bf16.xpose.msra.mxu0 0
        %6507 = vmatprep.subr.bf16.mxu0 0
        %6508 = vmatpush2.bf16.xpose.msra.mxu0 0
        %6509 = vmatprep.mubr.bf16.mxu0 0
        %6510 = vmatmul.mubr.bf16.gmra.mxu0 %v6463
        %v6511 = vpop.f32.mrf.mxu0
        %v6512 = vadd.f32 0.0, %v6511
        %v6513 = vpop.f32.mrf.mxu0
        %v6514 = vpop.f32.mrf.mxu0
        %v6515 = vadd.f32 0.0, %v6514
        %v6516 = vpop.f32.mrf.mxu0
        %6517 = vmatprep.mubr.bf16.mxu0 0
        %6518 = vmatmul.mubr.bf16.gmra.mxu0 %v6466
        %v6519 = vpop.f32.mrf.mxu0
        %v6520 = vadd.f32 0.0, %v6519
        %v6521 = vpop.f32.mrf.mxu0
        %v6522 = vpop.f32.mrf.mxu0
        %v6523 = vadd.f32 0.0, %v6522
        %v6524 = vpop.f32.mrf.mxu0
        %6525 = vmatprep.mubr.bf16.mxu0 0
        %6526 = vmatmul.mubr.bf16.gmra.mxu0 %v6469
        %v6527 = vpop.f32.mrf.mxu0
        %v6528 = vadd.f32 0.0, %v6527
        %v6529 = vpop.f32.mrf.mxu0
        %v6530 = vpop.f32.mrf.mxu0
        %v6531 = vadd.f32 0.0, %v6530
        %v6532 = vpop.f32.mrf.mxu0
        %6533 = vmatprep.mubr.bf16.mxu0 0
        %6534 = vmatmul.mubr.bf16.gmra.mxu0 %v6472
        %v6535 = vpop.f32.mrf.mxu0
        %v6536 = vadd.f32 0.0, %v6535
        %v6537 = vpop.f32.mrf.mxu0
        %v6538 = vpop.f32.mrf.mxu0
        %v6539 = vadd.f32 0.0, %v6538
        %v6540 = vpop.f32.mrf.mxu0
        %6541 = vdwg.mxu0
        %v6542 = vsel %vm2923, %v6237, -inf
        %6543 = vmax.xlane.f32.xlu0 %v6542
        %v6544 = vpop.xlane.xlu0 %6543
        %v6545 = vsel %vm2923, %v6240, -inf
        %6546 = vmax.xlane.f32.xlu0 %v6545
        %v6547 = vpop.xlane.xlu0 %6546
        %v6548 = vsel %vm2923, %v6245, -inf
        %6549 = vmax.xlane.f32.xlu0 %v6548
        %v6550 = vpop.xlane.xlu0 %6549
        %v6551 = vsel %vm2923, %v6248, -inf
        %6552 = vmax.xlane.f32.xlu0 %v6551
        %v6553 = vpop.xlane.xlu0 %6552
        %v6554 = vsel %vm2923, %v6253, -inf
        %6555 = vmax.xlane.f32.xlu0 %v6554
        %v6556 = vpop.xlane.xlu0 %6555
        %v6557 = vsel %vm2923, %v6256, -inf
        %6558 = vmax.xlane.f32.xlu0 %v6557
        %v6559 = vpop.xlane.xlu0 %6558
        %v6560 = vsel %vm2923, %v6261, -inf
        %6561 = vmax.xlane.f32.xlu0 %v6560
        %v6562 = vpop.xlane.xlu0 %6561
        %v6563 = vsel %vm2923, %v6264, -inf
        %6564 = vmax.xlane.f32.xlu0 %v6563
        %v6565 = vpop.xlane.xlu0 %6564
        %v6566 = vsel %vm2923, %v6332, -inf
        %6567 = vmax.xlane.f32.xlu0 %v6566
        %v6568 = vpop.xlane.xlu0 %6567
        %v6569 = vsel %vm2923, %v6335, -inf
        %6570 = vmax.xlane.f32.xlu0 %v6569
        %v6571 = vpop.xlane.xlu0 %6570
        %v6572 = vsel %vm2923, %v6340, -inf
        %6573 = vmax.xlane.f32.xlu0 %v6572
        %v6574 = vpop.xlane.xlu0 %6573
        %v6575 = vsel %vm2923, %v6343, -inf
        %6576 = vmax.xlane.f32.xlu0 %v6575
        %v6577 = vpop.xlane.xlu0 %6576
        %v6578 = vsel %vm2923, %v6348, -inf
        %6579 = vmax.xlane.f32.xlu0 %v6578
        %v6580 = vpop.xlane.xlu0 %6579
        %v6581 = vsel %vm2923, %v6351, -inf
        %6582 = vmax.xlane.f32.xlu0 %v6581
        %v6583 = vpop.xlane.xlu0 %6582
        %v6584 = vsel %vm2923, %v6356, -inf
        %6585 = vmax.xlane.f32.xlu0 %v6584
        %v6586 = vpop.xlane.xlu0 %6585
        %v6587 = vsel %vm2923, %v6359, -inf
        %6588 = vmax.xlane.f32.xlu0 %v6587
        %v6589 = vpop.xlane.xlu0 %6588
        %v6590 = vsel %vm2923, %v6422, -inf
        %6591 = vmax.xlane.f32.xlu0 %v6590
        %v6592 = vpop.xlane.xlu0 %6591
        %v6593 = vsel %vm2923, %v6425, -inf
        %6594 = vmax.xlane.f32.xlu0 %v6593
        %v6595 = vpop.xlane.xlu0 %6594
        %v6596 = vsel %vm2923, %v6430, -inf
        %6597 = vmax.xlane.f32.xlu0 %v6596
        %v6598 = vpop.xlane.xlu0 %6597
        %v6599 = vsel %vm2923, %v6433, -inf
        %6600 = vmax.xlane.f32.xlu0 %v6599
        %v6601 = vpop.xlane.xlu0 %6600
        %v6602 = vsel %vm2923, %v6438, -inf
        %6603 = vmax.xlane.f32.xlu0 %v6602
        %v6604 = vpop.xlane.xlu0 %6603
        %v6605 = vsel %vm2923, %v6441, -inf
        %6606 = vmax.xlane.f32.xlu0 %v6605
        %v6607 = vpop.xlane.xlu0 %6606
        %v6608 = vsel %vm2923, %v6446, -inf
        %6609 = vmax.xlane.f32.xlu0 %v6608
        %v6610 = vpop.xlane.xlu0 %6609
        %v6611 = vsel %vm2923, %v6449, -inf
        %6612 = vmax.xlane.f32.xlu0 %v6611
        %v6613 = vpop.xlane.xlu0 %6612
        %v6614 = vsel %vm2923, %v6512, -inf
        %6615 = vmax.xlane.f32.xlu0 %v6614
        %v6616 = vpop.xlane.xlu0 %6615
        %v6617 = vsel %vm2923, %v6515, -inf
        %6618 = vmax.xlane.f32.xlu0 %v6617
        %v6619 = vpop.xlane.xlu0 %6618
        %v6620 = vsel %vm2923, %v6520, -inf
        %6621 = vmax.xlane.f32.xlu0 %v6620
        %v6622 = vpop.xlane.xlu0 %6621
        %v6623 = vsel %vm2923, %v6523, -inf
        %6624 = vmax.xlane.f32.xlu0 %v6623
        %v6625 = vpop.xlane.xlu0 %6624
        %v6626 = vsel %vm2923, %v6528, -inf
        %6627 = vmax.xlane.f32.xlu0 %v6626
        %v6628 = vpop.xlane.xlu0 %6627
        %v6629 = vsel %vm2923, %v6531, -inf
        %6630 = vmax.xlane.f32.xlu0 %v6629
        %v6631 = vpop.xlane.xlu0 %6630
        %v6632 = vsel %vm2923, %v6536, -inf
        %6633 = vmax.xlane.f32.xlu0 %v6632
        %v6634 = vpop.xlane.xlu0 %6633
        %v6635 = vsel %vm2923, %v6539, -inf
        %6636 = vmax.xlane.f32.xlu0 %v6635
        %v6637 = vpop.xlane.xlu0 %6636
        %v6638 = vsub.f32 %v6237, %v6544
        %v6639 = vsub.f32 %v6240, %v6547
        %v6640 = vsub.f32 %v6245, %v6550
        %v6641 = vsub.f32 %v6248, %v6553
        %v6642 = vsub.f32 %v6253, %v6556
        %v6643 = vsub.f32 %v6256, %v6559
        %v6644 = vsub.f32 %v6261, %v6562
        %v6645 = vsub.f32 %v6264, %v6565
        %v6646 = vsub.f32 %v6332, %v6568
        %v6647 = vsub.f32 %v6335, %v6571
        %v6648 = vsub.f32 %v6340, %v6574
        %v6649 = vsub.f32 %v6343, %v6577
        %v6650 = vsub.f32 %v6348, %v6580
        %v6651 = vsub.f32 %v6351, %v6583
        %v6652 = vsub.f32 %v6356, %v6586
        %v6653 = vsub.f32 %v6359, %v6589
        %v6654 = vsub.f32 %v6422, %v6592
        %v6655 = vsub.f32 %v6425, %v6595
        %v6656 = vsub.f32 %v6430, %v6598
        %v6657 = vsub.f32 %v6433, %v6601
        %v6658 = vsub.f32 %v6438, %v6604
        %v6659 = vsub.f32 %v6441, %v6607
        %v6660 = vsub.f32 %v6446, %v6610
        %v6661 = vsub.f32 %v6449, %v6613
        %v6662 = vsub.f32 %v6512, %v6616
        %v6663 = vsub.f32 %v6515, %v6619
        %v6664 = vsub.f32 %v6520, %v6622
        %v6665 = vsub.f32 %v6523, %v6625
        %v6666 = vsub.f32 %v6528, %v6628
        %v6667 = vsub.f32 %v6531, %v6631
        %v6668 = vsub.f32 %v6536, %v6634
        %v6669 = vsub.f32 %v6539, %v6637
        %v6670 = vmul.f32 %v6638, 1.442695
        %v6671 = vpow.pop %v6670
        %v6672 = vmul.f32 %v6639, 1.442695
        %v6673 = vpow.pop %v6672
        %v6674 = vmul.f32 %v6640, 1.442695
        %v6675 = vpow.pop %v6674
        %v6676 = vmul.f32 %v6641, 1.442695
        %v6677 = vpow.pop %v6676
        %v6678 = vmul.f32 %v6642, 1.442695
        %v6679 = vpow.pop %v6678
        %v6680 = vmul.f32 %v6643, 1.442695
        %v6681 = vpow.pop %v6680
        %v6682 = vmul.f32 %v6644, 1.442695
        %v6683 = vpow.pop %v6682
        %v6684 = vmul.f32 %v6645, 1.442695
        %v6685 = vpow.pop %v6684
        %v6686 = vmul.f32 %v6646, 1.442695
        %v6687 = vpow.pop %v6686
        %v6688 = vmul.f32 %v6647, 1.442695
        %v6689 = vpow.pop %v6688
        %v6690 = vmul.f32 %v6648, 1.442695
        %v6691 = vpow.pop %v6690
        %v6692 = vmul.f32 %v6649, 1.442695
        %v6693 = vpow.pop %v6692
        %v6694 = vmul.f32 %v6650, 1.442695
        %v6695 = vpow.pop %v6694
        %v6696 = vmul.f32 %v6651, 1.442695
        %v6697 = vpow.pop %v6696
        %v6698 = vmul.f32 %v6652, 1.442695
        %v6699 = vpow.pop %v6698
        %v6700 = vmul.f32 %v6653, 1.442695
        %v6701 = vpow.pop %v6700
        %v6702 = vmul.f32 %v6654, 1.442695
        %v6703 = vpow.pop %v6702
        %v6704 = vmul.f32 %v6655, 1.442695
        %v6705 = vpow.pop %v6704
        %v6706 = vmul.f32 %v6656, 1.442695
        %v6707 = vpow.pop %v6706
        %v6708 = vmul.f32 %v6657, 1.442695
        %v6709 = vpow.pop %v6708
        %v6710 = vmul.f32 %v6658, 1.442695
        %v6711 = vpow.pop %v6710
        %v6712 = vmul.f32 %v6659, 1.442695
        %v6713 = vpow.pop %v6712
        %v6714 = vmul.f32 %v6660, 1.442695
        %v6715 = vpow.pop %v6714
        %v6716 = vmul.f32 %v6661, 1.442695
        %v6717 = vpow.pop %v6716
        %v6718 = vmul.f32 %v6662, 1.442695
        %v6719 = vpow.pop %v6718
        %v6720 = vmul.f32 %v6663, 1.442695
        %v6721 = vpow.pop %v6720
        %v6722 = vmul.f32 %v6664, 1.442695
        %v6723 = vpow.pop %v6722
        %v6724 = vmul.f32 %v6665, 1.442695
        %v6725 = vpow.pop %v6724
        %v6726 = vmul.f32 %v6666, 1.442695
        %v6727 = vpow.pop %v6726
        %v6728 = vmul.f32 %v6667, 1.442695
        %v6729 = vpow.pop %v6728
        %v6730 = vmul.f32 %v6668, 1.442695
        %v6731 = vpow.pop %v6730
        %v6732 = vmul.f32 %v6669, 1.442695
        %v6733 = vpow.pop %v6732
        %v6734 = vsel %vm2923, %v6671, 0.0
        %6735 = vadd.xlane.f32.xlu0 %v6734
        %v6736 = vpop.xlane.xlu0 %6735
        %v6737 = vsel %vm2923, %v6673, 0.0
        %6738 = vadd.xlane.f32.xlu0 %v6737
        %v6739 = vpop.xlane.xlu0 %6738
        %v6740 = vsel %vm2923, %v6675, 0.0
        %6741 = vadd.xlane.f32.xlu0 %v6740
        %v6742 = vpop.xlane.xlu0 %6741
        %v6743 = vsel %vm2923, %v6677, 0.0
        %6744 = vadd.xlane.f32.xlu0 %v6743
        %v6745 = vpop.xlane.xlu0 %6744
        %v6746 = vsel %vm2923, %v6679, 0.0
        %6747 = vadd.xlane.f32.xlu0 %v6746
        %v6748 = vpop.xlane.xlu0 %6747
        %v6749 = vsel %vm2923, %v6681, 0.0
        %6750 = vadd.xlane.f32.xlu0 %v6749
        %v6751 = vpop.xlane.xlu0 %6750
        %v6752 = vsel %vm2923, %v6683, 0.0
        %6753 = vadd.xlane.f32.xlu0 %v6752
        %v6754 = vpop.xlane.xlu0 %6753
        %v6755 = vsel %vm2923, %v6685, 0.0
        %6756 = vadd.xlane.f32.xlu0 %v6755
        %v6757 = vpop.xlane.xlu0 %6756
        %v6758 = vsel %vm2923, %v6687, 0.0
        %6759 = vadd.xlane.f32.xlu0 %v6758
        %v6760 = vpop.xlane.xlu0 %6759
        %v6761 = vsel %vm2923, %v6689, 0.0
        %6762 = vadd.xlane.f32.xlu0 %v6761
        %v6763 = vpop.xlane.xlu0 %6762
        %v6764 = vsel %vm2923, %v6691, 0.0
        %6765 = vadd.xlane.f32.xlu0 %v6764
        %v6766 = vpop.xlane.xlu0 %6765
        %v6767 = vsel %vm2923, %v6693, 0.0
        %6768 = vadd.xlane.f32.xlu0 %v6767
        %v6769 = vpop.xlane.xlu0 %6768
        %v6770 = vsel %vm2923, %v6695, 0.0
        %6771 = vadd.xlane.f32.xlu0 %v6770
        %v6772 = vpop.xlane.xlu0 %6771
        %v6773 = vsel %vm2923, %v6697, 0.0
        %6774 = vadd.xlane.f32.xlu0 %v6773
        %v6775 = vpop.xlane.xlu0 %6774
        %v6776 = vsel %vm2923, %v6699, 0.0
        %6777 = vadd.xlane.f32.xlu0 %v6776
        %v6778 = vpop.xlane.xlu0 %6777
        %v6779 = vsel %vm2923, %v6701, 0.0
        %6780 = vadd.xlane.f32.xlu0 %v6779
        %v6781 = vpop.xlane.xlu0 %6780
        %v6782 = vsel %vm2923, %v6703, 0.0
        %6783 = vadd.xlane.f32.xlu0 %v6782
        %v6784 = vpop.xlane.xlu0 %6783
        %v6785 = vsel %vm2923, %v6705, 0.0
        %6786 = vadd.xlane.f32.xlu0 %v6785
        %v6787 = vpop.xlane.xlu0 %6786
        %v6788 = vsel %vm2923, %v6707, 0.0
        %6789 = vadd.xlane.f32.xlu0 %v6788
        %v6790 = vpop.xlane.xlu0 %6789
        %v6791 = vsel %vm2923, %v6709, 0.0
        %6792 = vadd.xlane.f32.xlu0 %v6791
        %v6793 = vpop.xlane.xlu0 %6792
        %v6794 = vsel %vm2923, %v6711, 0.0
        %6795 = vadd.xlane.f32.xlu0 %v6794
        %v6796 = vpop.xlane.xlu0 %6795
        %v6797 = vsel %vm2923, %v6713, 0.0
        %6798 = vadd.xlane.f32.xlu0 %v6797
        %v6799 = vpop.xlane.xlu0 %6798
        %v6800 = vsel %vm2923, %v6715, 0.0
        %6801 = vadd.xlane.f32.xlu0 %v6800
        %v6802 = vpop.xlane.xlu0 %6801
        %v6803 = vsel %vm2923, %v6717, 0.0
        %6804 = vadd.xlane.f32.xlu0 %v6803
        %v6805 = vpop.xlane.xlu0 %6804
        %v6806 = vsel %vm2923, %v6719, 0.0
        %6807 = vadd.xlane.f32.xlu0 %v6806
        %v6808 = vpop.xlane.xlu0 %6807
        %v6809 = vsel %vm2923, %v6721, 0.0
        %6810 = vadd.xlane.f32.xlu0 %v6809
        %v6811 = vpop.xlane.xlu0 %6810
        %v6812 = vsel %vm2923, %v6723, 0.0
        %6813 = vadd.xlane.f32.xlu0 %v6812
        %v6814 = vpop.xlane.xlu0 %6813
        %v6815 = vsel %vm2923, %v6725, 0.0
        %6816 = vadd.xlane.f32.xlu0 %v6815
        %v6817 = vpop.xlane.xlu0 %6816
        %v6818 = vsel %vm2923, %v6727, 0.0
        %6819 = vadd.xlane.f32.xlu0 %v6818
        %v6820 = vpop.xlane.xlu0 %6819
        %v6821 = vsel %vm2923, %v6729, 0.0
        %6822 = vadd.xlane.f32.xlu0 %v6821
        %v6823 = vpop.xlane.xlu0 %6822
        %v6824 = vsel %vm2923, %v6731, 0.0
        %6825 = vadd.xlane.f32.xlu0 %v6824
        %v6826 = vpop.xlane.xlu0 %6825
        %v6827 = vsel %vm2923, %v6733, 0.0
        %6828 = vadd.xlane.f32.xlu0 %v6827
        %v6829 = vpop.xlane.xlu0 %6828
        %v6830 = vrcp.pop %v6736
        %v6831 = vrcp.pop %v6739
        %v6832 = vrcp.pop %v6742
        %v6833 = vrcp.pop %v6745
        %v6834 = vrcp.pop %v6748
        %v6835 = vrcp.pop %v6751
        %v6836 = vrcp.pop %v6754
        %v6837 = vrcp.pop %v6757
        %v6838 = vrcp.pop %v6760
        %v6839 = vrcp.pop %v6763
        %v6840 = vrcp.pop %v6766
        %v6841 = vrcp.pop %v6769
        %v6842 = vrcp.pop %v6772
        %v6843 = vrcp.pop %v6775
        %v6844 = vrcp.pop %v6778
        %v6845 = vrcp.pop %v6781
        %v6846 = vrcp.pop %v6784
        %v6847 = vrcp.pop %v6787
        %v6848 = vrcp.pop %v6790
        %v6849 = vrcp.pop %v6793
        %v6850 = vrcp.pop %v6796
        %v6851 = vrcp.pop %v6799
        %v6852 = vrcp.pop %v6802
        %v6853 = vrcp.pop %v6805
        %v6854 = vrcp.pop %v6808
        %v6855 = vrcp.pop %v6811
        %v6856 = vrcp.pop %v6814
        %v6857 = vrcp.pop %v6817
        %v6858 = vrcp.pop %v6820
        %v6859 = vrcp.pop %v6823
        %v6860 = vrcp.pop %v6826
        %v6861 = vrcp.pop %v6829
        %v6862 = vmul.f32 %v6671, %v6830
        %v6863 = vmul.f32 %v6673, %v6831
        %v6864 = vmul.f32 %v6675, %v6832
        %v6865 = vmul.f32 %v6677, %v6833
        %v6866 = vmul.f32 %v6679, %v6834
        %v6867 = vmul.f32 %v6681, %v6835
        %v6868 = vmul.f32 %v6683, %v6836
        %v6869 = vmul.f32 %v6685, %v6837
        %v6870 = vmul.f32 %v6687, %v6838
        %v6871 = vmul.f32 %v6689, %v6839
        %v6872 = vmul.f32 %v6691, %v6840
        %v6873 = vmul.f32 %v6693, %v6841
        %v6874 = vmul.f32 %v6695, %v6842
        %v6875 = vmul.f32 %v6697, %v6843
        %v6876 = vmul.f32 %v6699, %v6844
        %v6877 = vmul.f32 %v6701, %v6845
        %v6878 = vmul.f32 %v6703, %v6846
        %v6879 = vmul.f32 %v6705, %v6847
        %v6880 = vmul.f32 %v6707, %v6848
        %v6881 = vmul.f32 %v6709, %v6849
        %v6882 = vmul.f32 %v6711, %v6850
        %v6883 = vmul.f32 %v6713, %v6851
        %v6884 = vmul.f32 %v6715, %v6852
        %v6885 = vmul.f32 %v6717, %v6853
        %v6886 = vmul.f32 %v6719, %v6854
        %v6887 = vmul.f32 %v6721, %v6855
        %v6888 = vmul.f32 %v6723, %v6856
        %v6889 = vmul.f32 %v6725, %v6857
        %v6890 = vmul.f32 %v6727, %v6858
        %v6891 = vmul.f32 %v6729, %v6859
        %v6892 = vmul.f32 %v6731, %v6860
        %v6893 = vmul.f32 %v6733, %v6861
        %v6894 = vpack.c.bf16 %v6863, %v6862
        %v6895 = vpack.c.bf16 %v6865, %v6864
        %v6896 = vpack.c.bf16 %v6867, %v6866
        %v6897 = vpack.c.bf16 %v6869, %v6868
        %v6898 = vpack.c.bf16 %v6871, %v6870
        %v6899 = vpack.c.bf16 %v6873, %v6872
        %v6900 = vpack.c.bf16 %v6875, %v6874
        %v6901 = vpack.c.bf16 %v6877, %v6876
        %v6902 = vpack.c.bf16 %v6879, %v6878
        %v6903 = vpack.c.bf16 %v6881, %v6880
        %v6904 = vpack.c.bf16 %v6883, %v6882
        %v6905 = vpack.c.bf16 %v6885, %v6884
        %v6906 = vpack.c.bf16 %v6887, %v6886
        %v6907 = vpack.c.bf16 %v6889, %v6888
        %v6908 = vpack.c.bf16 %v6891, %v6890
        %v6909 = vpack.c.bf16 %v6893, %v6892
        %v6911 = vsel %vm2923, %v6894, 0
        %v6914 = vsel %vm2923, %v6895, 0
        %v6917 = vsel %vm2923, %v6896, 0
        %v6920 = vsel %vm2923, %v6897, 0
        %6922 = vmatprep.subr.bf16.mxu0 0
        %6923 = vmatpush1.bf16.msra.mxu0 0
        %6924 = vmatprep.subr.bf16.mxu0 0
        %6925 = vmatpush1.bf16.msra.mxu0 0
        %6926 = vmatprep.subr.bf16.mxu0 0
        %6927 = vmatpush1.bf16.msra.mxu0 0
        %6928 = vmatprep.subr.bf16.mxu0 0
        %6929 = vmatpush1.bf16.msra.mxu0 0
        %6930 = vmatprep.subr.bf16.mxu0 0
        %6931 = vmatpush1.bf16.msra.mxu0 0
        %6932 = vmatprep.subr.bf16.mxu0 0
        %6933 = vmatpush1.bf16.msra.mxu0 0
        %6934 = vmatprep.subr.bf16.mxu0 0
        %6935 = vmatpush1.bf16.msra.mxu0 0
        %6936 = vmatprep.subr.bf16.mxu0 0
        %6937 = vmatpush1.bf16.msra.mxu0 %v6186
        %6938 = vmatprep.subr.bf16.mxu0 0
        %6939 = vmatpush2.bf16.msra.mxu0 0
        %6940 = vmatprep.subr.bf16.mxu0 0
        %6941 = vmatpush2.bf16.msra.mxu0 0
        %6942 = vmatprep.subr.bf16.mxu0 0
        %6943 = vmatpush2.bf16.msra.mxu0 0
        %6944 = vmatprep.subr.bf16.mxu0 0
        %6945 = vmatpush2.bf16.msra.mxu0 0
        %6946 = vmatprep.subr.bf16.mxu0 0
        %6947 = vmatpush2.bf16.msra.mxu0 0
        %6948 = vmatprep.subr.bf16.mxu0 0
        %6949 = vmatpush2.bf16.msra.mxu0 0
        %6950 = vmatprep.subr.bf16.mxu0 0
        %6951 = vmatpush2.bf16.msra.mxu0 0
        %6952 = vmatprep.subr.bf16.mxu0 0
        %6953 = vmatpush2.bf16.msra.mxu0 0
        %6954 = vmatprep.mubr.bf16.mxu0 0
        %6955 = vmatmul.mubr.bf16.gmra.mxu0 %v6911
        %v6956 = vpop.f32.mrf.mxu0
        %v6957 = vadd.f32 0.0, %v6956
        %v6958 = vpop.f32.mrf.mxu0
        %v6959 = vpop.f32.mrf.mxu0
        %v6960 = vadd.f32 0.0, %v6959
        %v6961 = vpop.f32.mrf.mxu0
        %6962 = vmatprep.mubr.bf16.mxu0 0
        %6963 = vmatmul.mubr.bf16.gmra.mxu0 %v6914
        %v6964 = vpop.f32.mrf.mxu0
        %v6965 = vadd.f32 0.0, %v6964
        %v6966 = vpop.f32.mrf.mxu0
        %v6967 = vpop.f32.mrf.mxu0
        %v6968 = vadd.f32 0.0, %v6967
        %v6969 = vpop.f32.mrf.mxu0
        %6970 = vmatprep.mubr.bf16.mxu0 0
        %6971 = vmatmul.mubr.bf16.gmra.mxu0 %v6917
        %v6972 = vpop.f32.mrf.mxu0
        %v6973 = vadd.f32 0.0, %v6972
        %v6974 = vpop.f32.mrf.mxu0
        %v6975 = vpop.f32.mrf.mxu0
        %v6976 = vadd.f32 0.0, %v6975
        %v6977 = vpop.f32.mrf.mxu0
        %6978 = vmatprep.mubr.bf16.mxu0 0
        %6979 = vmatmul.mubr.bf16.gmra.mxu0 %v6920
        %v6980 = vpop.f32.mrf.mxu0
        %v6981 = vadd.f32 0.0, %v6980
        %v6982 = vpop.f32.mrf.mxu0
        %v6983 = vpop.f32.mrf.mxu0
        %v6984 = vadd.f32 0.0, %v6983
        %v6985 = vpop.f32.mrf.mxu0
        %6986 = vdwg.mxu0
        %6988 = vrot.lane.b32.xlu0 %v6186, 96
        %v6989 = vpop.permute.xlu0 %6988
        %v6992 = vsel %vm2923, %v6898, 0
        %v6995 = vsel %vm2923, %v6899, 0
        %v6998 = vsel %vm2923, %v6900, 0
        %v7001 = vsel %vm2923, %v6901, 0
        %7003 = vmatprep.subr.bf16.mxu0 0
        %7004 = vmatpush1.bf16.msra.mxu0 0
        %7005 = vmatprep.subr.bf16.mxu0 0
        %7006 = vmatpush1.bf16.msra.mxu0 0
        %7007 = vmatprep.subr.bf16.mxu0 0
        %7008 = vmatpush1.bf16.msra.mxu0 0
        %7009 = vmatprep.subr.bf16.mxu0 0
        %7010 = vmatpush1.bf16.msra.mxu0 0
        %7011 = vmatprep.subr.bf16.mxu0 0
        %7012 = vmatpush1.bf16.msra.mxu0 0
        %7013 = vmatprep.subr.bf16.mxu0 0
        %7014 = vmatpush1.bf16.msra.mxu0 0
        %7015 = vmatprep.subr.bf16.mxu0 0
        %7016 = vmatpush1.bf16.msra.mxu0 0
        %7017 = vmatprep.subr.bf16.mxu0 0
        %7018 = vmatpush1.bf16.msra.mxu0 %v6989
        %7019 = vmatprep.subr.bf16.mxu0 0
        %7020 = vmatpush2.bf16.msra.mxu0 0
        %7021 = vmatprep.subr.bf16.mxu0 0
        %7022 = vmatpush2.bf16.msra.mxu0 0
        %7023 = vmatprep.subr.bf16.mxu0 0
        %7024 = vmatpush2.bf16.msra.mxu0 0
        %7025 = vmatprep.subr.bf16.mxu0 0
        %7026 = vmatpush2.bf16.msra.mxu0 0
        %7027 = vmatprep.subr.bf16.mxu0 0
        %7028 = vmatpush2.bf16.msra.mxu0 0
        %7029 = vmatprep.subr.bf16.mxu0 0
        %7030 = vmatpush2.bf16.msra.mxu0 0
        %7031 = vmatprep.subr.bf16.mxu0 0
        %7032 = vmatpush2.bf16.msra.mxu0 0
        %7033 = vmatprep.subr.bf16.mxu0 0
        %7034 = vmatpush2.bf16.msra.mxu0 0
        %7035 = vmatprep.mubr.bf16.mxu0 0
        %7036 = vmatmul.mubr.bf16.gmra.mxu0 %v6992
        %v7037 = vpop.f32.mrf.mxu0
        %v7038 = vadd.f32 0.0, %v7037
        %v7039 = vpop.f32.mrf.mxu0
        %v7040 = vpop.f32.mrf.mxu0
        %v7041 = vadd.f32 0.0, %v7040
        %v7042 = vpop.f32.mrf.mxu0
        %7043 = vmatprep.mubr.bf16.mxu0 0
        %7044 = vmatmul.mubr.bf16.gmra.mxu0 %v6995
        %v7045 = vpop.f32.mrf.mxu0
        %v7046 = vadd.f32 0.0, %v7045
        %v7047 = vpop.f32.mrf.mxu0
        %v7048 = vpop.f32.mrf.mxu0
        %v7049 = vadd.f32 0.0, %v7048
        %v7050 = vpop.f32.mrf.mxu0
        %7051 = vmatprep.mubr.bf16.mxu0 0
        %7052 = vmatmul.mubr.bf16.gmra.mxu0 %v6998
        %v7053 = vpop.f32.mrf.mxu0
        %v7054 = vadd.f32 0.0, %v7053
        %v7055 = vpop.f32.mrf.mxu0
        %v7056 = vpop.f32.mrf.mxu0
        %v7057 = vadd.f32 0.0, %v7056
        %v7058 = vpop.f32.mrf.mxu0
        %7059 = vmatprep.mubr.bf16.mxu0 0
        %7060 = vmatmul.mubr.bf16.gmra.mxu0 %v7001
        %v7061 = vpop.f32.mrf.mxu0
        %v7062 = vadd.f32 0.0, %v7061
        %v7063 = vpop.f32.mrf.mxu0
        %v7064 = vpop.f32.mrf.mxu0
        %v7065 = vadd.f32 0.0, %v7064
        %v7066 = vpop.f32.mrf.mxu0
        %7067 = vdwg.mxu0
        %7068 = vrot.lane.b32.xlu0 %v6186, 64
        %v7069 = vpop.permute.xlu0 %7068
        %v7072 = vsel %vm2923, %v6902, 0
        %v7075 = vsel %vm2923, %v6903, 0
        %v7078 = vsel %vm2923, %v6904, 0
        %v7081 = vsel %vm2923, %v6905, 0
        %7083 = vmatprep.subr.bf16.mxu0 0
        %7084 = vmatpush1.bf16.msra.mxu0 0
        %7085 = vmatprep.subr.bf16.mxu0 0
        %7086 = vmatpush1.bf16.msra.mxu0 0
        %7087 = vmatprep.subr.bf16.mxu0 0
        %7088 = vmatpush1.bf16.msra.mxu0 0
        %7089 = vmatprep.subr.bf16.mxu0 0
        %7090 = vmatpush1.bf16.msra.mxu0 0
        %7091 = vmatprep.subr.bf16.mxu0 0
        %7092 = vmatpush1.bf16.msra.mxu0 0
        %7093 = vmatprep.subr.bf16.mxu0 0
        %7094 = vmatpush1.bf16.msra.mxu0 0
        %7095 = vmatprep.subr.bf16.mxu0 0
        %7096 = vmatpush1.bf16.msra.mxu0 0
        %7097 = vmatprep.subr.bf16.mxu0 0
        %7098 = vmatpush1.bf16.msra.mxu0 %v7069
        %7099 = vmatprep.subr.bf16.mxu0 0
        %7100 = vmatpush2.bf16.msra.mxu0 0
        %7101 = vmatprep.subr.bf16.mxu0 0
        %7102 = vmatpush2.bf16.msra.mxu0 0
        %7103 = vmatprep.subr.bf16.mxu0 0
        %7104 = vmatpush2.bf16.msra.mxu0 0
        %7105 = vmatprep.subr.bf16.mxu0 0
        %7106 = vmatpush2.bf16.msra.mxu0 0
        %7107 = vmatprep.subr.bf16.mxu0 0
        %7108 = vmatpush2.bf16.msra.mxu0 0
        %7109 = vmatprep.subr.bf16.mxu0 0
        %7110 = vmatpush2.bf16.msra.mxu0 0
        %7111 = vmatprep.subr.bf16.mxu0 0
        %7112 = vmatpush2.bf16.msra.mxu0 0
        %7113 = vmatprep.subr.bf16.mxu0 0
        %7114 = vmatpush2.bf16.msra.mxu0 0
        %7115 = vmatprep.mubr.bf16.mxu0 0
        %7116 = vmatmul.mubr.bf16.gmra.mxu0 %v7072
        %v7117 = vpop.f32.mrf.mxu0
        %v7118 = vadd.f32 0.0, %v7117
        %v7119 = vpop.f32.mrf.mxu0
        %v7120 = vpop.f32.mrf.mxu0
        %v7121 = vadd.f32 0.0, %v7120
        %v7122 = vpop.f32.mrf.mxu0
        %7123 = vmatprep.mubr.bf16.mxu0 0
        %7124 = vmatmul.mubr.bf16.gmra.mxu0 %v7075
        %v7125 = vpop.f32.mrf.mxu0
        %v7126 = vadd.f32 0.0, %v7125
        %v7127 = vpop.f32.mrf.mxu0
        %v7128 = vpop.f32.mrf.mxu0
        %v7129 = vadd.f32 0.0, %v7128
        %v7130 = vpop.f32.mrf.mxu0
        %7131 = vmatprep.mubr.bf16.mxu0 0
        %7132 = vmatmul.mubr.bf16.gmra.mxu0 %v7078
        %v7133 = vpop.f32.mrf.mxu0
        %v7134 = vadd.f32 0.0, %v7133
        %v7135 = vpop.f32.mrf.mxu0
        %v7136 = vpop.f32.mrf.mxu0
        %v7137 = vadd.f32 0.0, %v7136
        %v7138 = vpop.f32.mrf.mxu0
        %7139 = vmatprep.mubr.bf16.mxu0 0
        %7140 = vmatmul.mubr.bf16.gmra.mxu0 %v7081
        %v7141 = vpop.f32.mrf.mxu0
        %v7142 = vadd.f32 0.0, %v7141
        %v7143 = vpop.f32.mrf.mxu0
        %v7144 = vpop.f32.mrf.mxu0
        %v7145 = vadd.f32 0.0, %v7144
        %v7146 = vpop.f32.mrf.mxu0
        %7147 = vdwg.mxu0
        %7148 = vrot.lane.b32.xlu0 %v6186, 32
        %v7149 = vpop.permute.xlu0 %7148
        %v7152 = vsel %vm2923, %v6906, 0
        %v7155 = vsel %vm2923, %v6907, 0
        %v7158 = vsel %vm2923, %v6908, 0
        %v7161 = vsel %vm2923, %v6909, 0
        %7163 = vmatprep.subr.bf16.mxu0 0
        %7164 = vmatpush1.bf16.msra.mxu0 0
        %7165 = vmatprep.subr.bf16.mxu0 0
        %7166 = vmatpush1.bf16.msra.mxu0 0
        %7167 = vmatprep.subr.bf16.mxu0 0
        %7168 = vmatpush1.bf16.msra.mxu0 0
        %7169 = vmatprep.subr.bf16.mxu0 0
        %7170 = vmatpush1.bf16.msra.mxu0 0
        %7171 = vmatprep.subr.bf16.mxu0 0
        %7172 = vmatpush1.bf16.msra.mxu0 0
        %7173 = vmatprep.subr.bf16.mxu0 0
        %7174 = vmatpush1.bf16.msra.mxu0 0
        %7175 = vmatprep.subr.bf16.mxu0 0
        %7176 = vmatpush1.bf16.msra.mxu0 0
        %7177 = vmatprep.subr.bf16.mxu0 0
        %7178 = vmatpush1.bf16.msra.mxu0 %v7149
        %7179 = vmatprep.subr.bf16.mxu0 0
        %7180 = vmatpush2.bf16.msra.mxu0 0
        %7181 = vmatprep.subr.bf16.mxu0 0
        %7182 = vmatpush2.bf16.msra.mxu0 0
        %7183 = vmatprep.subr.bf16.mxu0 0
        %7184 = vmatpush2.bf16.msra.mxu0 0
        %7185 = vmatprep.subr.bf16.mxu0 0
        %7186 = vmatpush2.bf16.msra.mxu0 0
        %7187 = vmatprep.subr.bf16.mxu0 0
        %7188 = vmatpush2.bf16.msra.mxu0 0
        %7189 = vmatprep.subr.bf16.mxu0 0
        %7190 = vmatpush2.bf16.msra.mxu0 0
        %7191 = vmatprep.subr.bf16.mxu0 0
        %7192 = vmatpush2.bf16.msra.mxu0 0
        %7193 = vmatprep.subr.bf16.mxu0 0
        %7194 = vmatpush2.bf16.msra.mxu0 0
        %7195 = vmatprep.mubr.bf16.mxu0 0
        %7196 = vmatmul.mubr.bf16.gmra.mxu0 %v7152
        %v7197 = vpop.f32.mrf.mxu0
        %v7198 = vadd.f32 0.0, %v7197
        %v7199 = vpop.f32.mrf.mxu0
        %v7200 = vpop.f32.mrf.mxu0
        %v7201 = vadd.f32 0.0, %v7200
        %v7202 = vpop.f32.mrf.mxu0
        %7203 = vmatprep.mubr.bf16.mxu0 0
        %7204 = vmatmul.mubr.bf16.gmra.mxu0 %v7155
        %v7205 = vpop.f32.mrf.mxu0
        %v7206 = vadd.f32 0.0, %v7205
        %v7207 = vpop.f32.mrf.mxu0
        %v7208 = vpop.f32.mrf.mxu0
        %v7209 = vadd.f32 0.0, %v7208
        %v7210 = vpop.f32.mrf.mxu0
        %7211 = vmatprep.mubr.bf16.mxu0 0
        %7212 = vmatmul.mubr.bf16.gmra.mxu0 %v7158
        %v7213 = vpop.f32.mrf.mxu0
        %v7214 = vadd.f32 0.0, %v7213
        %v7215 = vpop.f32.mrf.mxu0
        %v7216 = vpop.f32.mrf.mxu0
        %v7217 = vadd.f32 0.0, %v7216
        %v7218 = vpop.f32.mrf.mxu0
        %7219 = vmatprep.mubr.bf16.mxu0 0
        %7220 = vmatmul.mubr.bf16.gmra.mxu0 %v7161
        %v7221 = vpop.f32.mrf.mxu0
        %v7222 = vadd.f32 0.0, %v7221
        %v7223 = vpop.f32.mrf.mxu0
        %v7224 = vpop.f32.mrf.mxu0
        %v7225 = vadd.f32 0.0, %v7224
        %v7226 = vpop.f32.mrf.mxu0
        %7227 = vdwg.mxu0
        %7236 = vrot.lane.b32.xlu0 %v7038, 32
        %v7237 = vpop.permute.xlu0 %7236
        %7238 = vrot.lane.b32.xlu0 %v7041, 32
        %v7239 = vpop.permute.xlu0 %7238
        %7240 = vrot.lane.b32.xlu0 %v7046, 32
        %v7241 = vpop.permute.xlu0 %7240
        %7242 = vrot.lane.b32.xlu0 %v7049, 32
        %v7243 = vpop.permute.xlu0 %7242
        %7244 = vrot.lane.b32.xlu0 %v7054, 32
        %v7245 = vpop.permute.xlu0 %7244
        %7246 = vrot.lane.b32.xlu0 %v7057, 32
        %v7247 = vpop.permute.xlu0 %7246
        %7248 = vrot.lane.b32.xlu0 %v7062, 32
        %v7249 = vpop.permute.xlu0 %7248
        %7250 = vrot.lane.b32.xlu0 %v7065, 32
        %v7251 = vpop.permute.xlu0 %7250
        %7268 = vrot.lane.b32.xlu0 %v7118, 64
        %v7269 = vpop.permute.xlu0 %7268
        %7270 = vrot.lane.b32.xlu0 %v7121, 64
        %v7271 = vpop.permute.xlu0 %7270
        %7272 = vrot.lane.b32.xlu0 %v7126, 64
        %v7273 = vpop.permute.xlu0 %7272
        %7274 = vrot.lane.b32.xlu0 %v7129, 64
        %v7275 = vpop.permute.xlu0 %7274
        %7276 = vrot.lane.b32.xlu0 %v7134, 64
        %v7277 = vpop.permute.xlu0 %7276
        %7278 = vrot.lane.b32.xlu0 %v7137, 64
        %v7279 = vpop.permute.xlu0 %7278
        %7280 = vrot.lane.b32.xlu0 %v7142, 64
        %v7281 = vpop.permute.xlu0 %7280
        %7282 = vrot.lane.b32.xlu0 %v7145, 64
        %v7283 = vpop.permute.xlu0 %7282
        %7300 = vrot.lane.b32.xlu0 %v7198, 96
        %v7301 = vpop.permute.xlu0 %7300
        %7302 = vrot.lane.b32.xlu0 %v7201, 96
        %v7303 = vpop.permute.xlu0 %7302
        %7304 = vrot.lane.b32.xlu0 %v7206, 96
        %v7305 = vpop.permute.xlu0 %7304
        %7306 = vrot.lane.b32.xlu0 %v7209, 96
        %v7307 = vpop.permute.xlu0 %7306
        %7308 = vrot.lane.b32.xlu0 %v7214, 96
        %v7309 = vpop.permute.xlu0 %7308
        %7310 = vrot.lane.b32.xlu0 %v7217, 96
        %v7311 = vpop.permute.xlu0 %7310
        %7312 = vrot.lane.b32.xlu0 %v7222, 96
        %v7313 = vpop.permute.xlu0 %7312
        %7314 = vrot.lane.b32.xlu0 %v7225, 96
        %v7315 = vpop.permute.xlu0 %7314
        %v7324 = vsel %vm1251, %v6957, %v7237
        %v7325 = vsel %vm1251, %v6960, %v7239
        %v7326 = vsel %vm1251, %v6965, %v7241
        %v7327 = vsel %vm1251, %v6968, %v7243
        %v7328 = vsel %vm1251, %v6973, %v7245
        %v7329 = vsel %vm1251, %v6976, %v7247
        %v7330 = vsel %vm1251, %v6981, %v7249
        %v7331 = vsel %vm1251, %v6984, %v7251
        %v7332 = vsel %vm1132, %v7324, %v7269
        %v7333 = vsel %vm1132, %v7325, %v7271
        %v7334 = vsel %vm1132, %v7326, %v7273
        %v7335 = vsel %vm1132, %v7327, %v7275
        %v7336 = vsel %vm1132, %v7328, %v7277
        %v7337 = vsel %vm1132, %v7329, %v7279
        %v7338 = vsel %vm1132, %v7330, %v7281
        %v7339 = vsel %vm1132, %v7331, %v7283
        %v7340 = vsel %vm1847, %v7332, %v7301
        %v7341 = vsel %vm1847, %v7333, %v7303
        %v7342 = vsel %vm1847, %v7334, %v7305
        %v7343 = vsel %vm1847, %v7335, %v7307
        %v7344 = vsel %vm1847, %v7336, %v7309
        %v7345 = vsel %vm1847, %v7337, %v7311
        %v7346 = vsel %vm1847, %v7338, %v7313
        %v7347 = vsel %vm1847, %v7339, %v7315
        %v7348 = vpack.c.bf16 %v7341, %v7340
        %v7349 = vpack.c.bf16 %v7343, %v7342
        %v7350 = vpack.c.bf16 %v7345, %v7344
        %v7351 = vpack.c.bf16 %v7347, %v7346
        %v7352 = vld [vmem:[%s17] sm:$0xf]
        %v7353 = vld [vmem:[%s17 + $0x4] sm:$0xf]
        %v7354 = vld [vmem:[%s17 + $0x8] sm:$0xf]
        %v7355 = vld [vmem:[%s17 + $0xc] sm:$0xf]
        %v7356 = vld [vmem:[%s17 + $0x10] sm:$0xf]
        %v7357 = vld [vmem:[%s17 + $0x14] sm:$0xf]
        %v7358 = vld [vmem:[%s17 + $0x18] sm:$0xf]
        %v7359 = vld [vmem:[%s17 + $0x1c] sm:$0xf]
        %v7360 = vld [vmem:[%s17 + $0x20] sm:$0xf]
        %v7361 = vld [vmem:[%s17 + $0x24] sm:$0xf]
        %v7362 = vld [vmem:[%s17 + $0x28] sm:$0xf]
        %v7363 = vld [vmem:[%s17 + $0x2c] sm:$0xf]
        %v7364 = vld [vmem:[%s17 + $0x30] sm:$0xf]
        %v7365 = vld [vmem:[%s17 + $0x34] sm:$0xf]
        %v7366 = vld [vmem:[%s17 + $0x38] sm:$0xf]
        %v7367 = vld [vmem:[%s17 + $0x3c] sm:$0xf]
        %v7368 = vlaneseq
        %v7369 = vshrl.u32 %v7368, 7
        %v7370 = vsub.s32 4, %v7369
        %v7371 = vrot.slane %v5705, %v7370
        %v7388 = vunpack.c.l.b16 %v7352
        %v7389 = vunpack.c.l.b16 %v7353
        %v7390 = vunpack.c.l.b16 %v7354
        %v7391 = vunpack.c.l.b16 %v7355
        %v7392 = vunpack.c.l.b16 %v7356
        %v7393 = vunpack.c.l.b16 %v7357
        %v7394 = vunpack.c.l.b16 %v7358
        %v7395 = vunpack.c.l.b16 %v7359
        %v7396 = vunpack.c.l.b16 %v7360
        %v7397 = vunpack.c.l.b16 %v7361
        %v7398 = vunpack.c.l.b16 %v7362
        %v7399 = vunpack.c.l.b16 %v7363
        %v7400 = vunpack.c.l.b16 %v7364
        %v7401 = vunpack.c.l.b16 %v7365
        %v7402 = vunpack.c.l.b16 %v7366
        %v7403 = vunpack.c.l.b16 %v7367
        %v7404 = vpack.c.b16 %v7389, %v7388
        %v7405 = vpack.c.b16 %v7391, %v7390
        %v7406 = vpack.c.b16 %v7393, %v7392
        %v7407 = vpack.c.b16 %v7395, %v7394
        %v7408 = vpack.c.b16 %v7397, %v7396
        %v7409 = vpack.c.b16 %v7399, %v7398
        %v7410 = vpack.c.b16 %v7401, %v7400
        %v7411 = vpack.c.b16 %v7403, %v7402
        %7420 = vmatprep.subr.bf16.mxu0 0
        %7421 = vmatpush1.bf16.msra.mxu0 %v7411
        %7422 = vmatprep.subr.bf16.mxu0 0
        %7423 = vmatpush1.bf16.msra.mxu0 %v7410
        %7424 = vmatprep.subr.bf16.mxu0 0
        %7425 = vmatpush1.bf16.msra.mxu0 %v7409
        %7426 = vmatprep.subr.bf16.mxu0 0
        %7427 = vmatpush1.bf16.msra.mxu0 %v7408
        %7428 = vmatprep.subr.bf16.mxu0 0
        %7429 = vmatpush1.bf16.msra.mxu0 %v7407
        %7430 = vmatprep.subr.bf16.mxu0 0
        %7431 = vmatpush1.bf16.msra.mxu0 %v7406
        %7432 = vmatprep.subr.bf16.mxu0 0
        %7433 = vmatpush1.bf16.msra.mxu0 %v7405
        %7434 = vmatprep.subr.bf16.mxu0 0
        %7435 = vmatpush1.bf16.msra.mxu0 %v7404
        %7436 = vmatprep.subr.bf16.mxu0 0
        %7437 = vmatpush2.bf16.msra.mxu0 0
        %7438 = vmatprep.subr.bf16.mxu0 0
        %7439 = vmatpush2.bf16.msra.mxu0 0
        %7440 = vmatprep.subr.bf16.mxu0 0
        %7441 = vmatpush2.bf16.msra.mxu0 0
        %7442 = vmatprep.subr.bf16.mxu0 0
        %7443 = vmatpush2.bf16.msra.mxu0 0
        %7444 = vmatprep.subr.bf16.mxu0 0
        %7445 = vmatpush2.bf16.msra.mxu0 0
        %7446 = vmatprep.subr.bf16.mxu0 0
        %7447 = vmatpush2.bf16.msra.mxu0 0
        %7448 = vmatprep.subr.bf16.mxu0 0
        %7449 = vmatpush2.bf16.msra.mxu0 0
        %7450 = vmatprep.subr.bf16.mxu0 0
        %7451 = vmatpush2.bf16.msra.mxu0 0
        %7452 = vmatprep.mubr.bf16.mxu0 0
        %7453 = vmatmul.mubr.bf16.gmra.mxu0 %v7348
        %v7454 = vpop.f32.mrf.mxu0
        %v7455 = vadd.f32 %v7371, %v7454
        %v7456 = vpop.f32.mrf.mxu0
        %v7457 = vpop.f32.mrf.mxu0
        %v7458 = vadd.f32 %v7371, %v7457
        %v7459 = vpop.f32.mrf.mxu0
        %7460 = vmatprep.mubr.bf16.mxu0 0
        %7461 = vmatmul.mubr.bf16.gmra.mxu0 %v7349
        %v7462 = vpop.f32.mrf.mxu0
        %v7463 = vadd.f32 %v7371, %v7462
        %v7464 = vpop.f32.mrf.mxu0
        %v7465 = vpop.f32.mrf.mxu0
        %v7466 = vadd.f32 %v7371, %v7465
        %v7467 = vpop.f32.mrf.mxu0
        %7468 = vmatprep.mubr.bf16.mxu0 0
        %7469 = vmatmul.mubr.bf16.gmra.mxu0 %v7350
        %v7470 = vpop.f32.mrf.mxu0
        %v7471 = vadd.f32 %v7371, %v7470
        %v7472 = vpop.f32.mrf.mxu0
        %v7473 = vpop.f32.mrf.mxu0
        %v7474 = vadd.f32 %v7371, %v7473
        %v7475 = vpop.f32.mrf.mxu0
        %7476 = vmatprep.mubr.bf16.mxu0 0
        %7477 = vmatmul.mubr.bf16.gmra.mxu0 %v7351
        %v7478 = vpop.f32.mrf.mxu0
        %v7479 = vadd.f32 %v7371, %v7478
        %v7480 = vpop.f32.mrf.mxu0
        %v7481 = vpop.f32.mrf.mxu0
        %v7482 = vadd.f32 %v7371, %v7481
        %v7483 = vpop.f32.mrf.mxu0
        %7484 = vdwg.mxu0
        %v7485 = vadd.f32 %v6009, %v7455
        %v7486 = vadd.f32 %v6010, %v7458
        %v7487 = vadd.f32 %v6011, %v7463
        %v7488 = vadd.f32 %v6012, %v7466
        %v7489 = vadd.f32 %v6013, %v7471
        %v7490 = vadd.f32 %v6014, %v7474
        %v7491 = vadd.f32 %v6015, %v7479
        %v7492 = vadd.f32 %v6016, %v7482
        %7493 = vadd.xlane.f32.xlu0 %v7485
        %v7494 = vpop.xlane.xlu0 %7493
        %7495 = vadd.xlane.f32.xlu0 %v7486
        %v7496 = vpop.xlane.xlu0 %7495
        %7497 = vadd.xlane.f32.xlu0 %v7487
        %v7498 = vpop.xlane.xlu0 %7497
        %7499 = vadd.xlane.f32.xlu0 %v7488
        %v7500 = vpop.xlane.xlu0 %7499
        %7501 = vadd.xlane.f32.xlu0 %v7489
        %v7502 = vpop.xlane.xlu0 %7501
        %7503 = vadd.xlane.f32.xlu0 %v7490
        %v7504 = vpop.xlane.xlu0 %7503
        %7505 = vadd.xlane.f32.xlu0 %v7491
        %v7506 = vpop.xlane.xlu0 %7505
        %7507 = vadd.xlane.f32.xlu0 %v7492
        %v7508 = vpop.xlane.xlu0 %7507
        %v7509 = vmul.f32 %v7494, %v1966
        %v7510 = vmul.f32 %v7496, %v1966
        %v7511 = vmul.f32 %v7498, %v1966
        %v7512 = vmul.f32 %v7500, %v1966
        %v7513 = vmul.f32 %v7502, %v1966
        %v7514 = vmul.f32 %v7504, %v1966
        %v7515 = vmul.f32 %v7506, %v1966
        %v7516 = vmul.f32 %v7508, %v1966
        %v7517 = vsub.f32 %v7485, %v7509
        %v7518 = vsub.f32 %v7486, %v7510
        %v7519 = vsub.f32 %v7487, %v7511
        %v7520 = vsub.f32 %v7488, %v7512
        %v7521 = vsub.f32 %v7489, %v7513
        %v7522 = vsub.f32 %v7490, %v7514
        %v7523 = vsub.f32 %v7491, %v7515
        %v7524 = vsub.f32 %v7492, %v7516
        %v7525 = vmul.f32 %v7517, %v7517
        %v7526 = vmul.f32 %v7518, %v7518
        %v7527 = vmul.f32 %v7519, %v7519
        %v7528 = vmul.f32 %v7520, %v7520
        %v7529 = vmul.f32 %v7521, %v7521
        %v7530 = vmul.f32 %v7522, %v7522
        %v7531 = vmul.f32 %v7523, %v7523
        %v7532 = vmul.f32 %v7524, %v7524
        %7533 = vadd.xlane.f32.xlu0 %v7525
        %v7534 = vpop.xlane.xlu0 %7533
        %7535 = vadd.xlane.f32.xlu0 %v7526
        %v7536 = vpop.xlane.xlu0 %7535
        %7537 = vadd.xlane.f32.xlu0 %v7527
        %v7538 = vpop.xlane.xlu0 %7537
        %7539 = vadd.xlane.f32.xlu0 %v7528
        %v7540 = vpop.xlane.xlu0 %7539
        %7541 = vadd.xlane.f32.xlu0 %v7529
        %v7542 = vpop.xlane.xlu0 %7541
        %7543 = vadd.xlane.f32.xlu0 %v7530
        %v7544 = vpop.xlane.xlu0 %7543
        %7545 = vadd.xlane.f32.xlu0 %v7531
        %v7546 = vpop.xlane.xlu0 %7545
        %7547 = vadd.xlane.f32.xlu0 %v7532
        %v7548 = vpop.xlane.xlu0 %7547
        %v7549 = vmul.f32 %v7534, %v1966
        %v7550 = vmul.f32 %v7536, %v1966
        %v7551 = vmul.f32 %v7538, %v1966
        %v7552 = vmul.f32 %v7540, %v1966
        %v7553 = vmul.f32 %v7542, %v1966
        %v7554 = vmul.f32 %v7544, %v1966
        %v7555 = vmul.f32 %v7546, %v1966
        %v7556 = vmul.f32 %v7548, %v1966
        %v7557 = vadd.f32 %v7549, 1e-05
        %v7558 = vadd.f32 %v7550, 1e-05
        %v7559 = vadd.f32 %v7551, 1e-05
        %v7560 = vadd.f32 %v7552, 1e-05
        %v7561 = vadd.f32 %v7553, 1e-05
        %v7562 = vadd.f32 %v7554, 1e-05
        %v7563 = vadd.f32 %v7555, 1e-05
        %v7564 = vadd.f32 %v7556, 1e-05
        %v7565 = vrsqrt.pop %v7557
        %v7566 = vrsqrt.pop %v7558
        %v7567 = vrsqrt.pop %v7559
        %v7568 = vrsqrt.pop %v7560
        %v7569 = vrsqrt.pop %v7561
        %v7570 = vrsqrt.pop %v7562
        %v7571 = vrsqrt.pop %v7563
        %v7572 = vrsqrt.pop %v7564
        %v7573 = vmul.f32 %v7517, %v7565
        %v7574 = vmul.f32 %v7518, %v7566
        %v7575 = vmul.f32 %v7519, %v7567
        %v7576 = vmul.f32 %v7520, %v7568
        %v7577 = vmul.f32 %v7521, %v7569
        %v7578 = vmul.f32 %v7522, %v7570
        %v7579 = vmul.f32 %v7523, %v7571
        %v7580 = vmul.f32 %v7524, %v7572
        %v7581 = vlaneseq
        %v7582 = vshrl.u32 %v7581, 7
        %v7583 = vsub.s32 6, %v7582
        %v7584 = vrot.slane %v5705, %v7583
        %v7585 = vmul.f32 %v7573, %v7584
        %v7586 = vmul.f32 %v7574, %v7584
        %v7587 = vmul.f32 %v7575, %v7584
        %v7588 = vmul.f32 %v7576, %v7584
        %v7589 = vmul.f32 %v7577, %v7584
        %v7590 = vmul.f32 %v7578, %v7584
        %v7591 = vmul.f32 %v7579, %v7584
        %v7592 = vmul.f32 %v7580, %v7584
        %v7593 = vlaneseq
        %v7594 = vshrl.u32 %v7593, 7
        %v7595 = vsub.s32 7, %v7594
        %v7596 = vrot.slane %v5705, %v7595
        %v7597 = vadd.f32 %v7585, %v7596
        %v7598 = vadd.f32 %v7586, %v7596
        %v7599 = vadd.f32 %v7587, %v7596
        %v7600 = vadd.f32 %v7588, %v7596
        %v7601 = vadd.f32 %v7589, %v7596
        %v7602 = vadd.f32 %v7590, %v7596
        %v7603 = vadd.f32 %v7591, %v7596
        %v7604 = vadd.f32 %v7592, %v7596
        %v7605 = vpack.c.bf16 %v7598, %v7597
        %v7606 = vpack.c.bf16 %v7600, %v7599
        %v7607 = vpack.c.bf16 %v7602, %v7601
        %v7608 = vpack.c.bf16 %v7604, %v7603
        %s7609 = scalar_lea.vmem %s17, 64
        %v7610 = vld [vmem:[%s7609] sm:$0xf]
        %v7611 = vld [vmem:[%s7609 + $0x4] sm:$0xf]
        %v7612 = vld [vmem:[%s7609 + $0x8] sm:$0xf]
        %v7613 = vld [vmem:[%s7609 + $0xc] sm:$0xf]
        %v7614 = vld [vmem:[%s7609 + $0x10] sm:$0xf]
        %v7615 = vld [vmem:[%s7609 + $0x14] sm:$0xf]
        %v7616 = vld [vmem:[%s7609 + $0x18] sm:$0xf]
        %v7617 = vld [vmem:[%s7609 + $0x1c] sm:$0xf]
        %v7618 = vld [vmem:[%s7609 + $0x20] sm:$0xf]
        %v7619 = vld [vmem:[%s7609 + $0x24] sm:$0xf]
        %v7620 = vld [vmem:[%s7609 + $0x28] sm:$0xf]
        %v7621 = vld [vmem:[%s7609 + $0x2c] sm:$0xf]
        %v7622 = vld [vmem:[%s7609 + $0x30] sm:$0xf]
        %v7623 = vld [vmem:[%s7609 + $0x34] sm:$0xf]
        %v7624 = vld [vmem:[%s7609 + $0x38] sm:$0xf]
        %v7625 = vld [vmem:[%s7609 + $0x3c] sm:$0xf]
        %v7626 = vlaneseq
        %v7627 = vshrl.u32 %v7626, 7
        %v7628 = vsub.s32 5, %v7627
        %v7629 = vrot.slane %v5705, %v7628
        %v7646 = vunpack.c.l.b16 %v7610
        %v7647 = vunpack.c.l.b16 %v7611
        %v7648 = vunpack.c.l.b16 %v7612
        %v7649 = vunpack.c.l.b16 %v7613
        %v7650 = vunpack.c.l.b16 %v7614
        %v7651 = vunpack.c.l.b16 %v7615
        %v7652 = vunpack.c.l.b16 %v7616
        %v7653 = vunpack.c.l.b16 %v7617
        %v7654 = vunpack.c.l.b16 %v7618
        %v7655 = vunpack.c.l.b16 %v7619
        %v7656 = vunpack.c.l.b16 %v7620
        %v7657 = vunpack.c.l.b16 %v7621
        %v7658 = vunpack.c.l.b16 %v7622
        %v7659 = vunpack.c.l.b16 %v7623
        %v7660 = vunpack.c.l.b16 %v7624
        %v7661 = vunpack.c.l.b16 %v7625
        %v7662 = vpack.c.b16 %v7647, %v7646
        %v7663 = vpack.c.b16 %v7649, %v7648
        %v7664 = vpack.c.b16 %v7651, %v7650
        %v7665 = vpack.c.b16 %v7653, %v7652
        %v7666 = vpack.c.b16 %v7655, %v7654
        %v7667 = vpack.c.b16 %v7657, %v7656
        %v7668 = vpack.c.b16 %v7659, %v7658
        %v7669 = vpack.c.b16 %v7661, %v7660
        %7678 = vmatprep.subr.bf16.mxu0 0
        %7679 = vmatpush1.bf16.msra.mxu0 %v7669
        %7680 = vmatprep.subr.bf16.mxu0 0
        %7681 = vmatpush1.bf16.msra.mxu0 %v7668
        %7682 = vmatprep.subr.bf16.mxu0 0
        %7683 = vmatpush1.bf16.msra.mxu0 %v7667
        %7684 = vmatprep.subr.bf16.mxu0 0
        %7685 = vmatpush1.bf16.msra.mxu0 %v7666
        %7686 = vmatprep.subr.bf16.mxu0 0
        %7687 = vmatpush1.bf16.msra.mxu0 %v7665
        %7688 = vmatprep.subr.bf16.mxu0 0
        %7689 = vmatpush1.bf16.msra.mxu0 %v7664
        %7690 = vmatprep.subr.bf16.mxu0 0
        %7691 = vmatpush1.bf16.msra.mxu0 %v7663
        %7692 = vmatprep.subr.bf16.mxu0 0
        %7693 = vmatpush1.bf16.msra.mxu0 %v7662
        %7694 = vmatprep.subr.bf16.mxu0 0
        %7695 = vmatpush2.bf16.msra.mxu0 0
        %7696 = vmatprep.subr.bf16.mxu0 0
        %7697 = vmatpush2.bf16.msra.mxu0 0
        %7698 = vmatprep.subr.bf16.mxu0 0
        %7699 = vmatpush2.bf16.msra.mxu0 0
        %7700 = vmatprep.subr.bf16.mxu0 0
        %7701 = vmatpush2.bf16.msra.mxu0 0
        %7702 = vmatprep.subr.bf16.mxu0 0
        %7703 = vmatpush2.bf16.msra.mxu0 0
        %7704 = vmatprep.subr.bf16.mxu0 0
        %7705 = vmatpush2.bf16.msra.mxu0 0
        %7706 = vmatprep.subr.bf16.mxu0 0
        %7707 = vmatpush2.bf16.msra.mxu0 0
        %7708 = vmatprep.subr.bf16.mxu0 0
        %7709 = vmatpush2.bf16.msra.mxu0 0
        %7710 = vmatprep.mubr.bf16.mxu0 0
        %7711 = vmatmul.mubr.bf16.gmra.mxu0 %v7605
        %v7712 = vpop.f32.mrf.mxu0
        %v7713 = vadd.f32 %v7629, %v7712
        %v7714 = vpop.f32.mrf.mxu0
        %v7715 = vpop.f32.mrf.mxu0
        %v7716 = vadd.f32 %v7629, %v7715
        %v7717 = vpop.f32.mrf.mxu0
        %7718 = vmatprep.mubr.bf16.mxu0 0
        %7719 = vmatmul.mubr.bf16.gmra.mxu0 %v7606
        %v7720 = vpop.f32.mrf.mxu0
        %v7721 = vadd.f32 %v7629, %v7720
        %v7722 = vpop.f32.mrf.mxu0
        %v7723 = vpop.f32.mrf.mxu0
        %v7724 = vadd.f32 %v7629, %v7723
        %v7725 = vpop.f32.mrf.mxu0
        %7726 = vmatprep.mubr.bf16.mxu0 0
        %7727 = vmatmul.mubr.bf16.gmra.mxu0 %v7607
        %v7728 = vpop.f32.mrf.mxu0
        %v7729 = vadd.f32 %v7629, %v7728
        %v7730 = vpop.f32.mrf.mxu0
        %v7731 = vpop.f32.mrf.mxu0
        %v7732 = vadd.f32 %v7629, %v7731
        %v7733 = vpop.f32.mrf.mxu0
        %7734 = vmatprep.mubr.bf16.mxu0 0
        %7735 = vmatmul.mubr.bf16.gmra.mxu0 %v7608
        %v7736 = vpop.f32.mrf.mxu0
        %v7737 = vadd.f32 %v7629, %v7736
        %v7738 = vpop.f32.mrf.mxu0
        %v7739 = vpop.f32.mrf.mxu0
        %v7740 = vadd.f32 %v7629, %v7739
        %v7741 = vpop.f32.mrf.mxu0
        %7742 = vdwg.mxu0
        %v7743 = vmax.f32 %v7713, 0.0
        %v7744 = vmax.f32 %v7716, 0.0
        %v7745 = vmax.f32 %v7721, 0.0
        %v7746 = vmax.f32 %v7724, 0.0
        %v7747 = vmax.f32 %v7729, 0.0
        %v7748 = vmax.f32 %v7732, 0.0
        %v7749 = vmax.f32 %v7737, 0.0
        %v7750 = vmax.f32 %v7740, 0.0
        %v7751 = vadd.f32 %v7597, %v7743
        %v7752 = vadd.f32 %v7598, %v7744
        %v7753 = vadd.f32 %v7599, %v7745
        %v7754 = vadd.f32 %v7600, %v7746
        %v7755 = vadd.f32 %v7601, %v7747
        %v7756 = vadd.f32 %v7602, %v7748
        %v7757 = vadd.f32 %v7603, %v7749
        %v7758 = vadd.f32 %v7604, %v7750
        %7759 = vadd.xlane.f32.xlu0 %v7751
        %v7760 = vpop.xlane.xlu0 %7759
        %7761 = vadd.xlane.f32.xlu0 %v7752
        %v7762 = vpop.xlane.xlu0 %7761
        %7763 = vadd.xlane.f32.xlu0 %v7753
        %v7764 = vpop.xlane.xlu0 %7763
        %7765 = vadd.xlane.f32.xlu0 %v7754
        %v7766 = vpop.xlane.xlu0 %7765
        %7767 = vadd.xlane.f32.xlu0 %v7755
        %v7768 = vpop.xlane.xlu0 %7767
        %7769 = vadd.xlane.f32.xlu0 %v7756
        %v7770 = vpop.xlane.xlu0 %7769
        %7771 = vadd.xlane.f32.xlu0 %v7757
        %v7772 = vpop.xlane.xlu0 %7771
        %7773 = vadd.xlane.f32.xlu0 %v7758
        %v7774 = vpop.xlane.xlu0 %7773
        %v7775 = vmul.f32 %v7760, %v1966
        %v7776 = vmul.f32 %v7762, %v1966
        %v7777 = vmul.f32 %v7764, %v1966
        %v7778 = vmul.f32 %v7766, %v1966
        %v7779 = vmul.f32 %v7768, %v1966
        %v7780 = vmul.f32 %v7770, %v1966
        %v7781 = vmul.f32 %v7772, %v1966
        %v7782 = vmul.f32 %v7774, %v1966
        %v7783 = vsub.f32 %v7751, %v7775
        %v7784 = vsub.f32 %v7752, %v7776
        %v7785 = vsub.f32 %v7753, %v7777
        %v7786 = vsub.f32 %v7754, %v7778
        %v7787 = vsub.f32 %v7755, %v7779
        %v7788 = vsub.f32 %v7756, %v7780
        %v7789 = vsub.f32 %v7757, %v7781
        %v7790 = vsub.f32 %v7758, %v7782
        %v7791 = vmul.f32 %v7783, %v7783
        %v7792 = vmul.f32 %v7784, %v7784
        %v7793 = vmul.f32 %v7785, %v7785
        %v7794 = vmul.f32 %v7786, %v7786
        %v7795 = vmul.f32 %v7787, %v7787
        %v7796 = vmul.f32 %v7788, %v7788
        %v7797 = vmul.f32 %v7789, %v7789
        %v7798 = vmul.f32 %v7790, %v7790
        %7799 = vadd.xlane.f32.xlu0 %v7791
        %v7800 = vpop.xlane.xlu0 %7799
        %7801 = vadd.xlane.f32.xlu0 %v7792
        %v7802 = vpop.xlane.xlu0 %7801
        %7803 = vadd.xlane.f32.xlu0 %v7793
        %v7804 = vpop.xlane.xlu0 %7803
        %7805 = vadd.xlane.f32.xlu0 %v7794
        %v7806 = vpop.xlane.xlu0 %7805
        %7807 = vadd.xlane.f32.xlu0 %v7795
        %v7808 = vpop.xlane.xlu0 %7807
        %7809 = vadd.xlane.f32.xlu0 %v7796
        %v7810 = vpop.xlane.xlu0 %7809
        %7811 = vadd.xlane.f32.xlu0 %v7797
        %v7812 = vpop.xlane.xlu0 %7811
        %7813 = vadd.xlane.f32.xlu0 %v7798
        %v7814 = vpop.xlane.xlu0 %7813
        %v7815 = vmul.f32 %v7800, %v1966
        %v7816 = vmul.f32 %v7802, %v1966
        %v7817 = vmul.f32 %v7804, %v1966
        %v7818 = vmul.f32 %v7806, %v1966
        %v7819 = vmul.f32 %v7808, %v1966
        %v7820 = vmul.f32 %v7810, %v1966
        %v7821 = vmul.f32 %v7812, %v1966
        %v7822 = vmul.f32 %v7814, %v1966
        %v7823 = vadd.f32 %v7815, 1e-05
        %v7824 = vadd.f32 %v7816, 1e-05
        %v7825 = vadd.f32 %v7817, 1e-05
        %v7826 = vadd.f32 %v7818, 1e-05
        %v7827 = vadd.f32 %v7819, 1e-05
        %v7828 = vadd.f32 %v7820, 1e-05
        %v7829 = vadd.f32 %v7821, 1e-05
        %v7830 = vadd.f32 %v7822, 1e-05
        %v7831 = vrsqrt.pop %v7823
        %v7832 = vrsqrt.pop %v7824
        %v7833 = vrsqrt.pop %v7825
        %v7834 = vrsqrt.pop %v7826
        %v7835 = vrsqrt.pop %v7827
        %v7836 = vrsqrt.pop %v7828
        %v7837 = vrsqrt.pop %v7829
        %v7838 = vrsqrt.pop %v7830
        %v7839 = vmul.f32 %v7783, %v7831
        %v7840 = vmul.f32 %v7784, %v7832
        %v7841 = vmul.f32 %v7785, %v7833
        %v7842 = vmul.f32 %v7786, %v7834
        %v7843 = vmul.f32 %v7787, %v7835
        %v7844 = vmul.f32 %v7788, %v7836
        %v7845 = vmul.f32 %v7789, %v7837
        %v7846 = vmul.f32 %v7790, %v7838
        %v7847 = vlaneseq
        %v7848 = vshrl.u32 %v7847, 7
        %v7849 = vsub.s32 0, %v7848
        %v7850 = vrot.slane %v5706, %v7849
        %v7851 = vmul.f32 %v7839, %v7850
        %v7852 = vmul.f32 %v7840, %v7850
        %v7853 = vmul.f32 %v7841, %v7850
        %v7854 = vmul.f32 %v7842, %v7850
        %v7855 = vmul.f32 %v7843, %v7850
        %v7856 = vmul.f32 %v7844, %v7850
        %v7857 = vmul.f32 %v7845, %v7850
        %v7858 = vmul.f32 %v7846, %v7850
        %v7859 = vlaneseq
        %v7860 = vshrl.u32 %v7859, 7
        %v7861 = vsub.s32 1, %v7860
        %v7862 = vrot.slane %v5706, %v7861
        %v7863 = vadd.f32 %v7851, %v7862
        %v7864 = vadd.f32 %v7852, %v7862
        %v7865 = vadd.f32 %v7853, %v7862
        %v7866 = vadd.f32 %v7854, %v7862
        %v7867 = vadd.f32 %v7855, %v7862
        %v7868 = vadd.f32 %v7856, %v7862
        %v7869 = vadd.f32 %v7857, %v7862
        %v7870 = vadd.f32 %v7858, %v7862
        %v7871 = vlaneseq
        %v7872 = vshrl.u32 %v7871, 7
        %v7873 = vsub.s32 2, %v7872
        %v7874 = vrot.slane %v5706, %v7873
        %v7875 = vadd.f32 %v5975, %v7874
        %v7876 = vadd.f32 %v5978, %v7874
        %v7877 = vadd.f32 %v5983, %v7874
        %v7878 = vadd.f32 %v5986, %v7874
        %v7879 = vadd.f32 %v5991, %v7874
        %v7880 = vadd.f32 %v5994, %v7874
        %v7881 = vadd.f32 %v5999, %v7874
        %v7882 = vadd.f32 %v6002, %v7874
        %v7883 = vsub.f32 0.0, %v7875
        %v7884 = vsub.f32 0.0, %v7876
        %v7885 = vsub.f32 0.0, %v7877
        %v7886 = vsub.f32 0.0, %v7878
        %v7887 = vsub.f32 0.0, %v7879
        %v7888 = vsub.f32 0.0, %v7880
        %v7889 = vsub.f32 0.0, %v7881
        %v7890 = vsub.f32 0.0, %v7882
        %v7891 = vmul.f32 %v7883, 1.442695
        %v7892 = vpow.pop %v7891
        %v7893 = vmul.f32 %v7884, 1.442695
        %v7894 = vpow.pop %v7893
        %v7895 = vmul.f32 %v7885, 1.442695
        %v7896 = vpow.pop %v7895
        %v7897 = vmul.f32 %v7886, 1.442695
        %v7898 = vpow.pop %v7897
        %v7899 = vmul.f32 %v7887, 1.442695
        %v7900 = vpow.pop %v7899
        %v7901 = vmul.f32 %v7888, 1.442695
        %v7902 = vpow.pop %v7901
        %v7903 = vmul.f32 %v7889, 1.442695
        %v7904 = vpow.pop %v7903
        %v7905 = vmul.f32 %v7890, 1.442695
        %v7906 = vpow.pop %v7905
        %v7907 = vadd.f32 %v7892, 1.0
        %v7908 = vadd.f32 %v7894, 1.0
        %v7909 = vadd.f32 %v7896, 1.0
        %v7910 = vadd.f32 %v7898, 1.0
        %v7911 = vadd.f32 %v7900, 1.0
        %v7912 = vadd.f32 %v7902, 1.0
        %v7913 = vadd.f32 %v7904, 1.0
        %v7914 = vadd.f32 %v7906, 1.0
        %v7915 = vrcp.pop %v7907
        %v7916 = vrcp.pop %v7908
        %v7917 = vrcp.pop %v7909
        %v7918 = vrcp.pop %v7910
        %v7919 = vrcp.pop %v7911
        %v7920 = vrcp.pop %v7912
        %v7921 = vrcp.pop %v7913
        %v7922 = vrcp.pop %v7914
        %v7923 = vmul.f32 %v7875, %v7915
        %v7924 = vmul.f32 %v7876, %v7916
        %v7925 = vmul.f32 %v7877, %v7917
        %v7926 = vmul.f32 %v7878, %v7918
        %v7927 = vmul.f32 %v7879, %v7919
        %v7928 = vmul.f32 %v7880, %v7920
        %v7929 = vmul.f32 %v7881, %v7921
        %v7930 = vmul.f32 %v7882, %v7922
        %v7931 = vmul.f32 %v7863, %v7923
        %v7932 = vmul.f32 %v7864, %v7924
        %v7933 = vmul.f32 %v7865, %v7925
        %v7934 = vmul.f32 %v7866, %v7926
        %v7935 = vmul.f32 %v7867, %v7927
        %v7936 = vmul.f32 %v7868, %v7928
        %v7937 = vmul.f32 %v7869, %v7929
        %v7938 = vmul.f32 %v7870, %v7930
        %v7939 = vld [vmem:[%s19] sm:$0x1]
        %v7940 = vld [vmem:[%s23] sm:$0xff]
        %v7941 = vld [vmem:[%s23 + $0x8] sm:$0x7]
        %v7942 = vld [vmem:[%s20] sm:$0xff]
        %v7943 = vld [vmem:[%s20 + $0x8] sm:$0xff]
        %v7944 = vld [vmem:[%s20 + $0x10] sm:$0xff]
        %v7945 = vld [vmem:[%s20 + $0x18] sm:$0xff]
        %v7946 = vld [vmem:[%s20 + $0x20] sm:$0xff]
        %v7947 = vld [vmem:[%s20 + $0x28] sm:$0xff]
        %v7948 = vld [vmem:[%s20 + $0x30] sm:$0xff]
        %v7949 = vld [vmem:[%s20 + $0x38] sm:$0xff]
        %v7950 = vld [vmem:[%s20 + $0x40] sm:$0xff]
        %v7951 = vld [vmem:[%s20 + $0x48] sm:$0xff]
        %v7952 = vld [vmem:[%s20 + $0x50] sm:$0xff]
        %v7953 = vld [vmem:[%s20 + $0x58] sm:$0xff]
        %v7954 = vld [vmem:[%s20 + $0x60] sm:$0xff]
        %v7955 = vld [vmem:[%s20 + $0x68] sm:$0xff]
        %v7956 = vld [vmem:[%s20 + $0x70] sm:$0xff]
        %v7957 = vld [vmem:[%s20 + $0x78] sm:$0xff]
        %v7974 = vunpack.c.l.b16 %v7942
        %v7975 = vunpack.c.h.b16 %v7942
        %v7976 = vunpack.c.l.b16 %v7943
        %v7977 = vunpack.c.h.b16 %v7943
        %v7978 = vunpack.c.l.b16 %v7944
        %v7979 = vunpack.c.h.b16 %v7944
        %v7980 = vunpack.c.l.b16 %v7945
        %v7981 = vunpack.c.h.b16 %v7945
        %v7982 = vunpack.c.l.b16 %v7946
        %v7983 = vunpack.c.h.b16 %v7946
        %v7984 = vunpack.c.l.b16 %v7947
        %v7985 = vunpack.c.h.b16 %v7947
        %v7986 = vunpack.c.l.b16 %v7948
        %v7987 = vunpack.c.h.b16 %v7948
        %v7988 = vunpack.c.l.b16 %v7949
        %v7989 = vunpack.c.h.b16 %v7949
        %v7990 = vunpack.c.l.b16 %v7950
        %v7991 = vunpack.c.h.b16 %v7950
        %v7992 = vunpack.c.l.b16 %v7951
        %v7993 = vunpack.c.h.b16 %v7951
        %v7994 = vunpack.c.l.b16 %v7952
        %v7995 = vunpack.c.h.b16 %v7952
        %v7996 = vunpack.c.l.b16 %v7953
        %v7997 = vunpack.c.h.b16 %v7953
        %v7998 = vunpack.c.l.b16 %v7954
        %v7999 = vunpack.c.h.b16 %v7954
        %v8000 = vunpack.c.l.b16 %v7955
        %v8001 = vunpack.c.h.b16 %v7955
        %v8002 = vunpack.c.l.b16 %v7956
        %v8003 = vunpack.c.h.b16 %v7956
        %v8004 = vunpack.c.l.b16 %v7957
        %v8005 = vunpack.c.h.b16 %v7957
        %v8006 = vpack.c.b16 %v7976, %v7974
        %v8007 = vpack.c.b16 %v7977, %v7975
        %v8008 = vpack.c.b16 %v7980, %v7978
        %v8009 = vpack.c.b16 %v7981, %v7979
        %v8010 = vpack.c.b16 %v7984, %v7982
        %v8011 = vpack.c.b16 %v7985, %v7983
        %v8012 = vpack.c.b16 %v7988, %v7986
        %v8013 = vpack.c.b16 %v7989, %v7987
        %v8014 = vpack.c.b16 %v7992, %v7990
        %v8015 = vpack.c.b16 %v7993, %v7991
        %v8016 = vpack.c.b16 %v7996, %v7994
        %v8017 = vpack.c.b16 %v7997, %v7995
        %v8018 = vpack.c.b16 %v8000, %v7998
        %v8019 = vpack.c.b16 %v8001, %v7999
        %v8020 = vpack.c.b16 %v8004, %v8002
        %v8021 = vpack.c.b16 %v8005, %v8003
        %8038 = vmatprep.subr.bf16.mxu0 %v8021
        %8039 = vmatpush1.bf16.msra.mxu0 %v8020
        %8040 = vmatprep.subr.bf16.mxu0 %v8019
        %8041 = vmatpush1.bf16.msra.mxu0 %v8018
        %8042 = vmatprep.subr.bf16.mxu0 %v8017
        %8043 = vmatpush1.bf16.msra.mxu0 %v8016
        %8044 = vmatprep.subr.bf16.mxu0 %v8015
        %8045 = vmatpush1.bf16.msra.mxu0 %v8014
        %8046 = vmatprep.subr.bf16.mxu0 %v8013
        %8047 = vmatpush1.bf16.msra.mxu0 %v8012
        %8048 = vmatprep.subr.bf16.mxu0 %v8011
        %8049 = vmatpush1.bf16.msra.mxu0 %v8010
        %8050 = vmatprep.subr.bf16.mxu0 %v8009
        %8051 = vmatpush1.bf16.msra.mxu0 %v8008
        %8052 = vmatprep.subr.bf16.mxu0 %v8007
        %8053 = vmatpush1.bf16.msra.mxu0 %v8006
        %8054 = vmatprep.subr.bf16.mxu0 0
        %8055 = vmatpush2.bf16.msra.mxu0 0
        %8056 = vmatprep.subr.bf16.mxu0 0
        %8057 = vmatpush2.bf16.msra.mxu0 0
        %8058 = vmatprep.subr.bf16.mxu0 0
        %8059 = vmatpush2.bf16.msra.mxu0 0
        %8060 = vmatprep.subr.bf16.mxu0 0
        %8061 = vmatpush2.bf16.msra.mxu0 0
        %8062 = vmatprep.subr.bf16.mxu0 0
        %8063 = vmatpush2.bf16.msra.mxu0 0
        %8064 = vmatprep.subr.bf16.mxu0 0
        %8065 = vmatpush2.bf16.msra.mxu0 0
        %8066 = vmatprep.subr.bf16.mxu0 0
        %8067 = vmatpush2.bf16.msra.mxu0 0
        %8068 = vmatprep.subr.bf16.mxu0 0
        %8069 = vmatpush2.bf16.msra.mxu0 0
        %8070 = vmatprep.mubr.bf16.mxu0 0
        %8071 = vmatmul.mubr.bf16.gmra.mxu0 %v7939
        %v8072 = vpop.f32.mrf.mxu0
        %v8073 = vadd.f32 0.0, %v8072
        %v8074 = vpop.f32.mrf.mxu0
        %v8075 = vadd.f32 0.0, %v8074
        %v8076 = vpop.f32.mrf.mxu0
        %v8077 = vpop.f32.mrf.mxu0
        %8078 = vdwg.mxu0
        %v8079 = vadd.f32 %v8073, %v7940
        %v8081 = vrot.slane %v7940, 1
        %v8083 = vadd.f32 %v8075, %v8081
        %v8084 = vpack.c.bf16 %v7932, %v7931
        %v8085 = vpack.c.bf16 %v7934, %v7933
        %v8086 = vpack.c.bf16 %v7936, %v7935
        %v8087 = vpack.c.bf16 %v7938, %v7937
        %v8088 = vld [vmem:[%s21] sm:$0xff]
        %v8089 = vld [vmem:[%s21 + $0x8] sm:$0xff]
        %v8090 = vld [vmem:[%s21 + $0x10] sm:$0xff]
        %v8091 = vld [vmem:[%s21 + $0x18] sm:$0xff]
        %v8092 = vld [vmem:[%s21 + $0x20] sm:$0xff]
        %v8093 = vld [vmem:[%s21 + $0x28] sm:$0xff]
        %v8094 = vld [vmem:[%s21 + $0x30] sm:$0xff]
        %v8095 = vld [vmem:[%s21 + $0x38] sm:$0xff]
        %v8096 = vld [vmem:[%s21 + $0x40] sm:$0xff]
        %v8097 = vld [vmem:[%s21 + $0x48] sm:$0xff]
        %v8098 = vld [vmem:[%s21 + $0x50] sm:$0xff]
        %v8099 = vld [vmem:[%s21 + $0x58] sm:$0xff]
        %v8100 = vld [vmem:[%s21 + $0x60] sm:$0xff]
        %v8101 = vld [vmem:[%s21 + $0x68] sm:$0xff]
        %v8102 = vld [vmem:[%s21 + $0x70] sm:$0xff]
        %v8103 = vld [vmem:[%s21 + $0x78] sm:$0xff]
        %v8120 = vunpack.c.l.b16 %v8088
        %v8121 = vunpack.c.h.b16 %v8088
        %v8122 = vunpack.c.l.b16 %v8089
        %v8123 = vunpack.c.h.b16 %v8089
        %v8124 = vunpack.c.l.b16 %v8090
        %v8125 = vunpack.c.h.b16 %v8090
        %v8126 = vunpack.c.l.b16 %v8091
        %v8127 = vunpack.c.h.b16 %v8091
        %v8128 = vunpack.c.l.b16 %v8092
        %v8129 = vunpack.c.h.b16 %v8092
        %v8130 = vunpack.c.l.b16 %v8093
        %v8131 = vunpack.c.h.b16 %v8093
        %v8132 = vunpack.c.l.b16 %v8094
        %v8133 = vunpack.c.h.b16 %v8094
        %v8134 = vunpack.c.l.b16 %v8095
        %v8135 = vunpack.c.h.b16 %v8095
        %v8136 = vunpack.c.l.b16 %v8096
        %v8137 = vunpack.c.h.b16 %v8096
        %v8138 = vunpack.c.l.b16 %v8097
        %v8139 = vunpack.c.h.b16 %v8097
        %v8140 = vunpack.c.l.b16 %v8098
        %v8141 = vunpack.c.h.b16 %v8098
        %v8142 = vunpack.c.l.b16 %v8099
        %v8143 = vunpack.c.h.b16 %v8099
        %v8144 = vunpack.c.l.b16 %v8100
        %v8145 = vunpack.c.h.b16 %v8100
        %v8146 = vunpack.c.l.b16 %v8101
        %v8147 = vunpack.c.h.b16 %v8101
        %v8148 = vunpack.c.l.b16 %v8102
        %v8149 = vunpack.c.h.b16 %v8102
        %v8150 = vunpack.c.l.b16 %v8103
        %v8151 = vunpack.c.h.b16 %v8103
        %v8152 = vpack.c.b16 %v8122, %v8120
        %v8153 = vpack.c.b16 %v8123, %v8121
        %v8154 = vpack.c.b16 %v8126, %v8124
        %v8155 = vpack.c.b16 %v8127, %v8125
        %v8156 = vpack.c.b16 %v8130, %v8128
        %v8157 = vpack.c.b16 %v8131, %v8129
        %v8158 = vpack.c.b16 %v8134, %v8132
        %v8159 = vpack.c.b16 %v8135, %v8133
        %v8160 = vpack.c.b16 %v8138, %v8136
        %v8161 = vpack.c.b16 %v8139, %v8137
        %v8162 = vpack.c.b16 %v8142, %v8140
        %v8163 = vpack.c.b16 %v8143, %v8141
        %v8164 = vpack.c.b16 %v8146, %v8144
        %v8165 = vpack.c.b16 %v8147, %v8145
        %v8166 = vpack.c.b16 %v8150, %v8148
        %v8167 = vpack.c.b16 %v8151, %v8149
        %8184 = vmatprep.subr.bf16.mxu0 %v8167
        %8185 = vmatpush1.bf16.msra.mxu0 %v8166
        %8186 = vmatprep.subr.bf16.mxu0 %v8165
        %8187 = vmatpush1.bf16.msra.mxu0 %v8164
        %8188 = vmatprep.subr.bf16.mxu0 %v8163
        %8189 = vmatpush1.bf16.msra.mxu0 %v8162
        %8190 = vmatprep.subr.bf16.mxu0 %v8161
        %8191 = vmatpush1.bf16.msra.mxu0 %v8160
        %8192 = vmatprep.subr.bf16.mxu0 %v8159
        %8193 = vmatpush1.bf16.msra.mxu0 %v8158
        %8194 = vmatprep.subr.bf16.mxu0 %v8157
        %8195 = vmatpush1.bf16.msra.mxu0 %v8156
        %8196 = vmatprep.subr.bf16.mxu0 %v8155
        %8197 = vmatpush1.bf16.msra.mxu0 %v8154
        %8198 = vmatprep.subr.bf16.mxu0 %v8153
        %8199 = vmatpush1.bf16.msra.mxu0 %v8152
        %8200 = vmatprep.subr.bf16.mxu0 0
        %8201 = vmatpush2.bf16.msra.mxu0 0
        %8202 = vmatprep.subr.bf16.mxu0 0
        %8203 = vmatpush2.bf16.msra.mxu0 0
        %8204 = vmatprep.subr.bf16.mxu0 0
        %8205 = vmatpush2.bf16.msra.mxu0 0
        %8206 = vmatprep.subr.bf16.mxu0 0
        %8207 = vmatpush2.bf16.msra.mxu0 0
        %8208 = vmatprep.subr.bf16.mxu0 0
        %8209 = vmatpush2.bf16.msra.mxu0 0
        %8210 = vmatprep.subr.bf16.mxu0 0
        %8211 = vmatpush2.bf16.msra.mxu0 0
        %8212 = vmatprep.subr.bf16.mxu0 0
        %8213 = vmatpush2.bf16.msra.mxu0 0
        %8214 = vmatprep.subr.bf16.mxu0 0
        %8215 = vmatpush2.bf16.msra.mxu0 0
        %8216 = vmatprep.mubr.bf16.mxu0 0
        %8217 = vmatmul.mubr.bf16.gmra.mxu0 %v8084
        %v8218 = vpop.f32.mrf.mxu0
        %v8219 = vadd.f32 0.0, %v8218
        %v8220 = vpop.f32.mrf.mxu0
        %v8221 = vadd.f32 0.0, %v8220
        %v8222 = vpop.f32.mrf.mxu0
        %v8223 = vadd.f32 0.0, %v8222
        %v8224 = vpop.f32.mrf.mxu0
        %v8225 = vadd.f32 0.0, %v8224
        %8226 = vmatprep.mubr.bf16.mxu0 0
        %8227 = vmatmul.mubr.bf16.gmra.mxu0 %v8085
        %v8228 = vpop.f32.mrf.mxu0
        %v8229 = vadd.f32 0.0, %v8228
        %v8230 = vpop.f32.mrf.mxu0
        %v8231 = vadd.f32 0.0, %v8230
        %v8232 = vpop.f32.mrf.mxu0
        %v8233 = vadd.f32 0.0, %v8232
        %v8234 = vpop.f32.mrf.mxu0
        %v8235 = vadd.f32 0.0, %v8234
        %8236 = vmatprep.mubr.bf16.mxu0 0
        %8237 = vmatmul.mubr.bf16.gmra.mxu0 %v8086
        %v8238 = vpop.f32.mrf.mxu0
        %v8239 = vadd.f32 0.0, %v8238
        %v8240 = vpop.f32.mrf.mxu0
        %v8241 = vadd.f32 0.0, %v8240
        %v8242 = vpop.f32.mrf.mxu0
        %v8243 = vadd.f32 0.0, %v8242
        %v8244 = vpop.f32.mrf.mxu0
        %v8245 = vadd.f32 0.0, %v8244
        %8246 = vmatprep.mubr.bf16.mxu0 0
        %8247 = vmatmul.mubr.bf16.gmra.mxu0 %v8087
        %v8248 = vpop.f32.mrf.mxu0
        %v8249 = vadd.f32 0.0, %v8248
        %v8250 = vpop.f32.mrf.mxu0
        %v8251 = vadd.f32 0.0, %v8250
        %v8252 = vpop.f32.mrf.mxu0
        %v8253 = vadd.f32 0.0, %v8252
        %v8254 = vpop.f32.mrf.mxu0
        %v8255 = vadd.f32 0.0, %v8254
        %8256 = vdwg.mxu0
        %v8257 = vlaneseq
        %v8258 = vshrl.u32 %v8257, 7
        %v8259 = vsub.s32 2, %v8258
        %v8260 = vrot.slane %v7940, %v8259
        %v8261 = vadd.f32 %v8219, %v8260
        %v8262 = vadd.f32 %v8223, %v8260
        %v8263 = vadd.f32 %v8229, %v8260
        %v8264 = vadd.f32 %v8233, %v8260
        %v8265 = vadd.f32 %v8239, %v8260
        %v8266 = vadd.f32 %v8243, %v8260
        %v8267 = vadd.f32 %v8249, %v8260
        %v8268 = vadd.f32 %v8253, %v8260
        %v8269 = vlaneseq
        %v8270 = vshrl.u32 %v8269, 7
        %v8271 = vsub.s32 3, %v8270
        %v8272 = vrot.slane %v7940, %v8271
        %v8273 = vadd.f32 %v8221, %v8272
        %v8274 = vadd.f32 %v8225, %v8272
        %v8275 = vadd.f32 %v8231, %v8272
        %v8276 = vadd.f32 %v8235, %v8272
        %v8277 = vadd.f32 %v8241, %v8272
        %v8278 = vadd.f32 %v8245, %v8272
        %v8279 = vadd.f32 %v8251, %v8272
        %v8280 = vadd.f32 %v8255, %v8272
        %v8281 = vpack.c.bf16 %v8083, %v8083
        %v8282 = vpack.c.bf16 %v8262, %v8261
        %v8283 = vpack.c.bf16 %v8264, %v8263
        %v8284 = vpack.c.bf16 %v8266, %v8265
        %v8285 = vpack.c.bf16 %v8268, %v8267
        %v8286 = vpack.c.bf16 %v8274, %v8273
        %v8287 = vpack.c.bf16 %v8276, %v8275
        %v8288 = vpack.c.bf16 %v8278, %v8277
        %v8289 = vpack.c.bf16 %v8280, %v8279
        %v8291 = vsel %vm1251, %v8281, 0
        %v8294 = vsel %vm1251, %v8282, 0
        %v8297 = vsel %vm1251, %v8283, 0
        %v8300 = vsel %vm1251, %v8284, 0
        %v8303 = vsel %vm1251, %v8285, 0
        %8305 = vmatprep.subr.bf16.mxu0 0
        %8306 = vmatpush1.bf16.xpose.msra.mxu0 0
        %8307 = vmatprep.subr.bf16.mxu0 0
        %8308 = vmatpush1.bf16.xpose.msra.mxu0 0
        %8309 = vmatprep.subr.bf16.mxu0 0
        %8310 = vmatpush1.bf16.xpose.msra.mxu0 0
        %8311 = vmatprep.subr.bf16.mxu0 0
        %8312 = vmatpush1.bf16.xpose.msra.mxu0 0
        %8313 = vmatprep.subr.bf16.mxu0 0
        %8314 = vmatpush1.bf16.xpose.msra.mxu0 %v8303
        %8315 = vmatprep.subr.bf16.mxu0 0
        %8316 = vmatpush1.bf16.xpose.msra.mxu0 %v8300
        %8317 = vmatprep.subr.bf16.mxu0 0
        %8318 = vmatpush1.bf16.xpose.msra.mxu0 %v8297
        %8319 = vmatprep.subr.bf16.mxu0 0
        %8320 = vmatpush1.bf16.xpose.msra.mxu0 %v8294
        %8321 = vmatprep.subr.bf16.mxu0 0
        %8322 = vmatpush2.bf16.xpose.msra.mxu0 0
        %8323 = vmatprep.subr.bf16.mxu0 0
        %8324 = vmatpush2.bf16.xpose.msra.mxu0 0
        %8325 = vmatprep.subr.bf16.mxu0 0
        %8326 = vmatpush2.bf16.xpose.msra.mxu0 0
        %8327 = vmatprep.subr.bf16.mxu0 0
        %8328 = vmatpush2.bf16.xpose.msra.mxu0 0
        %8329 = vmatprep.subr.bf16.mxu0 0
        %8330 = vmatpush2.bf16.xpose.msra.mxu0 0
        %8331 = vmatprep.subr.bf16.mxu0 0
        %8332 = vmatpush2.bf16.xpose.msra.mxu0 0
        %8333 = vmatprep.subr.bf16.mxu0 0
        %8334 = vmatpush2.bf16.xpose.msra.mxu0 0
        %8335 = vmatprep.subr.bf16.mxu0 0
        %8336 = vmatpush2.bf16.xpose.msra.mxu0 0
        %8337 = vmatprep.mubr.bf16.mxu0 0
        %8338 = vmatmul.mubr.bf16.gmra.mxu0 %v8291
        %v8339 = vpop.f32.mrf.mxu0
        %v8340 = vadd.f32 0.0, %v8339
        %v8341 = vpop.f32.mrf.mxu0
        %v8342 = vpop.f32.mrf.mxu0
        %v8343 = vpop.f32.mrf.mxu0
        %8344 = vdwg.mxu0
        %8346 = vrot.lane.b32.xlu0 %v8281, 96
        %v8347 = vpop.permute.xlu0 %8346
        %8352 = vrot.lane.b32.xlu0 %v8282, 96
        %v8353 = vpop.permute.xlu0 %8352
        %8354 = vrot.lane.b32.xlu0 %v8283, 96
        %v8355 = vpop.permute.xlu0 %8354
        %8356 = vrot.lane.b32.xlu0 %v8284, 96
        %v8357 = vpop.permute.xlu0 %8356
        %8358 = vrot.lane.b32.xlu0 %v8285, 96
        %v8359 = vpop.permute.xlu0 %8358
        %v8361 = vsel %vm1251, %v8347, 0
        %v8364 = vsel %vm1251, %v8353, 0
        %v8367 = vsel %vm1251, %v8355, 0
        %v8370 = vsel %vm1251, %v8357, 0
        %v8373 = vsel %vm1251, %v8359, 0
        %8375 = vmatprep.subr.bf16.mxu0 0
        %8376 = vmatpush1.bf16.xpose.msra.mxu0 0
        %8377 = vmatprep.subr.bf16.mxu0 0
        %8378 = vmatpush1.bf16.xpose.msra.mxu0 0
        %8379 = vmatprep.subr.bf16.mxu0 0
        %8380 = vmatpush1.bf16.xpose.msra.mxu0 0
        %8381 = vmatprep.subr.bf16.mxu0 0
        %8382 = vmatpush1.bf16.xpose.msra.mxu0 0
        %8383 = vmatprep.subr.bf16.mxu0 0
        %8384 = vmatpush1.bf16.xpose.msra.mxu0 %v8373
        %8385 = vmatprep.subr.bf16.mxu0 0
        %8386 = vmatpush1.bf16.xpose.msra.mxu0 %v8370
        %8387 = vmatprep.subr.bf16.mxu0 0
        %8388 = vmatpush1.bf16.xpose.msra.mxu0 %v8367
        %8389 = vmatprep.subr.bf16.mxu0 0
        %8390 = vmatpush1.bf16.xpose.msra.mxu0 %v8364
        %8391 = vmatprep.subr.bf16.mxu0 0
        %8392 = vmatpush2.bf16.xpose.msra.mxu0 0
        %8393 = vmatprep.subr.bf16.mxu0 0
        %8394 = vmatpush2.bf16.xpose.msra.mxu0 0
        %8395 = vmatprep.subr.bf16.mxu0 0
        %8396 = vmatpush2.bf16.xpose.msra.mxu0 0
        %8397 = vmatprep.subr.bf16.mxu0 0
        %8398 = vmatpush2.bf16.xpose.msra.mxu0 0
        %8399 = vmatprep.subr.bf16.mxu0 0
        %8400 = vmatpush2.bf16.xpose.msra.mxu0 0
        %8401 = vmatprep.subr.bf16.mxu0 0
        %8402 = vmatpush2.bf16.xpose.msra.mxu0 0
        %8403 = vmatprep.subr.bf16.mxu0 0
        %8404 = vmatpush2.bf16.xpose.msra.mxu0 0
        %8405 = vmatprep.subr.bf16.mxu0 0
        %8406 = vmatpush2.bf16.xpose.msra.mxu0 0
        %8407 = vmatprep.mubr.bf16.mxu0 0
        %8408 = vmatmul.mubr.bf16.gmra.mxu0 %v8361
        %v8409 = vpop.f32.mrf.mxu0
        %v8410 = vadd.f32 0.0, %v8409
        %v8411 = vpop.f32.mrf.mxu0
        %v8412 = vpop.f32.mrf.mxu0
        %v8413 = vpop.f32.mrf.mxu0
        %8414 = vdwg.mxu0
        %8415 = vrot.lane.b32.xlu0 %v8281, 64
        %v8416 = vpop.permute.xlu0 %8415
        %8417 = vrot.lane.b32.xlu0 %v8282, 64
        %v8418 = vpop.permute.xlu0 %8417
        %8419 = vrot.lane.b32.xlu0 %v8283, 64
        %v8420 = vpop.permute.xlu0 %8419
        %8421 = vrot.lane.b32.xlu0 %v8284, 64
        %v8422 = vpop.permute.xlu0 %8421
        %8423 = vrot.lane.b32.xlu0 %v8285, 64
        %v8424 = vpop.permute.xlu0 %8423
        %v8426 = vsel %vm1251, %v8416, 0
        %v8429 = vsel %vm1251, %v8418, 0
        %v8432 = vsel %vm1251, %v8420, 0
        %v8435 = vsel %vm1251, %v8422, 0
        %v8438 = vsel %vm1251, %v8424, 0
        %8440 = vmatprep.subr.bf16.mxu0 0
        %8441 = vmatpush1.bf16.xpose.msra.mxu0 0
        %8442 = vmatprep.subr.bf16.mxu0 0
        %8443 = vmatpush1.bf16.xpose.msra.mxu0 0
        %8444 = vmatprep.subr.bf16.mxu0 0
        %8445 = vmatpush1.bf16.xpose.msra.mxu0 0
        %8446 = vmatprep.subr.bf16.mxu0 0
        %8447 = vmatpush1.bf16.xpose.msra.mxu0 0
        %8448 = vmatprep.subr.bf16.mxu0 0
        %8449 = vmatpush1.bf16.xpose.msra.mxu0 %v8438
        %8450 = vmatprep.subr.bf16.mxu0 0
        %8451 = vmatpush1.bf16.xpose.msra.mxu0 %v8435
        %8452 = vmatprep.subr.bf16.mxu0 0
        %8453 = vmatpush1.bf16.xpose.msra.mxu0 %v8432
        %8454 = vmatprep.subr.bf16.mxu0 0
        %8455 = vmatpush1.bf16.xpose.msra.mxu0 %v8429
        %8456 = vmatprep.subr.bf16.mxu0 0
        %8457 = vmatpush2.bf16.xpose.msra.mxu0 0
        %8458 = vmatprep.subr.bf16.mxu0 0
        %8459 = vmatpush2.bf16.xpose.msra.mxu0 0
        %8460 = vmatprep.subr.bf16.mxu0 0
        %8461 = vmatpush2.bf16.xpose.msra.mxu0 0
        %8462 = vmatprep.subr.bf16.mxu0 0
        %8463 = vmatpush2.bf16.xpose.msra.mxu0 0
        %8464 = vmatprep.subr.bf16.mxu0 0
        %8465 = vmatpush2.bf16.xpose.msra.mxu0 0
        %8466 = vmatprep.subr.bf16.mxu0 0
        %8467 = vmatpush2.bf16.xpose.msra.mxu0 0
        %8468 = vmatprep.subr.bf16.mxu0 0
        %8469 = vmatpush2.bf16.xpose.msra.mxu0 0
        %8470 = vmatprep.subr.bf16.mxu0 0
        %8471 = vmatpush2.bf16.xpose.msra.mxu0 0
        %8472 = vmatprep.mubr.bf16.mxu0 0
        %8473 = vmatmul.mubr.bf16.gmra.mxu0 %v8426
        %v8474 = vpop.f32.mrf.mxu0
        %v8475 = vadd.f32 0.0, %v8474
        %v8476 = vpop.f32.mrf.mxu0
        %v8477 = vpop.f32.mrf.mxu0
        %v8478 = vpop.f32.mrf.mxu0
        %8479 = vdwg.mxu0
        %8480 = vrot.lane.b32.xlu0 %v8281, 32
        %v8481 = vpop.permute.xlu0 %8480
        %8482 = vrot.lane.b32.xlu0 %v8282, 32
        %v8483 = vpop.permute.xlu0 %8482
        %8484 = vrot.lane.b32.xlu0 %v8283, 32
        %v8485 = vpop.permute.xlu0 %8484
        %8486 = vrot.lane.b32.xlu0 %v8284, 32
        %v8487 = vpop.permute.xlu0 %8486
        %8488 = vrot.lane.b32.xlu0 %v8285, 32
        %v8489 = vpop.permute.xlu0 %8488
        %v8491 = vsel %vm1251, %v8481, 0
        %v8494 = vsel %vm1251, %v8483, 0
        %v8497 = vsel %vm1251, %v8485, 0
        %v8500 = vsel %vm1251, %v8487, 0
        %v8503 = vsel %vm1251, %v8489, 0
        %8505 = vmatprep.subr.bf16.mxu0 0
        %8506 = vmatpush1.bf16.xpose.msra.mxu0 0
        %8507 = vmatprep.subr.bf16.mxu0 0
        %8508 = vmatpush1.bf16.xpose.msra.mxu0 0
        %8509 = vmatprep.subr.bf16.mxu0 0
        %8510 = vmatpush1.bf16.xpose.msra.mxu0 0
        %8511 = vmatprep.subr.bf16.mxu0 0
        %8512 = vmatpush1.bf16.xpose.msra.mxu0 0
        %8513 = vmatprep.subr.bf16.mxu0 0
        %8514 = vmatpush1.bf16.xpose.msra.mxu0 %v8503
        %8515 = vmatprep.subr.bf16.mxu0 0
        %8516 = vmatpush1.bf16.xpose.msra.mxu0 %v8500
        %8517 = vmatprep.subr.bf16.mxu0 0
        %8518 = vmatpush1.bf16.xpose.msra.mxu0 %v8497
        %8519 = vmatprep.subr.bf16.mxu0 0
        %8520 = vmatpush1.bf16.xpose.msra.mxu0 %v8494
        %8521 = vmatprep.subr.bf16.mxu0 0
        %8522 = vmatpush2.bf16.xpose.msra.mxu0 0
        %8523 = vmatprep.subr.bf16.mxu0 0
        %8524 = vmatpush2.bf16.xpose.msra.mxu0 0
        %8525 = vmatprep.subr.bf16.mxu0 0
        %8526 = vmatpush2.bf16.xpose.msra.mxu0 0
        %8527 = vmatprep.subr.bf16.mxu0 0
        %8528 = vmatpush2.bf16.xpose.msra.mxu0 0
        %8529 = vmatprep.subr.bf16.mxu0 0
        %8530 = vmatpush2.bf16.xpose.msra.mxu0 0
        %8531 = vmatprep.subr.bf16.mxu0 0
        %8532 = vmatpush2.bf16.xpose.msra.mxu0 0
        %8533 = vmatprep.subr.bf16.mxu0 0
        %8534 = vmatpush2.bf16.xpose.msra.mxu0 0
        %8535 = vmatprep.subr.bf16.mxu0 0
        %8536 = vmatpush2.bf16.xpose.msra.mxu0 0
        %8537 = vmatprep.mubr.bf16.mxu0 0
        %8538 = vmatmul.mubr.bf16.gmra.mxu0 %v8491
        %v8539 = vpop.f32.mrf.mxu0
        %v8540 = vadd.f32 0.0, %v8539
        %v8541 = vpop.f32.mrf.mxu0
        %v8542 = vpop.f32.mrf.mxu0
        %v8543 = vpop.f32.mrf.mxu0
        %8544 = vdwg.mxu0
        %v8546 = vrot.slane %v8410, 7
        %v8549 = vrot.slane %v8475, 6
        %v8552 = vrot.slane %v8540, 5
        %vm8554 = vcmask 1040384
        %v8555 = vsel %vm8554, %v8340, %v8546
        %vm8556 = vcmask 1041408
        %v8557 = vsel %vm8556, %v8555, %v8549
        %vm8558 = vcmask 1042432
        %v8559 = vsel %vm8558, %v8557, %v8552
        %vm8560 = vcmask 519168
        %v8561 = vsel %vm8560, %v8559, -inf
        %8562 = vmax.xlane.f32.xlu0 %v8561
        %v8563 = vpop.xlane.xlu0 %8562
        %v8564 = vsub.f32 %v8559, %v8563
        %v8565 = vmul.f32 %v8564, 1.442695
        %v8566 = vpow.pop %v8565
        %v8567 = vsel %vm8560, %v8566, 0.0
        %8568 = vadd.xlane.f32.xlu0 %v8567
        %v8569 = vpop.xlane.xlu0 %8568
        %v8570 = vrcp.pop %v8569
        %v8571 = vmul.f32 %v8566, %v8570
        %v8572 = vpack.c.bf16 %v8571, %v8571
        %v8574 = vsel %vm1132, %v8572, 0
        %8576 = vmatprep.subr.bf16.mxu0 0
        %8577 = vmatpush1.bf16.msra.mxu0 0
        %8578 = vmatprep.subr.bf16.mxu0 0
        %8579 = vmatpush1.bf16.msra.mxu0 0
        %8580 = vmatprep.subr.bf16.mxu0 0
        %8581 = vmatpush1.bf16.msra.mxu0 0
        %8582 = vmatprep.subr.bf16.mxu0 0
        %8583 = vmatpush1.bf16.msra.mxu0 0
        %8584 = vmatprep.subr.bf16.mxu0 0
        %8585 = vmatpush1.bf16.msra.mxu0 %v8289
        %8586 = vmatprep.subr.bf16.mxu0 0
        %8587 = vmatpush1.bf16.msra.mxu0 %v8288
        %8588 = vmatprep.subr.bf16.mxu0 0
        %8589 = vmatpush1.bf16.msra.mxu0 %v8287
        %8590 = vmatprep.subr.bf16.mxu0 0
        %8591 = vmatpush1.bf16.msra.mxu0 %v8286
        %8592 = vmatprep.subr.bf16.mxu0 0
        %8593 = vmatpush2.bf16.msra.mxu0 0
        %8594 = vmatprep.subr.bf16.mxu0 0
        %8595 = vmatpush2.bf16.msra.mxu0 0
        %8596 = vmatprep.subr.bf16.mxu0 0
        %8597 = vmatpush2.bf16.msra.mxu0 0
        %8598 = vmatprep.subr.bf16.mxu0 0
        %8599 = vmatpush2.bf16.msra.mxu0 0
        %8600 = vmatprep.subr.bf16.mxu0 0
        %8601 = vmatpush2.bf16.msra.mxu0 0
        %8602 = vmatprep.subr.bf16.mxu0 0
        %8603 = vmatpush2.bf16.msra.mxu0 0
        %8604 = vmatprep.subr.bf16.mxu0 0
        %8605 = vmatpush2.bf16.msra.mxu0 0
        %8606 = vmatprep.subr.bf16.mxu0 0
        %8607 = vmatpush2.bf16.msra.mxu0 0
        %8608 = vmatprep.mubr.bf16.mxu0 0
        %8609 = vmatmul.mubr.bf16.gmra.mxu0 %v8574
        %v8610 = vpop.f32.mrf.mxu0
        %v8611 = vadd.f32 0.0, %v8610
        %v8612 = vpop.f32.mrf.mxu0
        %v8613 = vpop.f32.mrf.mxu0
        %v8614 = vpop.f32.mrf.mxu0
        %8615 = vdwg.mxu0
        %v8616 = vshrl.u32 %v8572, 16
        %8622 = vrot.lane.b32.xlu0 %v8286, 96
        %v8623 = vpop.permute.xlu0 %8622
        %8624 = vrot.lane.b32.xlu0 %v8287, 96
        %v8625 = vpop.permute.xlu0 %8624
        %8626 = vrot.lane.b32.xlu0 %v8288, 96
        %v8627 = vpop.permute.xlu0 %8626
        %8628 = vrot.lane.b32.xlu0 %v8289, 96
        %v8629 = vpop.permute.xlu0 %8628
        %v8635 = vsel %vm1132, %v8616, 0
        %8637 = vmatprep.subr.bf16.mxu0 0
        %8638 = vmatpush1.bf16.msra.mxu0 0
        %8639 = vmatprep.subr.bf16.mxu0 0
        %8640 = vmatpush1.bf16.msra.mxu0 0
        %8641 = vmatprep.subr.bf16.mxu0 0
        %8642 = vmatpush1.bf16.msra.mxu0 0
        %8643 = vmatprep.subr.bf16.mxu0 0
        %8644 = vmatpush1.bf16.msra.mxu0 0
        %8645 = vmatprep.subr.bf16.mxu0 0
        %8646 = vmatpush1.bf16.msra.mxu0 %v8629
        %8647 = vmatprep.subr.bf16.mxu0 0
        %8648 = vmatpush1.bf16.msra.mxu0 %v8627
        %8649 = vmatprep.subr.bf16.mxu0 0
        %8650 = vmatpush1.bf16.msra.mxu0 %v8625
        %8651 = vmatprep.subr.bf16.mxu0 0
        %8652 = vmatpush1.bf16.msra.mxu0 %v8623
        %8653 = vmatprep.subr.bf16.mxu0 0
        %8654 = vmatpush2.bf16.msra.mxu0 0
        %8655 = vmatprep.subr.bf16.mxu0 0
        %8656 = vmatpush2.bf16.msra.mxu0 0
        %8657 = vmatprep.subr.bf16.mxu0 0
        %8658 = vmatpush2.bf16.msra.mxu0 0
        %8659 = vmatprep.subr.bf16.mxu0 0
        %8660 = vmatpush2.bf16.msra.mxu0 0
        %8661 = vmatprep.subr.bf16.mxu0 0
        %8662 = vmatpush2.bf16.msra.mxu0 0
        %8663 = vmatprep.subr.bf16.mxu0 0
        %8664 = vmatpush2.bf16.msra.mxu0 0
        %8665 = vmatprep.subr.bf16.mxu0 0
        %8666 = vmatpush2.bf16.msra.mxu0 0
        %8667 = vmatprep.subr.bf16.mxu0 0
        %8668 = vmatpush2.bf16.msra.mxu0 0
        %8669 = vmatprep.mubr.bf16.mxu0 0
        %8670 = vmatmul.mubr.bf16.gmra.mxu0 %v8635
        %v8671 = vpop.f32.mrf.mxu0
        %v8672 = vadd.f32 0.0, %v8671
        %v8673 = vpop.f32.mrf.mxu0
        %v8674 = vpop.f32.mrf.mxu0
        %v8675 = vpop.f32.mrf.mxu0
        %8676 = vdwg.mxu0
        %v8678 = vrot.slane %v8572, 1
        %8679 = vrot.lane.b32.xlu0 %v8286, 64
        %v8680 = vpop.permute.xlu0 %8679
        %8681 = vrot.lane.b32.xlu0 %v8287, 64
        %v8682 = vpop.permute.xlu0 %8681
        %8683 = vrot.lane.b32.xlu0 %v8288, 64
        %v8684 = vpop.permute.xlu0 %8683
        %8685 = vrot.lane.b32.xlu0 %v8289, 64
        %v8686 = vpop.permute.xlu0 %8685
        %v8692 = vsel %vm1132, %v8678, 0
        %8694 = vmatprep.subr.bf16.mxu0 0
        %8695 = vmatpush1.bf16.msra.mxu0 0
        %8696 = vmatprep.subr.bf16.mxu0 0
        %8697 = vmatpush1.bf16.msra.mxu0 0
        %8698 = vmatprep.subr.bf16.mxu0 0
        %8699 = vmatpush1.bf16.msra.mxu0 0
        %8700 = vmatprep.subr.bf16.mxu0 0
        %8701 = vmatpush1.bf16.msra.mxu0 0
        %8702 = vmatprep.subr.bf16.mxu0 0
        %8703 = vmatpush1.bf16.msra.mxu0 %v8686
        %8704 = vmatprep.subr.bf16.mxu0 0
        %8705 = vmatpush1.bf16.msra.mxu0 %v8684
        %8706 = vmatprep.subr.bf16.mxu0 0
        %8707 = vmatpush1.bf16.msra.mxu0 %v8682
        %8708 = vmatprep.subr.bf16.mxu0 0
        %8709 = vmatpush1.bf16.msra.mxu0 %v8680
        %8710 = vmatprep.subr.bf16.mxu0 0
        %8711 = vmatpush2.bf16.msra.mxu0 0
        %8712 = vmatprep.subr.bf16.mxu0 0
        %8713 = vmatpush2.bf16.msra.mxu0 0
        %8714 = vmatprep.subr.bf16.mxu0 0
        %8715 = vmatpush2.bf16.msra.mxu0 0
        %8716 = vmatprep.subr.bf16.mxu0 0
        %8717 = vmatpush2.bf16.msra.mxu0 0
        %8718 = vmatprep.subr.bf16.mxu0 0
        %8719 = vmatpush2.bf16.msra.mxu0 0
        %8720 = vmatprep.subr.bf16.mxu0 0
        %8721 = vmatpush2.bf16.msra.mxu0 0
        %8722 = vmatprep.subr.bf16.mxu0 0
        %8723 = vmatpush2.bf16.msra.mxu0 0
        %8724 = vmatprep.subr.bf16.mxu0 0
        %8725 = vmatpush2.bf16.msra.mxu0 0
        %8726 = vmatprep.mubr.bf16.mxu0 0
        %8727 = vmatmul.mubr.bf16.gmra.mxu0 %v8692
        %v8728 = vpop.f32.mrf.mxu0
        %v8729 = vadd.f32 0.0, %v8728
        %v8730 = vpop.f32.mrf.mxu0
        %v8731 = vpop.f32.mrf.mxu0
        %v8732 = vpop.f32.mrf.mxu0
        %8733 = vdwg.mxu0
        %v8734 = vrot.slane %v8616, 1
        %8735 = vrot.lane.b32.xlu0 %v8286, 32
        %v8736 = vpop.permute.xlu0 %8735
        %8737 = vrot.lane.b32.xlu0 %v8287, 32
        %v8738 = vpop.permute.xlu0 %8737
        %8739 = vrot.lane.b32.xlu0 %v8288, 32
        %v8740 = vpop.permute.xlu0 %8739
        %8741 = vrot.lane.b32.xlu0 %v8289, 32
        %v8742 = vpop.permute.xlu0 %8741
        %v8748 = vsel %vm1132, %v8734, 0
        %8750 = vmatprep.subr.bf16.mxu0 0
        %8751 = vmatpush1.bf16.msra.mxu0 0
        %8752 = vmatprep.subr.bf16.mxu0 0
        %8753 = vmatpush1.bf16.msra.mxu0 0
        %8754 = vmatprep.subr.bf16.mxu0 0
        %8755 = vmatpush1.bf16.msra.mxu0 0
        %8756 = vmatprep.subr.bf16.mxu0 0
        %8757 = vmatpush1.bf16.msra.mxu0 0
        %8758 = vmatprep.subr.bf16.mxu0 0
        %8759 = vmatpush1.bf16.msra.mxu0 %v8742
        %8760 = vmatprep.subr.bf16.mxu0 0
        %8761 = vmatpush1.bf16.msra.mxu0 %v8740
        %8762 = vmatprep.subr.bf16.mxu0 0
        %8763 = vmatpush1.bf16.msra.mxu0 %v8738
        %8764 = vmatprep.subr.bf16.mxu0 0
        %8765 = vmatpush1.bf16.msra.mxu0 %v8736
        %8766 = vmatprep.subr.bf16.mxu0 0
        %8767 = vmatpush2.bf16.msra.mxu0 0
        %8768 = vmatprep.subr.bf16.mxu0 0
        %8769 = vmatpush2.bf16.msra.mxu0 0
        %8770 = vmatprep.subr.bf16.mxu0 0
        %8771 = vmatpush2.bf16.msra.mxu0 0
        %8772 = vmatprep.subr.bf16.mxu0 0
        %8773 = vmatpush2.bf16.msra.mxu0 0
        %8774 = vmatprep.subr.bf16.mxu0 0
        %8775 = vmatpush2.bf16.msra.mxu0 0
        %8776 = vmatprep.subr.bf16.mxu0 0
        %8777 = vmatpush2.bf16.msra.mxu0 0
        %8778 = vmatprep.subr.bf16.mxu0 0
        %8779 = vmatpush2.bf16.msra.mxu0 0
        %8780 = vmatprep.subr.bf16.mxu0 0
        %8781 = vmatpush2.bf16.msra.mxu0 0
        %8782 = vmatprep.mubr.bf16.mxu0 0
        %8783 = vmatmul.mubr.bf16.gmra.mxu0 %v8748
        %v8784 = vpop.f32.mrf.mxu0
        %v8785 = vadd.f32 0.0, %v8784
        %v8786 = vpop.f32.mrf.mxu0
        %v8787 = vpop.f32.mrf.mxu0
        %v8788 = vpop.f32.mrf.mxu0
        %8789 = vdwg.mxu0
        %8791 = vrot.lane.b32.xlu0 %v8672, 32
        %v8792 = vpop.permute.xlu0 %8791
        %8795 = vrot.lane.b32.xlu0 %v8729, 64
        %v8796 = vpop.permute.xlu0 %8795
        %8799 = vrot.lane.b32.xlu0 %v8785, 96
        %v8800 = vpop.permute.xlu0 %8799
        %v8802 = vsel %vm1251, %v8611, %v8792
        %v8803 = vsel %vm1132, %v8802, %v8796
        %v8804 = vsel %vm1847, %v8803, %v8800
        %v8805 = vpack.c.bf16 %v8804, %v8804
        %v8806 = vld [vmem:[%s22] sm:$0xf]
        %v8807 = vld [vmem:[%s22 + $0x4] sm:$0xf]
        %v8808 = vld [vmem:[%s22 + $0x8] sm:$0xf]
        %v8809 = vld [vmem:[%s22 + $0xc] sm:$0xf]
        %v8810 = vld [vmem:[%s22 + $0x10] sm:$0xf]
        %v8811 = vld [vmem:[%s22 + $0x14] sm:$0xf]
        %v8812 = vld [vmem:[%s22 + $0x18] sm:$0xf]
        %v8813 = vld [vmem:[%s22 + $0x1c] sm:$0xf]
        %v8814 = vld [vmem:[%s22 + $0x20] sm:$0xf]
        %v8815 = vld [vmem:[%s22 + $0x24] sm:$0xf]
        %v8816 = vld [vmem:[%s22 + $0x28] sm:$0xf]
        %v8817 = vld [vmem:[%s22 + $0x2c] sm:$0xf]
        %v8818 = vld [vmem:[%s22 + $0x30] sm:$0xf]
        %v8819 = vld [vmem:[%s22 + $0x34] sm:$0xf]
        %v8820 = vld [vmem:[%s22 + $0x38] sm:$0xf]
        %v8821 = vld [vmem:[%s22 + $0x3c] sm:$0xf]
        %v8838 = vunpack.c.l.b16 %v8806
        %v8839 = vunpack.c.l.b16 %v8807
        %v8840 = vunpack.c.l.b16 %v8808
        %v8841 = vunpack.c.l.b16 %v8809
        %v8842 = vunpack.c.l.b16 %v8810
        %v8843 = vunpack.c.l.b16 %v8811
        %v8844 = vunpack.c.l.b16 %v8812
        %v8845 = vunpack.c.l.b16 %v8813
        %v8846 = vunpack.c.l.b16 %v8814
        %v8847 = vunpack.c.l.b16 %v8815
        %v8848 = vunpack.c.l.b16 %v8816
        %v8849 = vunpack.c.l.b16 %v8817
        %v8850 = vunpack.c.l.b16 %v8818
        %v8851 = vunpack.c.l.b16 %v8819
        %v8852 = vunpack.c.l.b16 %v8820
        %v8853 = vunpack.c.l.b16 %v8821
        %v8854 = vpack.c.b16 %v8839, %v8838
        %v8855 = vpack.c.b16 %v8841, %v8840
        %v8856 = vpack.c.b16 %v8843, %v8842
        %v8857 = vpack.c.b16 %v8845, %v8844
        %v8858 = vpack.c.b16 %v8847, %v8846
        %v8859 = vpack.c.b16 %v8849, %v8848
        %v8860 = vpack.c.b16 %v8851, %v8850
        %v8861 = vpack.c.b16 %v8853, %v8852
        %v8870 = vrot.slane %v7940, 4
        %8872 = vmatprep.subr.bf16.mxu0 0
        %8873 = vmatpush1.bf16.msra.mxu0 %v8861
        %8874 = vmatprep.subr.bf16.mxu0 0
        %8875 = vmatpush1.bf16.msra.mxu0 %v8860
        %8876 = vmatprep.subr.bf16.mxu0 0
        %8877 = vmatpush1.bf16.msra.mxu0 %v8859
        %8878 = vmatprep.subr.bf16.mxu0 0
        %8879 = vmatpush1.bf16.msra.mxu0 %v8858
        %8880 = vmatprep.subr.bf16.mxu0 0
        %8881 = vmatpush1.bf16.msra.mxu0 %v8857
        %8882 = vmatprep.subr.bf16.mxu0 0
        %8883 = vmatpush1.bf16.msra.mxu0 %v8856
        %8884 = vmatprep.subr.bf16.mxu0 0
        %8885 = vmatpush1.bf16.msra.mxu0 %v8855
        %8886 = vmatprep.subr.bf16.mxu0 0
        %8887 = vmatpush1.bf16.msra.mxu0 %v8854
        %8888 = vmatprep.subr.bf16.mxu0 0
        %8889 = vmatpush2.bf16.msra.mxu0 0
        %8890 = vmatprep.subr.bf16.mxu0 0
        %8891 = vmatpush2.bf16.msra.mxu0 0
        %8892 = vmatprep.subr.bf16.mxu0 0
        %8893 = vmatpush2.bf16.msra.mxu0 0
        %8894 = vmatprep.subr.bf16.mxu0 0
        %8895 = vmatpush2.bf16.msra.mxu0 0
        %8896 = vmatprep.subr.bf16.mxu0 0
        %8897 = vmatpush2.bf16.msra.mxu0 0
        %8898 = vmatprep.subr.bf16.mxu0 0
        %8899 = vmatpush2.bf16.msra.mxu0 0
        %8900 = vmatprep.subr.bf16.mxu0 0
        %8901 = vmatpush2.bf16.msra.mxu0 0
        %8902 = vmatprep.subr.bf16.mxu0 0
        %8903 = vmatpush2.bf16.msra.mxu0 0
        %8904 = vmatprep.mubr.bf16.mxu0 0
        %8905 = vmatmul.mubr.bf16.gmra.mxu0 %v8805
        %v8906 = vpop.f32.mrf.mxu0
        %v8907 = vadd.f32 %v8870, %v8906
        %v8908 = vpop.f32.mrf.mxu0
        %v8909 = vpop.f32.mrf.mxu0
        %v8910 = vpop.f32.mrf.mxu0
        %8911 = vdwg.mxu0
        %v8912 = vadd.f32 %v8079, %v8907
        %v8913 = vsel %vm8554, %v8912, 0.0
        %8914 = vadd.xlane.f32.xlu0 %v8913
        %v8915 = vpop.xlane.xlu0 %8914
        %v8916 = vmul.f32 %v8915, %v1966
        %v8917 = vsub.f32 %v8912, %v8916
        %v8918 = vmul.f32 %v8917, %v8917
        %v8919 = vsel %vm8554, %v8918, 0.0
        %8920 = vadd.xlane.f32.xlu0 %v8919
        %v8921 = vpop.xlane.xlu0 %8920
        %v8922 = vmul.f32 %v8921, %v1966
        %v8923 = vadd.f32 %v8922, 1e-05
        %v8924 = vrsqrt.pop %v8923
        %v8925 = vmul.f32 %v8917, %v8924
        %v8926 = vrot.slane %v7940, 6
        %v8928 = vmul.f32 %v8925, %v8926
        %v8929 = vrot.slane %v7940, 7
        %v8931 = vadd.f32 %v8928, %v8929
        %v8932 = vpack.c.bf16 %v8931, %v8931
        %s8933 = scalar_lea.vmem %s22, 64
        %v8934 = vld [vmem:[%s8933] sm:$0xf]
        %v8935 = vld [vmem:[%s8933 + $0x4] sm:$0xf]
        %v8936 = vld [vmem:[%s8933 + $0x8] sm:$0xf]
        %v8937 = vld [vmem:[%s8933 + $0xc] sm:$0xf]
        %v8938 = vld [vmem:[%s8933 + $0x10] sm:$0xf]
        %v8939 = vld [vmem:[%s8933 + $0x14] sm:$0xf]
        %v8940 = vld [vmem:[%s8933 + $0x18] sm:$0xf]
        %v8941 = vld [vmem:[%s8933 + $0x1c] sm:$0xf]
        %v8942 = vld [vmem:[%s8933 + $0x20] sm:$0xf]
        %v8943 = vld [vmem:[%s8933 + $0x24] sm:$0xf]
        %v8944 = vld [vmem:[%s8933 + $0x28] sm:$0xf]
        %v8945 = vld [vmem:[%s8933 + $0x2c] sm:$0xf]
        %v8946 = vld [vmem:[%s8933 + $0x30] sm:$0xf]
        %v8947 = vld [vmem:[%s8933 + $0x34] sm:$0xf]
        %v8948 = vld [vmem:[%s8933 + $0x38] sm:$0xf]
        %v8949 = vld [vmem:[%s8933 + $0x3c] sm:$0xf]
        %v8966 = vunpack.c.l.b16 %v8934
        %v8967 = vunpack.c.l.b16 %v8935
        %v8968 = vunpack.c.l.b16 %v8936
        %v8969 = vunpack.c.l.b16 %v8937
        %v8970 = vunpack.c.l.b16 %v8938
        %v8971 = vunpack.c.l.b16 %v8939
        %v8972 = vunpack.c.l.b16 %v8940
        %v8973 = vunpack.c.l.b16 %v8941
        %v8974 = vunpack.c.l.b16 %v8942
        %v8975 = vunpack.c.l.b16 %v8943
        %v8976 = vunpack.c.l.b16 %v8944
        %v8977 = vunpack.c.l.b16 %v8945
        %v8978 = vunpack.c.l.b16 %v8946
        %v8979 = vunpack.c.l.b16 %v8947
        %v8980 = vunpack.c.l.b16 %v8948
        %v8981 = vunpack.c.l.b16 %v8949
        %v8982 = vpack.c.b16 %v8967, %v8966
        %v8983 = vpack.c.b16 %v8969, %v8968
        %v8984 = vpack.c.b16 %v8971, %v8970
        %v8985 = vpack.c.b16 %v8973, %v8972
        %v8986 = vpack.c.b16 %v8975, %v8974
        %v8987 = vpack.c.b16 %v8977, %v8976
        %v8988 = vpack.c.b16 %v8979, %v8978
        %v8989 = vpack.c.b16 %v8981, %v8980
        %v8998 = vrot.slane %v7940, 5
        %9000 = vmatprep.subr.bf16.mxu0 0
        %9001 = vmatpush1.bf16.msra.mxu0 %v8989
        %9002 = vmatprep.subr.bf16.mxu0 0
        %9003 = vmatpush1.bf16.msra.mxu0 %v8988
        %9004 = vmatprep.subr.bf16.mxu0 0
        %9005 = vmatpush1.bf16.msra.mxu0 %v8987
        %9006 = vmatprep.subr.bf16.mxu0 0
        %9007 = vmatpush1.bf16.msra.mxu0 %v8986
        %9008 = vmatprep.subr.bf16.mxu0 0
        %9009 = vmatpush1.bf16.msra.mxu0 %v8985
        %9010 = vmatprep.subr.bf16.mxu0 0
        %9011 = vmatpush1.bf16.msra.mxu0 %v8984
        %9012 = vmatprep.subr.bf16.mxu0 0
        %9013 = vmatpush1.bf16.msra.mxu0 %v8983
        %9014 = vmatprep.subr.bf16.mxu0 0
        %9015 = vmatpush1.bf16.msra.mxu0 %v8982
        %9016 = vmatprep.subr.bf16.mxu0 0
        %9017 = vmatpush2.bf16.msra.mxu0 0
        %9018 = vmatprep.subr.bf16.mxu0 0
        %9019 = vmatpush2.bf16.msra.mxu0 0
        %9020 = vmatprep.subr.bf16.mxu0 0
        %9021 = vmatpush2.bf16.msra.mxu0 0
        %9022 = vmatprep.subr.bf16.mxu0 0
        %9023 = vmatpush2.bf16.msra.mxu0 0
        %9024 = vmatprep.subr.bf16.mxu0 0
        %9025 = vmatpush2.bf16.msra.mxu0 0
        %9026 = vmatprep.subr.bf16.mxu0 0
        %9027 = vmatpush2.bf16.msra.mxu0 0
        %9028 = vmatprep.subr.bf16.mxu0 0
        %9029 = vmatpush2.bf16.msra.mxu0 0
        %9030 = vmatprep.subr.bf16.mxu0 0
        %9031 = vmatpush2.bf16.msra.mxu0 0
        %9032 = vmatprep.mubr.bf16.mxu0 0
        %9033 = vmatmul.mubr.bf16.gmra.mxu0 %v8932
        %v9034 = vpop.f32.mrf.mxu0
        %v9035 = vadd.f32 %v8998, %v9034
        %v9036 = vpop.f32.mrf.mxu0
        %v9037 = vpop.f32.mrf.mxu0
        %v9038 = vpop.f32.mrf.mxu0
        %9039 = vdwg.mxu0
        %v9040 = vmax.f32 %v9035, 0.0
        %v9041 = vadd.f32 %v8931, %v9040
        %v9042 = vsel %vm8554, %v9041, 0.0
        %9043 = vadd.xlane.f32.xlu0 %v9042
        %v9044 = vpop.xlane.xlu0 %9043
        %v9045 = vmul.f32 %v9044, %v1966
        %v9046 = vsub.f32 %v9041, %v9045
        %v9047 = vmul.f32 %v9046, %v9046
        %v9048 = vsel %vm8554, %v9047, 0.0
        %9049 = vadd.xlane.f32.xlu0 %v9048
        %v9050 = vpop.xlane.xlu0 %9049
        %v9051 = vmul.f32 %v9050, %v1966
        %v9052 = vadd.f32 %v9051, 1e-05
        %v9053 = vrsqrt.pop %v9052
        %v9054 = vmul.f32 %v9046, %v9053
        %v9055 = vmul.f32 %v9054, %v7941
        %v9057 = vrot.slane %v7941, 1
        %v9059 = vadd.f32 %v9055, %v9057
        %v9060 = vld [vmem:[%s24] sm:$0xff]
        %v9061 = vld [vmem:[%s24 + $0x8] sm:$0xff]
        %v9062 = vld [vmem:[%s24 + $0x10] sm:$0xff]
        %v9063 = vld [vmem:[%s24 + $0x18] sm:$0xff]
        %v9064 = vld [vmem:[%s24 + $0x20] sm:$0xff]
        %v9065 = vld [vmem:[%s24 + $0x28] sm:$0xff]
        %v9066 = vld [vmem:[%s24 + $0x30] sm:$0xff]
        %v9067 = vld [vmem:[%s24 + $0x38] sm:$0xff]
        %v9068 = vld [vmem:[%s24 + $0x40] sm:$0xff]
        %v9069 = vld [vmem:[%s24 + $0x48] sm:$0xff]
        %v9070 = vld [vmem:[%s24 + $0x50] sm:$0xff]
        %v9071 = vld [vmem:[%s24 + $0x58] sm:$0xff]
        %v9072 = vld [vmem:[%s24 + $0x60] sm:$0xff]
        %v9073 = vld [vmem:[%s24 + $0x68] sm:$0xff]
        %v9074 = vld [vmem:[%s24 + $0x70] sm:$0xff]
        %v9075 = vld [vmem:[%s24 + $0x78] sm:$0xff]
        %v9076 = vld [vmem:[%s25] sm:$0x1]
        %9077 = vmatprep.subr.mxu0 0.0
        %9078 = vmatpush1.msra.mxu0 %v9075
        %9079 = vmatprep.subr.mxu0 0.0
        %9080 = vmatpush1.msra.mxu0 %v9074
        %9081 = vmatprep.subr.mxu0 0.0
        %9082 = vmatpush1.msra.mxu0 %v9073
        %9083 = vmatprep.subr.mxu0 0.0
        %9084 = vmatpush1.msra.mxu0 %v9072
        %9085 = vmatprep.subr.mxu0 0.0
        %9086 = vmatpush1.msra.mxu0 %v9071
        %9087 = vmatprep.subr.mxu0 0.0
        %9088 = vmatpush1.msra.mxu0 %v9070
        %9089 = vmatprep.subr.mxu0 0.0
        %9090 = vmatpush1.msra.mxu0 %v9069
        %9091 = vmatprep.subr.mxu0 0.0
        %9092 = vmatpush1.msra.mxu0 %v9068
        %9093 = vmatprep.subr.mxu0 0.0
        %9094 = vmatpush1.msra.mxu0 %v9067
        %9095 = vmatprep.subr.mxu0 0.0
        %9096 = vmatpush1.msra.mxu0 %v9066
        %9097 = vmatprep.subr.mxu0 0.0
        %9098 = vmatpush1.msra.mxu0 %v9065
        %9099 = vmatprep.subr.mxu0 0.0
        %9100 = vmatpush1.msra.mxu0 %v9064
        %9101 = vmatprep.subr.mxu0 0.0
        %9102 = vmatpush1.msra.mxu0 %v9063
        %9103 = vmatprep.subr.mxu0 0.0
        %9104 = vmatpush1.msra.mxu0 %v9062
        %9105 = vmatprep.subr.mxu0 0.0
        %9106 = vmatpush1.msra.mxu0 %v9061
        %9107 = vmatprep.subr.mxu0 0.0
        %9108 = vmatpush1.msra.mxu0 %v9060
        %9109 = vmatprep.subr.mxu0 0.0
        %9110 = vmatpush2.msra.mxu0 0.0
        %9111 = vmatprep.subr.mxu0 0.0
        %9112 = vmatpush2.msra.mxu0 0.0
        %9113 = vmatprep.subr.mxu0 0.0
        %9114 = vmatpush2.msra.mxu0 0.0
        %9115 = vmatprep.subr.mxu0 0.0
        %9116 = vmatpush2.msra.mxu0 0.0
        %9117 = vmatprep.subr.mxu0 0.0
        %9118 = vmatpush2.msra.mxu0 0.0
        %9119 = vmatprep.subr.mxu0 0.0
        %9120 = vmatpush2.msra.mxu0 0.0
        %9121 = vmatprep.subr.mxu0 0.0
        %9122 = vmatpush2.msra.mxu0 0.0
        %9123 = vmatprep.subr.mxu0 0.0
        %9124 = vmatpush2.msra.mxu0 0.0
        %9125 = vmatprep.subr.mxu0 0.0
        %9126 = vmatpush2.msra.mxu0 0.0
        %9127 = vmatprep.subr.mxu0 0.0
        %9128 = vmatpush2.msra.mxu0 0.0
        %9129 = vmatprep.subr.mxu0 0.0
        %9130 = vmatpush2.msra.mxu0 0.0
        %9131 = vmatprep.subr.mxu0 0.0
        %9132 = vmatpush2.msra.mxu0 0.0
        %9133 = vmatprep.subr.mxu0 0.0
        %9134 = vmatpush2.msra.mxu0 0.0
        %9135 = vmatprep.subr.mxu0 0.0
        %9136 = vmatpush2.msra.mxu0 0.0
        %9137 = vmatprep.subr.mxu0 0.0
        %9138 = vmatpush2.msra.mxu0 0.0
        %9139 = vmatprep.subr.mxu0 0.0
        %9140 = vmatpush2.msra.mxu0 0.0
        %9141 = vmatprep.mubr.f32.mxu0 0.0
        %9142 = vmatmul.mubr.f32.gmra.mxu0 %v9059
        %v9143 = vpop.f32.mrf.mxu0
        %v9144 = vadd.f32 %v9076, %v9143
        %v9145 = vpop.f32.mrf.mxu0
        %9146 = vdwg.mxu0
        %vm9147 = vcmask 24576
        %9148 = vst.msk [vmem:[%s783] sm:$0x1] %vm9147, %v9144
        %s9149 = sand.u32 %s599, 1
        %s9150 = scalar_lea.sflag [#allocation3], %s9149
        %s9151 = sand.u32 %s599, 1
        %s9152 = scalar_lea.vmem [#allocation2], %s9151
        // Predicated region
        $region125: #{_lambda_.1} parent=123 // pred_check
          %p9153 = pneg %p609
        $region126: #{_lambda_.1} parent=123 // pred_check_branch
          %9155 = sbr.rel (%p9153) target = $region128
        $region127: #{_lambda_.1} parent=123 // pred_region
          %s9157 = ssub.s32 16, 16
          %9158 = vsyncadd %s9150, %s9157
          %s9159 = smul.addr %s40, 16
          %s9160 = scalar_lea.hbm %s26, %s9159
          %s9162 = sshll.u32 %s9152, 4
          %s9163 = int_to_ptr.vmem [resolvable:$true] %s9162
          %9165 = dma.vmem_to_hbm [thread:$0]  %s9163, 16, %s9160, %s9150
        $region128: #{_lambda_.1} parent=123 // pred_fallthru
          _
      $region124: #{_lambda_.1} parent=5 // pred_fallthru
        _
      %p9166 = scmp.le.s32.totalorder 2, %s35
      // Predicated region
      $region129: #{_lambda_.1} parent=5 // pred_check
        %p9167 = pneg %p9166
      $region130: #{_lambda_.1} parent=5 // pred_check_branch
        %9169 = sbr.rel (%p9167) target = $region132
      $region131: #{_lambda_.1} parent=5 // pred_region
        %s9170 = ssub.s32 %s35, 2
        // Predicated region
        $region133: #{_lambda_.1} parent=131 // pred_check
          %p9171 = pneg %p615
        $region134: #{_lambda_.1} parent=131 // pred_check_branch
          %9173 = sbr.rel (%p9171) target = $region136
        $region135: #{_lambda_.1} parent=131 // pred_region
          %s9174 = sand.u32 %s600, 1
          %s9175 = scalar_lea.sflag [#allocation3], %s9174
          %s9176 = sand.u32 %s600, 1
          %s9177 = scalar_lea.vmem [#allocation2], %s9176
          %9178 = dma.done %s9175, 16
        $region136: #{_lambda_.1} parent=131 // pred_fallthru
          _
      $region132: #{_lambda_.1} parent=5 // pred_fallthru
        _
    $region6: #{_lambda_.1} parent=1 // loop_footer
      %s39 = sadd.s32 1, %s35
    $region7: #{_lambda_.1} parent=1 // loop_footer_branch
      %34 = sbr.rel target = $region3
    $region8: #{_lambda_.1} parent=1 // loop_exit
      _
    %9179 = vsyncpa [#allocation3], 1
    %s9180 = scalar_lea.sflag [#allocation3], 1
    %9181 = vsyncpa %s9180, 1

</llo_original>
